<compile_context>
chip_gen: v5e
topology: v5e:2x2
jax: 0.10.0
libtpu: 0.0.40
codegen_flags: <defaults>
</compile_context>

<pallas_src>
import functools

import jax
import jax.numpy as jnp
from jax import lax
from jax.experimental import pallas as pl
from jax.experimental.pallas import tpu as pltpu


# Crossover (per review): below this Cin a single K=9*Cin im2col matmul wins
# (tiny-K per-matmul fixed cost, v5e MXU underfill); above it, 9 accumulated
# matmuls avoid the 9-way lane concat and the 9x im2col VMEM blowup.
_NINE_TAP_MIN_CIN = 64


def _zero_border(pad_ref, H, W):
    """Zero only the 1-px halo strips of a (H+2, W+2, C) padded VMEM scratch."""
    C = pad_ref.shape[-1]
    dt = pad_ref.dtype
    zrow = jnp.zeros((1, W + 2, C), dt)
    pad_ref[0:1, :, :] = zrow
    pad_ref[H + 1:H + 2, :, :] = zrow
    zcol = jnp.zeros((H + 2, 1, C), dt)
    pad_ref[:, 0:1, :] = zcol
    pad_ref[:, W + 1:W + 2, :] = zcol


def _conv3x3_bias_relu(pad_ref, w, b, H, W, nine_tap):
    """3x3 'same' conv + bias + ReLU from a zero-padded VMEM scratch.

    pad_ref: (H+2, W+2, Cin) bf16 scratch (border already zero)
    w      : (9*Cin, Cout)   bf16, rows ordered (dy, dx, cin) row-major
    b      : (1, Cout)       f32
    returns: (H*W, Cout)     f32
    """
    Cin = pad_ref.shape[-1]
    Cout = w.shape[-1]
    if nine_tap:
        # 9 accumulated matmuls: no im2col patch, no lane concat.
        acc = jnp.zeros((H * W, Cout), jnp.float32)
        t = 0
        for dy in range(3):
            for dx in range(3):
                win = pad_ref[dy:dy + H, dx:dx + W, :].reshape(H * W, Cin)
                acc = acc + jnp.dot(win, w[t * Cin:(t + 1) * Cin, :],
                                    preferred_element_type=jnp.float32)
                t += 1
    else:
        # Single MXU matmul over the concatenated 9 shifted windows.
        cols = [
            pad_ref[dy:dy + H, dx:dx + W, :].reshape(H * W, Cin)
            for dy in range(3) for dx in range(3)
        ]
        patch = jnp.concatenate(cols, axis=-1)            # (H*W, 9*Cin) bf16
        acc = jnp.dot(patch, w, preferred_element_type=jnp.float32)
    return jnp.maximum(acc + b, 0.0)                      # (H*W, Cout) f32


def _upsample_block_kernel(xu_ref, sk_ref, w1_ref, b1_ref, w2_ref, b2_ref,
                           o_ref, pad1_ref, pad2_ref, *,
                           sy, sx, nine_tap1, nine_tap2):
    # xu_ref : (1, H0, W0, Cx) bf16  low-res x (H0*sy == H, W0*sx == W)
    # sk_ref : (1, H,  W,  Cs) bf16  skip connection
    # w1_ref : (9*(Cx+Cs), Cout) bf16 ; b1_ref: (1, Cout) f32
    # w2_ref : (9*Cout, Cout)    bf16 ; b2_ref: (1, Cout) f32
    # o_ref  : (1, H, W, Cout) bf16
    H = sk_ref.shape[1]
    W = sk_ref.shape[2]
    H0 = xu_ref.shape[1]
    W0 = xu_ref.shape[2]
    Cx = xu_ref.shape[3]
    Cout = o_ref.shape[3]

    # Zero only the halo strips (interior is fully overwritten below).
    _zero_border(pad1_ref, H, W)
    _zero_border(pad2_ref, H, W)

    # In-kernel nearest upsample of x by integer factors (sy, sx) via
    # broadcast+reshape (pure replication; exact for integer ratios).
    x_up = xu_ref[0]                                       # (H0, W0, Cx)
    if sx > 1:
        x_up = jnp.broadcast_to(x_up[:, :, None, :],
                                (H0, W0, sx, Cx)).reshape(H0, W0 * sx, Cx)
    if sy > 1:
        Wc = x_up.shape[1]
        x_up = jnp.broadcast_to(x_up[:, None, :, :],
                                (H0, sy, Wc, Cx)).reshape(H0 * sy, Wc, Cx)
    # x_up is now (H, W, Cx)

    # Stage 1: channel-concat in VMEM (matches torch.cat([x, skip], 1)),
    # then conv3x3 + bias + ReLU.
    pad1_ref[1:H + 1, 1:W + 1, :] = jnp.concatenate([x_up, sk_ref[0]], axis=-1)
    h = _conv3x3_bias_relu(pad1_ref, w1_ref[...], b1_ref[...], H, W, nine_tap1)

    # Stage 2: second conv3x3 + bias + ReLU; `h` never leaves VMEM.
    pad2_ref[1:H + 1, 1:W + 1, :] = (
        h.reshape(H, W, Cout).astype(pad2_ref.dtype))
    out = _conv3x3_bias_relu(pad2_ref, w2_ref[...], b2_ref[...], H, W,
                             nine_tap2)

    o_ref[...] = out.reshape(1, H, W, Cout).astype(o_ref.dtype)


def _upsample_block_fused(xu, sk, w1_mat, b1_row, w2_mat, b2_row, sy, sx):
    """xu: (N,H0,W0,Cx) bf16 low-res x; sk: (N,H,W,Cs) bf16; sy,sx static ints."""
    N, H0, W0, Cx = xu.shape
    _, H, W, Cs = sk.shape
    assert H == H0 * sy and W == W0 * sx
    C1 = Cx + Cs
    Cout = w2_mat.shape[-1]

    kernel = functools.partial(
        _upsample_block_kernel, sy=sy, sx=sx,
        nine_tap1=(C1 >= _NINE_TAP_MIN_CIN),
        nine_tap2=(Cout >= _NINE_TAP_MIN_CIN))

    return pl.pallas_call(
        kernel,
        out_shape=jax.ShapeDtypeStruct((N, H, W, Cout), jnp.bfloat16),
        grid_spec=pltpu.PrefetchScalarGridSpec(
            num_scalar_prefetch=0,
            grid=(N,),
            in_specs=[
                pl.BlockSpec((1, H0, W0, Cx), lambda n: (n, 0, 0, 0)),
                pl.BlockSpec((1, H, W, Cs), lambda n: (n, 0, 0, 0)),
                pl.BlockSpec((9 * C1, Cout), lambda n: (0, 0)),
                pl.BlockSpec((1, Cout), lambda n: (0, 0)),
                pl.BlockSpec((9 * Cout, Cout), lambda n: (0, 0)),
                pl.BlockSpec((1, Cout), lambda n: (0, 0)),
            ],
            out_specs=pl.BlockSpec((1, H, W, Cout), lambda n: (n, 0, 0, 0)),
            scratch_shapes=[
                pltpu.VMEM((H + 2, W + 2, C1), jnp.bfloat16),
                pltpu.VMEM((H + 2, W + 2, Cout), jnp.bfloat16),
            ],
        ),
        compiler_params=pltpu.CompilerParams(
            dimension_semantics=("parallel",),        # N>=2 -> both v7x TCs busy
            vmem_limit_bytes=32 * 1024 * 1024,        # explicit budget, all gens
        ),
    )(xu, sk, w1_mat, b1_row, w2_mat, b2_row)


# ----------------------------------------------------------------------------
# Wrapper glue (plain JAX): layout/dtype at the NCHW boundary, params.
# ----------------------------------------------------------------------------
def nearest_resize_nchw(x, out_h, out_w):
    # Integer floor((dst*in)/out); identical to PyTorch 'nearest' for integer
    # ratios (the case used here).  For non-integer ratios PyTorch uses
    # floor(dst * float(in/out)), which can differ by one pixel at large sizes.
    N, C, H, W = x.shape
    rows = (jnp.arange(out_h) * H) // out_h
    cols = (jnp.arange(out_w) * W) // out_w
    return x[:, :, rows, :][:, :, :, cols]


def _init_conv_params(key, c_in, c_out, k=3):
    # Deterministic init mimicking PyTorch Conv2d default (U(+-1/sqrt(fan_in))).
    kw, kb = jax.random.split(key)
    fan_in = c_in * k * k
    bound = 1.0 / jnp.sqrt(fan_in)
    w_oihw = jax.random.uniform(kw, (c_out, c_in, k, k), jnp.float32,
                                minval=-bound, maxval=bound)
    b = jax.random.uniform(kb, (c_out,), jnp.float32, -bound, bound)
    w_hwio = jnp.transpose(w_oihw, (2, 3, 1, 0))   # OIHW -> HWIO
    return w_hwio, b


class UpsampleBlockPallas:
    """UpsampleBlock(upsample_mode='nearest', use_skip=True), identity norm."""

    def __init__(self, in_channels, skip_channels, out_channels, key):
        conv_in = in_channels + skip_channels       # nearest + use_skip
        k1, k2 = jax.random.split(key)
        self.w1_hwio, self.b1 = _init_conv_params(k1, conv_in, out_channels)
        self.w2_hwio, self.b2 = _init_conv_params(k2, out_channels, out_channels)
        # Kernel-side parameter forms: im2col weight matrices in bf16
        # (rows ordered (dy, dx, cin)), biases as (1, Cout) rows in f32.
        self.w1_mat = self.w1_hwio.reshape(-1, out_channels).astype(jnp.bfloat16)
        self.w2_mat = self.w2_hwio.reshape(-1, out_channels).astype(jnp.bfloat16)
        self.b1_row = self.b1.reshape(1, -1)
        self.b2_row = self.b2.reshape(1, -1)

    @functools.partial(jax.jit, static_argnums=0)
    def __call__(self, x_nchw, skip_nchw):
        out_h, out_w = skip_nchw.shape[2], skip_nchw.shape[3]
        in_h, in_w = x_nchw.shape[2], x_nchw.shape[3]
        # NCHW -> NHWC + bf16 cast on the SMALL low-res x (before any
        # upsample), so the 4x-larger upsampled tensor never touches HBM.
        x_nhwc = jnp.transpose(x_nchw, (0, 2, 3, 1)).astype(jnp.bfloat16)
        sk_nhwc = jnp.transpose(skip_nchw, (0, 2, 3, 1)).astype(jnp.bfloat16)

        if out_h % in_h == 0 and out_w % in_w == 0:
            sy, sx = out_h // in_h, out_w // in_w
            xu = x_nhwc                              # upsample fused in-kernel
        else:
            # TODO(synk): non-integer nearest ratios fall back to a wrapper
            # gather (and PyTorch's fp index rounding can differ by 1 px).
            sy = sx = 1
            rows = (jnp.arange(out_h) * in_h) // out_h
            cols = (jnp.arange(out_w) * in_w) // out_w
            xu = x_nhwc[:, rows, :, :][:, :, cols, :]

        o_nhwc = _upsample_block_fused(xu, sk_nhwc, self.w1_mat, self.b1_row,
                                       self.w2_mat, self.b2_row, sy, sx)
        # Back to NCHW; kernel emits bf16 (half the transpose traffic), the
        # module boundary stays f32 like the PyTorch reference.
        return jnp.transpose(o_nhwc, (0, 3, 1, 2)).astype(jnp.float32)


# ----------------------------------------------------------------------------
# Pure-JAX reference using the SAME bf16 operand precision (f32 accumulation),
# so the check validates the Pallas data path exactly.
# ----------------------------------------------------------------------------
def _ref_forward(block, x_nchw, skip_nchw):
    out_h, out_w = skip_nchw.shape[2], skip_nchw.shape[3]
    x_up = nearest_resize_nchw(x_nchw, out_h, out_w)
    cat = jnp.concatenate([x_up, skip_nchw], axis=1)
    cat_nhwc = jnp.transpose(cat, (0, 2, 3, 1))

    def conv(x, w_hwio, b):
        y = lax.conv_general_dilated(
            x.astype(jnp.bfloat16), w_hwio.astype(jnp.bfloat16),
            window_strides=(1, 1), padding="SAME",
            dimension_numbers=("NHWC", "HWIO", "NHWC"),
            preferred_element_type=jnp.float32)
        return jnp.maximum(y + b[None, None, None, :], 0.0)

    h = conv(cat_nhwc, block.w1_hwio, block.b1)
    o = conv(h, block.w2_hwio, block.b2)   # conv() re-casts h to bf16, like the kernel
    return jnp.transpose(o, (0, 3, 1, 2))


if __name__ == "__main__":
    key = jax.random.PRNGKey(0)
    k_params, k_x, k_skip = jax.random.split(key, 3)

    in_channels, skip_channels, out_channels = 8, 8, 8
    N, H, W = 2, 8, 8                      # x spatial (low-res)
    SH, SW = 16, 16                        # skip spatial (2x)

    x = jax.random.normal(k_x, (N, in_channels, H, W), jnp.float32)
    skip = jax.random.normal(k_skip, (N, skip_channels, SH, SW), jnp.float32)

    block = UpsampleBlockPallas(in_channels, skip_channels, out_channels,
                                k_params)

    out = jax.block_until_ready(block(x, skip))
    ref = jax.block_until_ready(_ref_forward(block, x, skip))
    # The kernel stores its result in bf16; compare against the bf16-rounded
    # reference (both paths use bf16 operands + f32 accumulation).
    ref_q = ref.astype(jnp.bfloat16).astype(jnp.float32)

    assert out.shape == (N, out_channels, SH, SW)
    assert out.dtype == jnp.float32
    max_err = float(jnp.max(jnp.abs(out - ref_q)))
    assert jnp.allclose(out, ref_q, atol=2e-2, rtol=2e-2), max_err

    print("KERNEL_OK")
</pallas_src>

<mosaic_0001>
module attributes {stable_mosaic.version = 11 : i64} {
  func.func @_upsample_block_kernel(%arg0: i32, %arg1: memref<1x8x8x8xbf16, #tpu.memory_space<vmem>>, %arg2: memref<1x16x16x8xbf16, #tpu.memory_space<vmem>>, %arg3: memref<144x8xbf16, #tpu.memory_space<vmem>>, %arg4: memref<1x8xf32, #tpu.memory_space<vmem>>, %arg5: memref<72x8xbf16, #tpu.memory_space<vmem>>, %arg6: memref<1x8xf32, #tpu.memory_space<vmem>>, %arg7: memref<1x16x16x8xbf16, #tpu.memory_space<vmem>>, %arg8: memref<18x18x16xbf16, #tpu.memory_space<vmem>>, %arg9: memref<18x18x8xbf16, #tpu.memory_space<vmem>>) attributes {dimension_semantics = [#tpu.dimension_semantics<parallel>], iteration_bounds = array<i64: 2>, scalar_prefetch = 0 : i64, scratch_operands = 2 : i64, tpu.core_type = #tpu.core_type<tc>, window_params = [{transform_indices = @transform_0, window_bounds = array<i64: 1, 8, 8, 8>}, {transform_indices = @transform_1, window_bounds = array<i64: 1, 16, 16, 8>}, {pipeline_mode = #tpu.pipeline_mode<synchronous>, transform_indices = @transform_2, window_bounds = array<i64: 144, 8>}, {pipeline_mode = #tpu.pipeline_mode<synchronous>, transform_indices = @transform_3, window_bounds = array<i64: 1, 8>}, {pipeline_mode = #tpu.pipeline_mode<synchronous>, transform_indices = @transform_4, window_bounds = array<i64: 72, 8>}, {pipeline_mode = #tpu.pipeline_mode<synchronous>, transform_indices = @transform_5, window_bounds = array<i64: 1, 8>}, {transform_indices = @transform_6, window_bounds = array<i64: 1, 16, 16, 8>}]} {
    %cst = arith.constant 0.000000e+00 : bf16
    %0 = vector.broadcast %cst : bf16 to vector<1x18x16xbf16>
    %c0 = arith.constant 0 : index
    %c0_0 = arith.constant 0 : index
    %c0_1 = arith.constant 0 : index
    %1 = vector.load %arg8[%c0, %c0_0, %c0_1] : memref<18x18x16xbf16, #tpu.memory_space<vmem>>, vector<1x18x16xbf16>
    tpu.vector_store %arg8[%c0, %c0_0, %c0_1], %0 {strides = array<i32>} : memref<18x18x16xbf16, #tpu.memory_space<vmem>>, vector<1x18x16xbf16>,
    %c17 = arith.constant 17 : index
    %c0_2 = arith.constant 0 : index
    %c0_3 = arith.constant 0 : index
    %2 = vector.load %arg8[%c17, %c0_2, %c0_3] : memref<18x18x16xbf16, #tpu.memory_space<vmem>>, vector<1x18x16xbf16>
    tpu.vector_store %arg8[%c17, %c0_2, %c0_3], %0 {strides = array<i32>} : memref<18x18x16xbf16, #tpu.memory_space<vmem>>, vector<1x18x16xbf16>,
    %cst_4 = arith.constant 0.000000e+00 : bf16
    %3 = vector.broadcast %cst_4 : bf16 to vector<18x1x16xbf16>
    %c0_5 = arith.constant 0 : index
    %c0_6 = arith.constant 0 : index
    %c0_7 = arith.constant 0 : index
    %4 = vector.load %arg8[%c0_5, %c0_6, %c0_7] : memref<18x18x16xbf16, #tpu.memory_space<vmem>>, vector<18x1x16xbf16>
    tpu.vector_store %arg8[%c0_5, %c0_6, %c0_7], %3 {strides = array<i32>} : memref<18x18x16xbf16, #tpu.memory_space<vmem>>, vector<18x1x16xbf16>,
    %c0_8 = arith.constant 0 : index
    %c17_9 = arith.constant 17 : index
    %c0_10 = arith.constant 0 : index
    %5 = vector.load %arg8[%c0_8, %c17_9, %c0_10] : memref<18x18x16xbf16, #tpu.memory_space<vmem>>, vector<18x1x16xbf16>
    tpu.vector_store %arg8[%c0_8, %c17_9, %c0_10], %3 {strides = array<i32>} : memref<18x18x16xbf16, #tpu.memory_space<vmem>>, vector<18x1x16xbf16>,
    %cst_11 = arith.constant 0.000000e+00 : bf16
    %6 = vector.broadcast %cst_11 : bf16 to vector<1x18x8xbf16>
    %c0_12 = arith.constant 0 : index
    %c0_13 = arith.constant 0 : index
    %c0_14 = arith.constant 0 : index
    %7 = vector.load %arg9[%c0_12, %c0_13, %c0_14] : memref<18x18x8xbf16, #tpu.memory_space<vmem>>, vector<1x18x8xbf16>
    tpu.vector_store %arg9[%c0_12, %c0_13, %c0_14], %6 {strides = array<i32>} : memref<18x18x8xbf16, #tpu.memory_space<vmem>>, vector<1x18x8xbf16>,
    %c17_15 = arith.constant 17 : index
    %c0_16 = arith.constant 0 : index
    %c0_17 = arith.constant 0 : index
    %8 = vector.load %arg9[%c17_15, %c0_16, %c0_17] : memref<18x18x8xbf16, #tpu.memory_space<vmem>>, vector<1x18x8xbf16>
    tpu.vector_store %arg9[%c17_15, %c0_16, %c0_17], %6 {strides = array<i32>} : memref<18x18x8xbf16, #tpu.memory_space<vmem>>, vector<1x18x8xbf16>,
    %cst_18 = arith.constant 0.000000e+00 : bf16
    %9 = vector.broadcast %cst_18 : bf16 to vector<18x1x8xbf16>
    %c0_19 = arith.constant 0 : index
    %c0_20 = arith.constant 0 : index
    %c0_21 = arith.constant 0 : index
    %10 = vector.load %arg9[%c0_19, %c0_20, %c0_21] : memref<18x18x8xbf16, #tpu.memory_space<vmem>>, vector<18x1x8xbf16>
    tpu.vector_store %arg9[%c0_19, %c0_20, %c0_21], %9 {strides = array<i32>} : memref<18x18x8xbf16, #tpu.memory_space<vmem>>, vector<18x1x8xbf16>,
    %c0_22 = arith.constant 0 : index
    %c17_23 = arith.constant 17 : index
    %c0_24 = arith.constant 0 : index
    %11 = vector.load %arg9[%c0_22, %c17_23, %c0_24] : memref<18x18x8xbf16, #tpu.memory_space<vmem>>, vector<18x1x8xbf16>
    tpu.vector_store %arg9[%c0_22, %c17_23, %c0_24], %9 {strides = array<i32>} : memref<18x18x8xbf16, #tpu.memory_space<vmem>>, vector<18x1x8xbf16>,
    %c0_25 = arith.constant 0 : index
    %c0_26 = arith.constant 0 : index
    %c0_27 = arith.constant 0 : index
    %c0_28 = arith.constant 0 : index
    %12 = vector.load %arg1[%c0_25, %c0_26, %c0_27, %c0_28] : memref<1x8x8x8xbf16, #tpu.memory_space<vmem>>, vector<1x8x8x8xbf16>
    %13 = vector.shape_cast %12 : vector<1x8x8x8xbf16> to vector<8x8x8xbf16>
    %14 = vector.shape_cast %13 : vector<8x8x8xbf16> to vector<8x8x1x8xbf16>
    %15 = vector.shape_cast %14 : vector<8x8x1x8xbf16> to vector<8x8x1x8xbf16>
    %16 = vector.broadcast %15 : vector<8x8x1x8xbf16> to vector<8x8x2x8xbf16>
    %17 = vector.shape_cast %16 : vector<8x8x2x8xbf16> to vector<8x16x8xbf16>
    %18 = vector.shape_cast %17 : vector<8x16x8xbf16> to vector<8x1x16x8xbf16>
    %19 = vector.shape_cast %18 : vector<8x1x16x8xbf16> to vector<8x1x16x8xbf16>
    %20 = vector.broadcast %19 : vector<8x1x16x8xbf16> to vector<8x2x16x8xbf16>
    %21 = vector.shape_cast %20 : vector<8x2x16x8xbf16> to vector<16x16x8xbf16>
    %c0_29 = arith.constant 0 : index
    %c0_30 = arith.constant 0 : index
    %c0_31 = arith.constant 0 : index
    %c0_32 = arith.constant 0 : index
    %22 = vector.load %arg2[%c0_29, %c0_30, %c0_31, %c0_32] : memref<1x16x16x8xbf16, #tpu.memory_space<vmem>>, vector<1x16x16x8xbf16>
    %23 = vector.shape_cast %22 : vector<1x16x16x8xbf16> to vector<16x16x8xbf16>
    %24 = tpu.concatenate %21, %23 in 2 : vector<16x16x8xbf16>, vector<16x16x8xbf16> -> vector<16x16x16xbf16>
    %c1 = arith.constant 1 : index
    %c1_33 = arith.constant 1 : index
    %c0_34 = arith.constant 0 : index
    %25 = vector.load %arg8[%c1, %c1_33, %c0_34] : memref<18x18x16xbf16, #tpu.memory_space<vmem>>, vector<16x16x16xbf16>
    tpu.vector_store %arg8[%c1, %c1_33, %c0_34], %24 {strides = array<i32>} : memref<18x18x16xbf16, #tpu.memory_space<vmem>>, vector<16x16x16xbf16>,
    %c0_35 = arith.constant 0 : index
    %c0_36 = arith.constant 0 : index
    %26 = vector.load %arg3[%c0_35, %c0_36] : memref<144x8xbf16, #tpu.memory_space<vmem>>, vector<144x8xbf16>
    %c0_37 = arith.constant 0 : index
    %c0_38 = arith.constant 0 : index
    %27 = vector.load %arg4[%c0_37, %c0_38] : memref<1x8xf32, #tpu.memory_space<vmem>>, vector<1x8xf32>
    %c0_39 = arith.constant 0 : index
    %c0_40 = arith.constant 0 : index
    %c0_41 = arith.constant 0 : index
    %28 = vector.load %arg8[%c0_39, %c0_40, %c0_41] : memref<18x18x16xbf16, #tpu.memory_space<vmem>>, vector<16x16x16xbf16>
    %29 = vector.shape_cast %28 : vector<16x16x16xbf16> to vector<256x16xbf16>
    %c0_42 = arith.constant 0 : index
    %c1_43 = arith.constant 1 : index
    %c0_44 = arith.constant 0 : index
    %30 = vector.load %arg8[%c0_42, %c1_43, %c0_44] : memref<18x18x16xbf16, #tpu.memory_space<vmem>>, vector<16x16x16xbf16>
    %31 = vector.shape_cast %30 : vector<16x16x16xbf16> to vector<256x16xbf16>
    %c0_45 = arith.constant 0 : index
    %c2 = arith.constant 2 : index
    %c0_46 = arith.constant 0 : index
    %32 = vector.load %arg8[%c0_45, %c2, %c0_46] : memref<18x18x16xbf16, #tpu.memory_space<vmem>>, vector<16x16x16xbf16>
    %33 = vector.shape_cast %32 : vector<16x16x16xbf16> to vector<256x16xbf16>
    %c1_47 = arith.constant 1 : index
    %c0_48 = arith.constant 0 : index
    %c0_49 = arith.constant 0 : index
    %34 = vector.load %arg8[%c1_47, %c0_48, %c0_49] : memref<18x18x16xbf16, #tpu.memory_space<vmem>>, vector<16x16x16xbf16>
    %35 = vector.shape_cast %34 : vector<16x16x16xbf16> to vector<256x16xbf16>
    %c1_50 = arith.constant 1 : index
    %c1_51 = arith.constant 1 : index
    %c0_52 = arith.constant 0 : index
    %36 = vector.load %arg8[%c1_50, %c1_51, %c0_52] : memref<18x18x16xbf16, #tpu.memory_space<vmem>>, vector<16x16x16xbf16>
    %37 = vector.shape_cast %36 : vector<16x16x16xbf16> to vector<256x16xbf16>
    %c1_53 = arith.constant 1 : index
    %c2_54 = arith.constant 2 : index
    %c0_55 = arith.constant 0 : index
    %38 = vector.load %arg8[%c1_53, %c2_54, %c0_55] : memref<18x18x16xbf16, #tpu.memory_space<vmem>>, vector<16x16x16xbf16>
    %39 = vector.shape_cast %38 : vector<16x16x16xbf16> to vector<256x16xbf16>
    %c2_56 = arith.constant 2 : index
    %c0_57 = arith.constant 0 : index
    %c0_58 = arith.constant 0 : index
    %40 = vector.load %arg8[%c2_56, %c0_57, %c0_58] : memref<18x18x16xbf16, #tpu.memory_space<vmem>>, vector<16x16x16xbf16>
    %41 = vector.shape_cast %40 : vector<16x16x16xbf16> to vector<256x16xbf16>
    %c2_59 = arith.constant 2 : index
    %c1_60 = arith.constant 1 : index
    %c0_61 = arith.constant 0 : index
    %42 = vector.load %arg8[%c2_59, %c1_60, %c0_61] : memref<18x18x16xbf16, #tpu.memory_space<vmem>>, vector<16x16x16xbf16>
    %43 = vector.shape_cast %42 : vector<16x16x16xbf16> to vector<256x16xbf16>
    %c2_62 = arith.constant 2 : index
    %c2_63 = arith.constant 2 : index
    %c0_64 = arith.constant 0 : index
    %44 = vector.load %arg8[%c2_62, %c2_63, %c0_64] : memref<18x18x16xbf16, #tpu.memory_space<vmem>>, vector<16x16x16xbf16>
    %45 = vector.shape_cast %44 : vector<16x16x16xbf16> to vector<256x16xbf16>
    %46 = tpu.concatenate %29, %31, %33, %35, %37, %39, %41, %43, %45 in 1 : vector<256x16xbf16>, vector<256x16xbf16>, vector<256x16xbf16>, vector<256x16xbf16>, vector<256x16xbf16>, vector<256x16xbf16>, vector<256x16xbf16>, vector<256x16xbf16>, vector<256x16xbf16> -> vector<256x144xbf16>
    %cst_65 = arith.constant dense<0.000000e+00> : vector<256x8xf32>
    %47 = tpu.matmul %46, %26, %cst_65 {dimension_numbers = #tpu.dot_dimension_numbers<[1], [0], [0], [1], [0, 0, 1, 1], [], []>} : vector<256x144xbf16>, vector<144x8xbf16>, vector<256x8xf32> -> vector<256x8xf32>
    %48 = vector.broadcast %27 : vector<1x8xf32> to vector<256x8xf32>
    %49 = arith.addf %47, %48 : vector<256x8xf32>
    %cst_66 = arith.constant 0.000000e+00 : f32
    %50 = vector.broadcast %cst_66 : f32 to vector<256x8xf32>
    %51 = arith.maximumf %49, %50 : vector<256x8xf32>
    %52 = vector.shape_cast %51 : vector<256x8xf32> to vector<16x16x8xf32>
    %53 = arith.truncf %52 : vector<16x16x8xf32> to vector<16x16x8xbf16>
    %c1_67 = arith.constant 1 : index
    %c1_68 = arith.constant 1 : index
    %c0_69 = arith.constant 0 : index
    %54 = vector.load %arg9[%c1_67, %c1_68, %c0_69] : memref<18x18x8xbf16, #tpu.memory_space<vmem>>, vector<16x16x8xbf16>
    tpu.vector_store %arg9[%c1_67, %c1_68, %c0_69], %53 {strides = array<i32>} : memref<18x18x8xbf16, #tpu.memory_space<vmem>>, vector<16x16x8xbf16>,
    %c0_70 = arith.constant 0 : index
    %c0_71 = arith.constant 0 : index
    %55 = vector.load %arg5[%c0_70, %c0_71] : memref<72x8xbf16, #tpu.memory_space<vmem>>, vector<72x8xbf16>
    %c0_72 = arith.constant 0 : index
    %c0_73 = arith.constant 0 : index
    %56 = vector.load %arg6[%c0_72, %c0_73] : memref<1x8xf32, #tpu.memory_space<vmem>>, vector<1x8xf32>
    %c0_74 = arith.constant 0 : index
    %c0_75 = arith.constant 0 : index
    %c0_76 = arith.constant 0 : index
    %57 = vector.load %arg9[%c0_74, %c0_75, %c0_76] : memref<18x18x8xbf16, #tpu.memory_space<vmem>>, vector<16x16x8xbf16>
    %58 = vector.shape_cast %57 : vector<16x16x8xbf16> to vector<256x8xbf16>
    %c0_77 = arith.constant 0 : index
    %c1_78 = arith.constant 1 : index
    %c0_79 = arith.constant 0 : index
    %59 = vector.load %arg9[%c0_77, %c1_78, %c0_79] : memref<18x18x8xbf16, #tpu.memory_space<vmem>>, vector<16x16x8xbf16>
    %60 = vector.shape_cast %59 : vector<16x16x8xbf16> to vector<256x8xbf16>
    %c0_80 = arith.constant 0 : index
    %c2_81 = arith.constant 2 : index
    %c0_82 = arith.constant 0 : index
    %61 = vector.load %arg9[%c0_80, %c2_81, %c0_82] : memref<18x18x8xbf16, #tpu.memory_space<vmem>>, vector<16x16x8xbf16>
    %62 = vector.shape_cast %61 : vector<16x16x8xbf16> to vector<256x8xbf16>
    %c1_83 = arith.constant 1 : index
    %c0_84 = arith.constant 0 : index
    %c0_85 = arith.constant 0 : index
    %63 = vector.load %arg9[%c1_83, %c0_84, %c0_85] : memref<18x18x8xbf16, #tpu.memory_space<vmem>>, vector<16x16x8xbf16>
    %64 = vector.shape_cast %63 : vector<16x16x8xbf16> to vector<256x8xbf16>
    %c1_86 = arith.constant 1 : index
    %c1_87 = arith.constant 1 : index
    %c0_88 = arith.constant 0 : index
    %65 = vector.load %arg9[%c1_86, %c1_87, %c0_88] : memref<18x18x8xbf16, #tpu.memory_space<vmem>>, vector<16x16x8xbf16>
    %66 = vector.shape_cast %65 : vector<16x16x8xbf16> to vector<256x8xbf16>
    %c1_89 = arith.constant 1 : index
    %c2_90 = arith.constant 2 : index
    %c0_91 = arith.constant 0 : index
    %67 = vector.load %arg9[%c1_89, %c2_90, %c0_91] : memref<18x18x8xbf16, #tpu.memory_space<vmem>>, vector<16x16x8xbf16>
    %68 = vector.shape_cast %67 : vector<16x16x8xbf16> to vector<256x8xbf16>
    %c2_92 = arith.constant 2 : index
    %c0_93 = arith.constant 0 : index
    %c0_94 = arith.constant 0 : index
    %69 = vector.load %arg9[%c2_92, %c0_93, %c0_94] : memref<18x18x8xbf16, #tpu.memory_space<vmem>>, vector<16x16x8xbf16>
    %70 = vector.shape_cast %69 : vector<16x16x8xbf16> to vector<256x8xbf16>
    %c2_95 = arith.constant 2 : index
    %c1_96 = arith.constant 1 : index
    %c0_97 = arith.constant 0 : index
    %71 = vector.load %arg9[%c2_95, %c1_96, %c0_97] : memref<18x18x8xbf16, #tpu.memory_space<vmem>>, vector<16x16x8xbf16>
    %72 = vector.shape_cast %71 : vector<16x16x8xbf16> to vector<256x8xbf16>
    %c2_98 = arith.constant 2 : index
    %c2_99 = arith.constant 2 : index
    %c0_100 = arith.constant 0 : index
    %73 = vector.load %arg9[%c2_98, %c2_99, %c0_100] : memref<18x18x8xbf16, #tpu.memory_space<vmem>>, vector<16x16x8xbf16>
    %74 = vector.shape_cast %73 : vector<16x16x8xbf16> to vector<256x8xbf16>
    %75 = tpu.concatenate %58, %60, %62, %64, %66, %68, %70, %72, %74 in 1 : vector<256x8xbf16>, vector<256x8xbf16>, vector<256x8xbf16>, vector<256x8xbf16>, vector<256x8xbf16>, vector<256x8xbf16>, vector<256x8xbf16>, vector<256x8xbf16>, vector<256x8xbf16> -> vector<256x72xbf16>
    %cst_101 = arith.constant dense<0.000000e+00> : vector<256x8xf32>
    %76 = tpu.matmul %75, %55, %cst_101 {dimension_numbers = #tpu.dot_dimension_numbers<[1], [0], [0], [1], [0, 0, 1, 1], [], []>} : vector<256x72xbf16>, vector<72x8xbf16>, vector<256x8xf32> -> vector<256x8xf32>
    %77 = vector.broadcast %56 : vector<1x8xf32> to vector<256x8xf32>
    %78 = arith.addf %76, %77 : vector<256x8xf32>
    %cst_102 = arith.constant 0.000000e+00 : f32
    %79 = vector.broadcast %cst_102 : f32 to vector<256x8xf32>
    %80 = arith.maximumf %78, %79 : vector<256x8xf32>
    %81 = vector.shape_cast %80 : vector<256x8xf32> to vector<1x16x16x8xf32>
    %82 = arith.truncf %81 : vector<1x16x16x8xf32> to vector<1x16x16x8xbf16>
    %c0_103 = arith.constant 0 : index
    %c0_104 = arith.constant 0 : index
    %c0_105 = arith.constant 0 : index
    %c0_106 = arith.constant 0 : index
    %83 = vector.load %arg7[%c0_103, %c0_104, %c0_105, %c0_106] : memref<1x16x16x8xbf16, #tpu.memory_space<vmem>>, vector<1x16x16x8xbf16>
    tpu.vector_store %arg7[%c0_103, %c0_104, %c0_105, %c0_106], %82 {strides = array<i32>} : memref<1x16x16x8xbf16, #tpu.memory_space<vmem>>, vector<1x16x16x8xbf16>,
    return
  }
  func.func @transform_0(%arg0: i32) -> (i32, i32, i32, i32) {
    %c0_i32 = arith.constant 0 : i32
    %c0_i32_0 = arith.constant 0 : i32
    %c0_i32_1 = arith.constant 0 : i32
    %c0_i32_2 = arith.constant 0 : i32
    return %arg0, %c0_i32, %c0_i32_0, %c0_i32_1 : i32, i32, i32, i32
  }
  func.func @transform_1(%arg0: i32) -> (i32, i32, i32, i32) {
    %c0_i32 = arith.constant 0 : i32
    %c0_i32_0 = arith.constant 0 : i32
    %c0_i32_1 = arith.constant 0 : i32
    %c0_i32_2 = arith.constant 0 : i32
    return %arg0, %c0_i32, %c0_i32_0, %c0_i32_1 : i32, i32, i32, i32
  }
  func.func @transform_2(%arg0: i32) -> (i32, i32) {
    %c0_i32 = arith.constant 0 : i32
    %c0_i32_0 = arith.constant 0 : i32
    %c0_i32_1 = arith.constant 0 : i32
    return %c0_i32, %c0_i32_0 : i32, i32
  }
  func.func @transform_3(%arg0: i32) -> (i32, i32) {
    %c0_i32 = arith.constant 0 : i32
    %c0_i32_0 = arith.constant 0 : i32
    %c0_i32_1 = arith.constant 0 : i32
    return %c0_i32, %c0_i32_0 : i32, i32
  }
  func.func @transform_4(%arg0: i32) -> (i32, i32) {
    %c0_i32 = arith.constant 0 : i32
    %c0_i32_0 = arith.constant 0 : i32
    %c0_i32_1 = arith.constant 0 : i32
    return %c0_i32, %c0_i32_0 : i32, i32
  }
  func.func @transform_5(%arg0: i32) -> (i32, i32) {
    %c0_i32 = arith.constant 0 : i32
    %c0_i32_0 = arith.constant 0 : i32
    %c0_i32_1 = arith.constant 0 : i32
    return %c0_i32, %c0_i32_0 : i32, i32
  }
  func.func @transform_6(%arg0: i32) -> (i32, i32, i32, i32) {
    %c0_i32 = arith.constant 0 : i32
    %c0_i32_0 = arith.constant 0 : i32
    %c0_i32_1 = arith.constant 0 : i32
    %c0_i32_2 = arith.constant 0 : i32
    return %arg0, %c0_i32, %c0_i32_0, %c0_i32_1 : i32, i32, i32, i32
  }
}

</mosaic_0001>

<llo_original>
// kernel: a_call__.1
$region0: #{a_call__.1}
  #allocation0 [shape = 'u32[]', space=smem, size = 0x4, offset = 0x4, fixed_abs, tag = 'smem constant byte address 0x4 - core index']
  #allocation1 [shape = 'u32[72,128]{1,0:T(1,128)}', space=vmem, size = 0x9000, scoped, tag = 'internal scratch']
  #allocation2 [shape = 'bf16[18,18,16]{2,1,0:T(8,128)(2,1)}', space=vmem, size = 0x1b000, scoped, tag = 'scratch operand']
  #allocation3 [shape = 'bf16[18,18,8]{2,1,0:T(8,128)(2,1)}', space=vmem, size = 0x1b000, scoped, tag = 'scratch operand']
  %s0 = inlined_call_operand.vmem [shape: bf16[2,8,8,8], index: 0, kind: input, shape index: {}]
  %s1 = inlined_call_operand.vmem [shape: bf16[2,16,16,8], index: 1, kind: input, shape index: {}]
  %s2 = inlined_call_operand.vmem [shape: bf16[144,8], index: 2, kind: input, shape index: {}]
  %s3 = inlined_call_operand.vmem [shape: f32[1,8], index: 3, kind: input, shape index: {}]
  %s4 = inlined_call_operand.vmem [shape: bf16[72,8], index: 4, kind: input, shape index: {}]
  %s5 = inlined_call_operand.vmem [shape: f32[1,8], index: 5, kind: input, shape index: {}]
  %s6 = inlined_call_operand.vmem [shape: bf16[2,16,16,8], index: 6, kind: output, shape index: {}]
  %s7 = sld [smem:[#allocation0]]
  $region57: #{a_call__.1} parent=0
    _
  %s9 = ssub.s32 1, %s7
  %s10 = scalar_select 0, %s9, %s7
  loop: start=0, step=1, limit=4
  $region2: #{a_call__.1} parent=0 // loop_pre_header
    _
  $region3: #{a_call__.1} parent=0 // loop_header
    %s12 = sphi 0, %s16
    %p13 = scmp.ge.s32.totalorder %s12, 4
    %s22 = sphi 0, %s24
    %s25 = sphi 0, %s22
    %s26 = sphi 0, %s25
    %s42 = sphi 0, %s26
    %s48 = sphi 0, %s50
    %s51 = sphi 0, %s48
    %s52 = sphi 0, %s51
    %s68 = sphi 0, %s52
    %s72 = sphi 0, %s72
    %s74 = sphi 0, %s72
    %s75 = sphi 0, %s74
    %s89 = sphi 0, %s75
    %s93 = sphi 0, %s93
    %s95 = sphi 0, %s93
    %s96 = sphi 0, %s95
    %s110 = sphi 0, %s96
    %s114 = sphi 0, %s114
    %s116 = sphi 0, %s114
    %s117 = sphi 0, %s116
    %s131 = sphi 0, %s117
    %s135 = sphi 0, %s135
    %s137 = sphi 0, %s135
    %s138 = sphi 0, %s137
    %s152 = sphi 0, %s138
    %s158 = sphi 0, %s160
    %s161 = sphi 0, %s158
    %s162 = sphi 0, %s161
    %s178 = sphi 0, %s162
  $region4: #{a_call__.1} parent=0 // loop_header_branch
    %15 = sbr.rel (%p13) target = $region8
  $region5: #{a_call__.1} parent=0 // loop_body
    %s17 = ssub.s32 %s12, 1
    %s18 = ssub.s32 %s12, 2
    %s19 = sadd.s32 %s12, 1
    %s20 = ssub.s32 %s12, %s19
    %p21 = scmp.eq.s32.totalorder %s20, 0
    %s23 = sadd.s32 %s22, 1
    %s24 = scalar_select %p21, %s22, %s23
    %p27 = pneg %p21
    %p28 = scmp.eq.s32.totalorder %s12, 1
    %p29 = por %p27, %p28
    %p30 = scmp.ne.s32.totalorder %s22, %s25
    %p31 = scmp.eq.s32.totalorder %s12, 0
    %p32 = por %p30, %p31
    %p33 = scmp.ne.s32.totalorder %s22, %s25
    %p34 = scmp.eq.s32.totalorder %s17, 1
    %p35 = por %p33, %p34
    %p36 = scmp.ne.s32.totalorder %s25, %s26
    %p37 = scmp.eq.s32.totalorder %s17, 0
    %p38 = por %p36, %p37
    %p39 = scmp.ne.s32.totalorder %s25, %s26
    %p40 = scmp.eq.s32.totalorder %s18, 1
    %p41 = por %p39, %p40
    %p43 = scmp.ne.s32.totalorder %s26, %s42
    %p44 = scmp.eq.s32.totalorder %s18, 0
    %p45 = por %p43, %p44
    %s46 = ssub.s32 %s12, %s19
    %p47 = scmp.eq.s32.totalorder %s46, 0
    %s49 = sadd.s32 %s48, 1
    %s50 = scalar_select %p47, %s48, %s49
    %p53 = pneg %p47
    %p54 = scmp.eq.s32.totalorder %s12, 1
    %p55 = por %p53, %p54
    %p56 = scmp.ne.s32.totalorder %s48, %s51
    %p57 = scmp.eq.s32.totalorder %s12, 0
    %p58 = por %p56, %p57
    %p59 = scmp.ne.s32.totalorder %s48, %s51
    %p60 = scmp.eq.s32.totalorder %s17, 1
    %p61 = por %p59, %p60
    %p62 = scmp.ne.s32.totalorder %s51, %s52
    %p63 = scmp.eq.s32.totalorder %s17, 0
    %p64 = por %p62, %p63
    %p65 = scmp.ne.s32.totalorder %s51, %s52
    %p66 = scmp.eq.s32.totalorder %s18, 1
    %p67 = por %p65, %p66
    %p69 = scmp.ne.s32.totalorder %s52, %s68
    %p70 = scmp.eq.s32.totalorder %s18, 0
    %p71 = por %p69, %p70
    %s73 = sadd.s32 %s72, 1
    %p76 = scmp.eq.s32.totalorder %s12, 1
    %p77 = scmp.ne.s32.totalorder %s72, %s74
    %p78 = scmp.eq.s32.totalorder %s12, 0
    %p79 = por %p77, %p78
    %p80 = scmp.ne.s32.totalorder %s72, %s74
    %p81 = scmp.eq.s32.totalorder %s17, 1
    %p82 = por %p80, %p81
    %p83 = scmp.ne.s32.totalorder %s74, %s75
    %p84 = scmp.eq.s32.totalorder %s17, 0
    %p85 = por %p83, %p84
    %p86 = scmp.ne.s32.totalorder %s74, %s75
    %p87 = scmp.eq.s32.totalorder %s18, 1
    %p88 = por %p86, %p87
    %p90 = scmp.ne.s32.totalorder %s75, %s89
    %p91 = scmp.eq.s32.totalorder %s18, 0
    %p92 = por %p90, %p91
    %s94 = sadd.s32 %s93, 1
    %p97 = scmp.eq.s32.totalorder %s12, 1
    %p98 = scmp.ne.s32.totalorder %s93, %s95
    %p99 = scmp.eq.s32.totalorder %s12, 0
    %p100 = por %p98, %p99
    %p101 = scmp.ne.s32.totalorder %s93, %s95
    %p102 = scmp.eq.s32.totalorder %s17, 1
    %p103 = por %p101, %p102
    %p104 = scmp.ne.s32.totalorder %s95, %s96
    %p105 = scmp.eq.s32.totalorder %s17, 0
    %p106 = por %p104, %p105
    %p107 = scmp.ne.s32.totalorder %s95, %s96
    %p108 = scmp.eq.s32.totalorder %s18, 1
    %p109 = por %p107, %p108
    %p111 = scmp.ne.s32.totalorder %s96, %s110
    %p112 = scmp.eq.s32.totalorder %s18, 0
    %p113 = por %p111, %p112
    %s115 = sadd.s32 %s114, 1
    %p118 = scmp.eq.s32.totalorder %s12, 1
    %p119 = scmp.ne.s32.totalorder %s114, %s116
    %p120 = scmp.eq.s32.totalorder %s12, 0
    %p121 = por %p119, %p120
    %p122 = scmp.ne.s32.totalorder %s114, %s116
    %p123 = scmp.eq.s32.totalorder %s17, 1
    %p124 = por %p122, %p123
    %p125 = scmp.ne.s32.totalorder %s116, %s117
    %p126 = scmp.eq.s32.totalorder %s17, 0
    %p127 = por %p125, %p126
    %p128 = scmp.ne.s32.totalorder %s116, %s117
    %p129 = scmp.eq.s32.totalorder %s18, 1
    %p130 = por %p128, %p129
    %p132 = scmp.ne.s32.totalorder %s117, %s131
    %p133 = scmp.eq.s32.totalorder %s18, 0
    %p134 = por %p132, %p133
    %s136 = sadd.s32 %s135, 1
    %p139 = scmp.eq.s32.totalorder %s12, 1
    %p140 = scmp.ne.s32.totalorder %s135, %s137
    %p141 = scmp.eq.s32.totalorder %s12, 0
    %p142 = por %p140, %p141
    %p143 = scmp.ne.s32.totalorder %s135, %s137
    %p144 = scmp.eq.s32.totalorder %s17, 1
    %p145 = por %p143, %p144
    %p146 = scmp.ne.s32.totalorder %s137, %s138
    %p147 = scmp.eq.s32.totalorder %s17, 0
    %p148 = por %p146, %p147
    %p149 = scmp.ne.s32.totalorder %s137, %s138
    %p150 = scmp.eq.s32.totalorder %s18, 1
    %p151 = por %p149, %p150
    %p153 = scmp.ne.s32.totalorder %s138, %s152
    %p154 = scmp.eq.s32.totalorder %s18, 0
    %p155 = por %p153, %p154
    %s156 = ssub.s32 %s12, %s19
    %p157 = scmp.eq.s32.totalorder %s156, 0
    %s159 = sadd.s32 %s158, 1
    %s160 = scalar_select %p157, %s158, %s159
    %p163 = pneg %p157
    %p164 = scmp.eq.s32.totalorder %s12, 1
    %p165 = por %p163, %p164
    %p166 = scmp.ne.s32.totalorder %s158, %s161
    %p167 = scmp.eq.s32.totalorder %s12, 0
    %p168 = por %p166, %p167
    %p169 = scmp.ne.s32.totalorder %s158, %s161
    %p170 = scmp.eq.s32.totalorder %s17, 1
    %p171 = por %p169, %p170
    %p172 = scmp.ne.s32.totalorder %s161, %s162
    %p173 = scmp.eq.s32.totalorder %s17, 0
    %p174 = por %p172, %p173
    %p175 = scmp.ne.s32.totalorder %s161, %s162
    %p176 = scmp.eq.s32.totalorder %s18, 1
    %p177 = por %p175, %p176
    %p179 = scmp.ne.s32.totalorder %s162, %s178
    %p180 = scmp.eq.s32.totalorder %s18, 0
    %p181 = por %p179, %p180
    %p182 = scmp.le.s32.totalorder 1, %s12
    %p183 = scmp.lt.s32.totalorder %s12, 3
    %p184 = pnand %p182, %p183
    %p185 = pneg %p184
    // Predicated region
    $region9: #{a_call__.1} parent=5 // pred_check
      _
    $region10: #{a_call__.1} parent=5 // pred_check_branch
      %187 = sbr.rel (%p184) target = $region12
    $region11: #{a_call__.1} parent=5 // pred_region
      %s188 = ssub.s32 %s12, 1
      // Predicated region
      $region13: #{a_call__.1} parent=11 // pred_check
        %p189 = pneg %p85
      $region14: #{a_call__.1} parent=11 // pred_check_branch
        %191 = sbr.rel (%p189) target = $region16
      $region15: #{a_call__.1} parent=11 // pred_region
        _
      $region16: #{a_call__.1} parent=11 // pred_fallthru
        _
      // Predicated region
      $region17: #{a_call__.1} parent=11 // pred_check
        %p192 = pneg %p106
      $region18: #{a_call__.1} parent=11 // pred_check_branch
        %194 = sbr.rel (%p192) target = $region20
      $region19: #{a_call__.1} parent=11 // pred_region
        _
      $region20: #{a_call__.1} parent=11 // pred_fallthru
        _
      // Predicated region
      $region21: #{a_call__.1} parent=11 // pred_check
        %p195 = pneg %p127
      $region22: #{a_call__.1} parent=11 // pred_check_branch
        %197 = sbr.rel (%p195) target = $region24
      $region23: #{a_call__.1} parent=11 // pred_region
        _
      $region24: #{a_call__.1} parent=11 // pred_fallthru
        _
      // Predicated region
      $region25: #{a_call__.1} parent=11 // pred_check
        %p198 = pneg %p148
      $region26: #{a_call__.1} parent=11 // pred_check_branch
        %200 = sbr.rel (%p198) target = $region28
      $region27: #{a_call__.1} parent=11 // pred_region
        _
      $region28: #{a_call__.1} parent=11 // pred_fallthru
        _
    $region12: #{a_call__.1} parent=5 // pred_fallthru
      _
    %p201 = scmp.lt.s32.totalorder %s12, 2
    // Predicated region
    $region29: #{a_call__.1} parent=5 // pred_check
      %p202 = pneg %p201
    $region30: #{a_call__.1} parent=5 // pred_check_branch
      %204 = sbr.rel (%p202) target = $region32
    $region31: #{a_call__.1} parent=5 // pred_region
      // Predicated region
      $region33: #{a_call__.1} parent=31 // pred_check
        %p205 = pneg %p32
      $region34: #{a_call__.1} parent=31 // pred_check_branch
        %207 = sbr.rel (%p205) target = $region36
      $region35: #{a_call__.1} parent=31 // pred_region
        %p208 = scmp.lt.s32.totalorder %s12, 1
        %s209 = scalar_select %p208, %s12, 1
        %s210 = smul.addr %s209, 8
        %s211 = smul.addr %s210, 4
        %s212 = scalar_lea.vmem %s0, %s211
      $region36: #{a_call__.1} parent=31 // pred_fallthru
        _
      // Predicated region
      $region37: #{a_call__.1} parent=31 // pred_check
        %p213 = pneg %p58
      $region38: #{a_call__.1} parent=31 // pred_check_branch
        %215 = sbr.rel (%p213) target = $region40
      $region39: #{a_call__.1} parent=31 // pred_region
        %p216 = scmp.lt.s32.totalorder %s12, 1
        %s217 = scalar_select %p216, %s12, 1
        %s218 = smul.addr %s217, 32
        %s219 = smul.addr %s218, 4
        %s220 = scalar_lea.vmem %s1, %s219
      $region40: #{a_call__.1} parent=31 // pred_fallthru
        _
    $region32: #{a_call__.1} parent=5 // pred_fallthru
      _
    %p221 = scmp.le.s32.totalorder 1, %s12
    %p222 = scmp.lt.s32.totalorder %s12, 3
    %p223 = pnand %p221, %p222
    %p224 = pneg %p223
    // Predicated region
    $region41: #{a_call__.1} parent=5 // pred_check
      _
    $region42: #{a_call__.1} parent=5 // pred_check_branch
      %226 = sbr.rel (%p223) target = $region44
    $region43: #{a_call__.1} parent=5 // pred_region
      %s227 = ssub.s32 %s12, 1
      %p228 = scmp.lt.s32.totalorder %s17, 1
      %s229 = scalar_select %p228, %s17, 1
      %s230 = smul.addr %s229, 8
      %s231 = smul.addr %s230, 4
      %s232 = scalar_lea.vmem %s0, %s231
      %p233 = pneg %p38
      %p234 = pneg %p35
      %p235 = scmp.lt.s32.totalorder %s17, 1
      %s236 = scalar_select %p235, %s17, 1
      %s237 = smul.addr %s236, 32
      %s238 = smul.addr %s237, 4
      %s239 = scalar_lea.vmem %s1, %s238
      %p240 = pneg %p64
      %p241 = pneg %p61
      %p242 = pneg %p85
      %p243 = pneg %p82
      %p244 = pneg %p106
      %p245 = pneg %p103
      %p246 = pneg %p127
      %p247 = pneg %p124
      %p248 = pneg %p148
      %p249 = pneg %p145
      %p250 = pneg %p174
      %p251 = pneg %p171
      %p252 = scmp.lt.s32.totalorder %s17, 1
      %s253 = scalar_select %p252, %s17, 1
      %s254 = smul.addr %s253, 32
      %s255 = smul.addr %s254, 4
      %s256 = scalar_lea.vmem %s6, %s255
      %p257 = scmp.lt.s32.totalorder %s17, 1
      %s258 = scalar_select %p257, %s17, 1
      %s259 = smul.addr %s258, 8
      %s260 = smul.addr %s259, 4
      %s261 = scalar_lea.vmem %s0, %s260
      %p262 = scmp.lt.s32.totalorder %s17, 1
      %s263 = scalar_select %p262, %s17, 1
      %s264 = smul.addr %s263, 32
      %s265 = smul.addr %s264, 4
      %s266 = scalar_lea.vmem %s1, %s265
      %p267 = scmp.lt.s32.totalorder %s17, 1
      %s268 = scalar_select %p267, %s17, 1
      %s269 = smul.addr %s268, 32
      %s270 = smul.addr %s269, 4
      %s271 = scalar_lea.vmem %s6, %s270
      %vm273 = vcmask 125952
      %274 = vst.msk [vmem:[#allocation2] sm:$0xf] %vm273, 0
      %275 = vst.msk [vmem:[#allocation2 + $0x4] sm:$0xf] %vm273, 0
      %vm276 = vcmask 122880
      %277 = vst.msk [vmem:[#allocation2 + $0x8] sm:$0x1] %vm276, 0
      %s278 = scalar_lea.vmem [#allocation2], 204
      %279 = vst.msk [vmem:[%s278] sm:$0xf] %vm273, 0
      %280 = vst.msk [vmem:[%s278 + $0x4] sm:$0xf] %vm273, 0
      %281 = vst.msk [vmem:[%s278 + $0x8] sm:$0x1] %vm276, 0
      %vm282 = vcmask 122880
      %vm283 = vsmask.f32 256
      %vm284 = vmand %vm282, %vm283
      %v285 = vld [vmem:[#allocation2] sm:$0x1]
      %v286 = vsel %vm284, 0, %v285
      %287 = vst [vmem:[#allocation2] sm:$0x1] %v286
      %v288 = vld [vmem:[#allocation2 + $0xc] sm:$0x1]
      %v289 = vsel %vm284, 0, %v288
      %290 = vst [vmem:[#allocation2 + $0xc] sm:$0x1] %v289
      %v291 = vld [vmem:[#allocation2 + $0x18] sm:$0x1]
      %v292 = vsel %vm284, 0, %v291
      %293 = vst [vmem:[#allocation2 + $0x18] sm:$0x1] %v292
      %v294 = vld [vmem:[#allocation2 + $0x24] sm:$0x1]
      %v295 = vsel %vm284, 0, %v294
      %296 = vst [vmem:[#allocation2 + $0x24] sm:$0x1] %v295
      %v297 = vld [vmem:[#allocation2 + $0x30] sm:$0x1]
      %v298 = vsel %vm284, 0, %v297
      %299 = vst [vmem:[#allocation2 + $0x30] sm:$0x1] %v298
      %v300 = vld [vmem:[#allocation2 + $0x3c] sm:$0x1]
      %v301 = vsel %vm284, 0, %v300
      %302 = vst [vmem:[#allocation2 + $0x3c] sm:$0x1] %v301
      %v303 = vld [vmem:[#allocation2 + $0x48] sm:$0x1]
      %v304 = vsel %vm284, 0, %v303
      %305 = vst [vmem:[#allocation2 + $0x48] sm:$0x1] %v304
      %v306 = vld [vmem:[#allocation2 + $0x54] sm:$0x1]
      %v307 = vsel %vm284, 0, %v306
      %308 = vst [vmem:[#allocation2 + $0x54] sm:$0x1] %v307
      %v309 = vld [vmem:[#allocation2 + $0x60] sm:$0x1]
      %v310 = vsel %vm284, 0, %v309
      %311 = vst [vmem:[#allocation2 + $0x60] sm:$0x1] %v310
      %v312 = vld [vmem:[#allocation2 + $0x6c] sm:$0x1]
      %v313 = vsel %vm284, 0, %v312
      %314 = vst [vmem:[#allocation2 + $0x6c] sm:$0x1] %v313
      %v315 = vld [vmem:[#allocation2 + $0x78] sm:$0x1]
      %v316 = vsel %vm284, 0, %v315
      %317 = vst [vmem:[#allocation2 + $0x78] sm:$0x1] %v316
      %v318 = vld [vmem:[#allocation2 + $0x84] sm:$0x1]
      %v319 = vsel %vm284, 0, %v318
      %320 = vst [vmem:[#allocation2 + $0x84] sm:$0x1] %v319
      %v321 = vld [vmem:[#allocation2 + $0x90] sm:$0x1]
      %v322 = vsel %vm284, 0, %v321
      %323 = vst [vmem:[#allocation2 + $0x90] sm:$0x1] %v322
      %v324 = vld [vmem:[#allocation2 + $0x9c] sm:$0x1]
      %v325 = vsel %vm284, 0, %v324
      %326 = vst [vmem:[#allocation2 + $0x9c] sm:$0x1] %v325
      %v327 = vld [vmem:[#allocation2 + $0xa8] sm:$0x1]
      %v328 = vsel %vm284, 0, %v327
      %329 = vst [vmem:[#allocation2 + $0xa8] sm:$0x1] %v328
      %v330 = vld [vmem:[#allocation2 + $0xb4] sm:$0x1]
      %v331 = vsel %vm284, 0, %v330
      %332 = vst [vmem:[#allocation2 + $0xb4] sm:$0x1] %v331
      %v333 = vld [vmem:[#allocation2 + $0xc0] sm:$0x1]
      %v334 = vsel %vm284, 0, %v333
      %335 = vst [vmem:[#allocation2 + $0xc0] sm:$0x1] %v334
      %v336 = vld [vmem:[#allocation2 + $0xcc] sm:$0x1]
      %v337 = vsel %vm284, 0, %v336
      %338 = vst [vmem:[#allocation2 + $0xcc] sm:$0x1] %v337
      %vm339 = vsmask.f32 7938
      %vm340 = vmand %vm282, %vm339
      %v341 = vld [vmem:[#allocation2 + $0x8] sm:$0x1]
      %v342 = vsel %vm340, 0, %v341
      %343 = vst [vmem:[#allocation2 + $0x8] sm:$0x1] %v342
      %v344 = vld [vmem:[#allocation2 + $0x14] sm:$0x1]
      %v345 = vsel %vm340, 0, %v344
      %346 = vst [vmem:[#allocation2 + $0x14] sm:$0x1] %v345
      %v347 = vld [vmem:[#allocation2 + $0x20] sm:$0x1]
      %v348 = vsel %vm340, 0, %v347
      %349 = vst [vmem:[#allocation2 + $0x20] sm:$0x1] %v348
      %v350 = vld [vmem:[#allocation2 + $0x2c] sm:$0x1]
      %v351 = vsel %vm340, 0, %v350
      %352 = vst [vmem:[#allocation2 + $0x2c] sm:$0x1] %v351
      %v353 = vld [vmem:[#allocation2 + $0x38] sm:$0x1]
      %v354 = vsel %vm340, 0, %v353
      %355 = vst [vmem:[#allocation2 + $0x38] sm:$0x1] %v354
      %v356 = vld [vmem:[#allocation2 + $0x44] sm:$0x1]
      %v357 = vsel %vm340, 0, %v356
      %358 = vst [vmem:[#allocation2 + $0x44] sm:$0x1] %v357
      %v359 = vld [vmem:[#allocation2 + $0x50] sm:$0x1]
      %v360 = vsel %vm340, 0, %v359
      %361 = vst [vmem:[#allocation2 + $0x50] sm:$0x1] %v360
      %v362 = vld [vmem:[#allocation2 + $0x5c] sm:$0x1]
      %v363 = vsel %vm340, 0, %v362
      %364 = vst [vmem:[#allocation2 + $0x5c] sm:$0x1] %v363
      %v365 = vld [vmem:[#allocation2 + $0x68] sm:$0x1]
      %v366 = vsel %vm340, 0, %v365
      %367 = vst [vmem:[#allocation2 + $0x68] sm:$0x1] %v366
      %v368 = vld [vmem:[#allocation2 + $0x74] sm:$0x1]
      %v369 = vsel %vm340, 0, %v368
      %370 = vst [vmem:[#allocation2 + $0x74] sm:$0x1] %v369
      %v371 = vld [vmem:[#allocation2 + $0x80] sm:$0x1]
      %v372 = vsel %vm340, 0, %v371
      %373 = vst [vmem:[#allocation2 + $0x80] sm:$0x1] %v372
      %v374 = vld [vmem:[#allocation2 + $0x8c] sm:$0x1]
      %v375 = vsel %vm340, 0, %v374
      %376 = vst [vmem:[#allocation2 + $0x8c] sm:$0x1] %v375
      %v377 = vld [vmem:[#allocation2 + $0x98] sm:$0x1]
      %v378 = vsel %vm340, 0, %v377
      %379 = vst [vmem:[#allocation2 + $0x98] sm:$0x1] %v378
      %v380 = vld [vmem:[#allocation2 + $0xa4] sm:$0x1]
      %v381 = vsel %vm340, 0, %v380
      %382 = vst [vmem:[#allocation2 + $0xa4] sm:$0x1] %v381
      %v383 = vld [vmem:[#allocation2 + $0xb0] sm:$0x1]
      %v384 = vsel %vm340, 0, %v383
      %385 = vst [vmem:[#allocation2 + $0xb0] sm:$0x1] %v384
      %v386 = vld [vmem:[#allocation2 + $0xbc] sm:$0x1]
      %v387 = vsel %vm340, 0, %v386
      %388 = vst [vmem:[#allocation2 + $0xbc] sm:$0x1] %v387
      %v389 = vld [vmem:[#allocation2 + $0xc8] sm:$0x1]
      %v390 = vsel %vm340, 0, %v389
      %391 = vst [vmem:[#allocation2 + $0xc8] sm:$0x1] %v390
      %v392 = vld [vmem:[#allocation2 + $0xd4] sm:$0x1]
      %v393 = vsel %vm340, 0, %v392
      %394 = vst [vmem:[#allocation2 + $0xd4] sm:$0x1] %v393
      %vm395 = vcmask 60416
      %396 = vst.msk [vmem:[#allocation3] sm:$0xf] %vm395, 0
      %397 = vst.msk [vmem:[#allocation3 + $0x4] sm:$0xf] %vm395, 0
      %vm398 = vcmask 57344
      %399 = vst.msk [vmem:[#allocation3 + $0x8] sm:$0x1] %vm398, 0
      %s400 = scalar_lea.vmem [#allocation3], 204
      %401 = vst.msk [vmem:[%s400] sm:$0xf] %vm395, 0
      %402 = vst.msk [vmem:[%s400 + $0x4] sm:$0xf] %vm395, 0
      %403 = vst.msk [vmem:[%s400 + $0x8] sm:$0x1] %vm398, 0
      %vm404 = vcmask 57344
      %vm405 = vmand %vm404, %vm283
      %v406 = vld [vmem:[#allocation3] sm:$0x1]
      %v407 = vsel %vm405, 0, %v406
      %408 = vst [vmem:[#allocation3] sm:$0x1] %v407
      %v409 = vld [vmem:[#allocation3 + $0xc] sm:$0x1]
      %v410 = vsel %vm405, 0, %v409
      %411 = vst [vmem:[#allocation3 + $0xc] sm:$0x1] %v410
      %v412 = vld [vmem:[#allocation3 + $0x18] sm:$0x1]
      %v413 = vsel %vm405, 0, %v412
      %414 = vst [vmem:[#allocation3 + $0x18] sm:$0x1] %v413
      %v415 = vld [vmem:[#allocation3 + $0x24] sm:$0x1]
      %v416 = vsel %vm405, 0, %v415
      %417 = vst [vmem:[#allocation3 + $0x24] sm:$0x1] %v416
      %v418 = vld [vmem:[#allocation3 + $0x30] sm:$0x1]
      %v419 = vsel %vm405, 0, %v418
      %420 = vst [vmem:[#allocation3 + $0x30] sm:$0x1] %v419
      %v421 = vld [vmem:[#allocation3 + $0x3c] sm:$0x1]
      %v422 = vsel %vm405, 0, %v421
      %423 = vst [vmem:[#allocation3 + $0x3c] sm:$0x1] %v422
      %v424 = vld [vmem:[#allocation3 + $0x48] sm:$0x1]
      %v425 = vsel %vm405, 0, %v424
      %426 = vst [vmem:[#allocation3 + $0x48] sm:$0x1] %v425
      %v427 = vld [vmem:[#allocation3 + $0x54] sm:$0x1]
      %v428 = vsel %vm405, 0, %v427
      %429 = vst [vmem:[#allocation3 + $0x54] sm:$0x1] %v428
      %v430 = vld [vmem:[#allocation3 + $0x60] sm:$0x1]
      %v431 = vsel %vm405, 0, %v430
      %432 = vst [vmem:[#allocation3 + $0x60] sm:$0x1] %v431
      %v433 = vld [vmem:[#allocation3 + $0x6c] sm:$0x1]
      %v434 = vsel %vm405, 0, %v433
      %435 = vst [vmem:[#allocation3 + $0x6c] sm:$0x1] %v434
      %v436 = vld [vmem:[#allocation3 + $0x78] sm:$0x1]
      %v437 = vsel %vm405, 0, %v436
      %438 = vst [vmem:[#allocation3 + $0x78] sm:$0x1] %v437
      %v439 = vld [vmem:[#allocation3 + $0x84] sm:$0x1]
      %v440 = vsel %vm405, 0, %v439
      %441 = vst [vmem:[#allocation3 + $0x84] sm:$0x1] %v440
      %v442 = vld [vmem:[#allocation3 + $0x90] sm:$0x1]
      %v443 = vsel %vm405, 0, %v442
      %444 = vst [vmem:[#allocation3 + $0x90] sm:$0x1] %v443
      %v445 = vld [vmem:[#allocation3 + $0x9c] sm:$0x1]
      %v446 = vsel %vm405, 0, %v445
      %447 = vst [vmem:[#allocation3 + $0x9c] sm:$0x1] %v446
      %v448 = vld [vmem:[#allocation3 + $0xa8] sm:$0x1]
      %v449 = vsel %vm405, 0, %v448
      %450 = vst [vmem:[#allocation3 + $0xa8] sm:$0x1] %v449
      %v451 = vld [vmem:[#allocation3 + $0xb4] sm:$0x1]
      %v452 = vsel %vm405, 0, %v451
      %453 = vst [vmem:[#allocation3 + $0xb4] sm:$0x1] %v452
      %v454 = vld [vmem:[#allocation3 + $0xc0] sm:$0x1]
      %v455 = vsel %vm405, 0, %v454
      %456 = vst [vmem:[#allocation3 + $0xc0] sm:$0x1] %v455
      %v457 = vld [vmem:[#allocation3 + $0xcc] sm:$0x1]
      %v458 = vsel %vm405, 0, %v457
      %459 = vst [vmem:[#allocation3 + $0xcc] sm:$0x1] %v458
      %vm460 = vmand %vm404, %vm339
      %v461 = vld [vmem:[#allocation3 + $0x8] sm:$0x1]
      %v462 = vsel %vm460, 0, %v461
      %463 = vst [vmem:[#allocation3 + $0x8] sm:$0x1] %v462
      %v464 = vld [vmem:[#allocation3 + $0x14] sm:$0x1]
      %v465 = vsel %vm460, 0, %v464
      %466 = vst [vmem:[#allocation3 + $0x14] sm:$0x1] %v465
      %v467 = vld [vmem:[#allocation3 + $0x20] sm:$0x1]
      %v468 = vsel %vm460, 0, %v467
      %469 = vst [vmem:[#allocation3 + $0x20] sm:$0x1] %v468
      %v470 = vld [vmem:[#allocation3 + $0x2c] sm:$0x1]
      %v471 = vsel %vm460, 0, %v470
      %472 = vst [vmem:[#allocation3 + $0x2c] sm:$0x1] %v471
      %v473 = vld [vmem:[#allocation3 + $0x38] sm:$0x1]
      %v474 = vsel %vm460, 0, %v473
      %475 = vst [vmem:[#allocation3 + $0x38] sm:$0x1] %v474
      %v476 = vld [vmem:[#allocation3 + $0x44] sm:$0x1]
      %v477 = vsel %vm460, 0, %v476
      %478 = vst [vmem:[#allocation3 + $0x44] sm:$0x1] %v477
      %v479 = vld [vmem:[#allocation3 + $0x50] sm:$0x1]
      %v480 = vsel %vm460, 0, %v479
      %481 = vst [vmem:[#allocation3 + $0x50] sm:$0x1] %v480
      %v482 = vld [vmem:[#allocation3 + $0x5c] sm:$0x1]
      %v483 = vsel %vm460, 0, %v482
      %484 = vst [vmem:[#allocation3 + $0x5c] sm:$0x1] %v483
      %v485 = vld [vmem:[#allocation3 + $0x68] sm:$0x1]
      %v486 = vsel %vm460, 0, %v485
      %487 = vst [vmem:[#allocation3 + $0x68] sm:$0x1] %v486
      %v488 = vld [vmem:[#allocation3 + $0x74] sm:$0x1]
      %v489 = vsel %vm460, 0, %v488
      %490 = vst [vmem:[#allocation3 + $0x74] sm:$0x1] %v489
      %v491 = vld [vmem:[#allocation3 + $0x80] sm:$0x1]
      %v492 = vsel %vm460, 0, %v491
      %493 = vst [vmem:[#allocation3 + $0x80] sm:$0x1] %v492
      %v494 = vld [vmem:[#allocation3 + $0x8c] sm:$0x1]
      %v495 = vsel %vm460, 0, %v494
      %496 = vst [vmem:[#allocation3 + $0x8c] sm:$0x1] %v495
      %v497 = vld [vmem:[#allocation3 + $0x98] sm:$0x1]
      %v498 = vsel %vm460, 0, %v497
      %499 = vst [vmem:[#allocation3 + $0x98] sm:$0x1] %v498
      %v500 = vld [vmem:[#allocation3 + $0xa4] sm:$0x1]
      %v501 = vsel %vm460, 0, %v500
      %502 = vst [vmem:[#allocation3 + $0xa4] sm:$0x1] %v501
      %v503 = vld [vmem:[#allocation3 + $0xb0] sm:$0x1]
      %v504 = vsel %vm460, 0, %v503
      %505 = vst [vmem:[#allocation3 + $0xb0] sm:$0x1] %v504
      %v506 = vld [vmem:[#allocation3 + $0xbc] sm:$0x1]
      %v507 = vsel %vm460, 0, %v506
      %508 = vst [vmem:[#allocation3 + $0xbc] sm:$0x1] %v507
      %v509 = vld [vmem:[#allocation3 + $0xc8] sm:$0x1]
      %v510 = vsel %vm460, 0, %v509
      %511 = vst [vmem:[#allocation3 + $0xc8] sm:$0x1] %v510
      %v512 = vld [vmem:[#allocation3 + $0xd4] sm:$0x1]
      %v513 = vsel %vm460, 0, %v512
      %514 = vst [vmem:[#allocation3 + $0xd4] sm:$0x1] %v513
      %v515 = vld [vmem:[%s261] sm:$0xf]
      %v516 = vld [vmem:[%s261 + $0x4] sm:$0xf]
      %v517 = vld [vmem:[%s261 + $0x8] sm:$0xf]
      %v518 = vld [vmem:[%s261 + $0xc] sm:$0xf]
      %v519 = vld [vmem:[%s261 + $0x10] sm:$0xf]
      %v520 = vld [vmem:[%s261 + $0x14] sm:$0xf]
      %v521 = vld [vmem:[%s261 + $0x18] sm:$0xf]
      %v522 = vld [vmem:[%s261 + $0x1c] sm:$0xf]
      %v531 = vrot.slane %v515, 3
      %v532 = vrot.slane %v516, 3
      %v533 = vrot.slane %v517, 3
      %v534 = vrot.slane %v518, 3
      %v535 = vrot.slane %v519, 3
      %v536 = vrot.slane %v520, 3
      %v537 = vrot.slane %v521, 3
      %v538 = vrot.slane %v522, 3
      %vm539 = vcmask 1040384
      %v542 = vsel %vm539, %v515, %v531
      %vm544 = vcmask 1041409
      %v545 = vsel %vm544, %v515, %v531
      %v547 = vrot.slane %v545, 1
      %vm548 = vcmask 1042434
      %v549 = vsel %vm548, %v515, %v531
      %v551 = vrot.slane %v549, 2
      %vm552 = vcmask 1043459
      %v553 = vsel %vm552, %v515, %v531
      %v555 = vrot.slane %v553, 3
      %v558 = vsel %vm539, %v516, %v532
      %v560 = vsel %vm544, %v516, %v532
      %v562 = vrot.slane %v560, 1
      %v563 = vsel %vm548, %v516, %v532
      %v565 = vrot.slane %v563, 2
      %v566 = vsel %vm552, %v516, %v532
      %v568 = vrot.slane %v566, 3
      %v571 = vsel %vm539, %v517, %v533
      %v573 = vsel %vm544, %v517, %v533
      %v575 = vrot.slane %v573, 1
      %v576 = vsel %vm548, %v517, %v533
      %v578 = vrot.slane %v576, 2
      %v579 = vsel %vm552, %v517, %v533
      %v581 = vrot.slane %v579, 3
      %v584 = vsel %vm539, %v518, %v534
      %v586 = vsel %vm544, %v518, %v534
      %v588 = vrot.slane %v586, 1
      %v589 = vsel %vm548, %v518, %v534
      %v591 = vrot.slane %v589, 2
      %v592 = vsel %vm552, %v518, %v534
      %v594 = vrot.slane %v592, 3
      %v597 = vsel %vm539, %v519, %v535
      %v599 = vsel %vm544, %v519, %v535
      %v601 = vrot.slane %v599, 1
      %v602 = vsel %vm548, %v519, %v535
      %v604 = vrot.slane %v602, 2
      %v605 = vsel %vm552, %v519, %v535
      %v607 = vrot.slane %v605, 3
      %v610 = vsel %vm539, %v520, %v536
      %v612 = vsel %vm544, %v520, %v536
      %v614 = vrot.slane %v612, 1
      %v615 = vsel %vm548, %v520, %v536
      %v617 = vrot.slane %v615, 2
      %v618 = vsel %vm552, %v520, %v536
      %v620 = vrot.slane %v618, 3
      %v623 = vsel %vm539, %v521, %v537
      %v625 = vsel %vm544, %v521, %v537
      %v627 = vrot.slane %v625, 1
      %v628 = vsel %vm548, %v521, %v537
      %v630 = vrot.slane %v628, 2
      %v631 = vsel %vm552, %v521, %v537
      %v633 = vrot.slane %v631, 3
      %v636 = vsel %vm539, %v522, %v538
      %v638 = vsel %vm544, %v522, %v538
      %v640 = vrot.slane %v638, 1
      %v641 = vsel %vm548, %v522, %v538
      %v643 = vrot.slane %v641, 2
      %v644 = vsel %vm552, %v522, %v538
      %v646 = vrot.slane %v644, 3
      %v647 = vunpack.i.l.s16 %v542
      %v648 = vunpack.i.h.s16 %v542
      %v649 = vunpack.i.l.s16 %v547
      %v650 = vunpack.i.h.s16 %v547
      %v651 = vunpack.i.l.s16 %v551
      %v652 = vunpack.i.h.s16 %v551
      %v653 = vunpack.i.l.s16 %v555
      %v654 = vunpack.i.h.s16 %v555
      %v655 = vunpack.i.l.s16 %v558
      %v656 = vunpack.i.h.s16 %v558
      %v657 = vunpack.i.l.s16 %v562
      %v658 = vunpack.i.h.s16 %v562
      %v659 = vunpack.i.l.s16 %v565
      %v660 = vunpack.i.h.s16 %v565
      %v661 = vunpack.i.l.s16 %v568
      %v662 = vunpack.i.h.s16 %v568
      %v663 = vunpack.i.l.s16 %v571
      %v664 = vunpack.i.h.s16 %v571
      %v665 = vunpack.i.l.s16 %v575
      %v666 = vunpack.i.h.s16 %v575
      %v667 = vunpack.i.l.s16 %v578
      %v668 = vunpack.i.h.s16 %v578
      %v669 = vunpack.i.l.s16 %v581
      %v670 = vunpack.i.h.s16 %v581
      %v671 = vunpack.i.l.s16 %v584
      %v672 = vunpack.i.h.s16 %v584
      %v673 = vunpack.i.l.s16 %v588
      %v674 = vunpack.i.h.s16 %v588
      %v675 = vunpack.i.l.s16 %v591
      %v676 = vunpack.i.h.s16 %v591
      %v677 = vunpack.i.l.s16 %v594
      %v678 = vunpack.i.h.s16 %v594
      %v679 = vunpack.i.l.s16 %v597
      %v680 = vunpack.i.h.s16 %v597
      %v681 = vunpack.i.l.s16 %v601
      %v682 = vunpack.i.h.s16 %v601
      %v683 = vunpack.i.l.s16 %v604
      %v684 = vunpack.i.h.s16 %v604
      %v685 = vunpack.i.l.s16 %v607
      %v686 = vunpack.i.h.s16 %v607
      %v687 = vunpack.i.l.s16 %v610
      %v688 = vunpack.i.h.s16 %v610
      %v689 = vunpack.i.l.s16 %v614
      %v690 = vunpack.i.h.s16 %v614
      %v691 = vunpack.i.l.s16 %v617
      %v692 = vunpack.i.h.s16 %v617
      %v693 = vunpack.i.l.s16 %v620
      %v694 = vunpack.i.h.s16 %v620
      %v695 = vunpack.i.l.s16 %v623
      %v696 = vunpack.i.h.s16 %v623
      %v697 = vunpack.i.l.s16 %v627
      %v698 = vunpack.i.h.s16 %v627
      %v699 = vunpack.i.l.s16 %v630
      %v700 = vunpack.i.h.s16 %v630
      %v701 = vunpack.i.l.s16 %v633
      %v702 = vunpack.i.h.s16 %v633
      %v703 = vunpack.i.l.s16 %v636
      %v704 = vunpack.i.h.s16 %v636
      %v705 = vunpack.i.l.s16 %v640
      %v706 = vunpack.i.h.s16 %v640
      %v707 = vunpack.i.l.s16 %v643
      %v708 = vunpack.i.h.s16 %v643
      %v709 = vunpack.i.l.s16 %v646
      %v710 = vunpack.i.h.s16 %v646
      %v711 = vpack.i.b16 %v647, %v647
      %v712 = vpack.i.b16 %v648, %v648
      %v713 = vpack.i.b16 %v649, %v649
      %v714 = vpack.i.b16 %v650, %v650
      %v715 = vpack.i.b16 %v651, %v651
      %v716 = vpack.i.b16 %v652, %v652
      %v717 = vpack.i.b16 %v653, %v653
      %v718 = vpack.i.b16 %v654, %v654
      %v719 = vpack.i.b16 %v655, %v655
      %v720 = vpack.i.b16 %v656, %v656
      %v721 = vpack.i.b16 %v657, %v657
      %v722 = vpack.i.b16 %v658, %v658
      %v723 = vpack.i.b16 %v659, %v659
      %v724 = vpack.i.b16 %v660, %v660
      %v725 = vpack.i.b16 %v661, %v661
      %v726 = vpack.i.b16 %v662, %v662
      %v727 = vpack.i.b16 %v663, %v663
      %v728 = vpack.i.b16 %v664, %v664
      %v729 = vpack.i.b16 %v665, %v665
      %v730 = vpack.i.b16 %v666, %v666
      %v731 = vpack.i.b16 %v667, %v667
      %v732 = vpack.i.b16 %v668, %v668
      %v733 = vpack.i.b16 %v669, %v669
      %v734 = vpack.i.b16 %v670, %v670
      %v735 = vpack.i.b16 %v671, %v671
      %v736 = vpack.i.b16 %v672, %v672
      %v737 = vpack.i.b16 %v673, %v673
      %v738 = vpack.i.b16 %v674, %v674
      %v739 = vpack.i.b16 %v675, %v675
      %v740 = vpack.i.b16 %v676, %v676
      %v741 = vpack.i.b16 %v677, %v677
      %v742 = vpack.i.b16 %v678, %v678
      %v743 = vpack.i.b16 %v679, %v679
      %v744 = vpack.i.b16 %v680, %v680
      %v745 = vpack.i.b16 %v681, %v681
      %v746 = vpack.i.b16 %v682, %v682
      %v747 = vpack.i.b16 %v683, %v683
      %v748 = vpack.i.b16 %v684, %v684
      %v749 = vpack.i.b16 %v685, %v685
      %v750 = vpack.i.b16 %v686, %v686
      %v751 = vpack.i.b16 %v687, %v687
      %v752 = vpack.i.b16 %v688, %v688
      %v753 = vpack.i.b16 %v689, %v689
      %v754 = vpack.i.b16 %v690, %v690
      %v755 = vpack.i.b16 %v691, %v691
      %v756 = vpack.i.b16 %v692, %v692
      %v757 = vpack.i.b16 %v693, %v693
      %v758 = vpack.i.b16 %v694, %v694
      %v759 = vpack.i.b16 %v695, %v695
      %v760 = vpack.i.b16 %v696, %v696
      %v761 = vpack.i.b16 %v697, %v697
      %v762 = vpack.i.b16 %v698, %v698
      %v763 = vpack.i.b16 %v699, %v699
      %v764 = vpack.i.b16 %v700, %v700
      %v765 = vpack.i.b16 %v701, %v701
      %v766 = vpack.i.b16 %v702, %v702
      %v767 = vpack.i.b16 %v703, %v703
      %v768 = vpack.i.b16 %v704, %v704
      %v769 = vpack.i.b16 %v705, %v705
      %v770 = vpack.i.b16 %v706, %v706
      %v771 = vpack.i.b16 %v707, %v707
      %v772 = vpack.i.b16 %v708, %v708
      %v773 = vpack.i.b16 %v709, %v709
      %v774 = vpack.i.b16 %v710, %v710
      %v775 = vperm.slane %v711, 0
      %v776 = vperm.slane %v712, 0
      %v777 = vperm.slane %v713, 0
      %v778 = vperm.slane %v714, 0
      %v779 = vperm.slane %v715, 0
      %v780 = vperm.slane %v716, 0
      %v781 = vperm.slane %v717, 0
      %v782 = vperm.slane %v718, 0
      %v783 = vperm.slane %v719, 0
      %v784 = vperm.slane %v720, 0
      %v785 = vperm.slane %v721, 0
      %v786 = vperm.slane %v722, 0
      %v787 = vperm.slane %v723, 0
      %v788 = vperm.slane %v724, 0
      %v789 = vperm.slane %v725, 0
      %v790 = vperm.slane %v726, 0
      %v791 = vperm.slane %v727, 0
      %v792 = vperm.slane %v728, 0
      %v793 = vperm.slane %v729, 0
      %v794 = vperm.slane %v730, 0
      %v795 = vperm.slane %v731, 0
      %v796 = vperm.slane %v732, 0
      %v797 = vperm.slane %v733, 0
      %v798 = vperm.slane %v734, 0
      %v799 = vperm.slane %v735, 0
      %v800 = vperm.slane %v736, 0
      %v801 = vperm.slane %v737, 0
      %v802 = vperm.slane %v738, 0
      %v803 = vperm.slane %v739, 0
      %v804 = vperm.slane %v740, 0
      %v805 = vperm.slane %v741, 0
      %v806 = vperm.slane %v742, 0
      %v807 = vperm.slane %v743, 0
      %v808 = vperm.slane %v744, 0
      %v809 = vperm.slane %v745, 0
      %v810 = vperm.slane %v746, 0
      %v811 = vperm.slane %v747, 0
      %v812 = vperm.slane %v748, 0
      %v813 = vperm.slane %v749, 0
      %v814 = vperm.slane %v750, 0
      %v815 = vperm.slane %v751, 0
      %v816 = vperm.slane %v752, 0
      %v817 = vperm.slane %v753, 0
      %v818 = vperm.slane %v754, 0
      %v819 = vperm.slane %v755, 0
      %v820 = vperm.slane %v756, 0
      %v821 = vperm.slane %v757, 0
      %v822 = vperm.slane %v758, 0
      %v823 = vperm.slane %v759, 0
      %v824 = vperm.slane %v760, 0
      %v825 = vperm.slane %v761, 0
      %v826 = vperm.slane %v762, 0
      %v827 = vperm.slane %v763, 0
      %v828 = vperm.slane %v764, 0
      %v829 = vperm.slane %v765, 0
      %v830 = vperm.slane %v766, 0
      %v831 = vperm.slane %v767, 0
      %v832 = vperm.slane %v768, 0
      %v833 = vperm.slane %v769, 0
      %v834 = vperm.slane %v770, 0
      %v835 = vperm.slane %v771, 0
      %v836 = vperm.slane %v772, 0
      %v837 = vperm.slane %v773, 0
      %v838 = vperm.slane %v774, 0
      %v840 = vpack.i.b16 %v775, %v775
      %v842 = vperm.slane %v840, 0
      %v844 = vpack.i.b16 %v776, %v776
      %v846 = vperm.slane %v844, 0
      %v848 = vpack.i.b16 %v777, %v777
      %v850 = vperm.slane %v848, 0
      %v852 = vpack.i.b16 %v778, %v778
      %v854 = vperm.slane %v852, 0
      %v856 = vpack.i.b16 %v779, %v779
      %v858 = vperm.slane %v856, 0
      %v860 = vpack.i.b16 %v780, %v780
      %v862 = vperm.slane %v860, 0
      %v864 = vpack.i.b16 %v781, %v781
      %v866 = vperm.slane %v864, 0
      %v868 = vpack.i.b16 %v782, %v782
      %v870 = vperm.slane %v868, 0
      %v872 = vpack.i.b16 %v783, %v783
      %v874 = vperm.slane %v872, 0
      %v876 = vpack.i.b16 %v784, %v784
      %v878 = vperm.slane %v876, 0
      %v880 = vpack.i.b16 %v785, %v785
      %v882 = vperm.slane %v880, 0
      %v884 = vpack.i.b16 %v786, %v786
      %v886 = vperm.slane %v884, 0
      %v888 = vpack.i.b16 %v787, %v787
      %v890 = vperm.slane %v888, 0
      %v892 = vpack.i.b16 %v788, %v788
      %v894 = vperm.slane %v892, 0
      %v896 = vpack.i.b16 %v789, %v789
      %v898 = vperm.slane %v896, 0
      %v900 = vpack.i.b16 %v790, %v790
      %v902 = vperm.slane %v900, 0
      %v904 = vpack.i.b16 %v791, %v791
      %v906 = vperm.slane %v904, 0
      %v908 = vpack.i.b16 %v792, %v792
      %v910 = vperm.slane %v908, 0
      %v912 = vpack.i.b16 %v793, %v793
      %v914 = vperm.slane %v912, 0
      %v916 = vpack.i.b16 %v794, %v794
      %v918 = vperm.slane %v916, 0
      %v920 = vpack.i.b16 %v795, %v795
      %v922 = vperm.slane %v920, 0
      %v924 = vpack.i.b16 %v796, %v796
      %v926 = vperm.slane %v924, 0
      %v928 = vpack.i.b16 %v797, %v797
      %v930 = vperm.slane %v928, 0
      %v932 = vpack.i.b16 %v798, %v798
      %v934 = vperm.slane %v932, 0
      %v936 = vpack.i.b16 %v799, %v799
      %v938 = vperm.slane %v936, 0
      %v940 = vpack.i.b16 %v800, %v800
      %v942 = vperm.slane %v940, 0
      %v944 = vpack.i.b16 %v801, %v801
      %v946 = vperm.slane %v944, 0
      %v948 = vpack.i.b16 %v802, %v802
      %v950 = vperm.slane %v948, 0
      %v952 = vpack.i.b16 %v803, %v803
      %v954 = vperm.slane %v952, 0
      %v956 = vpack.i.b16 %v804, %v804
      %v958 = vperm.slane %v956, 0
      %v960 = vpack.i.b16 %v805, %v805
      %v962 = vperm.slane %v960, 0
      %v964 = vpack.i.b16 %v806, %v806
      %v966 = vperm.slane %v964, 0
      %v968 = vpack.i.b16 %v807, %v807
      %v970 = vperm.slane %v968, 0
      %v972 = vpack.i.b16 %v808, %v808
      %v974 = vperm.slane %v972, 0
      %v976 = vpack.i.b16 %v809, %v809
      %v978 = vperm.slane %v976, 0
      %v980 = vpack.i.b16 %v810, %v810
      %v982 = vperm.slane %v980, 0
      %v984 = vpack.i.b16 %v811, %v811
      %v986 = vperm.slane %v984, 0
      %v988 = vpack.i.b16 %v812, %v812
      %v990 = vperm.slane %v988, 0
      %v992 = vpack.i.b16 %v813, %v813
      %v994 = vperm.slane %v992, 0
      %v996 = vpack.i.b16 %v814, %v814
      %v998 = vperm.slane %v996, 0
      %v1000 = vpack.i.b16 %v815, %v815
      %v1002 = vperm.slane %v1000, 0
      %v1004 = vpack.i.b16 %v816, %v816
      %v1006 = vperm.slane %v1004, 0
      %v1008 = vpack.i.b16 %v817, %v817
      %v1010 = vperm.slane %v1008, 0
      %v1012 = vpack.i.b16 %v818, %v818
      %v1014 = vperm.slane %v1012, 0
      %v1016 = vpack.i.b16 %v819, %v819
      %v1018 = vperm.slane %v1016, 0
      %v1020 = vpack.i.b16 %v820, %v820
      %v1022 = vperm.slane %v1020, 0
      %v1024 = vpack.i.b16 %v821, %v821
      %v1026 = vperm.slane %v1024, 0
      %v1028 = vpack.i.b16 %v822, %v822
      %v1030 = vperm.slane %v1028, 0
      %v1032 = vpack.i.b16 %v823, %v823
      %v1034 = vperm.slane %v1032, 0
      %v1036 = vpack.i.b16 %v824, %v824
      %v1038 = vperm.slane %v1036, 0
      %v1040 = vpack.i.b16 %v825, %v825
      %v1042 = vperm.slane %v1040, 0
      %v1044 = vpack.i.b16 %v826, %v826
      %v1046 = vperm.slane %v1044, 0
      %v1048 = vpack.i.b16 %v827, %v827
      %v1050 = vperm.slane %v1048, 0
      %v1052 = vpack.i.b16 %v828, %v828
      %v1054 = vperm.slane %v1052, 0
      %v1056 = vpack.i.b16 %v829, %v829
      %v1058 = vperm.slane %v1056, 0
      %v1060 = vpack.i.b16 %v830, %v830
      %v1062 = vperm.slane %v1060, 0
      %v1064 = vpack.i.b16 %v831, %v831
      %v1066 = vperm.slane %v1064, 0
      %v1068 = vpack.i.b16 %v832, %v832
      %v1070 = vperm.slane %v1068, 0
      %v1072 = vpack.i.b16 %v833, %v833
      %v1074 = vperm.slane %v1072, 0
      %v1076 = vpack.i.b16 %v834, %v834
      %v1078 = vperm.slane %v1076, 0
      %v1080 = vpack.i.b16 %v835, %v835
      %v1082 = vperm.slane %v1080, 0
      %v1084 = vpack.i.b16 %v836, %v836
      %v1086 = vperm.slane %v1084, 0
      %v1088 = vpack.i.b16 %v837, %v837
      %v1090 = vperm.slane %v1088, 0
      %v1092 = vpack.i.b16 %v838, %v838
      %v1094 = vperm.slane %v1092, 0
      %v1095 = vld [vmem:[%s266] sm:$0xf]
      %v1096 = vld [vmem:[%s266 + $0x4] sm:$0xf]
      %v1097 = vld [vmem:[%s266 + $0x8] sm:$0xf]
      %v1098 = vld [vmem:[%s266 + $0xc] sm:$0xf]
      %v1099 = vld [vmem:[%s266 + $0x10] sm:$0xf]
      %v1100 = vld [vmem:[%s266 + $0x14] sm:$0xf]
      %v1101 = vld [vmem:[%s266 + $0x18] sm:$0xf]
      %v1102 = vld [vmem:[%s266 + $0x1c] sm:$0xf]
      %v1103 = vld [vmem:[%s266 + $0x20] sm:$0xf]
      %v1104 = vld [vmem:[%s266 + $0x24] sm:$0xf]
      %v1105 = vld [vmem:[%s266 + $0x28] sm:$0xf]
      %v1106 = vld [vmem:[%s266 + $0x2c] sm:$0xf]
      %v1107 = vld [vmem:[%s266 + $0x30] sm:$0xf]
      %v1108 = vld [vmem:[%s266 + $0x34] sm:$0xf]
      %v1109 = vld [vmem:[%s266 + $0x38] sm:$0xf]
      %v1110 = vld [vmem:[%s266 + $0x3c] sm:$0xf]
      %v1111 = vld [vmem:[%s266 + $0x40] sm:$0xf]
      %v1112 = vld [vmem:[%s266 + $0x44] sm:$0xf]
      %v1113 = vld [vmem:[%s266 + $0x48] sm:$0xf]
      %v1114 = vld [vmem:[%s266 + $0x4c] sm:$0xf]
      %v1115 = vld [vmem:[%s266 + $0x50] sm:$0xf]
      %v1116 = vld [vmem:[%s266 + $0x54] sm:$0xf]
      %v1117 = vld [vmem:[%s266 + $0x58] sm:$0xf]
      %v1118 = vld [vmem:[%s266 + $0x5c] sm:$0xf]
      %v1119 = vld [vmem:[%s266 + $0x60] sm:$0xf]
      %v1120 = vld [vmem:[%s266 + $0x64] sm:$0xf]
      %v1121 = vld [vmem:[%s266 + $0x68] sm:$0xf]
      %v1122 = vld [vmem:[%s266 + $0x6c] sm:$0xf]
      %v1123 = vld [vmem:[%s266 + $0x70] sm:$0xf]
      %v1124 = vld [vmem:[%s266 + $0x74] sm:$0xf]
      %v1125 = vld [vmem:[%s266 + $0x78] sm:$0xf]
      %v1126 = vld [vmem:[%s266 + $0x7c] sm:$0xf]
      %1128 = vst [vmem:[#allocation1] ss:$9 sm:$0xff] %v842
      %s1130 = scalar_lea.vmem [#allocation1], 1
      %1131 = vst [vmem:[%s1130] ss:$9 sm:$0xff] %v846
      %s1133 = scalar_lea.vmem [#allocation1], 2
      %1134 = vst [vmem:[%s1133] ss:$9 sm:$0xff] %v850
      %s1136 = scalar_lea.vmem [#allocation1], 3
      %1137 = vst [vmem:[%s1136] ss:$9 sm:$0xff] %v854
      %s1139 = scalar_lea.vmem [#allocation1], 4
      %1140 = vst [vmem:[%s1139] ss:$9 sm:$0xff] %v858
      %s1142 = scalar_lea.vmem [#allocation1], 5
      %1143 = vst [vmem:[%s1142] ss:$9 sm:$0xff] %v862
      %s1145 = scalar_lea.vmem [#allocation1], 6
      %1146 = vst [vmem:[%s1145] ss:$9 sm:$0xff] %v866
      %s1148 = scalar_lea.vmem [#allocation1], 7
      %1149 = vst [vmem:[%s1148] ss:$9 sm:$0xff] %v870
      %v1150 = vld [vmem:[#allocation1] sm:$0xff]
      %1151 = vst [vmem:[#allocation1] ss:$9 sm:$0xff] %v842
      %1152 = vst [vmem:[%s1130] ss:$9 sm:$0xff] %v846
      %1153 = vst [vmem:[%s1133] ss:$9 sm:$0xff] %v850
      %1154 = vst [vmem:[%s1136] ss:$9 sm:$0xff] %v854
      %1155 = vst [vmem:[%s1139] ss:$9 sm:$0xff] %v858
      %1156 = vst [vmem:[%s1142] ss:$9 sm:$0xff] %v862
      %1157 = vst [vmem:[%s1145] ss:$9 sm:$0xff] %v866
      %1158 = vst [vmem:[%s1148] ss:$9 sm:$0xff] %v870
      %v1159 = vld [vmem:[#allocation1] sm:$0xff]
      %1161 = vst [vmem:[#allocation1] ss:$9 sm:$0xff] %v874
      %1163 = vst [vmem:[%s1130] ss:$9 sm:$0xff] %v878
      %1165 = vst [vmem:[%s1133] ss:$9 sm:$0xff] %v882
      %1167 = vst [vmem:[%s1136] ss:$9 sm:$0xff] %v886
      %1169 = vst [vmem:[%s1139] ss:$9 sm:$0xff] %v890
      %1171 = vst [vmem:[%s1142] ss:$9 sm:$0xff] %v894
      %1173 = vst [vmem:[%s1145] ss:$9 sm:$0xff] %v898
      %1175 = vst [vmem:[%s1148] ss:$9 sm:$0xff] %v902
      %v1176 = vld [vmem:[#allocation1] sm:$0xff]
      %1177 = vst [vmem:[#allocation1] ss:$9 sm:$0xff] %v874
      %1178 = vst [vmem:[%s1130] ss:$9 sm:$0xff] %v878
      %1179 = vst [vmem:[%s1133] ss:$9 sm:$0xff] %v882
      %1180 = vst [vmem:[%s1136] ss:$9 sm:$0xff] %v886
      %1181 = vst [vmem:[%s1139] ss:$9 sm:$0xff] %v890
      %1182 = vst [vmem:[%s1142] ss:$9 sm:$0xff] %v894
      %1183 = vst [vmem:[%s1145] ss:$9 sm:$0xff] %v898
      %1184 = vst [vmem:[%s1148] ss:$9 sm:$0xff] %v902
      %v1185 = vld [vmem:[#allocation1] sm:$0xff]
      %1187 = vst [vmem:[#allocation1] ss:$9 sm:$0xff] %v906
      %1189 = vst [vmem:[%s1130] ss:$9 sm:$0xff] %v910
      %1191 = vst [vmem:[%s1133] ss:$9 sm:$0xff] %v914
      %1193 = vst [vmem:[%s1136] ss:$9 sm:$0xff] %v918
      %1195 = vst [vmem:[%s1139] ss:$9 sm:$0xff] %v922
      %1197 = vst [vmem:[%s1142] ss:$9 sm:$0xff] %v926
      %1199 = vst [vmem:[%s1145] ss:$9 sm:$0xff] %v930
      %1201 = vst [vmem:[%s1148] ss:$9 sm:$0xff] %v934
      %v1202 = vld [vmem:[#allocation1] sm:$0xff]
      %1203 = vst [vmem:[#allocation1] ss:$9 sm:$0xff] %v906
      %1204 = vst [vmem:[%s1130] ss:$9 sm:$0xff] %v910
      %1205 = vst [vmem:[%s1133] ss:$9 sm:$0xff] %v914
      %1206 = vst [vmem:[%s1136] ss:$9 sm:$0xff] %v918
      %1207 = vst [vmem:[%s1139] ss:$9 sm:$0xff] %v922
      %1208 = vst [vmem:[%s1142] ss:$9 sm:$0xff] %v926
      %1209 = vst [vmem:[%s1145] ss:$9 sm:$0xff] %v930
      %1210 = vst [vmem:[%s1148] ss:$9 sm:$0xff] %v934
      %v1211 = vld [vmem:[#allocation1] sm:$0xff]
      %1213 = vst [vmem:[#allocation1] ss:$9 sm:$0xff] %v938
      %1215 = vst [vmem:[%s1130] ss:$9 sm:$0xff] %v942
      %1217 = vst [vmem:[%s1133] ss:$9 sm:$0xff] %v946
      %1219 = vst [vmem:[%s1136] ss:$9 sm:$0xff] %v950
      %1221 = vst [vmem:[%s1139] ss:$9 sm:$0xff] %v954
      %1223 = vst [vmem:[%s1142] ss:$9 sm:$0xff] %v958
      %1225 = vst [vmem:[%s1145] ss:$9 sm:$0xff] %v962
      %1227 = vst [vmem:[%s1148] ss:$9 sm:$0xff] %v966
      %v1228 = vld [vmem:[#allocation1] sm:$0xff]
      %1229 = vst [vmem:[#allocation1] ss:$9 sm:$0xff] %v938
      %1230 = vst [vmem:[%s1130] ss:$9 sm:$0xff] %v942
      %1231 = vst [vmem:[%s1133] ss:$9 sm:$0xff] %v946
      %1232 = vst [vmem:[%s1136] ss:$9 sm:$0xff] %v950
      %1233 = vst [vmem:[%s1139] ss:$9 sm:$0xff] %v954
      %1234 = vst [vmem:[%s1142] ss:$9 sm:$0xff] %v958
      %1235 = vst [vmem:[%s1145] ss:$9 sm:$0xff] %v962
      %1236 = vst [vmem:[%s1148] ss:$9 sm:$0xff] %v966
      %v1237 = vld [vmem:[#allocation1] sm:$0xff]
      %1239 = vst [vmem:[#allocation1] ss:$9 sm:$0xff] %v970
      %1241 = vst [vmem:[%s1130] ss:$9 sm:$0xff] %v974
      %1243 = vst [vmem:[%s1133] ss:$9 sm:$0xff] %v978
      %1245 = vst [vmem:[%s1136] ss:$9 sm:$0xff] %v982
      %1247 = vst [vmem:[%s1139] ss:$9 sm:$0xff] %v986
      %1249 = vst [vmem:[%s1142] ss:$9 sm:$0xff] %v990
      %1251 = vst [vmem:[%s1145] ss:$9 sm:$0xff] %v994
      %1253 = vst [vmem:[%s1148] ss:$9 sm:$0xff] %v998
      %v1254 = vld [vmem:[#allocation1] sm:$0xff]
      %1255 = vst [vmem:[#allocation1] ss:$9 sm:$0xff] %v970
      %1256 = vst [vmem:[%s1130] ss:$9 sm:$0xff] %v974
      %1257 = vst [vmem:[%s1133] ss:$9 sm:$0xff] %v978
      %1258 = vst [vmem:[%s1136] ss:$9 sm:$0xff] %v982
      %1259 = vst [vmem:[%s1139] ss:$9 sm:$0xff] %v986
      %1260 = vst [vmem:[%s1142] ss:$9 sm:$0xff] %v990
      %1261 = vst [vmem:[%s1145] ss:$9 sm:$0xff] %v994
      %1262 = vst [vmem:[%s1148] ss:$9 sm:$0xff] %v998
      %v1263 = vld [vmem:[#allocation1] sm:$0xff]
      %1265 = vst [vmem:[#allocation1] ss:$9 sm:$0xff] %v1002
      %1267 = vst [vmem:[%s1130] ss:$9 sm:$0xff] %v1006
      %1269 = vst [vmem:[%s1133] ss:$9 sm:$0xff] %v1010
      %1271 = vst [vmem:[%s1136] ss:$9 sm:$0xff] %v1014
      %1273 = vst [vmem:[%s1139] ss:$9 sm:$0xff] %v1018
      %1275 = vst [vmem:[%s1142] ss:$9 sm:$0xff] %v1022
      %1277 = vst [vmem:[%s1145] ss:$9 sm:$0xff] %v1026
      %1279 = vst [vmem:[%s1148] ss:$9 sm:$0xff] %v1030
      %v1280 = vld [vmem:[#allocation1] sm:$0xff]
      %1281 = vst [vmem:[#allocation1] ss:$9 sm:$0xff] %v1002
      %1282 = vst [vmem:[%s1130] ss:$9 sm:$0xff] %v1006
      %1283 = vst [vmem:[%s1133] ss:$9 sm:$0xff] %v1010
      %1284 = vst [vmem:[%s1136] ss:$9 sm:$0xff] %v1014
      %1285 = vst [vmem:[%s1139] ss:$9 sm:$0xff] %v1018
      %1286 = vst [vmem:[%s1142] ss:$9 sm:$0xff] %v1022
      %1287 = vst [vmem:[%s1145] ss:$9 sm:$0xff] %v1026
      %1288 = vst [vmem:[%s1148] ss:$9 sm:$0xff] %v1030
      %v1289 = vld [vmem:[#allocation1] sm:$0xff]
      %1291 = vst [vmem:[#allocation1] ss:$9 sm:$0xff] %v1034
      %1293 = vst [vmem:[%s1130] ss:$9 sm:$0xff] %v1038
      %1295 = vst [vmem:[%s1133] ss:$9 sm:$0xff] %v1042
      %1297 = vst [vmem:[%s1136] ss:$9 sm:$0xff] %v1046
      %1299 = vst [vmem:[%s1139] ss:$9 sm:$0xff] %v1050
      %1301 = vst [vmem:[%s1142] ss:$9 sm:$0xff] %v1054
      %1303 = vst [vmem:[%s1145] ss:$9 sm:$0xff] %v1058
      %1305 = vst [vmem:[%s1148] ss:$9 sm:$0xff] %v1062
      %v1306 = vld [vmem:[#allocation1] sm:$0xff]
      %1307 = vst [vmem:[#allocation1] ss:$9 sm:$0xff] %v1034
      %1308 = vst [vmem:[%s1130] ss:$9 sm:$0xff] %v1038
      %1309 = vst [vmem:[%s1133] ss:$9 sm:$0xff] %v1042
      %1310 = vst [vmem:[%s1136] ss:$9 sm:$0xff] %v1046
      %1311 = vst [vmem:[%s1139] ss:$9 sm:$0xff] %v1050
      %1312 = vst [vmem:[%s1142] ss:$9 sm:$0xff] %v1054
      %1313 = vst [vmem:[%s1145] ss:$9 sm:$0xff] %v1058
      %1314 = vst [vmem:[%s1148] ss:$9 sm:$0xff] %v1062
      %v1315 = vld [vmem:[#allocation1] sm:$0xff]
      %1317 = vst [vmem:[#allocation1] ss:$9 sm:$0xff] %v1066
      %1319 = vst [vmem:[%s1130] ss:$9 sm:$0xff] %v1070
      %1321 = vst [vmem:[%s1133] ss:$9 sm:$0xff] %v1074
      %1323 = vst [vmem:[%s1136] ss:$9 sm:$0xff] %v1078
      %1325 = vst [vmem:[%s1139] ss:$9 sm:$0xff] %v1082
      %1327 = vst [vmem:[%s1142] ss:$9 sm:$0xff] %v1086
      %1329 = vst [vmem:[%s1145] ss:$9 sm:$0xff] %v1090
      %1331 = vst [vmem:[%s1148] ss:$9 sm:$0xff] %v1094
      %v1332 = vld [vmem:[#allocation1] sm:$0xff]
      %1333 = vst [vmem:[#allocation1] ss:$9 sm:$0xff] %v1066
      %1334 = vst [vmem:[%s1130] ss:$9 sm:$0xff] %v1070
      %1335 = vst [vmem:[%s1133] ss:$9 sm:$0xff] %v1074
      %1336 = vst [vmem:[%s1136] ss:$9 sm:$0xff] %v1078
      %1337 = vst [vmem:[%s1139] ss:$9 sm:$0xff] %v1082
      %1338 = vst [vmem:[%s1142] ss:$9 sm:$0xff] %v1086
      %1339 = vst [vmem:[%s1145] ss:$9 sm:$0xff] %v1090
      %1340 = vst [vmem:[%s1148] ss:$9 sm:$0xff] %v1094
      %v1341 = vld [vmem:[#allocation1] sm:$0xff]
      %v1374 = vunpack.c.l.b16 %v1095
      %v1375 = vunpack.c.l.b16 %v1096
      %v1376 = vunpack.c.l.b16 %v1097
      %v1377 = vunpack.c.l.b16 %v1098
      %v1378 = vunpack.c.l.b16 %v1099
      %v1379 = vunpack.c.l.b16 %v1100
      %v1380 = vunpack.c.l.b16 %v1101
      %v1381 = vunpack.c.l.b16 %v1102
      %v1382 = vunpack.c.l.b16 %v1103
      %v1383 = vunpack.c.l.b16 %v1104
      %v1384 = vunpack.c.l.b16 %v1105
      %v1385 = vunpack.c.l.b16 %v1106
      %v1386 = vunpack.c.l.b16 %v1107
      %v1387 = vunpack.c.l.b16 %v1108
      %v1388 = vunpack.c.l.b16 %v1109
      %v1389 = vunpack.c.l.b16 %v1110
      %v1390 = vunpack.c.l.b16 %v1111
      %v1391 = vunpack.c.l.b16 %v1112
      %v1392 = vunpack.c.l.b16 %v1113
      %v1393 = vunpack.c.l.b16 %v1114
      %v1394 = vunpack.c.l.b16 %v1115
      %v1395 = vunpack.c.l.b16 %v1116
      %v1396 = vunpack.c.l.b16 %v1117
      %v1397 = vunpack.c.l.b16 %v1118
      %v1398 = vunpack.c.l.b16 %v1119
      %v1399 = vunpack.c.l.b16 %v1120
      %v1400 = vunpack.c.l.b16 %v1121
      %v1401 = vunpack.c.l.b16 %v1122
      %v1402 = vunpack.c.l.b16 %v1123
      %v1403 = vunpack.c.l.b16 %v1124
      %v1404 = vunpack.c.l.b16 %v1125
      %v1405 = vunpack.c.l.b16 %v1126
      %v1406 = vpack.c.b16 %v1375, %v1374
      %v1407 = vpack.c.b16 %v1377, %v1376
      %v1408 = vpack.c.b16 %v1379, %v1378
      %v1409 = vpack.c.b16 %v1381, %v1380
      %v1410 = vpack.c.b16 %v1383, %v1382
      %v1411 = vpack.c.b16 %v1385, %v1384
      %v1412 = vpack.c.b16 %v1387, %v1386
      %v1413 = vpack.c.b16 %v1389, %v1388
      %v1414 = vpack.c.b16 %v1391, %v1390
      %v1415 = vpack.c.b16 %v1393, %v1392
      %v1416 = vpack.c.b16 %v1395, %v1394
      %v1417 = vpack.c.b16 %v1397, %v1396
      %v1418 = vpack.c.b16 %v1399, %v1398
      %v1419 = vpack.c.b16 %v1401, %v1400
      %v1420 = vpack.c.b16 %v1403, %v1402
      %v1421 = vpack.c.b16 %v1405, %v1404
      %1422 = vrot.lane.b32.xlu0 %v1406, 8
      %v1423 = vpop.permute.xlu0 %1422
      %1424 = vrot.lane.b32.xlu0 %v1407, 8
      %v1425 = vpop.permute.xlu0 %1424
      %1426 = vrot.lane.b32.xlu0 %v1408, 8
      %v1427 = vpop.permute.xlu0 %1426
      %1428 = vrot.lane.b32.xlu0 %v1409, 8
      %v1429 = vpop.permute.xlu0 %1428
      %1430 = vrot.lane.b32.xlu0 %v1410, 8
      %v1431 = vpop.permute.xlu0 %1430
      %1432 = vrot.lane.b32.xlu0 %v1411, 8
      %v1433 = vpop.permute.xlu0 %1432
      %1434 = vrot.lane.b32.xlu0 %v1412, 8
      %v1435 = vpop.permute.xlu0 %1434
      %1436 = vrot.lane.b32.xlu0 %v1413, 8
      %v1437 = vpop.permute.xlu0 %1436
      %1438 = vrot.lane.b32.xlu0 %v1414, 8
      %v1439 = vpop.permute.xlu0 %1438
      %1440 = vrot.lane.b32.xlu0 %v1415, 8
      %v1441 = vpop.permute.xlu0 %1440
      %1442 = vrot.lane.b32.xlu0 %v1416, 8
      %v1443 = vpop.permute.xlu0 %1442
      %1444 = vrot.lane.b32.xlu0 %v1417, 8
      %v1445 = vpop.permute.xlu0 %1444
      %1446 = vrot.lane.b32.xlu0 %v1418, 8
      %v1447 = vpop.permute.xlu0 %1446
      %1448 = vrot.lane.b32.xlu0 %v1419, 8
      %v1449 = vpop.permute.xlu0 %1448
      %1450 = vrot.lane.b32.xlu0 %v1420, 8
      %v1451 = vpop.permute.xlu0 %1450
      %1452 = vrot.lane.b32.xlu0 %v1421, 8
      %v1453 = vpop.permute.xlu0 %1452
      %vm1454 = vcmask 64512
      %v1456 = vsel %vm1454, %v1150, %v1423
      %v1458 = vsel %vm1454, %v1159, %v1425
      %v1460 = vsel %vm1454, %v1176, %v1427
      %v1462 = vsel %vm1454, %v1185, %v1429
      %v1464 = vsel %vm1454, %v1202, %v1431
      %v1466 = vsel %vm1454, %v1211, %v1433
      %v1468 = vsel %vm1454, %v1228, %v1435
      %v1470 = vsel %vm1454, %v1237, %v1437
      %v1472 = vsel %vm1454, %v1254, %v1439
      %v1474 = vsel %vm1454, %v1263, %v1441
      %v1476 = vsel %vm1454, %v1280, %v1443
      %v1478 = vsel %vm1454, %v1289, %v1445
      %v1480 = vsel %vm1454, %v1306, %v1447
      %v1482 = vsel %vm1454, %v1315, %v1449
      %v1484 = vsel %vm1454, %v1332, %v1451
      %v1486 = vsel %vm1454, %v1341, %v1453
      %v1503 = vunpack.c.l.b16 %v1456
      %v1504 = vunpack.c.h.b16 %v1456
      %v1505 = vunpack.c.l.b16 %v1458
      %v1506 = vunpack.c.h.b16 %v1458
      %v1507 = vunpack.c.l.b16 %v1460
      %v1508 = vunpack.c.h.b16 %v1460
      %v1509 = vunpack.c.l.b16 %v1462
      %v1510 = vunpack.c.h.b16 %v1462
      %v1511 = vunpack.c.l.b16 %v1464
      %v1512 = vunpack.c.h.b16 %v1464
      %v1513 = vunpack.c.l.b16 %v1466
      %v1514 = vunpack.c.h.b16 %v1466
      %v1515 = vunpack.c.l.b16 %v1468
      %v1516 = vunpack.c.h.b16 %v1468
      %v1517 = vunpack.c.l.b16 %v1470
      %v1518 = vunpack.c.h.b16 %v1470
      %v1519 = vunpack.c.l.b16 %v1472
      %v1520 = vunpack.c.h.b16 %v1472
      %v1521 = vunpack.c.l.b16 %v1474
      %v1522 = vunpack.c.h.b16 %v1474
      %v1523 = vunpack.c.l.b16 %v1476
      %v1524 = vunpack.c.h.b16 %v1476
      %v1525 = vunpack.c.l.b16 %v1478
      %v1526 = vunpack.c.h.b16 %v1478
      %v1527 = vunpack.c.l.b16 %v1480
      %v1528 = vunpack.c.h.b16 %v1480
      %v1529 = vunpack.c.l.b16 %v1482
      %v1530 = vunpack.c.h.b16 %v1482
      %v1531 = vunpack.c.l.b16 %v1484
      %v1532 = vunpack.c.h.b16 %v1484
      %v1533 = vunpack.c.l.b16 %v1486
      %v1534 = vunpack.c.h.b16 %v1486
      %v1535 = vpack.c.b16 %v1503, %v1503
      %v1536 = vpack.c.b16 %v1504, %v1504
      %v1537 = vpack.c.b16 %v1505, %v1505
      %v1538 = vpack.c.b16 %v1506, %v1506
      %v1539 = vpack.c.b16 %v1507, %v1507
      %v1540 = vpack.c.b16 %v1508, %v1508
      %v1541 = vpack.c.b16 %v1509, %v1509
      %v1542 = vpack.c.b16 %v1510, %v1510
      %v1543 = vpack.c.b16 %v1511, %v1511
      %v1544 = vpack.c.b16 %v1512, %v1512
      %v1545 = vpack.c.b16 %v1513, %v1513
      %v1546 = vpack.c.b16 %v1514, %v1514
      %v1547 = vpack.c.b16 %v1515, %v1515
      %v1548 = vpack.c.b16 %v1516, %v1516
      %v1549 = vpack.c.b16 %v1517, %v1517
      %v1550 = vpack.c.b16 %v1518, %v1518
      %v1551 = vpack.c.b16 %v1519, %v1519
      %v1552 = vpack.c.b16 %v1520, %v1520
      %v1553 = vpack.c.b16 %v1521, %v1521
      %v1554 = vpack.c.b16 %v1522, %v1522
      %v1555 = vpack.c.b16 %v1523, %v1523
      %v1556 = vpack.c.b16 %v1524, %v1524
      %v1557 = vpack.c.b16 %v1525, %v1525
      %v1558 = vpack.c.b16 %v1526, %v1526
      %v1559 = vpack.c.b16 %v1527, %v1527
      %v1560 = vpack.c.b16 %v1528, %v1528
      %v1561 = vpack.c.b16 %v1529, %v1529
      %v1562 = vpack.c.b16 %v1530, %v1530
      %v1563 = vpack.c.b16 %v1531, %v1531
      %v1564 = vpack.c.b16 %v1532, %v1532
      %v1565 = vpack.c.b16 %v1533, %v1533
      %v1566 = vpack.c.b16 %v1534, %v1534
      %vm1567 = vsmask.f32 4368
      %vm1568 = vmor %vm283, %vm1567
      %v1570 = vshrl.u32 %v1535, 16
      %v1572 = vrot.slane %v1570, 7
      %v1573 = vshll.u32 %v1535, 16
      %v1575 = vor.u32 %v1572, %v1573
      %v1576 = vrot.slane %v1572, 4
      %v1578 = vshrl.u32 %v1536, 16
      %v1580 = vrot.slane %v1578, 7
      %v1581 = vshll.u32 %v1536, 16
      %v1583 = vor.u32 %v1580, %v1581
      %v1584 = vsel %vm1568, %v1576, %v1583
      %v1585 = vrot.slane %v1580, 4
      %v1587 = vshrl.u32 %v1537, 16
      %v1589 = vrot.slane %v1587, 7
      %v1590 = vshll.u32 %v1537, 16
      %v1592 = vor.u32 %v1589, %v1590
      %v1593 = vrot.slane %v1589, 4
      %v1595 = vshrl.u32 %v1538, 16
      %v1597 = vrot.slane %v1595, 7
      %v1598 = vshll.u32 %v1538, 16
      %v1600 = vor.u32 %v1597, %v1598
      %v1601 = vsel %vm1568, %v1593, %v1600
      %v1602 = vrot.slane %v1597, 4
      %v1604 = vshrl.u32 %v1539, 16
      %v1606 = vrot.slane %v1604, 7
      %v1607 = vshll.u32 %v1539, 16
      %v1609 = vor.u32 %v1606, %v1607
      %v1610 = vrot.slane %v1606, 4
      %v1612 = vshrl.u32 %v1540, 16
      %v1614 = vrot.slane %v1612, 7
      %v1615 = vshll.u32 %v1540, 16
      %v1617 = vor.u32 %v1614, %v1615
      %v1618 = vsel %vm1568, %v1610, %v1617
      %v1619 = vrot.slane %v1614, 4
      %v1621 = vshrl.u32 %v1541, 16
      %v1623 = vrot.slane %v1621, 7
      %v1624 = vshll.u32 %v1541, 16
      %v1626 = vor.u32 %v1623, %v1624
      %v1627 = vrot.slane %v1623, 4
      %v1629 = vshrl.u32 %v1542, 16
      %v1631 = vrot.slane %v1629, 7
      %v1632 = vshll.u32 %v1542, 16
      %v1634 = vor.u32 %v1631, %v1632
      %v1635 = vsel %vm1568, %v1627, %v1634
      %v1636 = vrot.slane %v1631, 4
      %v1638 = vshrl.u32 %v1543, 16
      %v1640 = vrot.slane %v1638, 7
      %v1641 = vshll.u32 %v1543, 16
      %v1643 = vor.u32 %v1640, %v1641
      %v1644 = vrot.slane %v1640, 4
      %v1646 = vshrl.u32 %v1544, 16
      %v1648 = vrot.slane %v1646, 7
      %v1649 = vshll.u32 %v1544, 16
      %v1651 = vor.u32 %v1648, %v1649
      %v1652 = vsel %vm1568, %v1644, %v1651
      %v1653 = vrot.slane %v1648, 4
      %v1655 = vshrl.u32 %v1545, 16
      %v1657 = vrot.slane %v1655, 7
      %v1658 = vshll.u32 %v1545, 16
      %v1660 = vor.u32 %v1657, %v1658
      %v1661 = vrot.slane %v1657, 4
      %v1663 = vshrl.u32 %v1546, 16
      %v1665 = vrot.slane %v1663, 7
      %v1666 = vshll.u32 %v1546, 16
      %v1668 = vor.u32 %v1665, %v1666
      %v1669 = vsel %vm1568, %v1661, %v1668
      %v1670 = vrot.slane %v1665, 4
      %v1672 = vshrl.u32 %v1547, 16
      %v1674 = vrot.slane %v1672, 7
      %v1675 = vshll.u32 %v1547, 16
      %v1677 = vor.u32 %v1674, %v1675
      %v1678 = vrot.slane %v1674, 4
      %v1680 = vshrl.u32 %v1548, 16
      %v1682 = vrot.slane %v1680, 7
      %v1683 = vshll.u32 %v1548, 16
      %v1685 = vor.u32 %v1682, %v1683
      %v1686 = vsel %vm1568, %v1678, %v1685
      %v1687 = vrot.slane %v1682, 4
      %v1689 = vshrl.u32 %v1549, 16
      %v1691 = vrot.slane %v1689, 7
      %v1692 = vshll.u32 %v1549, 16
      %v1694 = vor.u32 %v1691, %v1692
      %v1695 = vrot.slane %v1691, 4
      %v1697 = vshrl.u32 %v1550, 16
      %v1699 = vrot.slane %v1697, 7
      %v1700 = vshll.u32 %v1550, 16
      %v1702 = vor.u32 %v1699, %v1700
      %v1703 = vsel %vm1568, %v1695, %v1702
      %v1704 = vrot.slane %v1699, 4
      %v1706 = vshrl.u32 %v1551, 16
      %v1708 = vrot.slane %v1706, 7
      %v1709 = vshll.u32 %v1551, 16
      %v1711 = vor.u32 %v1708, %v1709
      %v1712 = vrot.slane %v1708, 4
      %v1714 = vshrl.u32 %v1552, 16
      %v1716 = vrot.slane %v1714, 7
      %v1717 = vshll.u32 %v1552, 16
      %v1719 = vor.u32 %v1716, %v1717
      %v1720 = vsel %vm1568, %v1712, %v1719
      %v1721 = vrot.slane %v1716, 4
      %v1723 = vshrl.u32 %v1553, 16
      %v1725 = vrot.slane %v1723, 7
      %v1726 = vshll.u32 %v1553, 16
      %v1728 = vor.u32 %v1725, %v1726
      %v1729 = vrot.slane %v1725, 4
      %v1731 = vshrl.u32 %v1554, 16
      %v1733 = vrot.slane %v1731, 7
      %v1734 = vshll.u32 %v1554, 16
      %v1736 = vor.u32 %v1733, %v1734
      %v1737 = vsel %vm1568, %v1729, %v1736
      %v1738 = vrot.slane %v1733, 4
      %v1740 = vshrl.u32 %v1555, 16
      %v1742 = vrot.slane %v1740, 7
      %v1743 = vshll.u32 %v1555, 16
      %v1745 = vor.u32 %v1742, %v1743
      %v1746 = vrot.slane %v1742, 4
      %v1748 = vshrl.u32 %v1556, 16
      %v1750 = vrot.slane %v1748, 7
      %v1751 = vshll.u32 %v1556, 16
      %v1753 = vor.u32 %v1750, %v1751
      %v1754 = vsel %vm1568, %v1746, %v1753
      %v1755 = vrot.slane %v1750, 4
      %v1757 = vshrl.u32 %v1557, 16
      %v1759 = vrot.slane %v1757, 7
      %v1760 = vshll.u32 %v1557, 16
      %v1762 = vor.u32 %v1759, %v1760
      %v1763 = vrot.slane %v1759, 4
      %v1765 = vshrl.u32 %v1558, 16
      %v1767 = vrot.slane %v1765, 7
      %v1768 = vshll.u32 %v1558, 16
      %v1770 = vor.u32 %v1767, %v1768
      %v1771 = vsel %vm1568, %v1763, %v1770
      %v1772 = vrot.slane %v1767, 4
      %v1774 = vshrl.u32 %v1559, 16
      %v1776 = vrot.slane %v1774, 7
      %v1777 = vshll.u32 %v1559, 16
      %v1779 = vor.u32 %v1776, %v1777
      %v1780 = vrot.slane %v1776, 4
      %v1782 = vshrl.u32 %v1560, 16
      %v1784 = vrot.slane %v1782, 7
      %v1785 = vshll.u32 %v1560, 16
      %v1787 = vor.u32 %v1784, %v1785
      %v1788 = vsel %vm1568, %v1780, %v1787
      %v1789 = vrot.slane %v1784, 4
      %v1791 = vshrl.u32 %v1561, 16
      %v1793 = vrot.slane %v1791, 7
      %v1794 = vshll.u32 %v1561, 16
      %v1796 = vor.u32 %v1793, %v1794
      %v1797 = vrot.slane %v1793, 4
      %v1799 = vshrl.u32 %v1562, 16
      %v1801 = vrot.slane %v1799, 7
      %v1802 = vshll.u32 %v1562, 16
      %v1804 = vor.u32 %v1801, %v1802
      %v1805 = vsel %vm1568, %v1797, %v1804
      %v1806 = vrot.slane %v1801, 4
      %v1808 = vshrl.u32 %v1563, 16
      %v1810 = vrot.slane %v1808, 7
      %v1811 = vshll.u32 %v1563, 16
      %v1813 = vor.u32 %v1810, %v1811
      %v1814 = vrot.slane %v1810, 4
      %v1816 = vshrl.u32 %v1564, 16
      %v1818 = vrot.slane %v1816, 7
      %v1819 = vshll.u32 %v1564, 16
      %v1821 = vor.u32 %v1818, %v1819
      %v1822 = vsel %vm1568, %v1814, %v1821
      %v1823 = vrot.slane %v1818, 4
      %v1825 = vshrl.u32 %v1565, 16
      %v1827 = vrot.slane %v1825, 7
      %v1828 = vshll.u32 %v1565, 16
      %v1830 = vor.u32 %v1827, %v1828
      %v1831 = vrot.slane %v1827, 4
      %v1833 = vshrl.u32 %v1566, 16
      %v1835 = vrot.slane %v1833, 7
      %v1836 = vshll.u32 %v1566, 16
      %v1838 = vor.u32 %v1835, %v1836
      %v1839 = vsel %vm1568, %v1831, %v1838
      %v1840 = vrot.slane %v1835, 4
      %s1889 = scalar_lea.vmem [#allocation2], 12
      %vm1890 = vcmask 125952
      %vm1891 = vmand %vm1890, %vm339
      %v1892 = vld [vmem:[%s1889] sm:$0xf]
      %v1893 = vsel %vm1891, %v1575, %v1892
      %1894 = vst [vmem:[%s1889] sm:$0xf] %v1893
      %1895 = vst.msk [vmem:[%s1889 + $0x4] sm:$0xf] %vm273, %v1584
      %v1896 = vld [vmem:[%s1889 + $0x8] sm:$0x1]
      %v1897 = vsel %vm284, %v1585, %v1896
      %1898 = vst [vmem:[%s1889 + $0x8] sm:$0x1] %v1897
      %v1899 = vld [vmem:[%s1889 + $0xc] sm:$0xf]
      %v1900 = vsel %vm1891, %v1592, %v1899
      %1901 = vst [vmem:[%s1889 + $0xc] sm:$0xf] %v1900
      %1902 = vst.msk [vmem:[%s1889 + $0x10] sm:$0xf] %vm273, %v1601
      %v1903 = vld [vmem:[%s1889 + $0x14] sm:$0x1]
      %v1904 = vsel %vm284, %v1602, %v1903
      %1905 = vst [vmem:[%s1889 + $0x14] sm:$0x1] %v1904
      %v1906 = vld [vmem:[%s1889 + $0x18] sm:$0xf]
      %v1907 = vsel %vm1891, %v1609, %v1906
      %1908 = vst [vmem:[%s1889 + $0x18] sm:$0xf] %v1907
      %1909 = vst.msk [vmem:[%s1889 + $0x1c] sm:$0xf] %vm273, %v1618
      %v1910 = vld [vmem:[%s1889 + $0x20] sm:$0x1]
      %v1911 = vsel %vm284, %v1619, %v1910
      %1912 = vst [vmem:[%s1889 + $0x20] sm:$0x1] %v1911
      %v1913 = vld [vmem:[%s1889 + $0x24] sm:$0xf]
      %v1914 = vsel %vm1891, %v1626, %v1913
      %1915 = vst [vmem:[%s1889 + $0x24] sm:$0xf] %v1914
      %1916 = vst.msk [vmem:[%s1889 + $0x28] sm:$0xf] %vm273, %v1635
      %v1917 = vld [vmem:[%s1889 + $0x2c] sm:$0x1]
      %v1918 = vsel %vm284, %v1636, %v1917
      %1919 = vst [vmem:[%s1889 + $0x2c] sm:$0x1] %v1918
      %v1920 = vld [vmem:[%s1889 + $0x30] sm:$0xf]
      %v1921 = vsel %vm1891, %v1643, %v1920
      %1922 = vst [vmem:[%s1889 + $0x30] sm:$0xf] %v1921
      %1923 = vst.msk [vmem:[%s1889 + $0x34] sm:$0xf] %vm273, %v1652
      %v1924 = vld [vmem:[%s1889 + $0x38] sm:$0x1]
      %v1925 = vsel %vm284, %v1653, %v1924
      %1926 = vst [vmem:[%s1889 + $0x38] sm:$0x1] %v1925
      %v1927 = vld [vmem:[%s1889 + $0x3c] sm:$0xf]
      %v1928 = vsel %vm1891, %v1660, %v1927
      %1929 = vst [vmem:[%s1889 + $0x3c] sm:$0xf] %v1928
      %1930 = vst.msk [vmem:[%s1889 + $0x40] sm:$0xf] %vm273, %v1669
      %v1931 = vld [vmem:[%s1889 + $0x44] sm:$0x1]
      %v1932 = vsel %vm284, %v1670, %v1931
      %1933 = vst [vmem:[%s1889 + $0x44] sm:$0x1] %v1932
      %v1934 = vld [vmem:[%s1889 + $0x48] sm:$0xf]
      %v1935 = vsel %vm1891, %v1677, %v1934
      %1936 = vst [vmem:[%s1889 + $0x48] sm:$0xf] %v1935
      %1937 = vst.msk [vmem:[%s1889 + $0x4c] sm:$0xf] %vm273, %v1686
      %v1938 = vld [vmem:[%s1889 + $0x50] sm:$0x1]
      %v1939 = vsel %vm284, %v1687, %v1938
      %1940 = vst [vmem:[%s1889 + $0x50] sm:$0x1] %v1939
      %v1941 = vld [vmem:[%s1889 + $0x54] sm:$0xf]
      %v1942 = vsel %vm1891, %v1694, %v1941
      %1943 = vst [vmem:[%s1889 + $0x54] sm:$0xf] %v1942
      %1944 = vst.msk [vmem:[%s1889 + $0x58] sm:$0xf] %vm273, %v1703
      %v1945 = vld [vmem:[%s1889 + $0x5c] sm:$0x1]
      %v1946 = vsel %vm284, %v1704, %v1945
      %1947 = vst [vmem:[%s1889 + $0x5c] sm:$0x1] %v1946
      %v1948 = vld [vmem:[%s1889 + $0x60] sm:$0xf]
      %v1949 = vsel %vm1891, %v1711, %v1948
      %1950 = vst [vmem:[%s1889 + $0x60] sm:$0xf] %v1949
      %1951 = vst.msk [vmem:[%s1889 + $0x64] sm:$0xf] %vm273, %v1720
      %v1952 = vld [vmem:[%s1889 + $0x68] sm:$0x1]
      %v1953 = vsel %vm284, %v1721, %v1952
      %1954 = vst [vmem:[%s1889 + $0x68] sm:$0x1] %v1953
      %v1955 = vld [vmem:[%s1889 + $0x6c] sm:$0xf]
      %v1956 = vsel %vm1891, %v1728, %v1955
      %1957 = vst [vmem:[%s1889 + $0x6c] sm:$0xf] %v1956
      %1958 = vst.msk [vmem:[%s1889 + $0x70] sm:$0xf] %vm273, %v1737
      %v1959 = vld [vmem:[%s1889 + $0x74] sm:$0x1]
      %v1960 = vsel %vm284, %v1738, %v1959
      %1961 = vst [vmem:[%s1889 + $0x74] sm:$0x1] %v1960
      %v1962 = vld [vmem:[%s1889 + $0x78] sm:$0xf]
      %v1963 = vsel %vm1891, %v1745, %v1962
      %1964 = vst [vmem:[%s1889 + $0x78] sm:$0xf] %v1963
      %1965 = vst.msk [vmem:[%s1889 + $0x7c] sm:$0xf] %vm273, %v1754
      %v1966 = vld [vmem:[%s1889 + $0x80] sm:$0x1]
      %v1967 = vsel %vm284, %v1755, %v1966
      %1968 = vst [vmem:[%s1889 + $0x80] sm:$0x1] %v1967
      %v1969 = vld [vmem:[%s1889 + $0x84] sm:$0xf]
      %v1970 = vsel %vm1891, %v1762, %v1969
      %1971 = vst [vmem:[%s1889 + $0x84] sm:$0xf] %v1970
      %1972 = vst.msk [vmem:[%s1889 + $0x88] sm:$0xf] %vm273, %v1771
      %v1973 = vld [vmem:[%s1889 + $0x8c] sm:$0x1]
      %v1974 = vsel %vm284, %v1772, %v1973
      %1975 = vst [vmem:[%s1889 + $0x8c] sm:$0x1] %v1974
      %v1976 = vld [vmem:[%s1889 + $0x90] sm:$0xf]
      %v1977 = vsel %vm1891, %v1779, %v1976
      %1978 = vst [vmem:[%s1889 + $0x90] sm:$0xf] %v1977
      %1979 = vst.msk [vmem:[%s1889 + $0x94] sm:$0xf] %vm273, %v1788
      %v1980 = vld [vmem:[%s1889 + $0x98] sm:$0x1]
      %v1981 = vsel %vm284, %v1789, %v1980
      %1982 = vst [vmem:[%s1889 + $0x98] sm:$0x1] %v1981
      %v1983 = vld [vmem:[%s1889 + $0x9c] sm:$0xf]
      %v1984 = vsel %vm1891, %v1796, %v1983
      %1985 = vst [vmem:[%s1889 + $0x9c] sm:$0xf] %v1984
      %1986 = vst.msk [vmem:[%s1889 + $0xa0] sm:$0xf] %vm273, %v1805
      %v1987 = vld [vmem:[%s1889 + $0xa4] sm:$0x1]
      %v1988 = vsel %vm284, %v1806, %v1987
      %1989 = vst [vmem:[%s1889 + $0xa4] sm:$0x1] %v1988
      %v1990 = vld [vmem:[%s1889 + $0xa8] sm:$0xf]
      %v1991 = vsel %vm1891, %v1813, %v1990
      %1992 = vst [vmem:[%s1889 + $0xa8] sm:$0xf] %v1991
      %1993 = vst.msk [vmem:[%s1889 + $0xac] sm:$0xf] %vm273, %v1822
      %v1994 = vld [vmem:[%s1889 + $0xb0] sm:$0x1]
      %v1995 = vsel %vm284, %v1823, %v1994
      %1996 = vst [vmem:[%s1889 + $0xb0] sm:$0x1] %v1995
      %v1997 = vld [vmem:[%s1889 + $0xb4] sm:$0xf]
      %v1998 = vsel %vm1891, %v1830, %v1997
      %1999 = vst [vmem:[%s1889 + $0xb4] sm:$0xf] %v1998
      %2000 = vst.msk [vmem:[%s1889 + $0xb8] sm:$0xf] %vm273, %v1839
      %v2001 = vld [vmem:[%s1889 + $0xbc] sm:$0x1]
      %v2002 = vsel %vm284, %v1840, %v2001
      %2003 = vst [vmem:[%s1889 + $0xbc] sm:$0x1] %v2002
      %v2004 = vld [vmem:[%s2] sm:$0xf]
      %v2005 = vld [vmem:[%s2 + $0x4] sm:$0xf]
      %v2006 = vld [vmem:[%s2 + $0x8] sm:$0xf]
      %v2007 = vld [vmem:[%s2 + $0xc] sm:$0xf]
      %v2008 = vld [vmem:[%s2 + $0x10] sm:$0xf]
      %v2009 = vld [vmem:[%s2 + $0x14] sm:$0xf]
      %v2010 = vld [vmem:[%s2 + $0x18] sm:$0xf]
      %v2011 = vld [vmem:[%s2 + $0x1c] sm:$0xf]
      %v2012 = vld [vmem:[%s2 + $0x20] sm:$0xf]
      %v2013 = vld [vmem:[%s2 + $0x24] sm:$0xf]
      %v2014 = vld [vmem:[%s2 + $0x28] sm:$0xf]
      %v2015 = vld [vmem:[%s2 + $0x2c] sm:$0xf]
      %v2016 = vld [vmem:[%s2 + $0x30] sm:$0xf]
      %v2017 = vld [vmem:[%s2 + $0x34] sm:$0xf]
      %v2018 = vld [vmem:[%s2 + $0x38] sm:$0xf]
      %v2019 = vld [vmem:[%s2 + $0x3c] sm:$0xf]
      %v2020 = vld [vmem:[%s2 + $0x40] sm:$0xf]
      %v2021 = vld [vmem:[%s2 + $0x44] sm:$0xf]
      %v2022 = vld [vmem:[%s3] sm:$0x1]
      %v2023 = vld [vmem:[#allocation2] sm:$0xf]
      %v2024 = vld [vmem:[#allocation2 + $0x4] sm:$0xf]
      %v2025 = vld [vmem:[#allocation2 + $0xc] sm:$0xf]
      %v2026 = vld [vmem:[#allocation2 + $0x10] sm:$0xf]
      %v2027 = vld [vmem:[#allocation2 + $0x18] sm:$0xf]
      %v2028 = vld [vmem:[#allocation2 + $0x1c] sm:$0xf]
      %v2029 = vld [vmem:[#allocation2 + $0x24] sm:$0xf]
      %v2030 = vld [vmem:[#allocation2 + $0x28] sm:$0xf]
      %v2031 = vld [vmem:[#allocation2 + $0x30] sm:$0xf]
      %v2032 = vld [vmem:[#allocation2 + $0x34] sm:$0xf]
      %v2033 = vld [vmem:[#allocation2 + $0x3c] sm:$0xf]
      %v2034 = vld [vmem:[#allocation2 + $0x40] sm:$0xf]
      %v2035 = vld [vmem:[#allocation2 + $0x48] sm:$0xf]
      %v2036 = vld [vmem:[#allocation2 + $0x4c] sm:$0xf]
      %v2037 = vld [vmem:[#allocation2 + $0x54] sm:$0xf]
      %v2038 = vld [vmem:[#allocation2 + $0x58] sm:$0xf]
      %v2039 = vld [vmem:[#allocation2 + $0x60] sm:$0xf]
      %v2040 = vld [vmem:[#allocation2 + $0x64] sm:$0xf]
      %v2041 = vld [vmem:[#allocation2 + $0x6c] sm:$0xf]
      %v2042 = vld [vmem:[#allocation2 + $0x70] sm:$0xf]
      %v2043 = vld [vmem:[#allocation2 + $0x78] sm:$0xf]
      %v2044 = vld [vmem:[#allocation2 + $0x7c] sm:$0xf]
      %v2045 = vld [vmem:[#allocation2 + $0x84] sm:$0xf]
      %v2046 = vld [vmem:[#allocation2 + $0x88] sm:$0xf]
      %v2047 = vld [vmem:[#allocation2 + $0x90] sm:$0xf]
      %v2048 = vld [vmem:[#allocation2 + $0x94] sm:$0xf]
      %v2049 = vld [vmem:[#allocation2 + $0x9c] sm:$0xf]
      %v2050 = vld [vmem:[#allocation2 + $0xa0] sm:$0xf]
      %v2051 = vld [vmem:[#allocation2 + $0xa8] sm:$0xf]
      %v2052 = vld [vmem:[#allocation2 + $0xac] sm:$0xf]
      %v2053 = vld [vmem:[#allocation2 + $0xb4] sm:$0xf]
      %v2054 = vld [vmem:[#allocation2 + $0xb8] sm:$0xf]
      %v2055 = vld [vmem:[#allocation2 + $0x8] sm:$0x1]
      %v2056 = vld [vmem:[#allocation2 + $0x14] sm:$0x1]
      %v2057 = vld [vmem:[#allocation2 + $0x20] sm:$0x1]
      %v2058 = vld [vmem:[#allocation2 + $0x2c] sm:$0x1]
      %v2059 = vld [vmem:[#allocation2 + $0x38] sm:$0x1]
      %v2060 = vld [vmem:[#allocation2 + $0x44] sm:$0x1]
      %v2061 = vld [vmem:[#allocation2 + $0x50] sm:$0x1]
      %v2062 = vld [vmem:[#allocation2 + $0x5c] sm:$0x1]
      %v2063 = vld [vmem:[#allocation2 + $0x68] sm:$0x1]
      %v2064 = vld [vmem:[#allocation2 + $0x74] sm:$0x1]
      %v2065 = vld [vmem:[#allocation2 + $0x80] sm:$0x1]
      %v2066 = vld [vmem:[#allocation2 + $0x8c] sm:$0x1]
      %v2067 = vld [vmem:[#allocation2 + $0x98] sm:$0x1]
      %v2068 = vld [vmem:[#allocation2 + $0xa4] sm:$0x1]
      %v2069 = vld [vmem:[#allocation2 + $0xb0] sm:$0x1]
      %v2070 = vld [vmem:[#allocation2 + $0xbc] sm:$0x1]
      %vm2071 = vsmask.f32 3328
      %vm2072 = vsmask.f32 7440
      %vm2073 = vmor %vm2071, %vm2072
      %v2075 = vshrl.u32 %v2023, 16
      %v2077 = vrot.slane %v2075, 4
      %v2078 = vshll.u32 %v2023, 16
      %v2080 = vrot.slane %v2078, 5
      %v2081 = vor.u32 %v2077, %v2080
      %v2082 = vrot.slane %v2081, 4
      %v2084 = vshll.u32 %v2024, 16
      %v2086 = vrot.slane %v2084, 5
      %v2087 = vsel %vm2073, %v2082, %v2086
      %v2088 = vshrl.u32 %v2024, 16
      %v2090 = vrot.slane %v2088, 4
      %v2091 = vor.u32 %v2090, %v2086
      %v2092 = vrot.slane %v2091, 4
      %v2094 = vshll.u32 %v2055, 16
      %v2096 = vrot.slane %v2094, 5
      %v2097 = vsel %vm2073, %v2092, %v2096
      %v2099 = vshrl.u32 %v2025, 16
      %v2101 = vrot.slane %v2099, 4
      %v2102 = vshll.u32 %v2025, 16
      %v2104 = vrot.slane %v2102, 5
      %v2105 = vor.u32 %v2101, %v2104
      %v2106 = vrot.slane %v2105, 4
      %v2108 = vshll.u32 %v2026, 16
      %v2110 = vrot.slane %v2108, 5
      %v2111 = vsel %vm2073, %v2106, %v2110
      %v2112 = vshrl.u32 %v2026, 16
      %v2114 = vrot.slane %v2112, 4
      %v2115 = vor.u32 %v2114, %v2110
      %v2116 = vrot.slane %v2115, 4
      %v2118 = vshll.u32 %v2056, 16
      %v2120 = vrot.slane %v2118, 5
      %v2121 = vsel %vm2073, %v2116, %v2120
      %v2123 = vshrl.u32 %v2027, 16
      %v2125 = vrot.slane %v2123, 4
      %v2126 = vshll.u32 %v2027, 16
      %v2128 = vrot.slane %v2126, 5
      %v2129 = vor.u32 %v2125, %v2128
      %v2130 = vrot.slane %v2129, 4
      %v2132 = vshll.u32 %v2028, 16
      %v2134 = vrot.slane %v2132, 5
      %v2135 = vsel %vm2073, %v2130, %v2134
      %v2136 = vshrl.u32 %v2028, 16
      %v2138 = vrot.slane %v2136, 4
      %v2139 = vor.u32 %v2138, %v2134
      %v2140 = vrot.slane %v2139, 4
      %v2142 = vshll.u32 %v2057, 16
      %v2144 = vrot.slane %v2142, 5
      %v2145 = vsel %vm2073, %v2140, %v2144
      %v2147 = vshrl.u32 %v2029, 16
      %v2149 = vrot.slane %v2147, 4
      %v2150 = vshll.u32 %v2029, 16
      %v2152 = vrot.slane %v2150, 5
      %v2153 = vor.u32 %v2149, %v2152
      %v2154 = vrot.slane %v2153, 4
      %v2156 = vshll.u32 %v2030, 16
      %v2158 = vrot.slane %v2156, 5
      %v2159 = vsel %vm2073, %v2154, %v2158
      %v2160 = vshrl.u32 %v2030, 16
      %v2162 = vrot.slane %v2160, 4
      %v2163 = vor.u32 %v2162, %v2158
      %v2164 = vrot.slane %v2163, 4
      %v2166 = vshll.u32 %v2058, 16
      %v2168 = vrot.slane %v2166, 5
      %v2169 = vsel %vm2073, %v2164, %v2168
      %v2171 = vshrl.u32 %v2031, 16
      %v2173 = vrot.slane %v2171, 4
      %v2174 = vshll.u32 %v2031, 16
      %v2176 = vrot.slane %v2174, 5
      %v2177 = vor.u32 %v2173, %v2176
      %v2178 = vrot.slane %v2177, 4
      %v2180 = vshll.u32 %v2032, 16
      %v2182 = vrot.slane %v2180, 5
      %v2183 = vsel %vm2073, %v2178, %v2182
      %v2184 = vshrl.u32 %v2032, 16
      %v2186 = vrot.slane %v2184, 4
      %v2187 = vor.u32 %v2186, %v2182
      %v2188 = vrot.slane %v2187, 4
      %v2190 = vshll.u32 %v2059, 16
      %v2192 = vrot.slane %v2190, 5
      %v2193 = vsel %vm2073, %v2188, %v2192
      %v2195 = vshrl.u32 %v2033, 16
      %v2197 = vrot.slane %v2195, 4
      %v2198 = vshll.u32 %v2033, 16
      %v2200 = vrot.slane %v2198, 5
      %v2201 = vor.u32 %v2197, %v2200
      %v2202 = vrot.slane %v2201, 4
      %v2204 = vshll.u32 %v2034, 16
      %v2206 = vrot.slane %v2204, 5
      %v2207 = vsel %vm2073, %v2202, %v2206
      %v2208 = vshrl.u32 %v2034, 16
      %v2210 = vrot.slane %v2208, 4
      %v2211 = vor.u32 %v2210, %v2206
      %v2212 = vrot.slane %v2211, 4
      %v2214 = vshll.u32 %v2060, 16
      %v2216 = vrot.slane %v2214, 5
      %v2217 = vsel %vm2073, %v2212, %v2216
      %v2219 = vshrl.u32 %v2035, 16
      %v2221 = vrot.slane %v2219, 4
      %v2222 = vshll.u32 %v2035, 16
      %v2224 = vrot.slane %v2222, 5
      %v2225 = vor.u32 %v2221, %v2224
      %v2226 = vrot.slane %v2225, 4
      %v2228 = vshll.u32 %v2036, 16
      %v2230 = vrot.slane %v2228, 5
      %v2231 = vsel %vm2073, %v2226, %v2230
      %v2232 = vshrl.u32 %v2036, 16
      %v2234 = vrot.slane %v2232, 4
      %v2235 = vor.u32 %v2234, %v2230
      %v2236 = vrot.slane %v2235, 4
      %v2238 = vshll.u32 %v2061, 16
      %v2240 = vrot.slane %v2238, 5
      %v2241 = vsel %vm2073, %v2236, %v2240
      %v2243 = vshrl.u32 %v2037, 16
      %v2245 = vrot.slane %v2243, 4
      %v2246 = vshll.u32 %v2037, 16
      %v2248 = vrot.slane %v2246, 5
      %v2249 = vor.u32 %v2245, %v2248
      %v2250 = vrot.slane %v2249, 4
      %v2252 = vshll.u32 %v2038, 16
      %v2254 = vrot.slane %v2252, 5
      %v2255 = vsel %vm2073, %v2250, %v2254
      %v2256 = vshrl.u32 %v2038, 16
      %v2258 = vrot.slane %v2256, 4
      %v2259 = vor.u32 %v2258, %v2254
      %v2260 = vrot.slane %v2259, 4
      %v2262 = vshll.u32 %v2062, 16
      %v2264 = vrot.slane %v2262, 5
      %v2265 = vsel %vm2073, %v2260, %v2264
      %v2267 = vshrl.u32 %v2039, 16
      %v2269 = vrot.slane %v2267, 4
      %v2270 = vshll.u32 %v2039, 16
      %v2272 = vrot.slane %v2270, 5
      %v2273 = vor.u32 %v2269, %v2272
      %v2274 = vrot.slane %v2273, 4
      %v2276 = vshll.u32 %v2040, 16
      %v2278 = vrot.slane %v2276, 5
      %v2279 = vsel %vm2073, %v2274, %v2278
      %v2280 = vshrl.u32 %v2040, 16
      %v2282 = vrot.slane %v2280, 4
      %v2283 = vor.u32 %v2282, %v2278
      %v2284 = vrot.slane %v2283, 4
      %v2286 = vshll.u32 %v2063, 16
      %v2288 = vrot.slane %v2286, 5
      %v2289 = vsel %vm2073, %v2284, %v2288
      %v2291 = vshrl.u32 %v2041, 16
      %v2293 = vrot.slane %v2291, 4
      %v2294 = vshll.u32 %v2041, 16
      %v2296 = vrot.slane %v2294, 5
      %v2297 = vor.u32 %v2293, %v2296
      %v2298 = vrot.slane %v2297, 4
      %v2300 = vshll.u32 %v2042, 16
      %v2302 = vrot.slane %v2300, 5
      %v2303 = vsel %vm2073, %v2298, %v2302
      %v2304 = vshrl.u32 %v2042, 16
      %v2306 = vrot.slane %v2304, 4
      %v2307 = vor.u32 %v2306, %v2302
      %v2308 = vrot.slane %v2307, 4
      %v2310 = vshll.u32 %v2064, 16
      %v2312 = vrot.slane %v2310, 5
      %v2313 = vsel %vm2073, %v2308, %v2312
      %v2315 = vshrl.u32 %v2043, 16
      %v2317 = vrot.slane %v2315, 4
      %v2318 = vshll.u32 %v2043, 16
      %v2320 = vrot.slane %v2318, 5
      %v2321 = vor.u32 %v2317, %v2320
      %v2322 = vrot.slane %v2321, 4
      %v2324 = vshll.u32 %v2044, 16
      %v2326 = vrot.slane %v2324, 5
      %v2327 = vsel %vm2073, %v2322, %v2326
      %v2328 = vshrl.u32 %v2044, 16
      %v2330 = vrot.slane %v2328, 4
      %v2331 = vor.u32 %v2330, %v2326
      %v2332 = vrot.slane %v2331, 4
      %v2334 = vshll.u32 %v2065, 16
      %v2336 = vrot.slane %v2334, 5
      %v2337 = vsel %vm2073, %v2332, %v2336
      %v2339 = vshrl.u32 %v2045, 16
      %v2341 = vrot.slane %v2339, 4
      %v2342 = vshll.u32 %v2045, 16
      %v2344 = vrot.slane %v2342, 5
      %v2345 = vor.u32 %v2341, %v2344
      %v2346 = vrot.slane %v2345, 4
      %v2348 = vshll.u32 %v2046, 16
      %v2350 = vrot.slane %v2348, 5
      %v2351 = vsel %vm2073, %v2346, %v2350
      %v2352 = vshrl.u32 %v2046, 16
      %v2354 = vrot.slane %v2352, 4
      %v2355 = vor.u32 %v2354, %v2350
      %v2356 = vrot.slane %v2355, 4
      %v2358 = vshll.u32 %v2066, 16
      %v2360 = vrot.slane %v2358, 5
      %v2361 = vsel %vm2073, %v2356, %v2360
      %v2363 = vshrl.u32 %v2047, 16
      %v2365 = vrot.slane %v2363, 4
      %v2366 = vshll.u32 %v2047, 16
      %v2368 = vrot.slane %v2366, 5
      %v2369 = vor.u32 %v2365, %v2368
      %v2370 = vrot.slane %v2369, 4
      %v2372 = vshll.u32 %v2048, 16
      %v2374 = vrot.slane %v2372, 5
      %v2375 = vsel %vm2073, %v2370, %v2374
      %v2376 = vshrl.u32 %v2048, 16
      %v2378 = vrot.slane %v2376, 4
      %v2379 = vor.u32 %v2378, %v2374
      %v2380 = vrot.slane %v2379, 4
      %v2382 = vshll.u32 %v2067, 16
      %v2384 = vrot.slane %v2382, 5
      %v2385 = vsel %vm2073, %v2380, %v2384
      %v2387 = vshrl.u32 %v2049, 16
      %v2389 = vrot.slane %v2387, 4
      %v2390 = vshll.u32 %v2049, 16
      %v2392 = vrot.slane %v2390, 5
      %v2393 = vor.u32 %v2389, %v2392
      %v2394 = vrot.slane %v2393, 4
      %v2396 = vshll.u32 %v2050, 16
      %v2398 = vrot.slane %v2396, 5
      %v2399 = vsel %vm2073, %v2394, %v2398
      %v2400 = vshrl.u32 %v2050, 16
      %v2402 = vrot.slane %v2400, 4
      %v2403 = vor.u32 %v2402, %v2398
      %v2404 = vrot.slane %v2403, 4
      %v2406 = vshll.u32 %v2068, 16
      %v2408 = vrot.slane %v2406, 5
      %v2409 = vsel %vm2073, %v2404, %v2408
      %v2411 = vshrl.u32 %v2051, 16
      %v2413 = vrot.slane %v2411, 4
      %v2414 = vshll.u32 %v2051, 16
      %v2416 = vrot.slane %v2414, 5
      %v2417 = vor.u32 %v2413, %v2416
      %v2418 = vrot.slane %v2417, 4
      %v2420 = vshll.u32 %v2052, 16
      %v2422 = vrot.slane %v2420, 5
      %v2423 = vsel %vm2073, %v2418, %v2422
      %v2424 = vshrl.u32 %v2052, 16
      %v2426 = vrot.slane %v2424, 4
      %v2427 = vor.u32 %v2426, %v2422
      %v2428 = vrot.slane %v2427, 4
      %v2430 = vshll.u32 %v2069, 16
      %v2432 = vrot.slane %v2430, 5
      %v2433 = vsel %vm2073, %v2428, %v2432
      %v2435 = vshrl.u32 %v2053, 16
      %v2437 = vrot.slane %v2435, 4
      %v2438 = vshll.u32 %v2053, 16
      %v2440 = vrot.slane %v2438, 5
      %v2441 = vor.u32 %v2437, %v2440
      %v2442 = vrot.slane %v2441, 4
      %v2444 = vshll.u32 %v2054, 16
      %v2446 = vrot.slane %v2444, 5
      %v2447 = vsel %vm2073, %v2442, %v2446
      %v2448 = vshrl.u32 %v2054, 16
      %v2450 = vrot.slane %v2448, 4
      %v2451 = vor.u32 %v2450, %v2446
      %v2452 = vrot.slane %v2451, 4
      %v2454 = vshll.u32 %v2070, 16
      %v2456 = vrot.slane %v2454, 5
      %v2457 = vsel %vm2073, %v2452, %v2456
      %v2458 = vld [vmem:[#allocation2] sm:$0xe]
      %v2459 = vld [vmem:[#allocation2 + $0xc] sm:$0xe]
      %v2460 = vld [vmem:[#allocation2 + $0x18] sm:$0xe]
      %v2461 = vld [vmem:[#allocation2 + $0x24] sm:$0xe]
      %v2462 = vld [vmem:[#allocation2 + $0x30] sm:$0xe]
      %v2463 = vld [vmem:[#allocation2 + $0x3c] sm:$0xe]
      %v2464 = vld [vmem:[#allocation2 + $0x48] sm:$0xe]
      %v2465 = vld [vmem:[#allocation2 + $0x54] sm:$0xe]
      %v2466 = vld [vmem:[#allocation2 + $0x60] sm:$0xe]
      %v2467 = vld [vmem:[#allocation2 + $0x6c] sm:$0xe]
      %v2468 = vld [vmem:[#allocation2 + $0x78] sm:$0xe]
      %v2469 = vld [vmem:[#allocation2 + $0x84] sm:$0xe]
      %v2470 = vld [vmem:[#allocation2 + $0x90] sm:$0xe]
      %v2471 = vld [vmem:[#allocation2 + $0x9c] sm:$0xe]
      %v2472 = vld [vmem:[#allocation2 + $0xa8] sm:$0xe]
      %v2473 = vld [vmem:[#allocation2 + $0xb4] sm:$0xe]
      %vm2522 = vcmask 1042432
      %vm2523 = vcmask 1046532
      %vm2524 = vmor %vm2522, %vm2523
      %v2525 = vrot.slane %v2458, 5
      %v2526 = vrot.slane %v2525, 4
      %v2527 = vrot.slane %v2024, 5
      %v2528 = vsel %vm2524, %v2526, %v2527
      %v2529 = vrot.slane %v2527, 4
      %v2530 = vrot.slane %v2055, 5
      %v2531 = vsel %vm2524, %v2529, %v2530
      %v2532 = vrot.slane %v2459, 5
      %v2533 = vrot.slane %v2532, 4
      %v2534 = vrot.slane %v2026, 5
      %v2535 = vsel %vm2524, %v2533, %v2534
      %v2536 = vrot.slane %v2534, 4
      %v2537 = vrot.slane %v2056, 5
      %v2538 = vsel %vm2524, %v2536, %v2537
      %v2539 = vrot.slane %v2460, 5
      %v2540 = vrot.slane %v2539, 4
      %v2541 = vrot.slane %v2028, 5
      %v2542 = vsel %vm2524, %v2540, %v2541
      %v2543 = vrot.slane %v2541, 4
      %v2544 = vrot.slane %v2057, 5
      %v2545 = vsel %vm2524, %v2543, %v2544
      %v2546 = vrot.slane %v2461, 5
      %v2547 = vrot.slane %v2546, 4
      %v2548 = vrot.slane %v2030, 5
      %v2549 = vsel %vm2524, %v2547, %v2548
      %v2550 = vrot.slane %v2548, 4
      %v2551 = vrot.slane %v2058, 5
      %v2552 = vsel %vm2524, %v2550, %v2551
      %v2553 = vrot.slane %v2462, 5
      %v2554 = vrot.slane %v2553, 4
      %v2555 = vrot.slane %v2032, 5
      %v2556 = vsel %vm2524, %v2554, %v2555
      %v2557 = vrot.slane %v2555, 4
      %v2558 = vrot.slane %v2059, 5
      %v2559 = vsel %vm2524, %v2557, %v2558
      %v2560 = vrot.slane %v2463, 5
      %v2561 = vrot.slane %v2560, 4
      %v2562 = vrot.slane %v2034, 5
      %v2563 = vsel %vm2524, %v2561, %v2562
      %v2564 = vrot.slane %v2562, 4
      %v2565 = vrot.slane %v2060, 5
      %v2566 = vsel %vm2524, %v2564, %v2565
      %v2567 = vrot.slane %v2464, 5
      %v2568 = vrot.slane %v2567, 4
      %v2569 = vrot.slane %v2036, 5
      %v2570 = vsel %vm2524, %v2568, %v2569
      %v2571 = vrot.slane %v2569, 4
      %v2572 = vrot.slane %v2061, 5
      %v2573 = vsel %vm2524, %v2571, %v2572
      %v2574 = vrot.slane %v2465, 5
      %v2575 = vrot.slane %v2574, 4
      %v2576 = vrot.slane %v2038, 5
      %v2577 = vsel %vm2524, %v2575, %v2576
      %v2578 = vrot.slane %v2576, 4
      %v2579 = vrot.slane %v2062, 5
      %v2580 = vsel %vm2524, %v2578, %v2579
      %v2581 = vrot.slane %v2466, 5
      %v2582 = vrot.slane %v2581, 4
      %v2583 = vrot.slane %v2040, 5
      %v2584 = vsel %vm2524, %v2582, %v2583
      %v2585 = vrot.slane %v2583, 4
      %v2586 = vrot.slane %v2063, 5
      %v2587 = vsel %vm2524, %v2585, %v2586
      %v2588 = vrot.slane %v2467, 5
      %v2589 = vrot.slane %v2588, 4
      %v2590 = vrot.slane %v2042, 5
      %v2591 = vsel %vm2524, %v2589, %v2590
      %v2592 = vrot.slane %v2590, 4
      %v2593 = vrot.slane %v2064, 5
      %v2594 = vsel %vm2524, %v2592, %v2593
      %v2595 = vrot.slane %v2468, 5
      %v2596 = vrot.slane %v2595, 4
      %v2597 = vrot.slane %v2044, 5
      %v2598 = vsel %vm2524, %v2596, %v2597
      %v2599 = vrot.slane %v2597, 4
      %v2600 = vrot.slane %v2065, 5
      %v2601 = vsel %vm2524, %v2599, %v2600
      %v2602 = vrot.slane %v2469, 5
      %v2603 = vrot.slane %v2602, 4
      %v2604 = vrot.slane %v2046, 5
      %v2605 = vsel %vm2524, %v2603, %v2604
      %v2606 = vrot.slane %v2604, 4
      %v2607 = vrot.slane %v2066, 5
      %v2608 = vsel %vm2524, %v2606, %v2607
      %v2609 = vrot.slane %v2470, 5
      %v2610 = vrot.slane %v2609, 4
      %v2611 = vrot.slane %v2048, 5
      %v2612 = vsel %vm2524, %v2610, %v2611
      %v2613 = vrot.slane %v2611, 4
      %v2614 = vrot.slane %v2067, 5
      %v2615 = vsel %vm2524, %v2613, %v2614
      %v2616 = vrot.slane %v2471, 5
      %v2617 = vrot.slane %v2616, 4
      %v2618 = vrot.slane %v2050, 5
      %v2619 = vsel %vm2524, %v2617, %v2618
      %v2620 = vrot.slane %v2618, 4
      %v2621 = vrot.slane %v2068, 5
      %v2622 = vsel %vm2524, %v2620, %v2621
      %v2623 = vrot.slane %v2472, 5
      %v2624 = vrot.slane %v2623, 4
      %v2625 = vrot.slane %v2052, 5
      %v2626 = vsel %vm2524, %v2624, %v2625
      %v2627 = vrot.slane %v2625, 4
      %v2628 = vrot.slane %v2069, 5
      %v2629 = vsel %vm2524, %v2627, %v2628
      %v2630 = vrot.slane %v2473, 5
      %v2631 = vrot.slane %v2630, 4
      %v2632 = vrot.slane %v2054, 5
      %v2633 = vsel %vm2524, %v2631, %v2632
      %v2634 = vrot.slane %v2632, 4
      %v2635 = vrot.slane %v2070, 5
      %v2636 = vsel %vm2524, %v2634, %v2635
      %v2637 = vld [vmem:[%s1889] sm:$0xf]
      %v2638 = vld [vmem:[%s1889 + $0x4] sm:$0xf]
      %v2639 = vld [vmem:[%s1889 + $0xc] sm:$0xf]
      %v2640 = vld [vmem:[%s1889 + $0x10] sm:$0xf]
      %v2641 = vld [vmem:[%s1889 + $0x18] sm:$0xf]
      %v2642 = vld [vmem:[%s1889 + $0x1c] sm:$0xf]
      %v2643 = vld [vmem:[%s1889 + $0x24] sm:$0xf]
      %v2644 = vld [vmem:[%s1889 + $0x28] sm:$0xf]
      %v2645 = vld [vmem:[%s1889 + $0x30] sm:$0xf]
      %v2646 = vld [vmem:[%s1889 + $0x34] sm:$0xf]
      %v2647 = vld [vmem:[%s1889 + $0x3c] sm:$0xf]
      %v2648 = vld [vmem:[%s1889 + $0x40] sm:$0xf]
      %v2649 = vld [vmem:[%s1889 + $0x48] sm:$0xf]
      %v2650 = vld [vmem:[%s1889 + $0x4c] sm:$0xf]
      %v2651 = vld [vmem:[%s1889 + $0x54] sm:$0xf]
      %v2652 = vld [vmem:[%s1889 + $0x58] sm:$0xf]
      %v2653 = vld [vmem:[%s1889 + $0x60] sm:$0xf]
      %v2654 = vld [vmem:[%s1889 + $0x64] sm:$0xf]
      %v2655 = vld [vmem:[%s1889 + $0x6c] sm:$0xf]
      %v2656 = vld [vmem:[%s1889 + $0x70] sm:$0xf]
      %v2657 = vld [vmem:[%s1889 + $0x78] sm:$0xf]
      %v2658 = vld [vmem:[%s1889 + $0x7c] sm:$0xf]
      %v2659 = vld [vmem:[%s1889 + $0x84] sm:$0xf]
      %v2660 = vld [vmem:[%s1889 + $0x88] sm:$0xf]
      %v2661 = vld [vmem:[%s1889 + $0x90] sm:$0xf]
      %v2662 = vld [vmem:[%s1889 + $0x94] sm:$0xf]
      %v2663 = vld [vmem:[%s1889 + $0x9c] sm:$0xf]
      %v2664 = vld [vmem:[%s1889 + $0xa0] sm:$0xf]
      %v2665 = vld [vmem:[%s1889 + $0xa8] sm:$0xf]
      %v2666 = vld [vmem:[%s1889 + $0xac] sm:$0xf]
      %v2667 = vld [vmem:[%s1889 + $0xb4] sm:$0xf]
      %v2668 = vld [vmem:[%s1889 + $0xb8] sm:$0xf]
      %v2669 = vld [vmem:[%s1889 + $0x8] sm:$0x1]
      %v2670 = vld [vmem:[%s1889 + $0x14] sm:$0x1]
      %v2671 = vld [vmem:[%s1889 + $0x20] sm:$0x1]
      %v2672 = vld [vmem:[%s1889 + $0x2c] sm:$0x1]
      %v2673 = vld [vmem:[%s1889 + $0x38] sm:$0x1]
      %v2674 = vld [vmem:[%s1889 + $0x44] sm:$0x1]
      %v2675 = vld [vmem:[%s1889 + $0x50] sm:$0x1]
      %v2676 = vld [vmem:[%s1889 + $0x5c] sm:$0x1]
      %v2677 = vld [vmem:[%s1889 + $0x68] sm:$0x1]
      %v2678 = vld [vmem:[%s1889 + $0x74] sm:$0x1]
      %v2679 = vld [vmem:[%s1889 + $0x80] sm:$0x1]
      %v2680 = vld [vmem:[%s1889 + $0x8c] sm:$0x1]
      %v2681 = vld [vmem:[%s1889 + $0x98] sm:$0x1]
      %v2682 = vld [vmem:[%s1889 + $0xa4] sm:$0x1]
      %v2683 = vld [vmem:[%s1889 + $0xb0] sm:$0x1]
      %v2684 = vld [vmem:[%s1889 + $0xbc] sm:$0x1]
      %v2686 = vshrl.u32 %v2637, 16
      %v2688 = vrot.slane %v2686, 4
      %v2689 = vshll.u32 %v2637, 16
      %v2691 = vrot.slane %v2689, 5
      %v2692 = vor.u32 %v2688, %v2691
      %v2693 = vrot.slane %v2692, 4
      %v2695 = vshll.u32 %v2638, 16
      %v2697 = vrot.slane %v2695, 5
      %v2698 = vsel %vm2073, %v2693, %v2697
      %v2699 = vshrl.u32 %v2638, 16
      %v2701 = vrot.slane %v2699, 4
      %v2702 = vor.u32 %v2701, %v2697
      %v2703 = vrot.slane %v2702, 4
      %v2705 = vshll.u32 %v2669, 16
      %v2707 = vrot.slane %v2705, 5
      %v2708 = vsel %vm2073, %v2703, %v2707
      %v2710 = vshrl.u32 %v2639, 16
      %v2712 = vrot.slane %v2710, 4
      %v2713 = vshll.u32 %v2639, 16
      %v2715 = vrot.slane %v2713, 5
      %v2716 = vor.u32 %v2712, %v2715
      %v2717 = vrot.slane %v2716, 4
      %v2719 = vshll.u32 %v2640, 16
      %v2721 = vrot.slane %v2719, 5
      %v2722 = vsel %vm2073, %v2717, %v2721
      %v2723 = vshrl.u32 %v2640, 16
      %v2725 = vrot.slane %v2723, 4
      %v2726 = vor.u32 %v2725, %v2721
      %v2727 = vrot.slane %v2726, 4
      %v2729 = vshll.u32 %v2670, 16
      %v2731 = vrot.slane %v2729, 5
      %v2732 = vsel %vm2073, %v2727, %v2731
      %v2734 = vshrl.u32 %v2641, 16
      %v2736 = vrot.slane %v2734, 4
      %v2737 = vshll.u32 %v2641, 16
      %v2739 = vrot.slane %v2737, 5
      %v2740 = vor.u32 %v2736, %v2739
      %v2741 = vrot.slane %v2740, 4
      %v2743 = vshll.u32 %v2642, 16
      %v2745 = vrot.slane %v2743, 5
      %v2746 = vsel %vm2073, %v2741, %v2745
      %v2747 = vshrl.u32 %v2642, 16
      %v2749 = vrot.slane %v2747, 4
      %v2750 = vor.u32 %v2749, %v2745
      %v2751 = vrot.slane %v2750, 4
      %v2753 = vshll.u32 %v2671, 16
      %v2755 = vrot.slane %v2753, 5
      %v2756 = vsel %vm2073, %v2751, %v2755
      %v2758 = vshrl.u32 %v2643, 16
      %v2760 = vrot.slane %v2758, 4
      %v2761 = vshll.u32 %v2643, 16
      %v2763 = vrot.slane %v2761, 5
      %v2764 = vor.u32 %v2760, %v2763
      %v2765 = vrot.slane %v2764, 4
      %v2767 = vshll.u32 %v2644, 16
      %v2769 = vrot.slane %v2767, 5
      %v2770 = vsel %vm2073, %v2765, %v2769
      %v2771 = vshrl.u32 %v2644, 16
      %v2773 = vrot.slane %v2771, 4
      %v2774 = vor.u32 %v2773, %v2769
      %v2775 = vrot.slane %v2774, 4
      %v2777 = vshll.u32 %v2672, 16
      %v2779 = vrot.slane %v2777, 5
      %v2780 = vsel %vm2073, %v2775, %v2779
      %v2782 = vshrl.u32 %v2645, 16
      %v2784 = vrot.slane %v2782, 4
      %v2785 = vshll.u32 %v2645, 16
      %v2787 = vrot.slane %v2785, 5
      %v2788 = vor.u32 %v2784, %v2787
      %v2789 = vrot.slane %v2788, 4
      %v2791 = vshll.u32 %v2646, 16
      %v2793 = vrot.slane %v2791, 5
      %v2794 = vsel %vm2073, %v2789, %v2793
      %v2795 = vshrl.u32 %v2646, 16
      %v2797 = vrot.slane %v2795, 4
      %v2798 = vor.u32 %v2797, %v2793
      %v2799 = vrot.slane %v2798, 4
      %v2801 = vshll.u32 %v2673, 16
      %v2803 = vrot.slane %v2801, 5
      %v2804 = vsel %vm2073, %v2799, %v2803
      %v2806 = vshrl.u32 %v2647, 16
      %v2808 = vrot.slane %v2806, 4
      %v2809 = vshll.u32 %v2647, 16
      %v2811 = vrot.slane %v2809, 5
      %v2812 = vor.u32 %v2808, %v2811
      %v2813 = vrot.slane %v2812, 4
      %v2815 = vshll.u32 %v2648, 16
      %v2817 = vrot.slane %v2815, 5
      %v2818 = vsel %vm2073, %v2813, %v2817
      %v2819 = vshrl.u32 %v2648, 16
      %v2821 = vrot.slane %v2819, 4
      %v2822 = vor.u32 %v2821, %v2817
      %v2823 = vrot.slane %v2822, 4
      %v2825 = vshll.u32 %v2674, 16
      %v2827 = vrot.slane %v2825, 5
      %v2828 = vsel %vm2073, %v2823, %v2827
      %v2830 = vshrl.u32 %v2649, 16
      %v2832 = vrot.slane %v2830, 4
      %v2833 = vshll.u32 %v2649, 16
      %v2835 = vrot.slane %v2833, 5
      %v2836 = vor.u32 %v2832, %v2835
      %v2837 = vrot.slane %v2836, 4
      %v2839 = vshll.u32 %v2650, 16
      %v2841 = vrot.slane %v2839, 5
      %v2842 = vsel %vm2073, %v2837, %v2841
      %v2843 = vshrl.u32 %v2650, 16
      %v2845 = vrot.slane %v2843, 4
      %v2846 = vor.u32 %v2845, %v2841
      %v2847 = vrot.slane %v2846, 4
      %v2849 = vshll.u32 %v2675, 16
      %v2851 = vrot.slane %v2849, 5
      %v2852 = vsel %vm2073, %v2847, %v2851
      %v2854 = vshrl.u32 %v2651, 16
      %v2856 = vrot.slane %v2854, 4
      %v2857 = vshll.u32 %v2651, 16
      %v2859 = vrot.slane %v2857, 5
      %v2860 = vor.u32 %v2856, %v2859
      %v2861 = vrot.slane %v2860, 4
      %v2863 = vshll.u32 %v2652, 16
      %v2865 = vrot.slane %v2863, 5
      %v2866 = vsel %vm2073, %v2861, %v2865
      %v2867 = vshrl.u32 %v2652, 16
      %v2869 = vrot.slane %v2867, 4
      %v2870 = vor.u32 %v2869, %v2865
      %v2871 = vrot.slane %v2870, 4
      %v2873 = vshll.u32 %v2676, 16
      %v2875 = vrot.slane %v2873, 5
      %v2876 = vsel %vm2073, %v2871, %v2875
      %v2878 = vshrl.u32 %v2653, 16
      %v2880 = vrot.slane %v2878, 4
      %v2881 = vshll.u32 %v2653, 16
      %v2883 = vrot.slane %v2881, 5
      %v2884 = vor.u32 %v2880, %v2883
      %v2885 = vrot.slane %v2884, 4
      %v2887 = vshll.u32 %v2654, 16
      %v2889 = vrot.slane %v2887, 5
      %v2890 = vsel %vm2073, %v2885, %v2889
      %v2891 = vshrl.u32 %v2654, 16
      %v2893 = vrot.slane %v2891, 4
      %v2894 = vor.u32 %v2893, %v2889
      %v2895 = vrot.slane %v2894, 4
      %v2897 = vshll.u32 %v2677, 16
      %v2899 = vrot.slane %v2897, 5
      %v2900 = vsel %vm2073, %v2895, %v2899
      %v2902 = vshrl.u32 %v2655, 16
      %v2904 = vrot.slane %v2902, 4
      %v2905 = vshll.u32 %v2655, 16
      %v2907 = vrot.slane %v2905, 5
      %v2908 = vor.u32 %v2904, %v2907
      %v2909 = vrot.slane %v2908, 4
      %v2911 = vshll.u32 %v2656, 16
      %v2913 = vrot.slane %v2911, 5
      %v2914 = vsel %vm2073, %v2909, %v2913
      %v2915 = vshrl.u32 %v2656, 16
      %v2917 = vrot.slane %v2915, 4
      %v2918 = vor.u32 %v2917, %v2913
      %v2919 = vrot.slane %v2918, 4
      %v2921 = vshll.u32 %v2678, 16
      %v2923 = vrot.slane %v2921, 5
      %v2924 = vsel %vm2073, %v2919, %v2923
      %v2926 = vshrl.u32 %v2657, 16
      %v2928 = vrot.slane %v2926, 4
      %v2929 = vshll.u32 %v2657, 16
      %v2931 = vrot.slane %v2929, 5
      %v2932 = vor.u32 %v2928, %v2931
      %v2933 = vrot.slane %v2932, 4
      %v2935 = vshll.u32 %v2658, 16
      %v2937 = vrot.slane %v2935, 5
      %v2938 = vsel %vm2073, %v2933, %v2937
      %v2939 = vshrl.u32 %v2658, 16
      %v2941 = vrot.slane %v2939, 4
      %v2942 = vor.u32 %v2941, %v2937
      %v2943 = vrot.slane %v2942, 4
      %v2945 = vshll.u32 %v2679, 16
      %v2947 = vrot.slane %v2945, 5
      %v2948 = vsel %vm2073, %v2943, %v2947
      %v2950 = vshrl.u32 %v2659, 16
      %v2952 = vrot.slane %v2950, 4
      %v2953 = vshll.u32 %v2659, 16
      %v2955 = vrot.slane %v2953, 5
      %v2956 = vor.u32 %v2952, %v2955
      %v2957 = vrot.slane %v2956, 4
      %v2959 = vshll.u32 %v2660, 16
      %v2961 = vrot.slane %v2959, 5
      %v2962 = vsel %vm2073, %v2957, %v2961
      %v2963 = vshrl.u32 %v2660, 16
      %v2965 = vrot.slane %v2963, 4
      %v2966 = vor.u32 %v2965, %v2961
      %v2967 = vrot.slane %v2966, 4
      %v2969 = vshll.u32 %v2680, 16
      %v2971 = vrot.slane %v2969, 5
      %v2972 = vsel %vm2073, %v2967, %v2971
      %v2974 = vshrl.u32 %v2661, 16
      %v2976 = vrot.slane %v2974, 4
      %v2977 = vshll.u32 %v2661, 16
      %v2979 = vrot.slane %v2977, 5
      %v2980 = vor.u32 %v2976, %v2979
      %v2981 = vrot.slane %v2980, 4
      %v2983 = vshll.u32 %v2662, 16
      %v2985 = vrot.slane %v2983, 5
      %v2986 = vsel %vm2073, %v2981, %v2985
      %v2987 = vshrl.u32 %v2662, 16
      %v2989 = vrot.slane %v2987, 4
      %v2990 = vor.u32 %v2989, %v2985
      %v2991 = vrot.slane %v2990, 4
      %v2993 = vshll.u32 %v2681, 16
      %v2995 = vrot.slane %v2993, 5
      %v2996 = vsel %vm2073, %v2991, %v2995
      %v2998 = vshrl.u32 %v2663, 16
      %v3000 = vrot.slane %v2998, 4
      %v3001 = vshll.u32 %v2663, 16
      %v3003 = vrot.slane %v3001, 5
      %v3004 = vor.u32 %v3000, %v3003
      %v3005 = vrot.slane %v3004, 4
      %v3007 = vshll.u32 %v2664, 16
      %v3009 = vrot.slane %v3007, 5
      %v3010 = vsel %vm2073, %v3005, %v3009
      %v3011 = vshrl.u32 %v2664, 16
      %v3013 = vrot.slane %v3011, 4
      %v3014 = vor.u32 %v3013, %v3009
      %v3015 = vrot.slane %v3014, 4
      %v3017 = vshll.u32 %v2682, 16
      %v3019 = vrot.slane %v3017, 5
      %v3020 = vsel %vm2073, %v3015, %v3019
      %v3022 = vshrl.u32 %v2665, 16
      %v3024 = vrot.slane %v3022, 4
      %v3025 = vshll.u32 %v2665, 16
      %v3027 = vrot.slane %v3025, 5
      %v3028 = vor.u32 %v3024, %v3027
      %v3029 = vrot.slane %v3028, 4
      %v3031 = vshll.u32 %v2666, 16
      %v3033 = vrot.slane %v3031, 5
      %v3034 = vsel %vm2073, %v3029, %v3033
      %v3035 = vshrl.u32 %v2666, 16
      %v3037 = vrot.slane %v3035, 4
      %v3038 = vor.u32 %v3037, %v3033
      %v3039 = vrot.slane %v3038, 4
      %v3041 = vshll.u32 %v2683, 16
      %v3043 = vrot.slane %v3041, 5
      %v3044 = vsel %vm2073, %v3039, %v3043
      %v3046 = vshrl.u32 %v2667, 16
      %v3048 = vrot.slane %v3046, 4
      %v3049 = vshll.u32 %v2667, 16
      %v3051 = vrot.slane %v3049, 5
      %v3052 = vor.u32 %v3048, %v3051
      %v3053 = vrot.slane %v3052, 4
      %v3055 = vshll.u32 %v2668, 16
      %v3057 = vrot.slane %v3055, 5
      %v3058 = vsel %vm2073, %v3053, %v3057
      %v3059 = vshrl.u32 %v2668, 16
      %v3061 = vrot.slane %v3059, 4
      %v3062 = vor.u32 %v3061, %v3057
      %v3063 = vrot.slane %v3062, 4
      %v3065 = vshll.u32 %v2684, 16
      %v3067 = vrot.slane %v3065, 5
      %v3068 = vsel %vm2073, %v3063, %v3067
      %v3069 = vld [vmem:[%s1889] sm:$0xe]
      %v3070 = vld [vmem:[%s1889 + $0xc] sm:$0xe]
      %v3071 = vld [vmem:[%s1889 + $0x18] sm:$0xe]
      %v3072 = vld [vmem:[%s1889 + $0x24] sm:$0xe]
      %v3073 = vld [vmem:[%s1889 + $0x30] sm:$0xe]
      %v3074 = vld [vmem:[%s1889 + $0x3c] sm:$0xe]
      %v3075 = vld [vmem:[%s1889 + $0x48] sm:$0xe]
      %v3076 = vld [vmem:[%s1889 + $0x54] sm:$0xe]
      %v3077 = vld [vmem:[%s1889 + $0x60] sm:$0xe]
      %v3078 = vld [vmem:[%s1889 + $0x6c] sm:$0xe]
      %v3079 = vld [vmem:[%s1889 + $0x78] sm:$0xe]
      %v3080 = vld [vmem:[%s1889 + $0x84] sm:$0xe]
      %v3081 = vld [vmem:[%s1889 + $0x90] sm:$0xe]
      %v3082 = vld [vmem:[%s1889 + $0x9c] sm:$0xe]
      %v3083 = vld [vmem:[%s1889 + $0xa8] sm:$0xe]
      %v3084 = vld [vmem:[%s1889 + $0xb4] sm:$0xe]
      %v3133 = vrot.slane %v3069, 5
      %v3134 = vrot.slane %v3133, 4
      %v3135 = vrot.slane %v2638, 5
      %v3136 = vsel %vm2524, %v3134, %v3135
      %v3137 = vrot.slane %v3135, 4
      %v3138 = vrot.slane %v2669, 5
      %v3139 = vsel %vm2524, %v3137, %v3138
      %v3140 = vrot.slane %v3070, 5
      %v3141 = vrot.slane %v3140, 4
      %v3142 = vrot.slane %v2640, 5
      %v3143 = vsel %vm2524, %v3141, %v3142
      %v3144 = vrot.slane %v3142, 4
      %v3145 = vrot.slane %v2670, 5
      %v3146 = vsel %vm2524, %v3144, %v3145
      %v3147 = vrot.slane %v3071, 5
      %v3148 = vrot.slane %v3147, 4
      %v3149 = vrot.slane %v2642, 5
      %v3150 = vsel %vm2524, %v3148, %v3149
      %v3151 = vrot.slane %v3149, 4
      %v3152 = vrot.slane %v2671, 5
      %v3153 = vsel %vm2524, %v3151, %v3152
      %v3154 = vrot.slane %v3072, 5
      %v3155 = vrot.slane %v3154, 4
      %v3156 = vrot.slane %v2644, 5
      %v3157 = vsel %vm2524, %v3155, %v3156
      %v3158 = vrot.slane %v3156, 4
      %v3159 = vrot.slane %v2672, 5
      %v3160 = vsel %vm2524, %v3158, %v3159
      %v3161 = vrot.slane %v3073, 5
      %v3162 = vrot.slane %v3161, 4
      %v3163 = vrot.slane %v2646, 5
      %v3164 = vsel %vm2524, %v3162, %v3163
      %v3165 = vrot.slane %v3163, 4
      %v3166 = vrot.slane %v2673, 5
      %v3167 = vsel %vm2524, %v3165, %v3166
      %v3168 = vrot.slane %v3074, 5
      %v3169 = vrot.slane %v3168, 4
      %v3170 = vrot.slane %v2648, 5
      %v3171 = vsel %vm2524, %v3169, %v3170
      %v3172 = vrot.slane %v3170, 4
      %v3173 = vrot.slane %v2674, 5
      %v3174 = vsel %vm2524, %v3172, %v3173
      %v3175 = vrot.slane %v3075, 5
      %v3176 = vrot.slane %v3175, 4
      %v3177 = vrot.slane %v2650, 5
      %v3178 = vsel %vm2524, %v3176, %v3177
      %v3179 = vrot.slane %v3177, 4
      %v3180 = vrot.slane %v2675, 5
      %v3181 = vsel %vm2524, %v3179, %v3180
      %v3182 = vrot.slane %v3076, 5
      %v3183 = vrot.slane %v3182, 4
      %v3184 = vrot.slane %v2652, 5
      %v3185 = vsel %vm2524, %v3183, %v3184
      %v3186 = vrot.slane %v3184, 4
      %v3187 = vrot.slane %v2676, 5
      %v3188 = vsel %vm2524, %v3186, %v3187
      %v3189 = vrot.slane %v3077, 5
      %v3190 = vrot.slane %v3189, 4
      %v3191 = vrot.slane %v2654, 5
      %v3192 = vsel %vm2524, %v3190, %v3191
      %v3193 = vrot.slane %v3191, 4
      %v3194 = vrot.slane %v2677, 5
      %v3195 = vsel %vm2524, %v3193, %v3194
      %v3196 = vrot.slane %v3078, 5
      %v3197 = vrot.slane %v3196, 4
      %v3198 = vrot.slane %v2656, 5
      %v3199 = vsel %vm2524, %v3197, %v3198
      %v3200 = vrot.slane %v3198, 4
      %v3201 = vrot.slane %v2678, 5
      %v3202 = vsel %vm2524, %v3200, %v3201
      %v3203 = vrot.slane %v3079, 5
      %v3204 = vrot.slane %v3203, 4
      %v3205 = vrot.slane %v2658, 5
      %v3206 = vsel %vm2524, %v3204, %v3205
      %v3207 = vrot.slane %v3205, 4
      %v3208 = vrot.slane %v2679, 5
      %v3209 = vsel %vm2524, %v3207, %v3208
      %v3210 = vrot.slane %v3080, 5
      %v3211 = vrot.slane %v3210, 4
      %v3212 = vrot.slane %v2660, 5
      %v3213 = vsel %vm2524, %v3211, %v3212
      %v3214 = vrot.slane %v3212, 4
      %v3215 = vrot.slane %v2680, 5
      %v3216 = vsel %vm2524, %v3214, %v3215
      %v3217 = vrot.slane %v3081, 5
      %v3218 = vrot.slane %v3217, 4
      %v3219 = vrot.slane %v2662, 5
      %v3220 = vsel %vm2524, %v3218, %v3219
      %v3221 = vrot.slane %v3219, 4
      %v3222 = vrot.slane %v2681, 5
      %v3223 = vsel %vm2524, %v3221, %v3222
      %v3224 = vrot.slane %v3082, 5
      %v3225 = vrot.slane %v3224, 4
      %v3226 = vrot.slane %v2664, 5
      %v3227 = vsel %vm2524, %v3225, %v3226
      %v3228 = vrot.slane %v3226, 4
      %v3229 = vrot.slane %v2682, 5
      %v3230 = vsel %vm2524, %v3228, %v3229
      %v3231 = vrot.slane %v3083, 5
      %v3232 = vrot.slane %v3231, 4
      %v3233 = vrot.slane %v2666, 5
      %v3234 = vsel %vm2524, %v3232, %v3233
      %v3235 = vrot.slane %v3233, 4
      %v3236 = vrot.slane %v2683, 5
      %v3237 = vsel %vm2524, %v3235, %v3236
      %v3238 = vrot.slane %v3084, 5
      %v3239 = vrot.slane %v3238, 4
      %v3240 = vrot.slane %v2668, 5
      %v3241 = vsel %vm2524, %v3239, %v3240
      %v3242 = vrot.slane %v3240, 4
      %v3243 = vrot.slane %v2684, 5
      %v3244 = vsel %vm2524, %v3242, %v3243
      %s3245 = scalar_lea.vmem [#allocation2], 24
      %v3246 = vld [vmem:[%s3245] sm:$0xf]
      %v3247 = vld [vmem:[%s3245 + $0x4] sm:$0xf]
      %v3248 = vld [vmem:[%s3245 + $0xc] sm:$0xf]
      %v3249 = vld [vmem:[%s3245 + $0x10] sm:$0xf]
      %v3250 = vld [vmem:[%s3245 + $0x18] sm:$0xf]
      %v3251 = vld [vmem:[%s3245 + $0x1c] sm:$0xf]
      %v3252 = vld [vmem:[%s3245 + $0x24] sm:$0xf]
      %v3253 = vld [vmem:[%s3245 + $0x28] sm:$0xf]
      %v3254 = vld [vmem:[%s3245 + $0x30] sm:$0xf]
      %v3255 = vld [vmem:[%s3245 + $0x34] sm:$0xf]
      %v3256 = vld [vmem:[%s3245 + $0x3c] sm:$0xf]
      %v3257 = vld [vmem:[%s3245 + $0x40] sm:$0xf]
      %v3258 = vld [vmem:[%s3245 + $0x48] sm:$0xf]
      %v3259 = vld [vmem:[%s3245 + $0x4c] sm:$0xf]
      %v3260 = vld [vmem:[%s3245 + $0x54] sm:$0xf]
      %v3261 = vld [vmem:[%s3245 + $0x58] sm:$0xf]
      %v3262 = vld [vmem:[%s3245 + $0x60] sm:$0xf]
      %v3263 = vld [vmem:[%s3245 + $0x64] sm:$0xf]
      %v3264 = vld [vmem:[%s3245 + $0x6c] sm:$0xf]
      %v3265 = vld [vmem:[%s3245 + $0x70] sm:$0xf]
      %v3266 = vld [vmem:[%s3245 + $0x78] sm:$0xf]
      %v3267 = vld [vmem:[%s3245 + $0x7c] sm:$0xf]
      %v3268 = vld [vmem:[%s3245 + $0x84] sm:$0xf]
      %v3269 = vld [vmem:[%s3245 + $0x88] sm:$0xf]
      %v3270 = vld [vmem:[%s3245 + $0x90] sm:$0xf]
      %v3271 = vld [vmem:[%s3245 + $0x94] sm:$0xf]
      %v3272 = vld [vmem:[%s3245 + $0x9c] sm:$0xf]
      %v3273 = vld [vmem:[%s3245 + $0xa0] sm:$0xf]
      %v3274 = vld [vmem:[%s3245 + $0xa8] sm:$0xf]
      %v3275 = vld [vmem:[%s3245 + $0xac] sm:$0xf]
      %v3276 = vld [vmem:[%s3245 + $0xb4] sm:$0xf]
      %v3277 = vld [vmem:[%s3245 + $0xb8] sm:$0xf]
      %v3278 = vld [vmem:[%s3245 + $0x8] sm:$0x1]
      %v3279 = vld [vmem:[%s3245 + $0x14] sm:$0x1]
      %v3280 = vld [vmem:[%s3245 + $0x20] sm:$0x1]
      %v3281 = vld [vmem:[%s3245 + $0x2c] sm:$0x1]
      %v3282 = vld [vmem:[%s3245 + $0x38] sm:$0x1]
      %v3283 = vld [vmem:[%s3245 + $0x44] sm:$0x1]
      %v3284 = vld [vmem:[%s3245 + $0x50] sm:$0x1]
      %v3285 = vld [vmem:[%s3245 + $0x5c] sm:$0x1]
      %v3286 = vld [vmem:[%s3245 + $0x68] sm:$0x1]
      %v3287 = vld [vmem:[%s3245 + $0x74] sm:$0x1]
      %v3288 = vld [vmem:[%s3245 + $0x80] sm:$0x1]
      %v3289 = vld [vmem:[%s3245 + $0x8c] sm:$0x1]
      %v3290 = vld [vmem:[%s3245 + $0x98] sm:$0x1]
      %v3291 = vld [vmem:[%s3245 + $0xa4] sm:$0x1]
      %v3292 = vld [vmem:[%s3245 + $0xb0] sm:$0x1]
      %v3293 = vld [vmem:[%s3245 + $0xbc] sm:$0x1]
      %v3295 = vshrl.u32 %v3246, 16
      %v3297 = vrot.slane %v3295, 4
      %v3298 = vshll.u32 %v3246, 16
      %v3300 = vrot.slane %v3298, 5
      %v3301 = vor.u32 %v3297, %v3300
      %v3302 = vrot.slane %v3301, 4
      %v3304 = vshll.u32 %v3247, 16
      %v3306 = vrot.slane %v3304, 5
      %v3307 = vsel %vm2073, %v3302, %v3306
      %v3308 = vshrl.u32 %v3247, 16
      %v3310 = vrot.slane %v3308, 4
      %v3311 = vor.u32 %v3310, %v3306
      %v3312 = vrot.slane %v3311, 4
      %v3314 = vshll.u32 %v3278, 16
      %v3316 = vrot.slane %v3314, 5
      %v3317 = vsel %vm2073, %v3312, %v3316
      %v3319 = vshrl.u32 %v3248, 16
      %v3321 = vrot.slane %v3319, 4
      %v3322 = vshll.u32 %v3248, 16
      %v3324 = vrot.slane %v3322, 5
      %v3325 = vor.u32 %v3321, %v3324
      %v3326 = vrot.slane %v3325, 4
      %v3328 = vshll.u32 %v3249, 16
      %v3330 = vrot.slane %v3328, 5
      %v3331 = vsel %vm2073, %v3326, %v3330
      %v3332 = vshrl.u32 %v3249, 16
      %v3334 = vrot.slane %v3332, 4
      %v3335 = vor.u32 %v3334, %v3330
      %v3336 = vrot.slane %v3335, 4
      %v3338 = vshll.u32 %v3279, 16
      %v3340 = vrot.slane %v3338, 5
      %v3341 = vsel %vm2073, %v3336, %v3340
      %v3343 = vshrl.u32 %v3250, 16
      %v3345 = vrot.slane %v3343, 4
      %v3346 = vshll.u32 %v3250, 16
      %v3348 = vrot.slane %v3346, 5
      %v3349 = vor.u32 %v3345, %v3348
      %v3350 = vrot.slane %v3349, 4
      %v3352 = vshll.u32 %v3251, 16
      %v3354 = vrot.slane %v3352, 5
      %v3355 = vsel %vm2073, %v3350, %v3354
      %v3356 = vshrl.u32 %v3251, 16
      %v3358 = vrot.slane %v3356, 4
      %v3359 = vor.u32 %v3358, %v3354
      %v3360 = vrot.slane %v3359, 4
      %v3362 = vshll.u32 %v3280, 16
      %v3364 = vrot.slane %v3362, 5
      %v3365 = vsel %vm2073, %v3360, %v3364
      %v3367 = vshrl.u32 %v3252, 16
      %v3369 = vrot.slane %v3367, 4
      %v3370 = vshll.u32 %v3252, 16
      %v3372 = vrot.slane %v3370, 5
      %v3373 = vor.u32 %v3369, %v3372
      %v3374 = vrot.slane %v3373, 4
      %v3376 = vshll.u32 %v3253, 16
      %v3378 = vrot.slane %v3376, 5
      %v3379 = vsel %vm2073, %v3374, %v3378
      %v3380 = vshrl.u32 %v3253, 16
      %v3382 = vrot.slane %v3380, 4
      %v3383 = vor.u32 %v3382, %v3378
      %v3384 = vrot.slane %v3383, 4
      %v3386 = vshll.u32 %v3281, 16
      %v3388 = vrot.slane %v3386, 5
      %v3389 = vsel %vm2073, %v3384, %v3388
      %v3391 = vshrl.u32 %v3254, 16
      %v3393 = vrot.slane %v3391, 4
      %v3394 = vshll.u32 %v3254, 16
      %v3396 = vrot.slane %v3394, 5
      %v3397 = vor.u32 %v3393, %v3396
      %v3398 = vrot.slane %v3397, 4
      %v3400 = vshll.u32 %v3255, 16
      %v3402 = vrot.slane %v3400, 5
      %v3403 = vsel %vm2073, %v3398, %v3402
      %v3404 = vshrl.u32 %v3255, 16
      %v3406 = vrot.slane %v3404, 4
      %v3407 = vor.u32 %v3406, %v3402
      %v3408 = vrot.slane %v3407, 4
      %v3410 = vshll.u32 %v3282, 16
      %v3412 = vrot.slane %v3410, 5
      %v3413 = vsel %vm2073, %v3408, %v3412
      %v3415 = vshrl.u32 %v3256, 16
      %v3417 = vrot.slane %v3415, 4
      %v3418 = vshll.u32 %v3256, 16
      %v3420 = vrot.slane %v3418, 5
      %v3421 = vor.u32 %v3417, %v3420
      %v3422 = vrot.slane %v3421, 4
      %v3424 = vshll.u32 %v3257, 16
      %v3426 = vrot.slane %v3424, 5
      %v3427 = vsel %vm2073, %v3422, %v3426
      %v3428 = vshrl.u32 %v3257, 16
      %v3430 = vrot.slane %v3428, 4
      %v3431 = vor.u32 %v3430, %v3426
      %v3432 = vrot.slane %v3431, 4
      %v3434 = vshll.u32 %v3283, 16
      %v3436 = vrot.slane %v3434, 5
      %v3437 = vsel %vm2073, %v3432, %v3436
      %v3439 = vshrl.u32 %v3258, 16
      %v3441 = vrot.slane %v3439, 4
      %v3442 = vshll.u32 %v3258, 16
      %v3444 = vrot.slane %v3442, 5
      %v3445 = vor.u32 %v3441, %v3444
      %v3446 = vrot.slane %v3445, 4
      %v3448 = vshll.u32 %v3259, 16
      %v3450 = vrot.slane %v3448, 5
      %v3451 = vsel %vm2073, %v3446, %v3450
      %v3452 = vshrl.u32 %v3259, 16
      %v3454 = vrot.slane %v3452, 4
      %v3455 = vor.u32 %v3454, %v3450
      %v3456 = vrot.slane %v3455, 4
      %v3458 = vshll.u32 %v3284, 16
      %v3460 = vrot.slane %v3458, 5
      %v3461 = vsel %vm2073, %v3456, %v3460
      %v3463 = vshrl.u32 %v3260, 16
      %v3465 = vrot.slane %v3463, 4
      %v3466 = vshll.u32 %v3260, 16
      %v3468 = vrot.slane %v3466, 5
      %v3469 = vor.u32 %v3465, %v3468
      %v3470 = vrot.slane %v3469, 4
      %v3472 = vshll.u32 %v3261, 16
      %v3474 = vrot.slane %v3472, 5
      %v3475 = vsel %vm2073, %v3470, %v3474
      %v3476 = vshrl.u32 %v3261, 16
      %v3478 = vrot.slane %v3476, 4
      %v3479 = vor.u32 %v3478, %v3474
      %v3480 = vrot.slane %v3479, 4
      %v3482 = vshll.u32 %v3285, 16
      %v3484 = vrot.slane %v3482, 5
      %v3485 = vsel %vm2073, %v3480, %v3484
      %v3487 = vshrl.u32 %v3262, 16
      %v3489 = vrot.slane %v3487, 4
      %v3490 = vshll.u32 %v3262, 16
      %v3492 = vrot.slane %v3490, 5
      %v3493 = vor.u32 %v3489, %v3492
      %v3494 = vrot.slane %v3493, 4
      %v3496 = vshll.u32 %v3263, 16
      %v3498 = vrot.slane %v3496, 5
      %v3499 = vsel %vm2073, %v3494, %v3498
      %v3500 = vshrl.u32 %v3263, 16
      %v3502 = vrot.slane %v3500, 4
      %v3503 = vor.u32 %v3502, %v3498
      %v3504 = vrot.slane %v3503, 4
      %v3506 = vshll.u32 %v3286, 16
      %v3508 = vrot.slane %v3506, 5
      %v3509 = vsel %vm2073, %v3504, %v3508
      %v3511 = vshrl.u32 %v3264, 16
      %v3513 = vrot.slane %v3511, 4
      %v3514 = vshll.u32 %v3264, 16
      %v3516 = vrot.slane %v3514, 5
      %v3517 = vor.u32 %v3513, %v3516
      %v3518 = vrot.slane %v3517, 4
      %v3520 = vshll.u32 %v3265, 16
      %v3522 = vrot.slane %v3520, 5
      %v3523 = vsel %vm2073, %v3518, %v3522
      %v3524 = vshrl.u32 %v3265, 16
      %v3526 = vrot.slane %v3524, 4
      %v3527 = vor.u32 %v3526, %v3522
      %v3528 = vrot.slane %v3527, 4
      %v3530 = vshll.u32 %v3287, 16
      %v3532 = vrot.slane %v3530, 5
      %v3533 = vsel %vm2073, %v3528, %v3532
      %v3535 = vshrl.u32 %v3266, 16
      %v3537 = vrot.slane %v3535, 4
      %v3538 = vshll.u32 %v3266, 16
      %v3540 = vrot.slane %v3538, 5
      %v3541 = vor.u32 %v3537, %v3540
      %v3542 = vrot.slane %v3541, 4
      %v3544 = vshll.u32 %v3267, 16
      %v3546 = vrot.slane %v3544, 5
      %v3547 = vsel %vm2073, %v3542, %v3546
      %v3548 = vshrl.u32 %v3267, 16
      %v3550 = vrot.slane %v3548, 4
      %v3551 = vor.u32 %v3550, %v3546
      %v3552 = vrot.slane %v3551, 4
      %v3554 = vshll.u32 %v3288, 16
      %v3556 = vrot.slane %v3554, 5
      %v3557 = vsel %vm2073, %v3552, %v3556
      %v3559 = vshrl.u32 %v3268, 16
      %v3561 = vrot.slane %v3559, 4
      %v3562 = vshll.u32 %v3268, 16
      %v3564 = vrot.slane %v3562, 5
      %v3565 = vor.u32 %v3561, %v3564
      %v3566 = vrot.slane %v3565, 4
      %v3568 = vshll.u32 %v3269, 16
      %v3570 = vrot.slane %v3568, 5
      %v3571 = vsel %vm2073, %v3566, %v3570
      %v3572 = vshrl.u32 %v3269, 16
      %v3574 = vrot.slane %v3572, 4
      %v3575 = vor.u32 %v3574, %v3570
      %v3576 = vrot.slane %v3575, 4
      %v3578 = vshll.u32 %v3289, 16
      %v3580 = vrot.slane %v3578, 5
      %v3581 = vsel %vm2073, %v3576, %v3580
      %v3583 = vshrl.u32 %v3270, 16
      %v3585 = vrot.slane %v3583, 4
      %v3586 = vshll.u32 %v3270, 16
      %v3588 = vrot.slane %v3586, 5
      %v3589 = vor.u32 %v3585, %v3588
      %v3590 = vrot.slane %v3589, 4
      %v3592 = vshll.u32 %v3271, 16
      %v3594 = vrot.slane %v3592, 5
      %v3595 = vsel %vm2073, %v3590, %v3594
      %v3596 = vshrl.u32 %v3271, 16
      %v3598 = vrot.slane %v3596, 4
      %v3599 = vor.u32 %v3598, %v3594
      %v3600 = vrot.slane %v3599, 4
      %v3602 = vshll.u32 %v3290, 16
      %v3604 = vrot.slane %v3602, 5
      %v3605 = vsel %vm2073, %v3600, %v3604
      %v3607 = vshrl.u32 %v3272, 16
      %v3609 = vrot.slane %v3607, 4
      %v3610 = vshll.u32 %v3272, 16
      %v3612 = vrot.slane %v3610, 5
      %v3613 = vor.u32 %v3609, %v3612
      %v3614 = vrot.slane %v3613, 4
      %v3616 = vshll.u32 %v3273, 16
      %v3618 = vrot.slane %v3616, 5
      %v3619 = vsel %vm2073, %v3614, %v3618
      %v3620 = vshrl.u32 %v3273, 16
      %v3622 = vrot.slane %v3620, 4
      %v3623 = vor.u32 %v3622, %v3618
      %v3624 = vrot.slane %v3623, 4
      %v3626 = vshll.u32 %v3291, 16
      %v3628 = vrot.slane %v3626, 5
      %v3629 = vsel %vm2073, %v3624, %v3628
      %v3631 = vshrl.u32 %v3274, 16
      %v3633 = vrot.slane %v3631, 4
      %v3634 = vshll.u32 %v3274, 16
      %v3636 = vrot.slane %v3634, 5
      %v3637 = vor.u32 %v3633, %v3636
      %v3638 = vrot.slane %v3637, 4
      %v3640 = vshll.u32 %v3275, 16
      %v3642 = vrot.slane %v3640, 5
      %v3643 = vsel %vm2073, %v3638, %v3642
      %v3644 = vshrl.u32 %v3275, 16
      %v3646 = vrot.slane %v3644, 4
      %v3647 = vor.u32 %v3646, %v3642
      %v3648 = vrot.slane %v3647, 4
      %v3650 = vshll.u32 %v3292, 16
      %v3652 = vrot.slane %v3650, 5
      %v3653 = vsel %vm2073, %v3648, %v3652
      %v3655 = vshrl.u32 %v3276, 16
      %v3657 = vrot.slane %v3655, 4
      %v3658 = vshll.u32 %v3276, 16
      %v3660 = vrot.slane %v3658, 5
      %v3661 = vor.u32 %v3657, %v3660
      %v3662 = vrot.slane %v3661, 4
      %v3664 = vshll.u32 %v3277, 16
      %v3666 = vrot.slane %v3664, 5
      %v3667 = vsel %vm2073, %v3662, %v3666
      %v3668 = vshrl.u32 %v3277, 16
      %v3670 = vrot.slane %v3668, 4
      %v3671 = vor.u32 %v3670, %v3666
      %v3672 = vrot.slane %v3671, 4
      %v3674 = vshll.u32 %v3293, 16
      %v3676 = vrot.slane %v3674, 5
      %v3677 = vsel %vm2073, %v3672, %v3676
      %v3678 = vld [vmem:[%s3245] sm:$0xe]
      %v3679 = vld [vmem:[%s3245 + $0xc] sm:$0xe]
      %v3680 = vld [vmem:[%s3245 + $0x18] sm:$0xe]
      %v3681 = vld [vmem:[%s3245 + $0x24] sm:$0xe]
      %v3682 = vld [vmem:[%s3245 + $0x30] sm:$0xe]
      %v3683 = vld [vmem:[%s3245 + $0x3c] sm:$0xe]
      %v3684 = vld [vmem:[%s3245 + $0x48] sm:$0xe]
      %v3685 = vld [vmem:[%s3245 + $0x54] sm:$0xe]
      %v3686 = vld [vmem:[%s3245 + $0x60] sm:$0xe]
      %v3687 = vld [vmem:[%s3245 + $0x6c] sm:$0xe]
      %v3688 = vld [vmem:[%s3245 + $0x78] sm:$0xe]
      %v3689 = vld [vmem:[%s3245 + $0x84] sm:$0xe]
      %v3690 = vld [vmem:[%s3245 + $0x90] sm:$0xe]
      %v3691 = vld [vmem:[%s3245 + $0x9c] sm:$0xe]
      %v3692 = vld [vmem:[%s3245 + $0xa8] sm:$0xe]
      %v3693 = vld [vmem:[%s3245 + $0xb4] sm:$0xe]
      %v3742 = vrot.slane %v3678, 5
      %v3743 = vrot.slane %v3742, 4
      %v3744 = vrot.slane %v3247, 5
      %v3745 = vsel %vm2524, %v3743, %v3744
      %v3746 = vrot.slane %v3744, 4
      %v3747 = vrot.slane %v3278, 5
      %v3748 = vsel %vm2524, %v3746, %v3747
      %v3749 = vrot.slane %v3679, 5
      %v3750 = vrot.slane %v3749, 4
      %v3751 = vrot.slane %v3249, 5
      %v3752 = vsel %vm2524, %v3750, %v3751
      %v3753 = vrot.slane %v3751, 4
      %v3754 = vrot.slane %v3279, 5
      %v3755 = vsel %vm2524, %v3753, %v3754
      %v3756 = vrot.slane %v3680, 5
      %v3757 = vrot.slane %v3756, 4
      %v3758 = vrot.slane %v3251, 5
      %v3759 = vsel %vm2524, %v3757, %v3758
      %v3760 = vrot.slane %v3758, 4
      %v3761 = vrot.slane %v3280, 5
      %v3762 = vsel %vm2524, %v3760, %v3761
      %v3763 = vrot.slane %v3681, 5
      %v3764 = vrot.slane %v3763, 4
      %v3765 = vrot.slane %v3253, 5
      %v3766 = vsel %vm2524, %v3764, %v3765
      %v3767 = vrot.slane %v3765, 4
      %v3768 = vrot.slane %v3281, 5
      %v3769 = vsel %vm2524, %v3767, %v3768
      %v3770 = vrot.slane %v3682, 5
      %v3771 = vrot.slane %v3770, 4
      %v3772 = vrot.slane %v3255, 5
      %v3773 = vsel %vm2524, %v3771, %v3772
      %v3774 = vrot.slane %v3772, 4
      %v3775 = vrot.slane %v3282, 5
      %v3776 = vsel %vm2524, %v3774, %v3775
      %v3777 = vrot.slane %v3683, 5
      %v3778 = vrot.slane %v3777, 4
      %v3779 = vrot.slane %v3257, 5
      %v3780 = vsel %vm2524, %v3778, %v3779
      %v3781 = vrot.slane %v3779, 4
      %v3782 = vrot.slane %v3283, 5
      %v3783 = vsel %vm2524, %v3781, %v3782
      %v3784 = vrot.slane %v3684, 5
      %v3785 = vrot.slane %v3784, 4
      %v3786 = vrot.slane %v3259, 5
      %v3787 = vsel %vm2524, %v3785, %v3786
      %v3788 = vrot.slane %v3786, 4
      %v3789 = vrot.slane %v3284, 5
      %v3790 = vsel %vm2524, %v3788, %v3789
      %v3791 = vrot.slane %v3685, 5
      %v3792 = vrot.slane %v3791, 4
      %v3793 = vrot.slane %v3261, 5
      %v3794 = vsel %vm2524, %v3792, %v3793
      %v3795 = vrot.slane %v3793, 4
      %v3796 = vrot.slane %v3285, 5
      %v3797 = vsel %vm2524, %v3795, %v3796
      %v3798 = vrot.slane %v3686, 5
      %v3799 = vrot.slane %v3798, 4
      %v3800 = vrot.slane %v3263, 5
      %v3801 = vsel %vm2524, %v3799, %v3800
      %v3802 = vrot.slane %v3800, 4
      %v3803 = vrot.slane %v3286, 5
      %v3804 = vsel %vm2524, %v3802, %v3803
      %v3805 = vrot.slane %v3687, 5
      %v3806 = vrot.slane %v3805, 4
      %v3807 = vrot.slane %v3265, 5
      %v3808 = vsel %vm2524, %v3806, %v3807
      %v3809 = vrot.slane %v3807, 4
      %v3810 = vrot.slane %v3287, 5
      %v3811 = vsel %vm2524, %v3809, %v3810
      %v3812 = vrot.slane %v3688, 5
      %v3813 = vrot.slane %v3812, 4
      %v3814 = vrot.slane %v3267, 5
      %v3815 = vsel %vm2524, %v3813, %v3814
      %v3816 = vrot.slane %v3814, 4
      %v3817 = vrot.slane %v3288, 5
      %v3818 = vsel %vm2524, %v3816, %v3817
      %v3819 = vrot.slane %v3689, 5
      %v3820 = vrot.slane %v3819, 4
      %v3821 = vrot.slane %v3269, 5
      %v3822 = vsel %vm2524, %v3820, %v3821
      %v3823 = vrot.slane %v3821, 4
      %v3824 = vrot.slane %v3289, 5
      %v3825 = vsel %vm2524, %v3823, %v3824
      %v3826 = vrot.slane %v3690, 5
      %v3827 = vrot.slane %v3826, 4
      %v3828 = vrot.slane %v3271, 5
      %v3829 = vsel %vm2524, %v3827, %v3828
      %v3830 = vrot.slane %v3828, 4
      %v3831 = vrot.slane %v3290, 5
      %v3832 = vsel %vm2524, %v3830, %v3831
      %v3833 = vrot.slane %v3691, 5
      %v3834 = vrot.slane %v3833, 4
      %v3835 = vrot.slane %v3273, 5
      %v3836 = vsel %vm2524, %v3834, %v3835
      %v3837 = vrot.slane %v3835, 4
      %v3838 = vrot.slane %v3291, 5
      %v3839 = vsel %vm2524, %v3837, %v3838
      %v3840 = vrot.slane %v3692, 5
      %v3841 = vrot.slane %v3840, 4
      %v3842 = vrot.slane %v3275, 5
      %v3843 = vsel %vm2524, %v3841, %v3842
      %v3844 = vrot.slane %v3842, 4
      %v3845 = vrot.slane %v3292, 5
      %v3846 = vsel %vm2524, %v3844, %v3845
      %v3847 = vrot.slane %v3693, 5
      %v3848 = vrot.slane %v3847, 4
      %v3849 = vrot.slane %v3277, 5
      %v3850 = vsel %vm2524, %v3848, %v3849
      %v3851 = vrot.slane %v3849, 4
      %v3852 = vrot.slane %v3293, 5
      %v3853 = vsel %vm2524, %v3851, %v3852
      %v3870 = vunpack.c.l.b16 %v2023
      %v3871 = vunpack.c.l.b16 %v2024
      %v3872 = vunpack.c.l.b16 %v2025
      %v3873 = vunpack.c.l.b16 %v2026
      %v3874 = vunpack.c.l.b16 %v2027
      %v3875 = vunpack.c.l.b16 %v2028
      %v3876 = vunpack.c.l.b16 %v2029
      %v3877 = vunpack.c.l.b16 %v2030
      %v3878 = vunpack.c.l.b16 %v2031
      %v3879 = vunpack.c.l.b16 %v2032
      %v3880 = vunpack.c.l.b16 %v2033
      %v3881 = vunpack.c.l.b16 %v2034
      %v3882 = vunpack.c.l.b16 %v2035
      %v3883 = vunpack.c.l.b16 %v2036
      %v3884 = vunpack.c.l.b16 %v2037
      %v3885 = vunpack.c.l.b16 %v2038
      %v3886 = vunpack.c.l.b16 %v2039
      %v3887 = vunpack.c.l.b16 %v2040
      %v3888 = vunpack.c.l.b16 %v2041
      %v3889 = vunpack.c.l.b16 %v2042
      %v3890 = vunpack.c.l.b16 %v2043
      %v3891 = vunpack.c.l.b16 %v2044
      %v3892 = vunpack.c.l.b16 %v2045
      %v3893 = vunpack.c.l.b16 %v2046
      %v3894 = vunpack.c.l.b16 %v2047
      %v3895 = vunpack.c.l.b16 %v2048
      %v3896 = vunpack.c.l.b16 %v2049
      %v3897 = vunpack.c.l.b16 %v2050
      %v3898 = vunpack.c.l.b16 %v2051
      %v3899 = vunpack.c.l.b16 %v2052
      %v3900 = vunpack.c.l.b16 %v2053
      %v3901 = vunpack.c.l.b16 %v2054
      %v3902 = vpack.c.b16 %v3871, %v3870
      %v3903 = vpack.c.b16 %v3873, %v3872
      %v3904 = vpack.c.b16 %v3875, %v3874
      %v3905 = vpack.c.b16 %v3877, %v3876
      %v3906 = vpack.c.b16 %v3879, %v3878
      %v3907 = vpack.c.b16 %v3881, %v3880
      %v3908 = vpack.c.b16 %v3883, %v3882
      %v3909 = vpack.c.b16 %v3885, %v3884
      %v3910 = vpack.c.b16 %v3887, %v3886
      %v3911 = vpack.c.b16 %v3889, %v3888
      %v3912 = vpack.c.b16 %v3891, %v3890
      %v3913 = vpack.c.b16 %v3893, %v3892
      %v3914 = vpack.c.b16 %v3895, %v3894
      %v3915 = vpack.c.b16 %v3897, %v3896
      %v3916 = vpack.c.b16 %v3899, %v3898
      %v3917 = vpack.c.b16 %v3901, %v3900
      %v3918 = vunpack.c.l.b16 %v2087
      %v3919 = vunpack.c.l.b16 %v2097
      %v3920 = vunpack.c.l.b16 %v2111
      %v3921 = vunpack.c.l.b16 %v2121
      %v3922 = vunpack.c.l.b16 %v2135
      %v3923 = vunpack.c.l.b16 %v2145
      %v3924 = vunpack.c.l.b16 %v2159
      %v3925 = vunpack.c.l.b16 %v2169
      %v3926 = vunpack.c.l.b16 %v2183
      %v3927 = vunpack.c.l.b16 %v2193
      %v3928 = vunpack.c.l.b16 %v2207
      %v3929 = vunpack.c.l.b16 %v2217
      %v3930 = vunpack.c.l.b16 %v2231
      %v3931 = vunpack.c.l.b16 %v2241
      %v3932 = vunpack.c.l.b16 %v2255
      %v3933 = vunpack.c.l.b16 %v2265
      %v3934 = vunpack.c.l.b16 %v2279
      %v3935 = vunpack.c.l.b16 %v2289
      %v3936 = vunpack.c.l.b16 %v2303
      %v3937 = vunpack.c.l.b16 %v2313
      %v3938 = vunpack.c.l.b16 %v2327
      %v3939 = vunpack.c.l.b16 %v2337
      %v3940 = vunpack.c.l.b16 %v2351
      %v3941 = vunpack.c.l.b16 %v2361
      %v3942 = vunpack.c.l.b16 %v2375
      %v3943 = vunpack.c.l.b16 %v2385
      %v3944 = vunpack.c.l.b16 %v2399
      %v3945 = vunpack.c.l.b16 %v2409
      %v3946 = vunpack.c.l.b16 %v2423
      %v3947 = vunpack.c.l.b16 %v2433
      %v3948 = vunpack.c.l.b16 %v2447
      %v3949 = vunpack.c.l.b16 %v2457
      %v3950 = vpack.c.b16 %v3919, %v3918
      %v3951 = vpack.c.b16 %v3921, %v3920
      %v3952 = vpack.c.b16 %v3923, %v3922
      %v3953 = vpack.c.b16 %v3925, %v3924
      %v3954 = vpack.c.b16 %v3927, %v3926
      %v3955 = vpack.c.b16 %v3929, %v3928
      %v3956 = vpack.c.b16 %v3931, %v3930
      %v3957 = vpack.c.b16 %v3933, %v3932
      %v3958 = vpack.c.b16 %v3935, %v3934
      %v3959 = vpack.c.b16 %v3937, %v3936
      %v3960 = vpack.c.b16 %v3939, %v3938
      %v3961 = vpack.c.b16 %v3941, %v3940
      %v3962 = vpack.c.b16 %v3943, %v3942
      %v3963 = vpack.c.b16 %v3945, %v3944
      %v3964 = vpack.c.b16 %v3947, %v3946
      %v3965 = vpack.c.b16 %v3949, %v3948
      %3966 = vrot.lane.b32.xlu0 %v3950, 16
      %v3967 = vpop.permute.xlu0 %3966
      %3968 = vrot.lane.b32.xlu0 %v3951, 16
      %v3969 = vpop.permute.xlu0 %3968
      %3970 = vrot.lane.b32.xlu0 %v3952, 16
      %v3971 = vpop.permute.xlu0 %3970
      %3972 = vrot.lane.b32.xlu0 %v3953, 16
      %v3973 = vpop.permute.xlu0 %3972
      %3974 = vrot.lane.b32.xlu0 %v3954, 16
      %v3975 = vpop.permute.xlu0 %3974
      %3976 = vrot.lane.b32.xlu0 %v3955, 16
      %v3977 = vpop.permute.xlu0 %3976
      %3978 = vrot.lane.b32.xlu0 %v3956, 16
      %v3979 = vpop.permute.xlu0 %3978
      %3980 = vrot.lane.b32.xlu0 %v3957, 16
      %v3981 = vpop.permute.xlu0 %3980
      %3982 = vrot.lane.b32.xlu0 %v3958, 16
      %v3983 = vpop.permute.xlu0 %3982
      %3984 = vrot.lane.b32.xlu0 %v3959, 16
      %v3985 = vpop.permute.xlu0 %3984
      %3986 = vrot.lane.b32.xlu0 %v3960, 16
      %v3987 = vpop.permute.xlu0 %3986
      %3988 = vrot.lane.b32.xlu0 %v3961, 16
      %v3989 = vpop.permute.xlu0 %3988
      %3990 = vrot.lane.b32.xlu0 %v3962, 16
      %v3991 = vpop.permute.xlu0 %3990
      %3992 = vrot.lane.b32.xlu0 %v3963, 16
      %v3993 = vpop.permute.xlu0 %3992
      %3994 = vrot.lane.b32.xlu0 %v3964, 16
      %v3995 = vpop.permute.xlu0 %3994
      %3996 = vrot.lane.b32.xlu0 %v3965, 16
      %v3997 = vpop.permute.xlu0 %3996
      %v3998 = vunpack.c.l.b16 %v2528
      %v3999 = vunpack.c.l.b16 %v2531
      %v4000 = vunpack.c.l.b16 %v2535
      %v4001 = vunpack.c.l.b16 %v2538
      %v4002 = vunpack.c.l.b16 %v2542
      %v4003 = vunpack.c.l.b16 %v2545
      %v4004 = vunpack.c.l.b16 %v2549
      %v4005 = vunpack.c.l.b16 %v2552
      %v4006 = vunpack.c.l.b16 %v2556
      %v4007 = vunpack.c.l.b16 %v2559
      %v4008 = vunpack.c.l.b16 %v2563
      %v4009 = vunpack.c.l.b16 %v2566
      %v4010 = vunpack.c.l.b16 %v2570
      %v4011 = vunpack.c.l.b16 %v2573
      %v4012 = vunpack.c.l.b16 %v2577
      %v4013 = vunpack.c.l.b16 %v2580
      %v4014 = vunpack.c.l.b16 %v2584
      %v4015 = vunpack.c.l.b16 %v2587
      %v4016 = vunpack.c.l.b16 %v2591
      %v4017 = vunpack.c.l.b16 %v2594
      %v4018 = vunpack.c.l.b16 %v2598
      %v4019 = vunpack.c.l.b16 %v2601
      %v4020 = vunpack.c.l.b16 %v2605
      %v4021 = vunpack.c.l.b16 %v2608
      %v4022 = vunpack.c.l.b16 %v2612
      %v4023 = vunpack.c.l.b16 %v2615
      %v4024 = vunpack.c.l.b16 %v2619
      %v4025 = vunpack.c.l.b16 %v2622
      %v4026 = vunpack.c.l.b16 %v2626
      %v4027 = vunpack.c.l.b16 %v2629
      %v4028 = vunpack.c.l.b16 %v2633
      %v4029 = vunpack.c.l.b16 %v2636
      %v4030 = vpack.c.b16 %v3999, %v3998
      %v4031 = vpack.c.b16 %v4001, %v4000
      %v4032 = vpack.c.b16 %v4003, %v4002
      %v4033 = vpack.c.b16 %v4005, %v4004
      %v4034 = vpack.c.b16 %v4007, %v4006
      %v4035 = vpack.c.b16 %v4009, %v4008
      %v4036 = vpack.c.b16 %v4011, %v4010
      %v4037 = vpack.c.b16 %v4013, %v4012
      %v4038 = vpack.c.b16 %v4015, %v4014
      %v4039 = vpack.c.b16 %v4017, %v4016
      %v4040 = vpack.c.b16 %v4019, %v4018
      %v4041 = vpack.c.b16 %v4021, %v4020
      %v4042 = vpack.c.b16 %v4023, %v4022
      %v4043 = vpack.c.b16 %v4025, %v4024
      %v4044 = vpack.c.b16 %v4027, %v4026
      %v4045 = vpack.c.b16 %v4029, %v4028
      %4046 = vrot.lane.b32.xlu0 %v4030, 32
      %v4047 = vpop.permute.xlu0 %4046
      %4048 = vrot.lane.b32.xlu0 %v4031, 32
      %v4049 = vpop.permute.xlu0 %4048
      %4050 = vrot.lane.b32.xlu0 %v4032, 32
      %v4051 = vpop.permute.xlu0 %4050
      %4052 = vrot.lane.b32.xlu0 %v4033, 32
      %v4053 = vpop.permute.xlu0 %4052
      %4054 = vrot.lane.b32.xlu0 %v4034, 32
      %v4055 = vpop.permute.xlu0 %4054
      %4056 = vrot.lane.b32.xlu0 %v4035, 32
      %v4057 = vpop.permute.xlu0 %4056
      %4058 = vrot.lane.b32.xlu0 %v4036, 32
      %v4059 = vpop.permute.xlu0 %4058
      %4060 = vrot.lane.b32.xlu0 %v4037, 32
      %v4061 = vpop.permute.xlu0 %4060
      %4062 = vrot.lane.b32.xlu0 %v4038, 32
      %v4063 = vpop.permute.xlu0 %4062
      %4064 = vrot.lane.b32.xlu0 %v4039, 32
      %v4065 = vpop.permute.xlu0 %4064
      %4066 = vrot.lane.b32.xlu0 %v4040, 32
      %v4067 = vpop.permute.xlu0 %4066
      %4068 = vrot.lane.b32.xlu0 %v4041, 32
      %v4069 = vpop.permute.xlu0 %4068
      %4070 = vrot.lane.b32.xlu0 %v4042, 32
      %v4071 = vpop.permute.xlu0 %4070
      %4072 = vrot.lane.b32.xlu0 %v4043, 32
      %v4073 = vpop.permute.xlu0 %4072
      %4074 = vrot.lane.b32.xlu0 %v4044, 32
      %v4075 = vpop.permute.xlu0 %4074
      %4076 = vrot.lane.b32.xlu0 %v4045, 32
      %v4077 = vpop.permute.xlu0 %4076
      %v4094 = vunpack.c.l.b16 %v2637
      %v4095 = vunpack.c.l.b16 %v2638
      %v4096 = vunpack.c.l.b16 %v2639
      %v4097 = vunpack.c.l.b16 %v2640
      %v4098 = vunpack.c.l.b16 %v2641
      %v4099 = vunpack.c.l.b16 %v2642
      %v4100 = vunpack.c.l.b16 %v2643
      %v4101 = vunpack.c.l.b16 %v2644
      %v4102 = vunpack.c.l.b16 %v2645
      %v4103 = vunpack.c.l.b16 %v2646
      %v4104 = vunpack.c.l.b16 %v2647
      %v4105 = vunpack.c.l.b16 %v2648
      %v4106 = vunpack.c.l.b16 %v2649
      %v4107 = vunpack.c.l.b16 %v2650
      %v4108 = vunpack.c.l.b16 %v2651
      %v4109 = vunpack.c.l.b16 %v2652
      %v4110 = vunpack.c.l.b16 %v2653
      %v4111 = vunpack.c.l.b16 %v2654
      %v4112 = vunpack.c.l.b16 %v2655
      %v4113 = vunpack.c.l.b16 %v2656
      %v4114 = vunpack.c.l.b16 %v2657
      %v4115 = vunpack.c.l.b16 %v2658
      %v4116 = vunpack.c.l.b16 %v2659
      %v4117 = vunpack.c.l.b16 %v2660
      %v4118 = vunpack.c.l.b16 %v2661
      %v4119 = vunpack.c.l.b16 %v2662
      %v4120 = vunpack.c.l.b16 %v2663
      %v4121 = vunpack.c.l.b16 %v2664
      %v4122 = vunpack.c.l.b16 %v2665
      %v4123 = vunpack.c.l.b16 %v2666
      %v4124 = vunpack.c.l.b16 %v2667
      %v4125 = vunpack.c.l.b16 %v2668
      %v4126 = vpack.c.b16 %v4095, %v4094
      %v4127 = vpack.c.b16 %v4097, %v4096
      %v4128 = vpack.c.b16 %v4099, %v4098
      %v4129 = vpack.c.b16 %v4101, %v4100
      %v4130 = vpack.c.b16 %v4103, %v4102
      %v4131 = vpack.c.b16 %v4105, %v4104
      %v4132 = vpack.c.b16 %v4107, %v4106
      %v4133 = vpack.c.b16 %v4109, %v4108
      %v4134 = vpack.c.b16 %v4111, %v4110
      %v4135 = vpack.c.b16 %v4113, %v4112
      %v4136 = vpack.c.b16 %v4115, %v4114
      %v4137 = vpack.c.b16 %v4117, %v4116
      %v4138 = vpack.c.b16 %v4119, %v4118
      %v4139 = vpack.c.b16 %v4121, %v4120
      %v4140 = vpack.c.b16 %v4123, %v4122
      %v4141 = vpack.c.b16 %v4125, %v4124
      %4142 = vrot.lane.b32.xlu0 %v4126, 48
      %v4143 = vpop.permute.xlu0 %4142
      %4144 = vrot.lane.b32.xlu0 %v4127, 48
      %v4145 = vpop.permute.xlu0 %4144
      %4146 = vrot.lane.b32.xlu0 %v4128, 48
      %v4147 = vpop.permute.xlu0 %4146
      %4148 = vrot.lane.b32.xlu0 %v4129, 48
      %v4149 = vpop.permute.xlu0 %4148
      %4150 = vrot.lane.b32.xlu0 %v4130, 48
      %v4151 = vpop.permute.xlu0 %4150
      %4152 = vrot.lane.b32.xlu0 %v4131, 48
      %v4153 = vpop.permute.xlu0 %4152
      %4154 = vrot.lane.b32.xlu0 %v4132, 48
      %v4155 = vpop.permute.xlu0 %4154
      %4156 = vrot.lane.b32.xlu0 %v4133, 48
      %v4157 = vpop.permute.xlu0 %4156
      %4158 = vrot.lane.b32.xlu0 %v4134, 48
      %v4159 = vpop.permute.xlu0 %4158
      %4160 = vrot.lane.b32.xlu0 %v4135, 48
      %v4161 = vpop.permute.xlu0 %4160
      %4162 = vrot.lane.b32.xlu0 %v4136, 48
      %v4163 = vpop.permute.xlu0 %4162
      %4164 = vrot.lane.b32.xlu0 %v4137, 48
      %v4165 = vpop.permute.xlu0 %4164
      %4166 = vrot.lane.b32.xlu0 %v4138, 48
      %v4167 = vpop.permute.xlu0 %4166
      %4168 = vrot.lane.b32.xlu0 %v4139, 48
      %v4169 = vpop.permute.xlu0 %4168
      %4170 = vrot.lane.b32.xlu0 %v4140, 48
      %v4171 = vpop.permute.xlu0 %4170
      %4172 = vrot.lane.b32.xlu0 %v4141, 48
      %v4173 = vpop.permute.xlu0 %4172
      %v4174 = vunpack.c.l.b16 %v2698
      %v4175 = vunpack.c.l.b16 %v2708
      %v4176 = vunpack.c.l.b16 %v2722
      %v4177 = vunpack.c.l.b16 %v2732
      %v4178 = vunpack.c.l.b16 %v2746
      %v4179 = vunpack.c.l.b16 %v2756
      %v4180 = vunpack.c.l.b16 %v2770
      %v4181 = vunpack.c.l.b16 %v2780
      %v4182 = vunpack.c.l.b16 %v2794
      %v4183 = vunpack.c.l.b16 %v2804
      %v4184 = vunpack.c.l.b16 %v2818
      %v4185 = vunpack.c.l.b16 %v2828
      %v4186 = vunpack.c.l.b16 %v2842
      %v4187 = vunpack.c.l.b16 %v2852
      %v4188 = vunpack.c.l.b16 %v2866
      %v4189 = vunpack.c.l.b16 %v2876
      %v4190 = vunpack.c.l.b16 %v2890
      %v4191 = vunpack.c.l.b16 %v2900
      %v4192 = vunpack.c.l.b16 %v2914
      %v4193 = vunpack.c.l.b16 %v2924
      %v4194 = vunpack.c.l.b16 %v2938
      %v4195 = vunpack.c.l.b16 %v2948
      %v4196 = vunpack.c.l.b16 %v2962
      %v4197 = vunpack.c.l.b16 %v2972
      %v4198 = vunpack.c.l.b16 %v2986
      %v4199 = vunpack.c.l.b16 %v2996
      %v4200 = vunpack.c.l.b16 %v3010
      %v4201 = vunpack.c.l.b16 %v3020
      %v4202 = vunpack.c.l.b16 %v3034
      %v4203 = vunpack.c.l.b16 %v3044
      %v4204 = vunpack.c.l.b16 %v3058
      %v4205 = vunpack.c.l.b16 %v3068
      %v4206 = vpack.c.b16 %v4175, %v4174
      %v4207 = vpack.c.b16 %v4177, %v4176
      %v4208 = vpack.c.b16 %v4179, %v4178
      %v4209 = vpack.c.b16 %v4181, %v4180
      %v4210 = vpack.c.b16 %v4183, %v4182
      %v4211 = vpack.c.b16 %v4185, %v4184
      %v4212 = vpack.c.b16 %v4187, %v4186
      %v4213 = vpack.c.b16 %v4189, %v4188
      %v4214 = vpack.c.b16 %v4191, %v4190
      %v4215 = vpack.c.b16 %v4193, %v4192
      %v4216 = vpack.c.b16 %v4195, %v4194
      %v4217 = vpack.c.b16 %v4197, %v4196
      %v4218 = vpack.c.b16 %v4199, %v4198
      %v4219 = vpack.c.b16 %v4201, %v4200
      %v4220 = vpack.c.b16 %v4203, %v4202
      %v4221 = vpack.c.b16 %v4205, %v4204
      %4222 = vrot.lane.b32.xlu0 %v4206, 64
      %v4223 = vpop.permute.xlu0 %4222
      %4224 = vrot.lane.b32.xlu0 %v4207, 64
      %v4225 = vpop.permute.xlu0 %4224
      %4226 = vrot.lane.b32.xlu0 %v4208, 64
      %v4227 = vpop.permute.xlu0 %4226
      %4228 = vrot.lane.b32.xlu0 %v4209, 64
      %v4229 = vpop.permute.xlu0 %4228
      %4230 = vrot.lane.b32.xlu0 %v4210, 64
      %v4231 = vpop.permute.xlu0 %4230
      %4232 = vrot.lane.b32.xlu0 %v4211, 64
      %v4233 = vpop.permute.xlu0 %4232
      %4234 = vrot.lane.b32.xlu0 %v4212, 64
      %v4235 = vpop.permute.xlu0 %4234
      %4236 = vrot.lane.b32.xlu0 %v4213, 64
      %v4237 = vpop.permute.xlu0 %4236
      %4238 = vrot.lane.b32.xlu0 %v4214, 64
      %v4239 = vpop.permute.xlu0 %4238
      %4240 = vrot.lane.b32.xlu0 %v4215, 64
      %v4241 = vpop.permute.xlu0 %4240
      %4242 = vrot.lane.b32.xlu0 %v4216, 64
      %v4243 = vpop.permute.xlu0 %4242
      %4244 = vrot.lane.b32.xlu0 %v4217, 64
      %v4245 = vpop.permute.xlu0 %4244
      %4246 = vrot.lane.b32.xlu0 %v4218, 64
      %v4247 = vpop.permute.xlu0 %4246
      %4248 = vrot.lane.b32.xlu0 %v4219, 64
      %v4249 = vpop.permute.xlu0 %4248
      %4250 = vrot.lane.b32.xlu0 %v4220, 64
      %v4251 = vpop.permute.xlu0 %4250
      %4252 = vrot.lane.b32.xlu0 %v4221, 64
      %v4253 = vpop.permute.xlu0 %4252
      %v4254 = vunpack.c.l.b16 %v3136
      %v4255 = vunpack.c.l.b16 %v3139
      %v4256 = vunpack.c.l.b16 %v3143
      %v4257 = vunpack.c.l.b16 %v3146
      %v4258 = vunpack.c.l.b16 %v3150
      %v4259 = vunpack.c.l.b16 %v3153
      %v4260 = vunpack.c.l.b16 %v3157
      %v4261 = vunpack.c.l.b16 %v3160
      %v4262 = vunpack.c.l.b16 %v3164
      %v4263 = vunpack.c.l.b16 %v3167
      %v4264 = vunpack.c.l.b16 %v3171
      %v4265 = vunpack.c.l.b16 %v3174
      %v4266 = vunpack.c.l.b16 %v3178
      %v4267 = vunpack.c.l.b16 %v3181
      %v4268 = vunpack.c.l.b16 %v3185
      %v4269 = vunpack.c.l.b16 %v3188
      %v4270 = vunpack.c.l.b16 %v3192
      %v4271 = vunpack.c.l.b16 %v3195
      %v4272 = vunpack.c.l.b16 %v3199
      %v4273 = vunpack.c.l.b16 %v3202
      %v4274 = vunpack.c.l.b16 %v3206
      %v4275 = vunpack.c.l.b16 %v3209
      %v4276 = vunpack.c.l.b16 %v3213
      %v4277 = vunpack.c.l.b16 %v3216
      %v4278 = vunpack.c.l.b16 %v3220
      %v4279 = vunpack.c.l.b16 %v3223
      %v4280 = vunpack.c.l.b16 %v3227
      %v4281 = vunpack.c.l.b16 %v3230
      %v4282 = vunpack.c.l.b16 %v3234
      %v4283 = vunpack.c.l.b16 %v3237
      %v4284 = vunpack.c.l.b16 %v3241
      %v4285 = vunpack.c.l.b16 %v3244
      %v4286 = vpack.c.b16 %v4255, %v4254
      %v4287 = vpack.c.b16 %v4257, %v4256
      %v4288 = vpack.c.b16 %v4259, %v4258
      %v4289 = vpack.c.b16 %v4261, %v4260
      %v4290 = vpack.c.b16 %v4263, %v4262
      %v4291 = vpack.c.b16 %v4265, %v4264
      %v4292 = vpack.c.b16 %v4267, %v4266
      %v4293 = vpack.c.b16 %v4269, %v4268
      %v4294 = vpack.c.b16 %v4271, %v4270
      %v4295 = vpack.c.b16 %v4273, %v4272
      %v4296 = vpack.c.b16 %v4275, %v4274
      %v4297 = vpack.c.b16 %v4277, %v4276
      %v4298 = vpack.c.b16 %v4279, %v4278
      %v4299 = vpack.c.b16 %v4281, %v4280
      %v4300 = vpack.c.b16 %v4283, %v4282
      %v4301 = vpack.c.b16 %v4285, %v4284
      %4302 = vrot.lane.b32.xlu0 %v4286, 80
      %v4303 = vpop.permute.xlu0 %4302
      %4304 = vrot.lane.b32.xlu0 %v4287, 80
      %v4305 = vpop.permute.xlu0 %4304
      %4306 = vrot.lane.b32.xlu0 %v4288, 80
      %v4307 = vpop.permute.xlu0 %4306
      %4308 = vrot.lane.b32.xlu0 %v4289, 80
      %v4309 = vpop.permute.xlu0 %4308
      %4310 = vrot.lane.b32.xlu0 %v4290, 80
      %v4311 = vpop.permute.xlu0 %4310
      %4312 = vrot.lane.b32.xlu0 %v4291, 80
      %v4313 = vpop.permute.xlu0 %4312
      %4314 = vrot.lane.b32.xlu0 %v4292, 80
      %v4315 = vpop.permute.xlu0 %4314
      %4316 = vrot.lane.b32.xlu0 %v4293, 80
      %v4317 = vpop.permute.xlu0 %4316
      %4318 = vrot.lane.b32.xlu0 %v4294, 80
      %v4319 = vpop.permute.xlu0 %4318
      %4320 = vrot.lane.b32.xlu0 %v4295, 80
      %v4321 = vpop.permute.xlu0 %4320
      %4322 = vrot.lane.b32.xlu0 %v4296, 80
      %v4323 = vpop.permute.xlu0 %4322
      %4324 = vrot.lane.b32.xlu0 %v4297, 80
      %v4325 = vpop.permute.xlu0 %4324
      %4326 = vrot.lane.b32.xlu0 %v4298, 80
      %v4327 = vpop.permute.xlu0 %4326
      %4328 = vrot.lane.b32.xlu0 %v4299, 80
      %v4329 = vpop.permute.xlu0 %4328
      %4330 = vrot.lane.b32.xlu0 %v4300, 80
      %v4331 = vpop.permute.xlu0 %4330
      %4332 = vrot.lane.b32.xlu0 %v4301, 80
      %v4333 = vpop.permute.xlu0 %4332
      %v4350 = vunpack.c.l.b16 %v3246
      %v4351 = vunpack.c.l.b16 %v3247
      %v4352 = vunpack.c.l.b16 %v3248
      %v4353 = vunpack.c.l.b16 %v3249
      %v4354 = vunpack.c.l.b16 %v3250
      %v4355 = vunpack.c.l.b16 %v3251
      %v4356 = vunpack.c.l.b16 %v3252
      %v4357 = vunpack.c.l.b16 %v3253
      %v4358 = vunpack.c.l.b16 %v3254
      %v4359 = vunpack.c.l.b16 %v3255
      %v4360 = vunpack.c.l.b16 %v3256
      %v4361 = vunpack.c.l.b16 %v3257
      %v4362 = vunpack.c.l.b16 %v3258
      %v4363 = vunpack.c.l.b16 %v3259
      %v4364 = vunpack.c.l.b16 %v3260
      %v4365 = vunpack.c.l.b16 %v3261
      %v4366 = vunpack.c.l.b16 %v3262
      %v4367 = vunpack.c.l.b16 %v3263
      %v4368 = vunpack.c.l.b16 %v3264
      %v4369 = vunpack.c.l.b16 %v3265
      %v4370 = vunpack.c.l.b16 %v3266
      %v4371 = vunpack.c.l.b16 %v3267
      %v4372 = vunpack.c.l.b16 %v3268
      %v4373 = vunpack.c.l.b16 %v3269
      %v4374 = vunpack.c.l.b16 %v3270
      %v4375 = vunpack.c.l.b16 %v3271
      %v4376 = vunpack.c.l.b16 %v3272
      %v4377 = vunpack.c.l.b16 %v3273
      %v4378 = vunpack.c.l.b16 %v3274
      %v4379 = vunpack.c.l.b16 %v3275
      %v4380 = vunpack.c.l.b16 %v3276
      %v4381 = vunpack.c.l.b16 %v3277
      %v4382 = vpack.c.b16 %v4351, %v4350
      %v4383 = vpack.c.b16 %v4353, %v4352
      %v4384 = vpack.c.b16 %v4355, %v4354
      %v4385 = vpack.c.b16 %v4357, %v4356
      %v4386 = vpack.c.b16 %v4359, %v4358
      %v4387 = vpack.c.b16 %v4361, %v4360
      %v4388 = vpack.c.b16 %v4363, %v4362
      %v4389 = vpack.c.b16 %v4365, %v4364
      %v4390 = vpack.c.b16 %v4367, %v4366
      %v4391 = vpack.c.b16 %v4369, %v4368
      %v4392 = vpack.c.b16 %v4371, %v4370
      %v4393 = vpack.c.b16 %v4373, %v4372
      %v4394 = vpack.c.b16 %v4375, %v4374
      %v4395 = vpack.c.b16 %v4377, %v4376
      %v4396 = vpack.c.b16 %v4379, %v4378
      %v4397 = vpack.c.b16 %v4381, %v4380
      %4398 = vrot.lane.b32.xlu0 %v4382, 96
      %v4399 = vpop.permute.xlu0 %4398
      %4400 = vrot.lane.b32.xlu0 %v4383, 96
      %v4401 = vpop.permute.xlu0 %4400
      %4402 = vrot.lane.b32.xlu0 %v4384, 96
      %v4403 = vpop.permute.xlu0 %4402
      %4404 = vrot.lane.b32.xlu0 %v4385, 96
      %v4405 = vpop.permute.xlu0 %4404
      %4406 = vrot.lane.b32.xlu0 %v4386, 96
      %v4407 = vpop.permute.xlu0 %4406
      %4408 = vrot.lane.b32.xlu0 %v4387, 96
      %v4409 = vpop.permute.xlu0 %4408
      %4410 = vrot.lane.b32.xlu0 %v4388, 96
      %v4411 = vpop.permute.xlu0 %4410
      %4412 = vrot.lane.b32.xlu0 %v4389, 96
      %v4413 = vpop.permute.xlu0 %4412
      %4414 = vrot.lane.b32.xlu0 %v4390, 96
      %v4415 = vpop.permute.xlu0 %4414
      %4416 = vrot.lane.b32.xlu0 %v4391, 96
      %v4417 = vpop.permute.xlu0 %4416
      %4418 = vrot.lane.b32.xlu0 %v4392, 96
      %v4419 = vpop.permute.xlu0 %4418
      %4420 = vrot.lane.b32.xlu0 %v4393, 96
      %v4421 = vpop.permute.xlu0 %4420
      %4422 = vrot.lane.b32.xlu0 %v4394, 96
      %v4423 = vpop.permute.xlu0 %4422
      %4424 = vrot.lane.b32.xlu0 %v4395, 96
      %v4425 = vpop.permute.xlu0 %4424
      %4426 = vrot.lane.b32.xlu0 %v4396, 96
      %v4427 = vpop.permute.xlu0 %4426
      %4428 = vrot.lane.b32.xlu0 %v4397, 96
      %v4429 = vpop.permute.xlu0 %4428
      %v4430 = vunpack.c.l.b16 %v3307
      %v4431 = vunpack.c.l.b16 %v3317
      %v4432 = vunpack.c.l.b16 %v3331
      %v4433 = vunpack.c.l.b16 %v3341
      %v4434 = vunpack.c.l.b16 %v3355
      %v4435 = vunpack.c.l.b16 %v3365
      %v4436 = vunpack.c.l.b16 %v3379
      %v4437 = vunpack.c.l.b16 %v3389
      %v4438 = vunpack.c.l.b16 %v3403
      %v4439 = vunpack.c.l.b16 %v3413
      %v4440 = vunpack.c.l.b16 %v3427
      %v4441 = vunpack.c.l.b16 %v3437
      %v4442 = vunpack.c.l.b16 %v3451
      %v4443 = vunpack.c.l.b16 %v3461
      %v4444 = vunpack.c.l.b16 %v3475
      %v4445 = vunpack.c.l.b16 %v3485
      %v4446 = vunpack.c.l.b16 %v3499
      %v4447 = vunpack.c.l.b16 %v3509
      %v4448 = vunpack.c.l.b16 %v3523
      %v4449 = vunpack.c.l.b16 %v3533
      %v4450 = vunpack.c.l.b16 %v3547
      %v4451 = vunpack.c.l.b16 %v3557
      %v4452 = vunpack.c.l.b16 %v3571
      %v4453 = vunpack.c.l.b16 %v3581
      %v4454 = vunpack.c.l.b16 %v3595
      %v4455 = vunpack.c.l.b16 %v3605
      %v4456 = vunpack.c.l.b16 %v3619
      %v4457 = vunpack.c.l.b16 %v3629
      %v4458 = vunpack.c.l.b16 %v3643
      %v4459 = vunpack.c.l.b16 %v3653
      %v4460 = vunpack.c.l.b16 %v3667
      %v4461 = vunpack.c.l.b16 %v3677
      %v4462 = vpack.c.b16 %v4431, %v4430
      %v4463 = vpack.c.b16 %v4433, %v4432
      %v4464 = vpack.c.b16 %v4435, %v4434
      %v4465 = vpack.c.b16 %v4437, %v4436
      %v4466 = vpack.c.b16 %v4439, %v4438
      %v4467 = vpack.c.b16 %v4441, %v4440
      %v4468 = vpack.c.b16 %v4443, %v4442
      %v4469 = vpack.c.b16 %v4445, %v4444
      %v4470 = vpack.c.b16 %v4447, %v4446
      %v4471 = vpack.c.b16 %v4449, %v4448
      %v4472 = vpack.c.b16 %v4451, %v4450
      %v4473 = vpack.c.b16 %v4453, %v4452
      %v4474 = vpack.c.b16 %v4455, %v4454
      %v4475 = vpack.c.b16 %v4457, %v4456
      %v4476 = vpack.c.b16 %v4459, %v4458
      %v4477 = vpack.c.b16 %v4461, %v4460
      %4478 = vrot.lane.b32.xlu0 %v4462, 112
      %v4479 = vpop.permute.xlu0 %4478
      %4480 = vrot.lane.b32.xlu0 %v4463, 112
      %v4481 = vpop.permute.xlu0 %4480
      %4482 = vrot.lane.b32.xlu0 %v4464, 112
      %v4483 = vpop.permute.xlu0 %4482
      %4484 = vrot.lane.b32.xlu0 %v4465, 112
      %v4485 = vpop.permute.xlu0 %4484
      %4486 = vrot.lane.b32.xlu0 %v4466, 112
      %v4487 = vpop.permute.xlu0 %4486
      %4488 = vrot.lane.b32.xlu0 %v4467, 112
      %v4489 = vpop.permute.xlu0 %4488
      %4490 = vrot.lane.b32.xlu0 %v4468, 112
      %v4491 = vpop.permute.xlu0 %4490
      %4492 = vrot.lane.b32.xlu0 %v4469, 112
      %v4493 = vpop.permute.xlu0 %4492
      %4494 = vrot.lane.b32.xlu0 %v4470, 112
      %v4495 = vpop.permute.xlu0 %4494
      %4496 = vrot.lane.b32.xlu0 %v4471, 112
      %v4497 = vpop.permute.xlu0 %4496
      %4498 = vrot.lane.b32.xlu0 %v4472, 112
      %v4499 = vpop.permute.xlu0 %4498
      %4500 = vrot.lane.b32.xlu0 %v4473, 112
      %v4501 = vpop.permute.xlu0 %4500
      %4502 = vrot.lane.b32.xlu0 %v4474, 112
      %v4503 = vpop.permute.xlu0 %4502
      %4504 = vrot.lane.b32.xlu0 %v4475, 112
      %v4505 = vpop.permute.xlu0 %4504
      %4506 = vrot.lane.b32.xlu0 %v4476, 112
      %v4507 = vpop.permute.xlu0 %4506
      %4508 = vrot.lane.b32.xlu0 %v4477, 112
      %v4509 = vpop.permute.xlu0 %4508
      %v4510 = vunpack.c.l.b16 %v3745
      %v4511 = vunpack.c.l.b16 %v3748
      %v4512 = vunpack.c.l.b16 %v3752
      %v4513 = vunpack.c.l.b16 %v3755
      %v4514 = vunpack.c.l.b16 %v3759
      %v4515 = vunpack.c.l.b16 %v3762
      %v4516 = vunpack.c.l.b16 %v3766
      %v4517 = vunpack.c.l.b16 %v3769
      %v4518 = vunpack.c.l.b16 %v3773
      %v4519 = vunpack.c.l.b16 %v3776
      %v4520 = vunpack.c.l.b16 %v3780
      %v4521 = vunpack.c.l.b16 %v3783
      %v4522 = vunpack.c.l.b16 %v3787
      %v4523 = vunpack.c.l.b16 %v3790
      %v4524 = vunpack.c.l.b16 %v3794
      %v4525 = vunpack.c.l.b16 %v3797
      %v4526 = vunpack.c.l.b16 %v3801
      %v4527 = vunpack.c.l.b16 %v3804
      %v4528 = vunpack.c.l.b16 %v3808
      %v4529 = vunpack.c.l.b16 %v3811
      %v4530 = vunpack.c.l.b16 %v3815
      %v4531 = vunpack.c.l.b16 %v3818
      %v4532 = vunpack.c.l.b16 %v3822
      %v4533 = vunpack.c.l.b16 %v3825
      %v4534 = vunpack.c.l.b16 %v3829
      %v4535 = vunpack.c.l.b16 %v3832
      %v4536 = vunpack.c.l.b16 %v3836
      %v4537 = vunpack.c.l.b16 %v3839
      %v4538 = vunpack.c.l.b16 %v3843
      %v4539 = vunpack.c.l.b16 %v3846
      %v4540 = vunpack.c.l.b16 %v3850
      %v4541 = vunpack.c.l.b16 %v3853
      %v4542 = vpack.c.b16 %v4511, %v4510
      %v4543 = vpack.c.b16 %v4513, %v4512
      %v4544 = vpack.c.b16 %v4515, %v4514
      %v4545 = vpack.c.b16 %v4517, %v4516
      %v4546 = vpack.c.b16 %v4519, %v4518
      %v4547 = vpack.c.b16 %v4521, %v4520
      %v4548 = vpack.c.b16 %v4523, %v4522
      %v4549 = vpack.c.b16 %v4525, %v4524
      %v4550 = vpack.c.b16 %v4527, %v4526
      %v4551 = vpack.c.b16 %v4529, %v4528
      %v4552 = vpack.c.b16 %v4531, %v4530
      %v4553 = vpack.c.b16 %v4533, %v4532
      %v4554 = vpack.c.b16 %v4535, %v4534
      %v4555 = vpack.c.b16 %v4537, %v4536
      %v4556 = vpack.c.b16 %v4539, %v4538
      %v4557 = vpack.c.b16 %v4541, %v4540
      %vm4558 = vcmask 130048
      %v4561 = vsel %vm4558, %v3902, %v3967
      %v4564 = vsel %vm4558, %v3903, %v3969
      %v4567 = vsel %vm4558, %v3904, %v3971
      %v4570 = vsel %vm4558, %v3905, %v3973
      %v4573 = vsel %vm4558, %v3906, %v3975
      %v4576 = vsel %vm4558, %v3907, %v3977
      %v4579 = vsel %vm4558, %v3908, %v3979
      %v4582 = vsel %vm4558, %v3909, %v3981
      %v4585 = vsel %vm4558, %v3910, %v3983
      %v4588 = vsel %vm4558, %v3911, %v3985
      %v4591 = vsel %vm4558, %v3912, %v3987
      %v4594 = vsel %vm4558, %v3913, %v3989
      %v4597 = vsel %vm4558, %v3914, %v3991
      %v4600 = vsel %vm4558, %v3915, %v3993
      %v4603 = vsel %vm4558, %v3916, %v3995
      %v4606 = vsel %vm4558, %v3917, %v3997
      %vm4607 = vcmask 261120
      %v4609 = vsel %vm4607, %v4561, %v4047
      %v4611 = vsel %vm4607, %v4564, %v4049
      %v4613 = vsel %vm4607, %v4567, %v4051
      %v4615 = vsel %vm4607, %v4570, %v4053
      %v4617 = vsel %vm4607, %v4573, %v4055
      %v4619 = vsel %vm4607, %v4576, %v4057
      %v4621 = vsel %vm4607, %v4579, %v4059
      %v4623 = vsel %vm4607, %v4582, %v4061
      %v4625 = vsel %vm4607, %v4585, %v4063
      %v4627 = vsel %vm4607, %v4588, %v4065
      %v4629 = vsel %vm4607, %v4591, %v4067
      %v4631 = vsel %vm4607, %v4594, %v4069
      %v4633 = vsel %vm4607, %v4597, %v4071
      %v4635 = vsel %vm4607, %v4600, %v4073
      %v4637 = vsel %vm4607, %v4603, %v4075
      %v4639 = vsel %vm4607, %v4606, %v4077
      %vm4640 = vcmask 392192
      %v4642 = vsel %vm4640, %v4609, %v4143
      %v4644 = vsel %vm4640, %v4611, %v4145
      %v4646 = vsel %vm4640, %v4613, %v4147
      %v4648 = vsel %vm4640, %v4615, %v4149
      %v4650 = vsel %vm4640, %v4617, %v4151
      %v4652 = vsel %vm4640, %v4619, %v4153
      %v4654 = vsel %vm4640, %v4621, %v4155
      %v4656 = vsel %vm4640, %v4623, %v4157
      %v4658 = vsel %vm4640, %v4625, %v4159
      %v4660 = vsel %vm4640, %v4627, %v4161
      %v4662 = vsel %vm4640, %v4629, %v4163
      %v4664 = vsel %vm4640, %v4631, %v4165
      %v4666 = vsel %vm4640, %v4633, %v4167
      %v4668 = vsel %vm4640, %v4635, %v4169
      %v4670 = vsel %vm4640, %v4637, %v4171
      %v4672 = vsel %vm4640, %v4639, %v4173
      %vm4673 = vcmask 523264
      %v4675 = vsel %vm4673, %v4642, %v4223
      %v4677 = vsel %vm4673, %v4644, %v4225
      %v4679 = vsel %vm4673, %v4646, %v4227
      %v4681 = vsel %vm4673, %v4648, %v4229
      %v4683 = vsel %vm4673, %v4650, %v4231
      %v4685 = vsel %vm4673, %v4652, %v4233
      %v4687 = vsel %vm4673, %v4654, %v4235
      %v4689 = vsel %vm4673, %v4656, %v4237
      %v4691 = vsel %vm4673, %v4658, %v4239
      %v4693 = vsel %vm4673, %v4660, %v4241
      %v4695 = vsel %vm4673, %v4662, %v4243
      %v4697 = vsel %vm4673, %v4664, %v4245
      %v4699 = vsel %vm4673, %v4666, %v4247
      %v4701 = vsel %vm4673, %v4668, %v4249
      %v4703 = vsel %vm4673, %v4670, %v4251
      %v4705 = vsel %vm4673, %v4672, %v4253
      %vm4706 = vcmask 654336
      %v4708 = vsel %vm4706, %v4675, %v4303
      %v4710 = vsel %vm4706, %v4677, %v4305
      %v4712 = vsel %vm4706, %v4679, %v4307
      %v4714 = vsel %vm4706, %v4681, %v4309
      %v4716 = vsel %vm4706, %v4683, %v4311
      %v4718 = vsel %vm4706, %v4685, %v4313
      %v4720 = vsel %vm4706, %v4687, %v4315
      %v4722 = vsel %vm4706, %v4689, %v4317
      %v4724 = vsel %vm4706, %v4691, %v4319
      %v4726 = vsel %vm4706, %v4693, %v4321
      %v4728 = vsel %vm4706, %v4695, %v4323
      %v4730 = vsel %vm4706, %v4697, %v4325
      %v4732 = vsel %vm4706, %v4699, %v4327
      %v4734 = vsel %vm4706, %v4701, %v4329
      %v4736 = vsel %vm4706, %v4703, %v4331
      %v4738 = vsel %vm4706, %v4705, %v4333
      %vm4739 = vcmask 785408
      %v4741 = vsel %vm4739, %v4708, %v4399
      %v4743 = vsel %vm4739, %v4710, %v4401
      %v4745 = vsel %vm4739, %v4712, %v4403
      %v4747 = vsel %vm4739, %v4714, %v4405
      %v4749 = vsel %vm4739, %v4716, %v4407
      %v4751 = vsel %vm4739, %v4718, %v4409
      %v4753 = vsel %vm4739, %v4720, %v4411
      %v4755 = vsel %vm4739, %v4722, %v4413
      %v4757 = vsel %vm4739, %v4724, %v4415
      %v4759 = vsel %vm4739, %v4726, %v4417
      %v4761 = vsel %vm4739, %v4728, %v4419
      %v4763 = vsel %vm4739, %v4730, %v4421
      %v4765 = vsel %vm4739, %v4732, %v4423
      %v4767 = vsel %vm4739, %v4734, %v4425
      %v4769 = vsel %vm4739, %v4736, %v4427
      %v4771 = vsel %vm4739, %v4738, %v4429
      %vm4772 = vcmask 916480
      %v4774 = vsel %vm4772, %v4741, %v4479
      %v4777 = vsel %vm4772, %v4743, %v4481
      %v4780 = vsel %vm4772, %v4745, %v4483
      %v4783 = vsel %vm4772, %v4747, %v4485
      %v4786 = vsel %vm4772, %v4749, %v4487
      %v4789 = vsel %vm4772, %v4751, %v4489
      %v4792 = vsel %vm4772, %v4753, %v4491
      %v4795 = vsel %vm4772, %v4755, %v4493
      %v4798 = vsel %vm4772, %v4757, %v4495
      %v4801 = vsel %vm4772, %v4759, %v4497
      %v4804 = vsel %vm4772, %v4761, %v4499
      %v4807 = vsel %vm4772, %v4763, %v4501
      %v4810 = vsel %vm4772, %v4765, %v4503
      %v4813 = vsel %vm4772, %v4767, %v4505
      %v4816 = vsel %vm4772, %v4769, %v4507
      %v4819 = vsel %vm4772, %v4771, %v4509
      %v4822 = vperm.slane %v2022, 0
      %v4842 = vunpack.c.l.b16 %v2004
      %v4843 = vunpack.c.l.b16 %v2005
      %v4844 = vunpack.c.l.b16 %v2006
      %v4845 = vunpack.c.l.b16 %v2007
      %v4846 = vunpack.c.l.b16 %v2008
      %v4847 = vunpack.c.l.b16 %v2009
      %v4848 = vunpack.c.l.b16 %v2010
      %v4849 = vunpack.c.l.b16 %v2011
      %v4850 = vunpack.c.l.b16 %v2012
      %v4851 = vunpack.c.l.b16 %v2013
      %v4852 = vunpack.c.l.b16 %v2014
      %v4853 = vunpack.c.l.b16 %v2015
      %v4854 = vunpack.c.l.b16 %v2016
      %v4855 = vunpack.c.l.b16 %v2017
      %v4856 = vunpack.c.l.b16 %v2018
      %v4857 = vunpack.c.l.b16 %v2019
      %v4858 = vunpack.c.l.b16 %v2020
      %v4859 = vunpack.c.l.b16 %v2021
      %v4860 = vpack.c.b16 %v4843, %v4842
      %v4861 = vpack.c.b16 %v4845, %v4844
      %v4862 = vpack.c.b16 %v4847, %v4846
      %v4863 = vpack.c.b16 %v4849, %v4848
      %v4864 = vpack.c.b16 %v4851, %v4850
      %v4865 = vpack.c.b16 %v4853, %v4852
      %v4866 = vpack.c.b16 %v4855, %v4854
      %v4867 = vpack.c.b16 %v4857, %v4856
      %v4868 = vpack.c.b16 %v4859, %v4858
      %v4879 = vsel %vm4558, %v4542, 0
      %v4882 = vsel %vm4558, %v4543, 0
      %v4885 = vsel %vm4558, %v4544, 0
      %v4888 = vsel %vm4558, %v4545, 0
      %v4891 = vsel %vm4558, %v4546, 0
      %v4894 = vsel %vm4558, %v4547, 0
      %v4897 = vsel %vm4558, %v4548, 0
      %v4900 = vsel %vm4558, %v4549, 0
      %v4903 = vsel %vm4558, %v4550, 0
      %v4906 = vsel %vm4558, %v4551, 0
      %v4909 = vsel %vm4558, %v4552, 0
      %v4912 = vsel %vm4558, %v4553, 0
      %v4915 = vsel %vm4558, %v4554, 0
      %v4918 = vsel %vm4558, %v4555, 0
      %v4921 = vsel %vm4558, %v4556, 0
      %v4924 = vsel %vm4558, %v4557, 0
      %4926 = vmatpush.bf16.msra.mxu0 %v4867
      %4927 = vmatpush.bf16.msra.mxu0 %v4866
      %4928 = vmatpush.bf16.msra.mxu0 %v4865
      %4929 = vmatpush.bf16.msra.mxu0 %v4864
      %4930 = vmatpush.bf16.msra.mxu0 %v4863
      %4931 = vmatpush.bf16.msra.mxu0 %v4862
      %4932 = vmatpush.bf16.msra.mxu0 %v4861
      %4933 = vmatpush.bf16.msra.mxu0 %v4860
      %4934 = vmatmul.bf16.gmra.mxu0 %v4774
      %v4935 = vpop.f32.mrf.mxu0
      %v4936 = vadd.f32 %v4822, %v4935
      %v4937 = vpop.f32.mrf.mxu0
      %v4938 = vadd.f32 %v4822, %v4937
      %4939 = vmatmul.bf16.gmra.mxu0 %v4777
      %v4940 = vpop.f32.mrf.mxu0
      %v4941 = vadd.f32 %v4822, %v4940
      %v4942 = vpop.f32.mrf.mxu0
      %v4943 = vadd.f32 %v4822, %v4942
      %4944 = vmatmul.bf16.gmra.mxu0 %v4780
      %v4945 = vpop.f32.mrf.mxu0
      %v4946 = vadd.f32 %v4822, %v4945
      %v4947 = vpop.f32.mrf.mxu0
      %v4948 = vadd.f32 %v4822, %v4947
      %4949 = vmatmul.bf16.gmra.mxu0 %v4783
      %v4950 = vpop.f32.mrf.mxu0
      %v4951 = vadd.f32 %v4822, %v4950
      %v4952 = vpop.f32.mrf.mxu0
      %v4953 = vadd.f32 %v4822, %v4952
      %4954 = vmatmul.bf16.gmra.mxu0 %v4786
      %v4955 = vpop.f32.mrf.mxu0
      %v4956 = vadd.f32 %v4822, %v4955
      %v4957 = vpop.f32.mrf.mxu0
      %v4958 = vadd.f32 %v4822, %v4957
      %4959 = vmatmul.bf16.gmra.mxu0 %v4789
      %v4960 = vpop.f32.mrf.mxu0
      %v4961 = vadd.f32 %v4822, %v4960
      %v4962 = vpop.f32.mrf.mxu0
      %v4963 = vadd.f32 %v4822, %v4962
      %4964 = vmatmul.bf16.gmra.mxu0 %v4792
      %v4965 = vpop.f32.mrf.mxu0
      %v4966 = vadd.f32 %v4822, %v4965
      %v4967 = vpop.f32.mrf.mxu0
      %v4968 = vadd.f32 %v4822, %v4967
      %4969 = vmatmul.bf16.gmra.mxu0 %v4795
      %v4970 = vpop.f32.mrf.mxu0
      %v4971 = vadd.f32 %v4822, %v4970
      %v4972 = vpop.f32.mrf.mxu0
      %v4973 = vadd.f32 %v4822, %v4972
      %4974 = vmatmul.bf16.gmra.mxu0 %v4798
      %v4975 = vpop.f32.mrf.mxu0
      %v4976 = vadd.f32 %v4822, %v4975
      %v4977 = vpop.f32.mrf.mxu0
      %v4978 = vadd.f32 %v4822, %v4977
      %4979 = vmatmul.bf16.gmra.mxu0 %v4801
      %v4980 = vpop.f32.mrf.mxu0
      %v4981 = vadd.f32 %v4822, %v4980
      %v4982 = vpop.f32.mrf.mxu0
      %v4983 = vadd.f32 %v4822, %v4982
      %4984 = vmatmul.bf16.gmra.mxu0 %v4804
      %v4985 = vpop.f32.mrf.mxu0
      %v4986 = vadd.f32 %v4822, %v4985
      %v4987 = vpop.f32.mrf.mxu0
      %v4988 = vadd.f32 %v4822, %v4987
      %4989 = vmatmul.bf16.gmra.mxu0 %v4807
      %v4990 = vpop.f32.mrf.mxu0
      %v4991 = vadd.f32 %v4822, %v4990
      %v4992 = vpop.f32.mrf.mxu0
      %v4993 = vadd.f32 %v4822, %v4992
      %4994 = vmatmul.bf16.gmra.mxu0 %v4810
      %v4995 = vpop.f32.mrf.mxu0
      %v4996 = vadd.f32 %v4822, %v4995
      %v4997 = vpop.f32.mrf.mxu0
      %v4998 = vadd.f32 %v4822, %v4997
      %4999 = vmatmul.bf16.gmra.mxu0 %v4813
      %v5000 = vpop.f32.mrf.mxu0
      %v5001 = vadd.f32 %v4822, %v5000
      %v5002 = vpop.f32.mrf.mxu0
      %v5003 = vadd.f32 %v4822, %v5002
      %5004 = vmatmul.bf16.gmra.mxu0 %v4816
      %v5005 = vpop.f32.mrf.mxu0
      %v5006 = vadd.f32 %v4822, %v5005
      %v5007 = vpop.f32.mrf.mxu0
      %v5008 = vadd.f32 %v4822, %v5007
      %5009 = vmatmul.bf16.gmra.mxu0 %v4819
      %v5010 = vpop.f32.mrf.mxu0
      %v5011 = vadd.f32 %v4822, %v5010
      %v5012 = vpop.f32.mrf.mxu0
      %v5013 = vadd.f32 %v4822, %v5012
      %5014 = vdwg.mxu0
      %5015 = vmatpush.bf16.msra.mxu0 0
      %5016 = vmatpush.bf16.msra.mxu0 0
      %5017 = vmatpush.bf16.msra.mxu0 0
      %5018 = vmatpush.bf16.msra.mxu0 0
      %5019 = vmatpush.bf16.msra.mxu0 0
      %5020 = vmatpush.bf16.msra.mxu0 0
      %5021 = vmatpush.bf16.msra.mxu0 0
      %5022 = vmatpush.bf16.msra.mxu0 %v4868
      %5023 = vmatmul.bf16.gmra.mxu0 %v4879
      %v5024 = vpop.f32.mrf.mxu0
      %v5025 = vadd.f32 %v4936, %v5024
      %v5026 = vpop.f32.mrf.mxu0
      %v5027 = vadd.f32 %v4938, %v5026
      %5028 = vmatmul.bf16.gmra.mxu0 %v4882
      %v5029 = vpop.f32.mrf.mxu0
      %v5030 = vadd.f32 %v4941, %v5029
      %v5031 = vpop.f32.mrf.mxu0
      %v5032 = vadd.f32 %v4943, %v5031
      %5033 = vmatmul.bf16.gmra.mxu0 %v4885
      %v5034 = vpop.f32.mrf.mxu0
      %v5035 = vadd.f32 %v4946, %v5034
      %v5036 = vpop.f32.mrf.mxu0
      %v5037 = vadd.f32 %v4948, %v5036
      %5038 = vmatmul.bf16.gmra.mxu0 %v4888
      %v5039 = vpop.f32.mrf.mxu0
      %v5040 = vadd.f32 %v4951, %v5039
      %v5041 = vpop.f32.mrf.mxu0
      %v5042 = vadd.f32 %v4953, %v5041
      %5043 = vmatmul.bf16.gmra.mxu0 %v4891
      %v5044 = vpop.f32.mrf.mxu0
      %v5045 = vadd.f32 %v4956, %v5044
      %v5046 = vpop.f32.mrf.mxu0
      %v5047 = vadd.f32 %v4958, %v5046
      %5048 = vmatmul.bf16.gmra.mxu0 %v4894
      %v5049 = vpop.f32.mrf.mxu0
      %v5050 = vadd.f32 %v4961, %v5049
      %v5051 = vpop.f32.mrf.mxu0
      %v5052 = vadd.f32 %v4963, %v5051
      %5053 = vmatmul.bf16.gmra.mxu0 %v4897
      %v5054 = vpop.f32.mrf.mxu0
      %v5055 = vadd.f32 %v4966, %v5054
      %v5056 = vpop.f32.mrf.mxu0
      %v5057 = vadd.f32 %v4968, %v5056
      %5058 = vmatmul.bf16.gmra.mxu0 %v4900
      %v5059 = vpop.f32.mrf.mxu0
      %v5060 = vadd.f32 %v4971, %v5059
      %v5061 = vpop.f32.mrf.mxu0
      %v5062 = vadd.f32 %v4973, %v5061
      %5063 = vmatmul.bf16.gmra.mxu0 %v4903
      %v5064 = vpop.f32.mrf.mxu0
      %v5065 = vadd.f32 %v4976, %v5064
      %v5066 = vpop.f32.mrf.mxu0
      %v5067 = vadd.f32 %v4978, %v5066
      %5068 = vmatmul.bf16.gmra.mxu0 %v4906
      %v5069 = vpop.f32.mrf.mxu0
      %v5070 = vadd.f32 %v4981, %v5069
      %v5071 = vpop.f32.mrf.mxu0
      %v5072 = vadd.f32 %v4983, %v5071
      %5073 = vmatmul.bf16.gmra.mxu0 %v4909
      %v5074 = vpop.f32.mrf.mxu0
      %v5075 = vadd.f32 %v4986, %v5074
      %v5076 = vpop.f32.mrf.mxu0
      %v5077 = vadd.f32 %v4988, %v5076
      %5078 = vmatmul.bf16.gmra.mxu0 %v4912
      %v5079 = vpop.f32.mrf.mxu0
      %v5080 = vadd.f32 %v4991, %v5079
      %v5081 = vpop.f32.mrf.mxu0
      %v5082 = vadd.f32 %v4993, %v5081
      %5083 = vmatmul.bf16.gmra.mxu0 %v4915
      %v5084 = vpop.f32.mrf.mxu0
      %v5085 = vadd.f32 %v4996, %v5084
      %v5086 = vpop.f32.mrf.mxu0
      %v5087 = vadd.f32 %v4998, %v5086
      %5088 = vmatmul.bf16.gmra.mxu0 %v4918
      %v5089 = vpop.f32.mrf.mxu0
      %v5090 = vadd.f32 %v5001, %v5089
      %v5091 = vpop.f32.mrf.mxu0
      %v5092 = vadd.f32 %v5003, %v5091
      %5093 = vmatmul.bf16.gmra.mxu0 %v4921
      %v5094 = vpop.f32.mrf.mxu0
      %v5095 = vadd.f32 %v5006, %v5094
      %v5096 = vpop.f32.mrf.mxu0
      %v5097 = vadd.f32 %v5008, %v5096
      %5098 = vmatmul.bf16.gmra.mxu0 %v4924
      %v5099 = vpop.f32.mrf.mxu0
      %v5100 = vadd.f32 %v5011, %v5099
      %v5101 = vpop.f32.mrf.mxu0
      %v5102 = vadd.f32 %v5013, %v5101
      %5103 = vdwg.mxu0
      %v5104 = vmax.f32 %v5025, 0.0
      %v5105 = vmax.f32 %v5027, 0.0
      %v5106 = vmax.f32 %v5030, 0.0
      %v5107 = vmax.f32 %v5032, 0.0
      %v5108 = vmax.f32 %v5035, 0.0
      %v5109 = vmax.f32 %v5037, 0.0
      %v5110 = vmax.f32 %v5040, 0.0
      %v5111 = vmax.f32 %v5042, 0.0
      %v5112 = vmax.f32 %v5045, 0.0
      %v5113 = vmax.f32 %v5047, 0.0
      %v5114 = vmax.f32 %v5050, 0.0
      %v5115 = vmax.f32 %v5052, 0.0
      %v5116 = vmax.f32 %v5055, 0.0
      %v5117 = vmax.f32 %v5057, 0.0
      %v5118 = vmax.f32 %v5060, 0.0
      %v5119 = vmax.f32 %v5062, 0.0
      %v5120 = vmax.f32 %v5065, 0.0
      %v5121 = vmax.f32 %v5067, 0.0
      %v5122 = vmax.f32 %v5070, 0.0
      %v5123 = vmax.f32 %v5072, 0.0
      %v5124 = vmax.f32 %v5075, 0.0
      %v5125 = vmax.f32 %v5077, 0.0
      %v5126 = vmax.f32 %v5080, 0.0
      %v5127 = vmax.f32 %v5082, 0.0
      %v5128 = vmax.f32 %v5085, 0.0
      %v5129 = vmax.f32 %v5087, 0.0
      %v5130 = vmax.f32 %v5090, 0.0
      %v5131 = vmax.f32 %v5092, 0.0
      %v5132 = vmax.f32 %v5095, 0.0
      %v5133 = vmax.f32 %v5097, 0.0
      %v5134 = vmax.f32 %v5100, 0.0
      %v5135 = vmax.f32 %v5102, 0.0
      %v5136 = vpack.c.bf16 %v5104, %v5104
      %v5137 = vpack.c.bf16 %v5105, %v5105
      %v5138 = vpack.c.bf16 %v5106, %v5106
      %v5139 = vpack.c.bf16 %v5107, %v5107
      %v5140 = vpack.c.bf16 %v5108, %v5108
      %v5141 = vpack.c.bf16 %v5109, %v5109
      %v5142 = vpack.c.bf16 %v5110, %v5110
      %v5143 = vpack.c.bf16 %v5111, %v5111
      %v5144 = vpack.c.bf16 %v5112, %v5112
      %v5145 = vpack.c.bf16 %v5113, %v5113
      %v5146 = vpack.c.bf16 %v5114, %v5114
      %v5147 = vpack.c.bf16 %v5115, %v5115
      %v5148 = vpack.c.bf16 %v5116, %v5116
      %v5149 = vpack.c.bf16 %v5117, %v5117
      %v5150 = vpack.c.bf16 %v5118, %v5118
      %v5151 = vpack.c.bf16 %v5119, %v5119
      %v5152 = vpack.c.bf16 %v5120, %v5120
      %v5153 = vpack.c.bf16 %v5121, %v5121
      %v5154 = vpack.c.bf16 %v5122, %v5122
      %v5155 = vpack.c.bf16 %v5123, %v5123
      %v5156 = vpack.c.bf16 %v5124, %v5124
      %v5157 = vpack.c.bf16 %v5125, %v5125
      %v5158 = vpack.c.bf16 %v5126, %v5126
      %v5159 = vpack.c.bf16 %v5127, %v5127
      %v5160 = vpack.c.bf16 %v5128, %v5128
      %v5161 = vpack.c.bf16 %v5129, %v5129
      %v5162 = vpack.c.bf16 %v5130, %v5130
      %v5163 = vpack.c.bf16 %v5131, %v5131
      %v5164 = vpack.c.bf16 %v5132, %v5132
      %v5165 = vpack.c.bf16 %v5133, %v5133
      %v5166 = vpack.c.bf16 %v5134, %v5134
      %v5167 = vpack.c.bf16 %v5135, %v5135
      %v5169 = vshrl.u32 %v5136, 16
      %v5171 = vrot.slane %v5169, 7
      %v5172 = vshll.u32 %v5136, 16
      %v5174 = vor.u32 %v5171, %v5172
      %v5175 = vrot.slane %v5171, 4
      %v5177 = vshrl.u32 %v5137, 16
      %v5179 = vrot.slane %v5177, 7
      %v5180 = vshll.u32 %v5137, 16
      %v5182 = vor.u32 %v5179, %v5180
      %v5183 = vsel %vm1568, %v5175, %v5182
      %v5184 = vrot.slane %v5179, 4
      %v5186 = vshrl.u32 %v5138, 16
      %v5188 = vrot.slane %v5186, 7
      %v5189 = vshll.u32 %v5138, 16
      %v5191 = vor.u32 %v5188, %v5189
      %v5192 = vrot.slane %v5188, 4
      %v5194 = vshrl.u32 %v5139, 16
      %v5196 = vrot.slane %v5194, 7
      %v5197 = vshll.u32 %v5139, 16
      %v5199 = vor.u32 %v5196, %v5197
      %v5200 = vsel %vm1568, %v5192, %v5199
      %v5201 = vrot.slane %v5196, 4
      %v5203 = vshrl.u32 %v5140, 16
      %v5205 = vrot.slane %v5203, 7
      %v5206 = vshll.u32 %v5140, 16
      %v5208 = vor.u32 %v5205, %v5206
      %v5209 = vrot.slane %v5205, 4
      %v5211 = vshrl.u32 %v5141, 16
      %v5213 = vrot.slane %v5211, 7
      %v5214 = vshll.u32 %v5141, 16
      %v5216 = vor.u32 %v5213, %v5214
      %v5217 = vsel %vm1568, %v5209, %v5216
      %v5218 = vrot.slane %v5213, 4
      %v5220 = vshrl.u32 %v5142, 16
      %v5222 = vrot.slane %v5220, 7
      %v5223 = vshll.u32 %v5142, 16
      %v5225 = vor.u32 %v5222, %v5223
      %v5226 = vrot.slane %v5222, 4
      %v5228 = vshrl.u32 %v5143, 16
      %v5230 = vrot.slane %v5228, 7
      %v5231 = vshll.u32 %v5143, 16
      %v5233 = vor.u32 %v5230, %v5231
      %v5234 = vsel %vm1568, %v5226, %v5233
      %v5235 = vrot.slane %v5230, 4
      %v5237 = vshrl.u32 %v5144, 16
      %v5239 = vrot.slane %v5237, 7
      %v5240 = vshll.u32 %v5144, 16
      %v5242 = vor.u32 %v5239, %v5240
      %v5243 = vrot.slane %v5239, 4
      %v5245 = vshrl.u32 %v5145, 16
      %v5247 = vrot.slane %v5245, 7
      %v5248 = vshll.u32 %v5145, 16
      %v5250 = vor.u32 %v5247, %v5248
      %v5251 = vsel %vm1568, %v5243, %v5250
      %v5252 = vrot.slane %v5247, 4
      %v5254 = vshrl.u32 %v5146, 16
      %v5256 = vrot.slane %v5254, 7
      %v5257 = vshll.u32 %v5146, 16
      %v5259 = vor.u32 %v5256, %v5257
      %v5260 = vrot.slane %v5256, 4
      %v5262 = vshrl.u32 %v5147, 16
      %v5264 = vrot.slane %v5262, 7
      %v5265 = vshll.u32 %v5147, 16
      %v5267 = vor.u32 %v5264, %v5265
      %v5268 = vsel %vm1568, %v5260, %v5267
      %v5269 = vrot.slane %v5264, 4
      %v5271 = vshrl.u32 %v5148, 16
      %v5273 = vrot.slane %v5271, 7
      %v5274 = vshll.u32 %v5148, 16
      %v5276 = vor.u32 %v5273, %v5274
      %v5277 = vrot.slane %v5273, 4
      %v5279 = vshrl.u32 %v5149, 16
      %v5281 = vrot.slane %v5279, 7
      %v5282 = vshll.u32 %v5149, 16
      %v5284 = vor.u32 %v5281, %v5282
      %v5285 = vsel %vm1568, %v5277, %v5284
      %v5286 = vrot.slane %v5281, 4
      %v5288 = vshrl.u32 %v5150, 16
      %v5290 = vrot.slane %v5288, 7
      %v5291 = vshll.u32 %v5150, 16
      %v5293 = vor.u32 %v5290, %v5291
      %v5294 = vrot.slane %v5290, 4
      %v5296 = vshrl.u32 %v5151, 16
      %v5298 = vrot.slane %v5296, 7
      %v5299 = vshll.u32 %v5151, 16
      %v5301 = vor.u32 %v5298, %v5299
      %v5302 = vsel %vm1568, %v5294, %v5301
      %v5303 = vrot.slane %v5298, 4
      %v5305 = vshrl.u32 %v5152, 16
      %v5307 = vrot.slane %v5305, 7
      %v5308 = vshll.u32 %v5152, 16
      %v5310 = vor.u32 %v5307, %v5308
      %v5311 = vrot.slane %v5307, 4
      %v5313 = vshrl.u32 %v5153, 16
      %v5315 = vrot.slane %v5313, 7
      %v5316 = vshll.u32 %v5153, 16
      %v5318 = vor.u32 %v5315, %v5316
      %v5319 = vsel %vm1568, %v5311, %v5318
      %v5320 = vrot.slane %v5315, 4
      %v5322 = vshrl.u32 %v5154, 16
      %v5324 = vrot.slane %v5322, 7
      %v5325 = vshll.u32 %v5154, 16
      %v5327 = vor.u32 %v5324, %v5325
      %v5328 = vrot.slane %v5324, 4
      %v5330 = vshrl.u32 %v5155, 16
      %v5332 = vrot.slane %v5330, 7
      %v5333 = vshll.u32 %v5155, 16
      %v5335 = vor.u32 %v5332, %v5333
      %v5336 = vsel %vm1568, %v5328, %v5335
      %v5337 = vrot.slane %v5332, 4
      %v5339 = vshrl.u32 %v5156, 16
      %v5341 = vrot.slane %v5339, 7
      %v5342 = vshll.u32 %v5156, 16
      %v5344 = vor.u32 %v5341, %v5342
      %v5345 = vrot.slane %v5341, 4
      %v5347 = vshrl.u32 %v5157, 16
      %v5349 = vrot.slane %v5347, 7
      %v5350 = vshll.u32 %v5157, 16
      %v5352 = vor.u32 %v5349, %v5350
      %v5353 = vsel %vm1568, %v5345, %v5352
      %v5354 = vrot.slane %v5349, 4
      %v5356 = vshrl.u32 %v5158, 16
      %v5358 = vrot.slane %v5356, 7
      %v5359 = vshll.u32 %v5158, 16
      %v5361 = vor.u32 %v5358, %v5359
      %v5362 = vrot.slane %v5358, 4
      %v5364 = vshrl.u32 %v5159, 16
      %v5366 = vrot.slane %v5364, 7
      %v5367 = vshll.u32 %v5159, 16
      %v5369 = vor.u32 %v5366, %v5367
      %v5370 = vsel %vm1568, %v5362, %v5369
      %v5371 = vrot.slane %v5366, 4
      %v5373 = vshrl.u32 %v5160, 16
      %v5375 = vrot.slane %v5373, 7
      %v5376 = vshll.u32 %v5160, 16
      %v5378 = vor.u32 %v5375, %v5376
      %v5379 = vrot.slane %v5375, 4
      %v5381 = vshrl.u32 %v5161, 16
      %v5383 = vrot.slane %v5381, 7
      %v5384 = vshll.u32 %v5161, 16
      %v5386 = vor.u32 %v5383, %v5384
      %v5387 = vsel %vm1568, %v5379, %v5386
      %v5388 = vrot.slane %v5383, 4
      %v5390 = vshrl.u32 %v5162, 16
      %v5392 = vrot.slane %v5390, 7
      %v5393 = vshll.u32 %v5162, 16
      %v5395 = vor.u32 %v5392, %v5393
      %v5396 = vrot.slane %v5392, 4
      %v5398 = vshrl.u32 %v5163, 16
      %v5400 = vrot.slane %v5398, 7
      %v5401 = vshll.u32 %v5163, 16
      %v5403 = vor.u32 %v5400, %v5401
      %v5404 = vsel %vm1568, %v5396, %v5403
      %v5405 = vrot.slane %v5400, 4
      %v5407 = vshrl.u32 %v5164, 16
      %v5409 = vrot.slane %v5407, 7
      %v5410 = vshll.u32 %v5164, 16
      %v5412 = vor.u32 %v5409, %v5410
      %v5413 = vrot.slane %v5409, 4
      %v5415 = vshrl.u32 %v5165, 16
      %v5417 = vrot.slane %v5415, 7
      %v5418 = vshll.u32 %v5165, 16
      %v5420 = vor.u32 %v5417, %v5418
      %v5421 = vsel %vm1568, %v5413, %v5420
      %v5422 = vrot.slane %v5417, 4
      %v5424 = vshrl.u32 %v5166, 16
      %v5426 = vrot.slane %v5424, 7
      %v5427 = vshll.u32 %v5166, 16
      %v5429 = vor.u32 %v5426, %v5427
      %v5430 = vrot.slane %v5426, 4
      %v5432 = vshrl.u32 %v5167, 16
      %v5434 = vrot.slane %v5432, 7
      %v5435 = vshll.u32 %v5167, 16
      %v5437 = vor.u32 %v5434, %v5435
      %v5438 = vsel %vm1568, %v5430, %v5437
      %v5439 = vrot.slane %v5434, 4
      %s5488 = scalar_lea.vmem [#allocation3], 12
      %vm5489 = vcmask 60416
      %vm5490 = vmand %vm5489, %vm339
      %v5491 = vld [vmem:[%s5488] sm:$0xf]
      %v5492 = vsel %vm5490, %v5174, %v5491
      %5493 = vst [vmem:[%s5488] sm:$0xf] %v5492
      %5494 = vst.msk [vmem:[%s5488 + $0x4] sm:$0xf] %vm395, %v5183
      %v5495 = vld [vmem:[%s5488 + $0x8] sm:$0x1]
      %v5496 = vsel %vm405, %v5184, %v5495
      %5497 = vst [vmem:[%s5488 + $0x8] sm:$0x1] %v5496
      %v5498 = vld [vmem:[%s5488 + $0xc] sm:$0xf]
      %v5499 = vsel %vm5490, %v5191, %v5498
      %5500 = vst [vmem:[%s5488 + $0xc] sm:$0xf] %v5499
      %5501 = vst.msk [vmem:[%s5488 + $0x10] sm:$0xf] %vm395, %v5200
      %v5502 = vld [vmem:[%s5488 + $0x14] sm:$0x1]
      %v5503 = vsel %vm405, %v5201, %v5502
      %5504 = vst [vmem:[%s5488 + $0x14] sm:$0x1] %v5503
      %v5505 = vld [vmem:[%s5488 + $0x18] sm:$0xf]
      %v5506 = vsel %vm5490, %v5208, %v5505
      %5507 = vst [vmem:[%s5488 + $0x18] sm:$0xf] %v5506
      %5508 = vst.msk [vmem:[%s5488 + $0x1c] sm:$0xf] %vm395, %v5217
      %v5509 = vld [vmem:[%s5488 + $0x20] sm:$0x1]
      %v5510 = vsel %vm405, %v5218, %v5509
      %5511 = vst [vmem:[%s5488 + $0x20] sm:$0x1] %v5510
      %v5512 = vld [vmem:[%s5488 + $0x24] sm:$0xf]
      %v5513 = vsel %vm5490, %v5225, %v5512
      %5514 = vst [vmem:[%s5488 + $0x24] sm:$0xf] %v5513
      %5515 = vst.msk [vmem:[%s5488 + $0x28] sm:$0xf] %vm395, %v5234
      %v5516 = vld [vmem:[%s5488 + $0x2c] sm:$0x1]
      %v5517 = vsel %vm405, %v5235, %v5516
      %5518 = vst [vmem:[%s5488 + $0x2c] sm:$0x1] %v5517
      %v5519 = vld [vmem:[%s5488 + $0x30] sm:$0xf]
      %v5520 = vsel %vm5490, %v5242, %v5519
      %5521 = vst [vmem:[%s5488 + $0x30] sm:$0xf] %v5520
      %5522 = vst.msk [vmem:[%s5488 + $0x34] sm:$0xf] %vm395, %v5251
      %v5523 = vld [vmem:[%s5488 + $0x38] sm:$0x1]
      %v5524 = vsel %vm405, %v5252, %v5523
      %5525 = vst [vmem:[%s5488 + $0x38] sm:$0x1] %v5524
      %v5526 = vld [vmem:[%s5488 + $0x3c] sm:$0xf]
      %v5527 = vsel %vm5490, %v5259, %v5526
      %5528 = vst [vmem:[%s5488 + $0x3c] sm:$0xf] %v5527
      %5529 = vst.msk [vmem:[%s5488 + $0x40] sm:$0xf] %vm395, %v5268
      %v5530 = vld [vmem:[%s5488 + $0x44] sm:$0x1]
      %v5531 = vsel %vm405, %v5269, %v5530
      %5532 = vst [vmem:[%s5488 + $0x44] sm:$0x1] %v5531
      %v5533 = vld [vmem:[%s5488 + $0x48] sm:$0xf]
      %v5534 = vsel %vm5490, %v5276, %v5533
      %5535 = vst [vmem:[%s5488 + $0x48] sm:$0xf] %v5534
      %5536 = vst.msk [vmem:[%s5488 + $0x4c] sm:$0xf] %vm395, %v5285
      %v5537 = vld [vmem:[%s5488 + $0x50] sm:$0x1]
      %v5538 = vsel %vm405, %v5286, %v5537
      %5539 = vst [vmem:[%s5488 + $0x50] sm:$0x1] %v5538
      %v5540 = vld [vmem:[%s5488 + $0x54] sm:$0xf]
      %v5541 = vsel %vm5490, %v5293, %v5540
      %5542 = vst [vmem:[%s5488 + $0x54] sm:$0xf] %v5541
      %5543 = vst.msk [vmem:[%s5488 + $0x58] sm:$0xf] %vm395, %v5302
      %v5544 = vld [vmem:[%s5488 + $0x5c] sm:$0x1]
      %v5545 = vsel %vm405, %v5303, %v5544
      %5546 = vst [vmem:[%s5488 + $0x5c] sm:$0x1] %v5545
      %v5547 = vld [vmem:[%s5488 + $0x60] sm:$0xf]
      %v5548 = vsel %vm5490, %v5310, %v5547
      %5549 = vst [vmem:[%s5488 + $0x60] sm:$0xf] %v5548
      %5550 = vst.msk [vmem:[%s5488 + $0x64] sm:$0xf] %vm395, %v5319
      %v5551 = vld [vmem:[%s5488 + $0x68] sm:$0x1]
      %v5552 = vsel %vm405, %v5320, %v5551
      %5553 = vst [vmem:[%s5488 + $0x68] sm:$0x1] %v5552
      %v5554 = vld [vmem:[%s5488 + $0x6c] sm:$0xf]
      %v5555 = vsel %vm5490, %v5327, %v5554
      %5556 = vst [vmem:[%s5488 + $0x6c] sm:$0xf] %v5555
      %5557 = vst.msk [vmem:[%s5488 + $0x70] sm:$0xf] %vm395, %v5336
      %v5558 = vld [vmem:[%s5488 + $0x74] sm:$0x1]
      %v5559 = vsel %vm405, %v5337, %v5558
      %5560 = vst [vmem:[%s5488 + $0x74] sm:$0x1] %v5559
      %v5561 = vld [vmem:[%s5488 + $0x78] sm:$0xf]
      %v5562 = vsel %vm5490, %v5344, %v5561
      %5563 = vst [vmem:[%s5488 + $0x78] sm:$0xf] %v5562
      %5564 = vst.msk [vmem:[%s5488 + $0x7c] sm:$0xf] %vm395, %v5353
      %v5565 = vld [vmem:[%s5488 + $0x80] sm:$0x1]
      %v5566 = vsel %vm405, %v5354, %v5565
      %5567 = vst [vmem:[%s5488 + $0x80] sm:$0x1] %v5566
      %v5568 = vld [vmem:[%s5488 + $0x84] sm:$0xf]
      %v5569 = vsel %vm5490, %v5361, %v5568
      %5570 = vst [vmem:[%s5488 + $0x84] sm:$0xf] %v5569
      %5571 = vst.msk [vmem:[%s5488 + $0x88] sm:$0xf] %vm395, %v5370
      %v5572 = vld [vmem:[%s5488 + $0x8c] sm:$0x1]
      %v5573 = vsel %vm405, %v5371, %v5572
      %5574 = vst [vmem:[%s5488 + $0x8c] sm:$0x1] %v5573
      %v5575 = vld [vmem:[%s5488 + $0x90] sm:$0xf]
      %v5576 = vsel %vm5490, %v5378, %v5575
      %5577 = vst [vmem:[%s5488 + $0x90] sm:$0xf] %v5576
      %5578 = vst.msk [vmem:[%s5488 + $0x94] sm:$0xf] %vm395, %v5387
      %v5579 = vld [vmem:[%s5488 + $0x98] sm:$0x1]
      %v5580 = vsel %vm405, %v5388, %v5579
      %5581 = vst [vmem:[%s5488 + $0x98] sm:$0x1] %v5580
      %v5582 = vld [vmem:[%s5488 + $0x9c] sm:$0xf]
      %v5583 = vsel %vm5490, %v5395, %v5582
      %5584 = vst [vmem:[%s5488 + $0x9c] sm:$0xf] %v5583
      %5585 = vst.msk [vmem:[%s5488 + $0xa0] sm:$0xf] %vm395, %v5404
      %v5586 = vld [vmem:[%s5488 + $0xa4] sm:$0x1]
      %v5587 = vsel %vm405, %v5405, %v5586
      %5588 = vst [vmem:[%s5488 + $0xa4] sm:$0x1] %v5587
      %v5589 = vld [vmem:[%s5488 + $0xa8] sm:$0xf]
      %v5590 = vsel %vm5490, %v5412, %v5589
      %5591 = vst [vmem:[%s5488 + $0xa8] sm:$0xf] %v5590
      %5592 = vst.msk [vmem:[%s5488 + $0xac] sm:$0xf] %vm395, %v5421
      %v5593 = vld [vmem:[%s5488 + $0xb0] sm:$0x1]
      %v5594 = vsel %vm405, %v5422, %v5593
      %5595 = vst [vmem:[%s5488 + $0xb0] sm:$0x1] %v5594
      %v5596 = vld [vmem:[%s5488 + $0xb4] sm:$0xf]
      %v5597 = vsel %vm5490, %v5429, %v5596
      %5598 = vst [vmem:[%s5488 + $0xb4] sm:$0xf] %v5597
      %5599 = vst.msk [vmem:[%s5488 + $0xb8] sm:$0xf] %vm395, %v5438
      %v5600 = vld [vmem:[%s5488 + $0xbc] sm:$0x1]
      %v5601 = vsel %vm405, %v5439, %v5600
      %5602 = vst [vmem:[%s5488 + $0xbc] sm:$0x1] %v5601
      %v5603 = vld [vmem:[%s4] sm:$0xf]
      %v5604 = vld [vmem:[%s4 + $0x4] sm:$0xf]
      %v5605 = vld [vmem:[%s4 + $0x8] sm:$0xf]
      %v5606 = vld [vmem:[%s4 + $0xc] sm:$0xf]
      %v5607 = vld [vmem:[%s4 + $0x10] sm:$0xf]
      %v5608 = vld [vmem:[%s4 + $0x14] sm:$0xf]
      %v5609 = vld [vmem:[%s4 + $0x18] sm:$0xf]
      %v5610 = vld [vmem:[%s4 + $0x1c] sm:$0xf]
      %v5611 = vld [vmem:[%s4 + $0x20] sm:$0xf]
      %v5612 = vld [vmem:[%s5] sm:$0x1]
      %v5613 = vld [vmem:[#allocation3] sm:$0xf]
      %v5614 = vld [vmem:[#allocation3 + $0x4] sm:$0xf]
      %v5615 = vld [vmem:[#allocation3 + $0xc] sm:$0xf]
      %v5616 = vld [vmem:[#allocation3 + $0x10] sm:$0xf]
      %v5617 = vld [vmem:[#allocation3 + $0x18] sm:$0xf]
      %v5618 = vld [vmem:[#allocation3 + $0x1c] sm:$0xf]
      %v5619 = vld [vmem:[#allocation3 + $0x24] sm:$0xf]
      %v5620 = vld [vmem:[#allocation3 + $0x28] sm:$0xf]
      %v5621 = vld [vmem:[#allocation3 + $0x30] sm:$0xf]
      %v5622 = vld [vmem:[#allocation3 + $0x34] sm:$0xf]
      %v5623 = vld [vmem:[#allocation3 + $0x3c] sm:$0xf]
      %v5624 = vld [vmem:[#allocation3 + $0x40] sm:$0xf]
      %v5625 = vld [vmem:[#allocation3 + $0x48] sm:$0xf]
      %v5626 = vld [vmem:[#allocation3 + $0x4c] sm:$0xf]
      %v5627 = vld [vmem:[#allocation3 + $0x54] sm:$0xf]
      %v5628 = vld [vmem:[#allocation3 + $0x58] sm:$0xf]
      %v5629 = vld [vmem:[#allocation3 + $0x60] sm:$0xf]
      %v5630 = vld [vmem:[#allocation3 + $0x64] sm:$0xf]
      %v5631 = vld [vmem:[#allocation3 + $0x6c] sm:$0xf]
      %v5632 = vld [vmem:[#allocation3 + $0x70] sm:$0xf]
      %v5633 = vld [vmem:[#allocation3 + $0x78] sm:$0xf]
      %v5634 = vld [vmem:[#allocation3 + $0x7c] sm:$0xf]
      %v5635 = vld [vmem:[#allocation3 + $0x84] sm:$0xf]
      %v5636 = vld [vmem:[#allocation3 + $0x88] sm:$0xf]
      %v5637 = vld [vmem:[#allocation3 + $0x90] sm:$0xf]
      %v5638 = vld [vmem:[#allocation3 + $0x94] sm:$0xf]
      %v5639 = vld [vmem:[#allocation3 + $0x9c] sm:$0xf]
      %v5640 = vld [vmem:[#allocation3 + $0xa0] sm:$0xf]
      %v5641 = vld [vmem:[#allocation3 + $0xa8] sm:$0xf]
      %v5642 = vld [vmem:[#allocation3 + $0xac] sm:$0xf]
      %v5643 = vld [vmem:[#allocation3 + $0xb4] sm:$0xf]
      %v5644 = vld [vmem:[#allocation3 + $0xb8] sm:$0xf]
      %v5645 = vld [vmem:[#allocation3 + $0x8] sm:$0x1]
      %v5646 = vld [vmem:[#allocation3 + $0x14] sm:$0x1]
      %v5647 = vld [vmem:[#allocation3 + $0x20] sm:$0x1]
      %v5648 = vld [vmem:[#allocation3 + $0x2c] sm:$0x1]
      %v5649 = vld [vmem:[#allocation3 + $0x38] sm:$0x1]
      %v5650 = vld [vmem:[#allocation3 + $0x44] sm:$0x1]
      %v5651 = vld [vmem:[#allocation3 + $0x50] sm:$0x1]
      %v5652 = vld [vmem:[#allocation3 + $0x5c] sm:$0x1]
      %v5653 = vld [vmem:[#allocation3 + $0x68] sm:$0x1]
      %v5654 = vld [vmem:[#allocation3 + $0x74] sm:$0x1]
      %v5655 = vld [vmem:[#allocation3 + $0x80] sm:$0x1]
      %v5656 = vld [vmem:[#allocation3 + $0x8c] sm:$0x1]
      %v5657 = vld [vmem:[#allocation3 + $0x98] sm:$0x1]
      %v5658 = vld [vmem:[#allocation3 + $0xa4] sm:$0x1]
      %v5659 = vld [vmem:[#allocation3 + $0xb0] sm:$0x1]
      %v5660 = vld [vmem:[#allocation3 + $0xbc] sm:$0x1]
      %v5662 = vshrl.u32 %v5613, 16
      %v5664 = vrot.slane %v5662, 4
      %v5665 = vshll.u32 %v5613, 16
      %v5667 = vrot.slane %v5665, 5
      %v5668 = vor.u32 %v5664, %v5667
      %v5669 = vrot.slane %v5668, 4
      %v5671 = vshll.u32 %v5614, 16
      %v5673 = vrot.slane %v5671, 5
      %v5674 = vsel %vm2073, %v5669, %v5673
      %v5675 = vshrl.u32 %v5614, 16
      %v5677 = vrot.slane %v5675, 4
      %v5678 = vor.u32 %v5677, %v5673
      %v5679 = vrot.slane %v5678, 4
      %v5681 = vshll.u32 %v5645, 16
      %v5683 = vrot.slane %v5681, 5
      %v5684 = vsel %vm2073, %v5679, %v5683
      %v5686 = vshrl.u32 %v5615, 16
      %v5688 = vrot.slane %v5686, 4
      %v5689 = vshll.u32 %v5615, 16
      %v5691 = vrot.slane %v5689, 5
      %v5692 = vor.u32 %v5688, %v5691
      %v5693 = vrot.slane %v5692, 4
      %v5695 = vshll.u32 %v5616, 16
      %v5697 = vrot.slane %v5695, 5
      %v5698 = vsel %vm2073, %v5693, %v5697
      %v5699 = vshrl.u32 %v5616, 16
      %v5701 = vrot.slane %v5699, 4
      %v5702 = vor.u32 %v5701, %v5697
      %v5703 = vrot.slane %v5702, 4
      %v5705 = vshll.u32 %v5646, 16
      %v5707 = vrot.slane %v5705, 5
      %v5708 = vsel %vm2073, %v5703, %v5707
      %v5710 = vshrl.u32 %v5617, 16
      %v5712 = vrot.slane %v5710, 4
      %v5713 = vshll.u32 %v5617, 16
      %v5715 = vrot.slane %v5713, 5
      %v5716 = vor.u32 %v5712, %v5715
      %v5717 = vrot.slane %v5716, 4
      %v5719 = vshll.u32 %v5618, 16
      %v5721 = vrot.slane %v5719, 5
      %v5722 = vsel %vm2073, %v5717, %v5721
      %v5723 = vshrl.u32 %v5618, 16
      %v5725 = vrot.slane %v5723, 4
      %v5726 = vor.u32 %v5725, %v5721
      %v5727 = vrot.slane %v5726, 4
      %v5729 = vshll.u32 %v5647, 16
      %v5731 = vrot.slane %v5729, 5
      %v5732 = vsel %vm2073, %v5727, %v5731
      %v5734 = vshrl.u32 %v5619, 16
      %v5736 = vrot.slane %v5734, 4
      %v5737 = vshll.u32 %v5619, 16
      %v5739 = vrot.slane %v5737, 5
      %v5740 = vor.u32 %v5736, %v5739
      %v5741 = vrot.slane %v5740, 4
      %v5743 = vshll.u32 %v5620, 16
      %v5745 = vrot.slane %v5743, 5
      %v5746 = vsel %vm2073, %v5741, %v5745
      %v5747 = vshrl.u32 %v5620, 16
      %v5749 = vrot.slane %v5747, 4
      %v5750 = vor.u32 %v5749, %v5745
      %v5751 = vrot.slane %v5750, 4
      %v5753 = vshll.u32 %v5648, 16
      %v5755 = vrot.slane %v5753, 5
      %v5756 = vsel %vm2073, %v5751, %v5755
      %v5758 = vshrl.u32 %v5621, 16
      %v5760 = vrot.slane %v5758, 4
      %v5761 = vshll.u32 %v5621, 16
      %v5763 = vrot.slane %v5761, 5
      %v5764 = vor.u32 %v5760, %v5763
      %v5765 = vrot.slane %v5764, 4
      %v5767 = vshll.u32 %v5622, 16
      %v5769 = vrot.slane %v5767, 5
      %v5770 = vsel %vm2073, %v5765, %v5769
      %v5771 = vshrl.u32 %v5622, 16
      %v5773 = vrot.slane %v5771, 4
      %v5774 = vor.u32 %v5773, %v5769
      %v5775 = vrot.slane %v5774, 4
      %v5777 = vshll.u32 %v5649, 16
      %v5779 = vrot.slane %v5777, 5
      %v5780 = vsel %vm2073, %v5775, %v5779
      %v5782 = vshrl.u32 %v5623, 16
      %v5784 = vrot.slane %v5782, 4
      %v5785 = vshll.u32 %v5623, 16
      %v5787 = vrot.slane %v5785, 5
      %v5788 = vor.u32 %v5784, %v5787
      %v5789 = vrot.slane %v5788, 4
      %v5791 = vshll.u32 %v5624, 16
      %v5793 = vrot.slane %v5791, 5
      %v5794 = vsel %vm2073, %v5789, %v5793
      %v5795 = vshrl.u32 %v5624, 16
      %v5797 = vrot.slane %v5795, 4
      %v5798 = vor.u32 %v5797, %v5793
      %v5799 = vrot.slane %v5798, 4
      %v5801 = vshll.u32 %v5650, 16
      %v5803 = vrot.slane %v5801, 5
      %v5804 = vsel %vm2073, %v5799, %v5803
      %v5806 = vshrl.u32 %v5625, 16
      %v5808 = vrot.slane %v5806, 4
      %v5809 = vshll.u32 %v5625, 16
      %v5811 = vrot.slane %v5809, 5
      %v5812 = vor.u32 %v5808, %v5811
      %v5813 = vrot.slane %v5812, 4
      %v5815 = vshll.u32 %v5626, 16
      %v5817 = vrot.slane %v5815, 5
      %v5818 = vsel %vm2073, %v5813, %v5817
      %v5819 = vshrl.u32 %v5626, 16
      %v5821 = vrot.slane %v5819, 4
      %v5822 = vor.u32 %v5821, %v5817
      %v5823 = vrot.slane %v5822, 4
      %v5825 = vshll.u32 %v5651, 16
      %v5827 = vrot.slane %v5825, 5
      %v5828 = vsel %vm2073, %v5823, %v5827
      %v5830 = vshrl.u32 %v5627, 16
      %v5832 = vrot.slane %v5830, 4
      %v5833 = vshll.u32 %v5627, 16
      %v5835 = vrot.slane %v5833, 5
      %v5836 = vor.u32 %v5832, %v5835
      %v5837 = vrot.slane %v5836, 4
      %v5839 = vshll.u32 %v5628, 16
      %v5841 = vrot.slane %v5839, 5
      %v5842 = vsel %vm2073, %v5837, %v5841
      %v5843 = vshrl.u32 %v5628, 16
      %v5845 = vrot.slane %v5843, 4
      %v5846 = vor.u32 %v5845, %v5841
      %v5847 = vrot.slane %v5846, 4
      %v5849 = vshll.u32 %v5652, 16
      %v5851 = vrot.slane %v5849, 5
      %v5852 = vsel %vm2073, %v5847, %v5851
      %v5854 = vshrl.u32 %v5629, 16
      %v5856 = vrot.slane %v5854, 4
      %v5857 = vshll.u32 %v5629, 16
      %v5859 = vrot.slane %v5857, 5
      %v5860 = vor.u32 %v5856, %v5859
      %v5861 = vrot.slane %v5860, 4
      %v5863 = vshll.u32 %v5630, 16
      %v5865 = vrot.slane %v5863, 5
      %v5866 = vsel %vm2073, %v5861, %v5865
      %v5867 = vshrl.u32 %v5630, 16
      %v5869 = vrot.slane %v5867, 4
      %v5870 = vor.u32 %v5869, %v5865
      %v5871 = vrot.slane %v5870, 4
      %v5873 = vshll.u32 %v5653, 16
      %v5875 = vrot.slane %v5873, 5
      %v5876 = vsel %vm2073, %v5871, %v5875
      %v5878 = vshrl.u32 %v5631, 16
      %v5880 = vrot.slane %v5878, 4
      %v5881 = vshll.u32 %v5631, 16
      %v5883 = vrot.slane %v5881, 5
      %v5884 = vor.u32 %v5880, %v5883
      %v5885 = vrot.slane %v5884, 4
      %v5887 = vshll.u32 %v5632, 16
      %v5889 = vrot.slane %v5887, 5
      %v5890 = vsel %vm2073, %v5885, %v5889
      %v5891 = vshrl.u32 %v5632, 16
      %v5893 = vrot.slane %v5891, 4
      %v5894 = vor.u32 %v5893, %v5889
      %v5895 = vrot.slane %v5894, 4
      %v5897 = vshll.u32 %v5654, 16
      %v5899 = vrot.slane %v5897, 5
      %v5900 = vsel %vm2073, %v5895, %v5899
      %v5902 = vshrl.u32 %v5633, 16
      %v5904 = vrot.slane %v5902, 4
      %v5905 = vshll.u32 %v5633, 16
      %v5907 = vrot.slane %v5905, 5
      %v5908 = vor.u32 %v5904, %v5907
      %v5909 = vrot.slane %v5908, 4
      %v5911 = vshll.u32 %v5634, 16
      %v5913 = vrot.slane %v5911, 5
      %v5914 = vsel %vm2073, %v5909, %v5913
      %v5915 = vshrl.u32 %v5634, 16
      %v5917 = vrot.slane %v5915, 4
      %v5918 = vor.u32 %v5917, %v5913
      %v5919 = vrot.slane %v5918, 4
      %v5921 = vshll.u32 %v5655, 16
      %v5923 = vrot.slane %v5921, 5
      %v5924 = vsel %vm2073, %v5919, %v5923
      %v5926 = vshrl.u32 %v5635, 16
      %v5928 = vrot.slane %v5926, 4
      %v5929 = vshll.u32 %v5635, 16
      %v5931 = vrot.slane %v5929, 5
      %v5932 = vor.u32 %v5928, %v5931
      %v5933 = vrot.slane %v5932, 4
      %v5935 = vshll.u32 %v5636, 16
      %v5937 = vrot.slane %v5935, 5
      %v5938 = vsel %vm2073, %v5933, %v5937
      %v5939 = vshrl.u32 %v5636, 16
      %v5941 = vrot.slane %v5939, 4
      %v5942 = vor.u32 %v5941, %v5937
      %v5943 = vrot.slane %v5942, 4
      %v5945 = vshll.u32 %v5656, 16
      %v5947 = vrot.slane %v5945, 5
      %v5948 = vsel %vm2073, %v5943, %v5947
      %v5950 = vshrl.u32 %v5637, 16
      %v5952 = vrot.slane %v5950, 4
      %v5953 = vshll.u32 %v5637, 16
      %v5955 = vrot.slane %v5953, 5
      %v5956 = vor.u32 %v5952, %v5955
      %v5957 = vrot.slane %v5956, 4
      %v5959 = vshll.u32 %v5638, 16
      %v5961 = vrot.slane %v5959, 5
      %v5962 = vsel %vm2073, %v5957, %v5961
      %v5963 = vshrl.u32 %v5638, 16
      %v5965 = vrot.slane %v5963, 4
      %v5966 = vor.u32 %v5965, %v5961
      %v5967 = vrot.slane %v5966, 4
      %v5969 = vshll.u32 %v5657, 16
      %v5971 = vrot.slane %v5969, 5
      %v5972 = vsel %vm2073, %v5967, %v5971
      %v5974 = vshrl.u32 %v5639, 16
      %v5976 = vrot.slane %v5974, 4
      %v5977 = vshll.u32 %v5639, 16
      %v5979 = vrot.slane %v5977, 5
      %v5980 = vor.u32 %v5976, %v5979
      %v5981 = vrot.slane %v5980, 4
      %v5983 = vshll.u32 %v5640, 16
      %v5985 = vrot.slane %v5983, 5
      %v5986 = vsel %vm2073, %v5981, %v5985
      %v5987 = vshrl.u32 %v5640, 16
      %v5989 = vrot.slane %v5987, 4
      %v5990 = vor.u32 %v5989, %v5985
      %v5991 = vrot.slane %v5990, 4
      %v5993 = vshll.u32 %v5658, 16
      %v5995 = vrot.slane %v5993, 5
      %v5996 = vsel %vm2073, %v5991, %v5995
      %v5998 = vshrl.u32 %v5641, 16
      %v6000 = vrot.slane %v5998, 4
      %v6001 = vshll.u32 %v5641, 16
      %v6003 = vrot.slane %v6001, 5
      %v6004 = vor.u32 %v6000, %v6003
      %v6005 = vrot.slane %v6004, 4
      %v6007 = vshll.u32 %v5642, 16
      %v6009 = vrot.slane %v6007, 5
      %v6010 = vsel %vm2073, %v6005, %v6009
      %v6011 = vshrl.u32 %v5642, 16
      %v6013 = vrot.slane %v6011, 4
      %v6014 = vor.u32 %v6013, %v6009
      %v6015 = vrot.slane %v6014, 4
      %v6017 = vshll.u32 %v5659, 16
      %v6019 = vrot.slane %v6017, 5
      %v6020 = vsel %vm2073, %v6015, %v6019
      %v6022 = vshrl.u32 %v5643, 16
      %v6024 = vrot.slane %v6022, 4
      %v6025 = vshll.u32 %v5643, 16
      %v6027 = vrot.slane %v6025, 5
      %v6028 = vor.u32 %v6024, %v6027
      %v6029 = vrot.slane %v6028, 4
      %v6031 = vshll.u32 %v5644, 16
      %v6033 = vrot.slane %v6031, 5
      %v6034 = vsel %vm2073, %v6029, %v6033
      %v6035 = vshrl.u32 %v5644, 16
      %v6037 = vrot.slane %v6035, 4
      %v6038 = vor.u32 %v6037, %v6033
      %v6039 = vrot.slane %v6038, 4
      %v6041 = vshll.u32 %v5660, 16
      %v6043 = vrot.slane %v6041, 5
      %v6044 = vsel %vm2073, %v6039, %v6043
      %v6045 = vld [vmem:[#allocation3] sm:$0xe]
      %v6046 = vld [vmem:[#allocation3 + $0xc] sm:$0xe]
      %v6047 = vld [vmem:[#allocation3 + $0x18] sm:$0xe]
      %v6048 = vld [vmem:[#allocation3 + $0x24] sm:$0xe]
      %v6049 = vld [vmem:[#allocation3 + $0x30] sm:$0xe]
      %v6050 = vld [vmem:[#allocation3 + $0x3c] sm:$0xe]
      %v6051 = vld [vmem:[#allocation3 + $0x48] sm:$0xe]
      %v6052 = vld [vmem:[#allocation3 + $0x54] sm:$0xe]
      %v6053 = vld [vmem:[#allocation3 + $0x60] sm:$0xe]
      %v6054 = vld [vmem:[#allocation3 + $0x6c] sm:$0xe]
      %v6055 = vld [vmem:[#allocation3 + $0x78] sm:$0xe]
      %v6056 = vld [vmem:[#allocation3 + $0x84] sm:$0xe]
      %v6057 = vld [vmem:[#allocation3 + $0x90] sm:$0xe]
      %v6058 = vld [vmem:[#allocation3 + $0x9c] sm:$0xe]
      %v6059 = vld [vmem:[#allocation3 + $0xa8] sm:$0xe]
      %v6060 = vld [vmem:[#allocation3 + $0xb4] sm:$0xe]
      %v6109 = vrot.slane %v6045, 5
      %v6110 = vrot.slane %v6109, 4
      %v6111 = vrot.slane %v5614, 5
      %v6112 = vsel %vm2524, %v6110, %v6111
      %v6113 = vrot.slane %v6111, 4
      %v6114 = vrot.slane %v5645, 5
      %v6115 = vsel %vm2524, %v6113, %v6114
      %v6116 = vrot.slane %v6046, 5
      %v6117 = vrot.slane %v6116, 4
      %v6118 = vrot.slane %v5616, 5
      %v6119 = vsel %vm2524, %v6117, %v6118
      %v6120 = vrot.slane %v6118, 4
      %v6121 = vrot.slane %v5646, 5
      %v6122 = vsel %vm2524, %v6120, %v6121
      %v6123 = vrot.slane %v6047, 5
      %v6124 = vrot.slane %v6123, 4
      %v6125 = vrot.slane %v5618, 5
      %v6126 = vsel %vm2524, %v6124, %v6125
      %v6127 = vrot.slane %v6125, 4
      %v6128 = vrot.slane %v5647, 5
      %v6129 = vsel %vm2524, %v6127, %v6128
      %v6130 = vrot.slane %v6048, 5
      %v6131 = vrot.slane %v6130, 4
      %v6132 = vrot.slane %v5620, 5
      %v6133 = vsel %vm2524, %v6131, %v6132
      %v6134 = vrot.slane %v6132, 4
      %v6135 = vrot.slane %v5648, 5
      %v6136 = vsel %vm2524, %v6134, %v6135
      %v6137 = vrot.slane %v6049, 5
      %v6138 = vrot.slane %v6137, 4
      %v6139 = vrot.slane %v5622, 5
      %v6140 = vsel %vm2524, %v6138, %v6139
      %v6141 = vrot.slane %v6139, 4
      %v6142 = vrot.slane %v5649, 5
      %v6143 = vsel %vm2524, %v6141, %v6142
      %v6144 = vrot.slane %v6050, 5
      %v6145 = vrot.slane %v6144, 4
      %v6146 = vrot.slane %v5624, 5
      %v6147 = vsel %vm2524, %v6145, %v6146
      %v6148 = vrot.slane %v6146, 4
      %v6149 = vrot.slane %v5650, 5
      %v6150 = vsel %vm2524, %v6148, %v6149
      %v6151 = vrot.slane %v6051, 5
      %v6152 = vrot.slane %v6151, 4
      %v6153 = vrot.slane %v5626, 5
      %v6154 = vsel %vm2524, %v6152, %v6153
      %v6155 = vrot.slane %v6153, 4
      %v6156 = vrot.slane %v5651, 5
      %v6157 = vsel %vm2524, %v6155, %v6156
      %v6158 = vrot.slane %v6052, 5
      %v6159 = vrot.slane %v6158, 4
      %v6160 = vrot.slane %v5628, 5
      %v6161 = vsel %vm2524, %v6159, %v6160
      %v6162 = vrot.slane %v6160, 4
      %v6163 = vrot.slane %v5652, 5
      %v6164 = vsel %vm2524, %v6162, %v6163
      %v6165 = vrot.slane %v6053, 5
      %v6166 = vrot.slane %v6165, 4
      %v6167 = vrot.slane %v5630, 5
      %v6168 = vsel %vm2524, %v6166, %v6167
      %v6169 = vrot.slane %v6167, 4
      %v6170 = vrot.slane %v5653, 5
      %v6171 = vsel %vm2524, %v6169, %v6170
      %v6172 = vrot.slane %v6054, 5
      %v6173 = vrot.slane %v6172, 4
      %v6174 = vrot.slane %v5632, 5
      %v6175 = vsel %vm2524, %v6173, %v6174
      %v6176 = vrot.slane %v6174, 4
      %v6177 = vrot.slane %v5654, 5
      %v6178 = vsel %vm2524, %v6176, %v6177
      %v6179 = vrot.slane %v6055, 5
      %v6180 = vrot.slane %v6179, 4
      %v6181 = vrot.slane %v5634, 5
      %v6182 = vsel %vm2524, %v6180, %v6181
      %v6183 = vrot.slane %v6181, 4
      %v6184 = vrot.slane %v5655, 5
      %v6185 = vsel %vm2524, %v6183, %v6184
      %v6186 = vrot.slane %v6056, 5
      %v6187 = vrot.slane %v6186, 4
      %v6188 = vrot.slane %v5636, 5
      %v6189 = vsel %vm2524, %v6187, %v6188
      %v6190 = vrot.slane %v6188, 4
      %v6191 = vrot.slane %v5656, 5
      %v6192 = vsel %vm2524, %v6190, %v6191
      %v6193 = vrot.slane %v6057, 5
      %v6194 = vrot.slane %v6193, 4
      %v6195 = vrot.slane %v5638, 5
      %v6196 = vsel %vm2524, %v6194, %v6195
      %v6197 = vrot.slane %v6195, 4
      %v6198 = vrot.slane %v5657, 5
      %v6199 = vsel %vm2524, %v6197, %v6198
      %v6200 = vrot.slane %v6058, 5
      %v6201 = vrot.slane %v6200, 4
      %v6202 = vrot.slane %v5640, 5
      %v6203 = vsel %vm2524, %v6201, %v6202
      %v6204 = vrot.slane %v6202, 4
      %v6205 = vrot.slane %v5658, 5
      %v6206 = vsel %vm2524, %v6204, %v6205
      %v6207 = vrot.slane %v6059, 5
      %v6208 = vrot.slane %v6207, 4
      %v6209 = vrot.slane %v5642, 5
      %v6210 = vsel %vm2524, %v6208, %v6209
      %v6211 = vrot.slane %v6209, 4
      %v6212 = vrot.slane %v5659, 5
      %v6213 = vsel %vm2524, %v6211, %v6212
      %v6214 = vrot.slane %v6060, 5
      %v6215 = vrot.slane %v6214, 4
      %v6216 = vrot.slane %v5644, 5
      %v6217 = vsel %vm2524, %v6215, %v6216
      %v6218 = vrot.slane %v6216, 4
      %v6219 = vrot.slane %v5660, 5
      %v6220 = vsel %vm2524, %v6218, %v6219
      %v6221 = vld [vmem:[%s5488] sm:$0xf]
      %v6222 = vld [vmem:[%s5488 + $0x4] sm:$0xf]
      %v6223 = vld [vmem:[%s5488 + $0xc] sm:$0xf]
      %v6224 = vld [vmem:[%s5488 + $0x10] sm:$0xf]
      %v6225 = vld [vmem:[%s5488 + $0x18] sm:$0xf]
      %v6226 = vld [vmem:[%s5488 + $0x1c] sm:$0xf]
      %v6227 = vld [vmem:[%s5488 + $0x24] sm:$0xf]
      %v6228 = vld [vmem:[%s5488 + $0x28] sm:$0xf]
      %v6229 = vld [vmem:[%s5488 + $0x30] sm:$0xf]
      %v6230 = vld [vmem:[%s5488 + $0x34] sm:$0xf]
      %v6231 = vld [vmem:[%s5488 + $0x3c] sm:$0xf]
      %v6232 = vld [vmem:[%s5488 + $0x40] sm:$0xf]
      %v6233 = vld [vmem:[%s5488 + $0x48] sm:$0xf]
      %v6234 = vld [vmem:[%s5488 + $0x4c] sm:$0xf]
      %v6235 = vld [vmem:[%s5488 + $0x54] sm:$0xf]
      %v6236 = vld [vmem:[%s5488 + $0x58] sm:$0xf]
      %v6237 = vld [vmem:[%s5488 + $0x60] sm:$0xf]
      %v6238 = vld [vmem:[%s5488 + $0x64] sm:$0xf]
      %v6239 = vld [vmem:[%s5488 + $0x6c] sm:$0xf]
      %v6240 = vld [vmem:[%s5488 + $0x70] sm:$0xf]
      %v6241 = vld [vmem:[%s5488 + $0x78] sm:$0xf]
      %v6242 = vld [vmem:[%s5488 + $0x7c] sm:$0xf]
      %v6243 = vld [vmem:[%s5488 + $0x84] sm:$0xf]
      %v6244 = vld [vmem:[%s5488 + $0x88] sm:$0xf]
      %v6245 = vld [vmem:[%s5488 + $0x90] sm:$0xf]
      %v6246 = vld [vmem:[%s5488 + $0x94] sm:$0xf]
      %v6247 = vld [vmem:[%s5488 + $0x9c] sm:$0xf]
      %v6248 = vld [vmem:[%s5488 + $0xa0] sm:$0xf]
      %v6249 = vld [vmem:[%s5488 + $0xa8] sm:$0xf]
      %v6250 = vld [vmem:[%s5488 + $0xac] sm:$0xf]
      %v6251 = vld [vmem:[%s5488 + $0xb4] sm:$0xf]
      %v6252 = vld [vmem:[%s5488 + $0xb8] sm:$0xf]
      %v6253 = vld [vmem:[%s5488 + $0x8] sm:$0x1]
      %v6254 = vld [vmem:[%s5488 + $0x14] sm:$0x1]
      %v6255 = vld [vmem:[%s5488 + $0x20] sm:$0x1]
      %v6256 = vld [vmem:[%s5488 + $0x2c] sm:$0x1]
      %v6257 = vld [vmem:[%s5488 + $0x38] sm:$0x1]
      %v6258 = vld [vmem:[%s5488 + $0x44] sm:$0x1]
      %v6259 = vld [vmem:[%s5488 + $0x50] sm:$0x1]
      %v6260 = vld [vmem:[%s5488 + $0x5c] sm:$0x1]
      %v6261 = vld [vmem:[%s5488 + $0x68] sm:$0x1]
      %v6262 = vld [vmem:[%s5488 + $0x74] sm:$0x1]
      %v6263 = vld [vmem:[%s5488 + $0x80] sm:$0x1]
      %v6264 = vld [vmem:[%s5488 + $0x8c] sm:$0x1]
      %v6265 = vld [vmem:[%s5488 + $0x98] sm:$0x1]
      %v6266 = vld [vmem:[%s5488 + $0xa4] sm:$0x1]
      %v6267 = vld [vmem:[%s5488 + $0xb0] sm:$0x1]
      %v6268 = vld [vmem:[%s5488 + $0xbc] sm:$0x1]
      %v6270 = vshrl.u32 %v6221, 16
      %v6272 = vrot.slane %v6270, 4
      %v6273 = vshll.u32 %v6221, 16
      %v6275 = vrot.slane %v6273, 5
      %v6276 = vor.u32 %v6272, %v6275
      %v6277 = vrot.slane %v6276, 4
      %v6279 = vshll.u32 %v6222, 16
      %v6281 = vrot.slane %v6279, 5
      %v6282 = vsel %vm2073, %v6277, %v6281
      %v6283 = vshrl.u32 %v6222, 16
      %v6285 = vrot.slane %v6283, 4
      %v6286 = vor.u32 %v6285, %v6281
      %v6287 = vrot.slane %v6286, 4
      %v6289 = vshll.u32 %v6253, 16
      %v6291 = vrot.slane %v6289, 5
      %v6292 = vsel %vm2073, %v6287, %v6291
      %v6294 = vshrl.u32 %v6223, 16
      %v6296 = vrot.slane %v6294, 4
      %v6297 = vshll.u32 %v6223, 16
      %v6299 = vrot.slane %v6297, 5
      %v6300 = vor.u32 %v6296, %v6299
      %v6301 = vrot.slane %v6300, 4
      %v6303 = vshll.u32 %v6224, 16
      %v6305 = vrot.slane %v6303, 5
      %v6306 = vsel %vm2073, %v6301, %v6305
      %v6307 = vshrl.u32 %v6224, 16
      %v6309 = vrot.slane %v6307, 4
      %v6310 = vor.u32 %v6309, %v6305
      %v6311 = vrot.slane %v6310, 4
      %v6313 = vshll.u32 %v6254, 16
      %v6315 = vrot.slane %v6313, 5
      %v6316 = vsel %vm2073, %v6311, %v6315
      %v6318 = vshrl.u32 %v6225, 16
      %v6320 = vrot.slane %v6318, 4
      %v6321 = vshll.u32 %v6225, 16
      %v6323 = vrot.slane %v6321, 5
      %v6324 = vor.u32 %v6320, %v6323
      %v6325 = vrot.slane %v6324, 4
      %v6327 = vshll.u32 %v6226, 16
      %v6329 = vrot.slane %v6327, 5
      %v6330 = vsel %vm2073, %v6325, %v6329
      %v6331 = vshrl.u32 %v6226, 16
      %v6333 = vrot.slane %v6331, 4
      %v6334 = vor.u32 %v6333, %v6329
      %v6335 = vrot.slane %v6334, 4
      %v6337 = vshll.u32 %v6255, 16
      %v6339 = vrot.slane %v6337, 5
      %v6340 = vsel %vm2073, %v6335, %v6339
      %v6342 = vshrl.u32 %v6227, 16
      %v6344 = vrot.slane %v6342, 4
      %v6345 = vshll.u32 %v6227, 16
      %v6347 = vrot.slane %v6345, 5
      %v6348 = vor.u32 %v6344, %v6347
      %v6349 = vrot.slane %v6348, 4
      %v6351 = vshll.u32 %v6228, 16
      %v6353 = vrot.slane %v6351, 5
      %v6354 = vsel %vm2073, %v6349, %v6353
      %v6355 = vshrl.u32 %v6228, 16
      %v6357 = vrot.slane %v6355, 4
      %v6358 = vor.u32 %v6357, %v6353
      %v6359 = vrot.slane %v6358, 4
      %v6361 = vshll.u32 %v6256, 16
      %v6363 = vrot.slane %v6361, 5
      %v6364 = vsel %vm2073, %v6359, %v6363
      %v6366 = vshrl.u32 %v6229, 16
      %v6368 = vrot.slane %v6366, 4
      %v6369 = vshll.u32 %v6229, 16
      %v6371 = vrot.slane %v6369, 5
      %v6372 = vor.u32 %v6368, %v6371
      %v6373 = vrot.slane %v6372, 4
      %v6375 = vshll.u32 %v6230, 16
      %v6377 = vrot.slane %v6375, 5
      %v6378 = vsel %vm2073, %v6373, %v6377
      %v6379 = vshrl.u32 %v6230, 16
      %v6381 = vrot.slane %v6379, 4
      %v6382 = vor.u32 %v6381, %v6377
      %v6383 = vrot.slane %v6382, 4
      %v6385 = vshll.u32 %v6257, 16
      %v6387 = vrot.slane %v6385, 5
      %v6388 = vsel %vm2073, %v6383, %v6387
      %v6390 = vshrl.u32 %v6231, 16
      %v6392 = vrot.slane %v6390, 4
      %v6393 = vshll.u32 %v6231, 16
      %v6395 = vrot.slane %v6393, 5
      %v6396 = vor.u32 %v6392, %v6395
      %v6397 = vrot.slane %v6396, 4
      %v6399 = vshll.u32 %v6232, 16
      %v6401 = vrot.slane %v6399, 5
      %v6402 = vsel %vm2073, %v6397, %v6401
      %v6403 = vshrl.u32 %v6232, 16
      %v6405 = vrot.slane %v6403, 4
      %v6406 = vor.u32 %v6405, %v6401
      %v6407 = vrot.slane %v6406, 4
      %v6409 = vshll.u32 %v6258, 16
      %v6411 = vrot.slane %v6409, 5
      %v6412 = vsel %vm2073, %v6407, %v6411
      %v6414 = vshrl.u32 %v6233, 16
      %v6416 = vrot.slane %v6414, 4
      %v6417 = vshll.u32 %v6233, 16
      %v6419 = vrot.slane %v6417, 5
      %v6420 = vor.u32 %v6416, %v6419
      %v6421 = vrot.slane %v6420, 4
      %v6423 = vshll.u32 %v6234, 16
      %v6425 = vrot.slane %v6423, 5
      %v6426 = vsel %vm2073, %v6421, %v6425
      %v6427 = vshrl.u32 %v6234, 16
      %v6429 = vrot.slane %v6427, 4
      %v6430 = vor.u32 %v6429, %v6425
      %v6431 = vrot.slane %v6430, 4
      %v6433 = vshll.u32 %v6259, 16
      %v6435 = vrot.slane %v6433, 5
      %v6436 = vsel %vm2073, %v6431, %v6435
      %v6438 = vshrl.u32 %v6235, 16
      %v6440 = vrot.slane %v6438, 4
      %v6441 = vshll.u32 %v6235, 16
      %v6443 = vrot.slane %v6441, 5
      %v6444 = vor.u32 %v6440, %v6443
      %v6445 = vrot.slane %v6444, 4
      %v6447 = vshll.u32 %v6236, 16
      %v6449 = vrot.slane %v6447, 5
      %v6450 = vsel %vm2073, %v6445, %v6449
      %v6451 = vshrl.u32 %v6236, 16
      %v6453 = vrot.slane %v6451, 4
      %v6454 = vor.u32 %v6453, %v6449
      %v6455 = vrot.slane %v6454, 4
      %v6457 = vshll.u32 %v6260, 16
      %v6459 = vrot.slane %v6457, 5
      %v6460 = vsel %vm2073, %v6455, %v6459
      %v6462 = vshrl.u32 %v6237, 16
      %v6464 = vrot.slane %v6462, 4
      %v6465 = vshll.u32 %v6237, 16
      %v6467 = vrot.slane %v6465, 5
      %v6468 = vor.u32 %v6464, %v6467
      %v6469 = vrot.slane %v6468, 4
      %v6471 = vshll.u32 %v6238, 16
      %v6473 = vrot.slane %v6471, 5
      %v6474 = vsel %vm2073, %v6469, %v6473
      %v6475 = vshrl.u32 %v6238, 16
      %v6477 = vrot.slane %v6475, 4
      %v6478 = vor.u32 %v6477, %v6473
      %v6479 = vrot.slane %v6478, 4
      %v6481 = vshll.u32 %v6261, 16
      %v6483 = vrot.slane %v6481, 5
      %v6484 = vsel %vm2073, %v6479, %v6483
      %v6486 = vshrl.u32 %v6239, 16
      %v6488 = vrot.slane %v6486, 4
      %v6489 = vshll.u32 %v6239, 16
      %v6491 = vrot.slane %v6489, 5
      %v6492 = vor.u32 %v6488, %v6491
      %v6493 = vrot.slane %v6492, 4
      %v6495 = vshll.u32 %v6240, 16
      %v6497 = vrot.slane %v6495, 5
      %v6498 = vsel %vm2073, %v6493, %v6497
      %v6499 = vshrl.u32 %v6240, 16
      %v6501 = vrot.slane %v6499, 4
      %v6502 = vor.u32 %v6501, %v6497
      %v6503 = vrot.slane %v6502, 4
      %v6505 = vshll.u32 %v6262, 16
      %v6507 = vrot.slane %v6505, 5
      %v6508 = vsel %vm2073, %v6503, %v6507
      %v6510 = vshrl.u32 %v6241, 16
      %v6512 = vrot.slane %v6510, 4
      %v6513 = vshll.u32 %v6241, 16
      %v6515 = vrot.slane %v6513, 5
      %v6516 = vor.u32 %v6512, %v6515
      %v6517 = vrot.slane %v6516, 4
      %v6519 = vshll.u32 %v6242, 16
      %v6521 = vrot.slane %v6519, 5
      %v6522 = vsel %vm2073, %v6517, %v6521
      %v6523 = vshrl.u32 %v6242, 16
      %v6525 = vrot.slane %v6523, 4
      %v6526 = vor.u32 %v6525, %v6521
      %v6527 = vrot.slane %v6526, 4
      %v6529 = vshll.u32 %v6263, 16
      %v6531 = vrot.slane %v6529, 5
      %v6532 = vsel %vm2073, %v6527, %v6531
      %v6534 = vshrl.u32 %v6243, 16
      %v6536 = vrot.slane %v6534, 4
      %v6537 = vshll.u32 %v6243, 16
      %v6539 = vrot.slane %v6537, 5
      %v6540 = vor.u32 %v6536, %v6539
      %v6541 = vrot.slane %v6540, 4
      %v6543 = vshll.u32 %v6244, 16
      %v6545 = vrot.slane %v6543, 5
      %v6546 = vsel %vm2073, %v6541, %v6545
      %v6547 = vshrl.u32 %v6244, 16
      %v6549 = vrot.slane %v6547, 4
      %v6550 = vor.u32 %v6549, %v6545
      %v6551 = vrot.slane %v6550, 4
      %v6553 = vshll.u32 %v6264, 16
      %v6555 = vrot.slane %v6553, 5
      %v6556 = vsel %vm2073, %v6551, %v6555
      %v6558 = vshrl.u32 %v6245, 16
      %v6560 = vrot.slane %v6558, 4
      %v6561 = vshll.u32 %v6245, 16
      %v6563 = vrot.slane %v6561, 5
      %v6564 = vor.u32 %v6560, %v6563
      %v6565 = vrot.slane %v6564, 4
      %v6567 = vshll.u32 %v6246, 16
      %v6569 = vrot.slane %v6567, 5
      %v6570 = vsel %vm2073, %v6565, %v6569
      %v6571 = vshrl.u32 %v6246, 16
      %v6573 = vrot.slane %v6571, 4
      %v6574 = vor.u32 %v6573, %v6569
      %v6575 = vrot.slane %v6574, 4
      %v6577 = vshll.u32 %v6265, 16
      %v6579 = vrot.slane %v6577, 5
      %v6580 = vsel %vm2073, %v6575, %v6579
      %v6582 = vshrl.u32 %v6247, 16
      %v6584 = vrot.slane %v6582, 4
      %v6585 = vshll.u32 %v6247, 16
      %v6587 = vrot.slane %v6585, 5
      %v6588 = vor.u32 %v6584, %v6587
      %v6589 = vrot.slane %v6588, 4
      %v6591 = vshll.u32 %v6248, 16
      %v6593 = vrot.slane %v6591, 5
      %v6594 = vsel %vm2073, %v6589, %v6593
      %v6595 = vshrl.u32 %v6248, 16
      %v6597 = vrot.slane %v6595, 4
      %v6598 = vor.u32 %v6597, %v6593
      %v6599 = vrot.slane %v6598, 4
      %v6601 = vshll.u32 %v6266, 16
      %v6603 = vrot.slane %v6601, 5
      %v6604 = vsel %vm2073, %v6599, %v6603
      %v6606 = vshrl.u32 %v6249, 16
      %v6608 = vrot.slane %v6606, 4
      %v6609 = vshll.u32 %v6249, 16
      %v6611 = vrot.slane %v6609, 5
      %v6612 = vor.u32 %v6608, %v6611
      %v6613 = vrot.slane %v6612, 4
      %v6615 = vshll.u32 %v6250, 16
      %v6617 = vrot.slane %v6615, 5
      %v6618 = vsel %vm2073, %v6613, %v6617
      %v6619 = vshrl.u32 %v6250, 16
      %v6621 = vrot.slane %v6619, 4
      %v6622 = vor.u32 %v6621, %v6617
      %v6623 = vrot.slane %v6622, 4
      %v6625 = vshll.u32 %v6267, 16
      %v6627 = vrot.slane %v6625, 5
      %v6628 = vsel %vm2073, %v6623, %v6627
      %v6630 = vshrl.u32 %v6251, 16
      %v6632 = vrot.slane %v6630, 4
      %v6633 = vshll.u32 %v6251, 16
      %v6635 = vrot.slane %v6633, 5
      %v6636 = vor.u32 %v6632, %v6635
      %v6637 = vrot.slane %v6636, 4
      %v6639 = vshll.u32 %v6252, 16
      %v6641 = vrot.slane %v6639, 5
      %v6642 = vsel %vm2073, %v6637, %v6641
      %v6643 = vshrl.u32 %v6252, 16
      %v6645 = vrot.slane %v6643, 4
      %v6646 = vor.u32 %v6645, %v6641
      %v6647 = vrot.slane %v6646, 4
      %v6649 = vshll.u32 %v6268, 16
      %v6651 = vrot.slane %v6649, 5
      %v6652 = vsel %vm2073, %v6647, %v6651
      %v6653 = vld [vmem:[%s5488] sm:$0xe]
      %v6654 = vld [vmem:[%s5488 + $0xc] sm:$0xe]
      %v6655 = vld [vmem:[%s5488 + $0x18] sm:$0xe]
      %v6656 = vld [vmem:[%s5488 + $0x24] sm:$0xe]
      %v6657 = vld [vmem:[%s5488 + $0x30] sm:$0xe]
      %v6658 = vld [vmem:[%s5488 + $0x3c] sm:$0xe]
      %v6659 = vld [vmem:[%s5488 + $0x48] sm:$0xe]
      %v6660 = vld [vmem:[%s5488 + $0x54] sm:$0xe]
      %v6661 = vld [vmem:[%s5488 + $0x60] sm:$0xe]
      %v6662 = vld [vmem:[%s5488 + $0x6c] sm:$0xe]
      %v6663 = vld [vmem:[%s5488 + $0x78] sm:$0xe]
      %v6664 = vld [vmem:[%s5488 + $0x84] sm:$0xe]
      %v6665 = vld [vmem:[%s5488 + $0x90] sm:$0xe]
      %v6666 = vld [vmem:[%s5488 + $0x9c] sm:$0xe]
      %v6667 = vld [vmem:[%s5488 + $0xa8] sm:$0xe]
      %v6668 = vld [vmem:[%s5488 + $0xb4] sm:$0xe]
      %v6717 = vrot.slane %v6653, 5
      %v6718 = vrot.slane %v6717, 4
      %v6719 = vrot.slane %v6222, 5
      %v6720 = vsel %vm2524, %v6718, %v6719
      %v6721 = vrot.slane %v6719, 4
      %v6722 = vrot.slane %v6253, 5
      %v6723 = vsel %vm2524, %v6721, %v6722
      %v6724 = vrot.slane %v6654, 5
      %v6725 = vrot.slane %v6724, 4
      %v6726 = vrot.slane %v6224, 5
      %v6727 = vsel %vm2524, %v6725, %v6726
      %v6728 = vrot.slane %v6726, 4
      %v6729 = vrot.slane %v6254, 5
      %v6730 = vsel %vm2524, %v6728, %v6729
      %v6731 = vrot.slane %v6655, 5
      %v6732 = vrot.slane %v6731, 4
      %v6733 = vrot.slane %v6226, 5
      %v6734 = vsel %vm2524, %v6732, %v6733
      %v6735 = vrot.slane %v6733, 4
      %v6736 = vrot.slane %v6255, 5
      %v6737 = vsel %vm2524, %v6735, %v6736
      %v6738 = vrot.slane %v6656, 5
      %v6739 = vrot.slane %v6738, 4
      %v6740 = vrot.slane %v6228, 5
      %v6741 = vsel %vm2524, %v6739, %v6740
      %v6742 = vrot.slane %v6740, 4
      %v6743 = vrot.slane %v6256, 5
      %v6744 = vsel %vm2524, %v6742, %v6743
      %v6745 = vrot.slane %v6657, 5
      %v6746 = vrot.slane %v6745, 4
      %v6747 = vrot.slane %v6230, 5
      %v6748 = vsel %vm2524, %v6746, %v6747
      %v6749 = vrot.slane %v6747, 4
      %v6750 = vrot.slane %v6257, 5
      %v6751 = vsel %vm2524, %v6749, %v6750
      %v6752 = vrot.slane %v6658, 5
      %v6753 = vrot.slane %v6752, 4
      %v6754 = vrot.slane %v6232, 5
      %v6755 = vsel %vm2524, %v6753, %v6754
      %v6756 = vrot.slane %v6754, 4
      %v6757 = vrot.slane %v6258, 5
      %v6758 = vsel %vm2524, %v6756, %v6757
      %v6759 = vrot.slane %v6659, 5
      %v6760 = vrot.slane %v6759, 4
      %v6761 = vrot.slane %v6234, 5
      %v6762 = vsel %vm2524, %v6760, %v6761
      %v6763 = vrot.slane %v6761, 4
      %v6764 = vrot.slane %v6259, 5
      %v6765 = vsel %vm2524, %v6763, %v6764
      %v6766 = vrot.slane %v6660, 5
      %v6767 = vrot.slane %v6766, 4
      %v6768 = vrot.slane %v6236, 5
      %v6769 = vsel %vm2524, %v6767, %v6768
      %v6770 = vrot.slane %v6768, 4
      %v6771 = vrot.slane %v6260, 5
      %v6772 = vsel %vm2524, %v6770, %v6771
      %v6773 = vrot.slane %v6661, 5
      %v6774 = vrot.slane %v6773, 4
      %v6775 = vrot.slane %v6238, 5
      %v6776 = vsel %vm2524, %v6774, %v6775
      %v6777 = vrot.slane %v6775, 4
      %v6778 = vrot.slane %v6261, 5
      %v6779 = vsel %vm2524, %v6777, %v6778
      %v6780 = vrot.slane %v6662, 5
      %v6781 = vrot.slane %v6780, 4
      %v6782 = vrot.slane %v6240, 5
      %v6783 = vsel %vm2524, %v6781, %v6782
      %v6784 = vrot.slane %v6782, 4
      %v6785 = vrot.slane %v6262, 5
      %v6786 = vsel %vm2524, %v6784, %v6785
      %v6787 = vrot.slane %v6663, 5
      %v6788 = vrot.slane %v6787, 4
      %v6789 = vrot.slane %v6242, 5
      %v6790 = vsel %vm2524, %v6788, %v6789
      %v6791 = vrot.slane %v6789, 4
      %v6792 = vrot.slane %v6263, 5
      %v6793 = vsel %vm2524, %v6791, %v6792
      %v6794 = vrot.slane %v6664, 5
      %v6795 = vrot.slane %v6794, 4
      %v6796 = vrot.slane %v6244, 5
      %v6797 = vsel %vm2524, %v6795, %v6796
      %v6798 = vrot.slane %v6796, 4
      %v6799 = vrot.slane %v6264, 5
      %v6800 = vsel %vm2524, %v6798, %v6799
      %v6801 = vrot.slane %v6665, 5
      %v6802 = vrot.slane %v6801, 4
      %v6803 = vrot.slane %v6246, 5
      %v6804 = vsel %vm2524, %v6802, %v6803
      %v6805 = vrot.slane %v6803, 4
      %v6806 = vrot.slane %v6265, 5
      %v6807 = vsel %vm2524, %v6805, %v6806
      %v6808 = vrot.slane %v6666, 5
      %v6809 = vrot.slane %v6808, 4
      %v6810 = vrot.slane %v6248, 5
      %v6811 = vsel %vm2524, %v6809, %v6810
      %v6812 = vrot.slane %v6810, 4
      %v6813 = vrot.slane %v6266, 5
      %v6814 = vsel %vm2524, %v6812, %v6813
      %v6815 = vrot.slane %v6667, 5
      %v6816 = vrot.slane %v6815, 4
      %v6817 = vrot.slane %v6250, 5
      %v6818 = vsel %vm2524, %v6816, %v6817
      %v6819 = vrot.slane %v6817, 4
      %v6820 = vrot.slane %v6267, 5
      %v6821 = vsel %vm2524, %v6819, %v6820
      %v6822 = vrot.slane %v6668, 5
      %v6823 = vrot.slane %v6822, 4
      %v6824 = vrot.slane %v6252, 5
      %v6825 = vsel %vm2524, %v6823, %v6824
      %v6826 = vrot.slane %v6824, 4
      %v6827 = vrot.slane %v6268, 5
      %v6828 = vsel %vm2524, %v6826, %v6827
      %s6829 = scalar_lea.vmem [#allocation3], 24
      %v6830 = vld [vmem:[%s6829] sm:$0xf]
      %v6831 = vld [vmem:[%s6829 + $0x4] sm:$0xf]
      %v6832 = vld [vmem:[%s6829 + $0xc] sm:$0xf]
      %v6833 = vld [vmem:[%s6829 + $0x10] sm:$0xf]
      %v6834 = vld [vmem:[%s6829 + $0x18] sm:$0xf]
      %v6835 = vld [vmem:[%s6829 + $0x1c] sm:$0xf]
      %v6836 = vld [vmem:[%s6829 + $0x24] sm:$0xf]
      %v6837 = vld [vmem:[%s6829 + $0x28] sm:$0xf]
      %v6838 = vld [vmem:[%s6829 + $0x30] sm:$0xf]
      %v6839 = vld [vmem:[%s6829 + $0x34] sm:$0xf]
      %v6840 = vld [vmem:[%s6829 + $0x3c] sm:$0xf]
      %v6841 = vld [vmem:[%s6829 + $0x40] sm:$0xf]
      %v6842 = vld [vmem:[%s6829 + $0x48] sm:$0xf]
      %v6843 = vld [vmem:[%s6829 + $0x4c] sm:$0xf]
      %v6844 = vld [vmem:[%s6829 + $0x54] sm:$0xf]
      %v6845 = vld [vmem:[%s6829 + $0x58] sm:$0xf]
      %v6846 = vld [vmem:[%s6829 + $0x60] sm:$0xf]
      %v6847 = vld [vmem:[%s6829 + $0x64] sm:$0xf]
      %v6848 = vld [vmem:[%s6829 + $0x6c] sm:$0xf]
      %v6849 = vld [vmem:[%s6829 + $0x70] sm:$0xf]
      %v6850 = vld [vmem:[%s6829 + $0x78] sm:$0xf]
      %v6851 = vld [vmem:[%s6829 + $0x7c] sm:$0xf]
      %v6852 = vld [vmem:[%s6829 + $0x84] sm:$0xf]
      %v6853 = vld [vmem:[%s6829 + $0x88] sm:$0xf]
      %v6854 = vld [vmem:[%s6829 + $0x90] sm:$0xf]
      %v6855 = vld [vmem:[%s6829 + $0x94] sm:$0xf]
      %v6856 = vld [vmem:[%s6829 + $0x9c] sm:$0xf]
      %v6857 = vld [vmem:[%s6829 + $0xa0] sm:$0xf]
      %v6858 = vld [vmem:[%s6829 + $0xa8] sm:$0xf]
      %v6859 = vld [vmem:[%s6829 + $0xac] sm:$0xf]
      %v6860 = vld [vmem:[%s6829 + $0xb4] sm:$0xf]
      %v6861 = vld [vmem:[%s6829 + $0xb8] sm:$0xf]
      %v6862 = vld [vmem:[%s6829 + $0x8] sm:$0x1]
      %v6863 = vld [vmem:[%s6829 + $0x14] sm:$0x1]
      %v6864 = vld [vmem:[%s6829 + $0x20] sm:$0x1]
      %v6865 = vld [vmem:[%s6829 + $0x2c] sm:$0x1]
      %v6866 = vld [vmem:[%s6829 + $0x38] sm:$0x1]
      %v6867 = vld [vmem:[%s6829 + $0x44] sm:$0x1]
      %v6868 = vld [vmem:[%s6829 + $0x50] sm:$0x1]
      %v6869 = vld [vmem:[%s6829 + $0x5c] sm:$0x1]
      %v6870 = vld [vmem:[%s6829 + $0x68] sm:$0x1]
      %v6871 = vld [vmem:[%s6829 + $0x74] sm:$0x1]
      %v6872 = vld [vmem:[%s6829 + $0x80] sm:$0x1]
      %v6873 = vld [vmem:[%s6829 + $0x8c] sm:$0x1]
      %v6874 = vld [vmem:[%s6829 + $0x98] sm:$0x1]
      %v6875 = vld [vmem:[%s6829 + $0xa4] sm:$0x1]
      %v6876 = vld [vmem:[%s6829 + $0xb0] sm:$0x1]
      %v6877 = vld [vmem:[%s6829 + $0xbc] sm:$0x1]
      %v6879 = vshrl.u32 %v6830, 16
      %v6881 = vrot.slane %v6879, 4
      %v6882 = vshll.u32 %v6830, 16
      %v6884 = vrot.slane %v6882, 5
      %v6885 = vor.u32 %v6881, %v6884
      %v6886 = vrot.slane %v6885, 4
      %v6888 = vshll.u32 %v6831, 16
      %v6890 = vrot.slane %v6888, 5
      %v6891 = vsel %vm2073, %v6886, %v6890
      %v6892 = vshrl.u32 %v6831, 16
      %v6894 = vrot.slane %v6892, 4
      %v6895 = vor.u32 %v6894, %v6890
      %v6896 = vrot.slane %v6895, 4
      %v6898 = vshll.u32 %v6862, 16
      %v6900 = vrot.slane %v6898, 5
      %v6901 = vsel %vm2073, %v6896, %v6900
      %v6903 = vshrl.u32 %v6832, 16
      %v6905 = vrot.slane %v6903, 4
      %v6906 = vshll.u32 %v6832, 16
      %v6908 = vrot.slane %v6906, 5
      %v6909 = vor.u32 %v6905, %v6908
      %v6910 = vrot.slane %v6909, 4
      %v6912 = vshll.u32 %v6833, 16
      %v6914 = vrot.slane %v6912, 5
      %v6915 = vsel %vm2073, %v6910, %v6914
      %v6916 = vshrl.u32 %v6833, 16
      %v6918 = vrot.slane %v6916, 4
      %v6919 = vor.u32 %v6918, %v6914
      %v6920 = vrot.slane %v6919, 4
      %v6922 = vshll.u32 %v6863, 16
      %v6924 = vrot.slane %v6922, 5
      %v6925 = vsel %vm2073, %v6920, %v6924
      %v6927 = vshrl.u32 %v6834, 16
      %v6929 = vrot.slane %v6927, 4
      %v6930 = vshll.u32 %v6834, 16
      %v6932 = vrot.slane %v6930, 5
      %v6933 = vor.u32 %v6929, %v6932
      %v6934 = vrot.slane %v6933, 4
      %v6936 = vshll.u32 %v6835, 16
      %v6938 = vrot.slane %v6936, 5
      %v6939 = vsel %vm2073, %v6934, %v6938
      %v6940 = vshrl.u32 %v6835, 16
      %v6942 = vrot.slane %v6940, 4
      %v6943 = vor.u32 %v6942, %v6938
      %v6944 = vrot.slane %v6943, 4
      %v6946 = vshll.u32 %v6864, 16
      %v6948 = vrot.slane %v6946, 5
      %v6949 = vsel %vm2073, %v6944, %v6948
      %v6951 = vshrl.u32 %v6836, 16
      %v6953 = vrot.slane %v6951, 4
      %v6954 = vshll.u32 %v6836, 16
      %v6956 = vrot.slane %v6954, 5
      %v6957 = vor.u32 %v6953, %v6956
      %v6958 = vrot.slane %v6957, 4
      %v6960 = vshll.u32 %v6837, 16
      %v6962 = vrot.slane %v6960, 5
      %v6963 = vsel %vm2073, %v6958, %v6962
      %v6964 = vshrl.u32 %v6837, 16
      %v6966 = vrot.slane %v6964, 4
      %v6967 = vor.u32 %v6966, %v6962
      %v6968 = vrot.slane %v6967, 4
      %v6970 = vshll.u32 %v6865, 16
      %v6972 = vrot.slane %v6970, 5
      %v6973 = vsel %vm2073, %v6968, %v6972
      %v6975 = vshrl.u32 %v6838, 16
      %v6977 = vrot.slane %v6975, 4
      %v6978 = vshll.u32 %v6838, 16
      %v6980 = vrot.slane %v6978, 5
      %v6981 = vor.u32 %v6977, %v6980
      %v6982 = vrot.slane %v6981, 4
      %v6984 = vshll.u32 %v6839, 16
      %v6986 = vrot.slane %v6984, 5
      %v6987 = vsel %vm2073, %v6982, %v6986
      %v6988 = vshrl.u32 %v6839, 16
      %v6990 = vrot.slane %v6988, 4
      %v6991 = vor.u32 %v6990, %v6986
      %v6992 = vrot.slane %v6991, 4
      %v6994 = vshll.u32 %v6866, 16
      %v6996 = vrot.slane %v6994, 5
      %v6997 = vsel %vm2073, %v6992, %v6996
      %v6999 = vshrl.u32 %v6840, 16
      %v7001 = vrot.slane %v6999, 4
      %v7002 = vshll.u32 %v6840, 16
      %v7004 = vrot.slane %v7002, 5
      %v7005 = vor.u32 %v7001, %v7004
      %v7006 = vrot.slane %v7005, 4
      %v7008 = vshll.u32 %v6841, 16
      %v7010 = vrot.slane %v7008, 5
      %v7011 = vsel %vm2073, %v7006, %v7010
      %v7012 = vshrl.u32 %v6841, 16
      %v7014 = vrot.slane %v7012, 4
      %v7015 = vor.u32 %v7014, %v7010
      %v7016 = vrot.slane %v7015, 4
      %v7018 = vshll.u32 %v6867, 16
      %v7020 = vrot.slane %v7018, 5
      %v7021 = vsel %vm2073, %v7016, %v7020
      %v7023 = vshrl.u32 %v6842, 16
      %v7025 = vrot.slane %v7023, 4
      %v7026 = vshll.u32 %v6842, 16
      %v7028 = vrot.slane %v7026, 5
      %v7029 = vor.u32 %v7025, %v7028
      %v7030 = vrot.slane %v7029, 4
      %v7032 = vshll.u32 %v6843, 16
      %v7034 = vrot.slane %v7032, 5
      %v7035 = vsel %vm2073, %v7030, %v7034
      %v7036 = vshrl.u32 %v6843, 16
      %v7038 = vrot.slane %v7036, 4
      %v7039 = vor.u32 %v7038, %v7034
      %v7040 = vrot.slane %v7039, 4
      %v7042 = vshll.u32 %v6868, 16
      %v7044 = vrot.slane %v7042, 5
      %v7045 = vsel %vm2073, %v7040, %v7044
      %v7047 = vshrl.u32 %v6844, 16
      %v7049 = vrot.slane %v7047, 4
      %v7050 = vshll.u32 %v6844, 16
      %v7052 = vrot.slane %v7050, 5
      %v7053 = vor.u32 %v7049, %v7052
      %v7054 = vrot.slane %v7053, 4
      %v7056 = vshll.u32 %v6845, 16
      %v7058 = vrot.slane %v7056, 5
      %v7059 = vsel %vm2073, %v7054, %v7058
      %v7060 = vshrl.u32 %v6845, 16
      %v7062 = vrot.slane %v7060, 4
      %v7063 = vor.u32 %v7062, %v7058
      %v7064 = vrot.slane %v7063, 4
      %v7066 = vshll.u32 %v6869, 16
      %v7068 = vrot.slane %v7066, 5
      %v7069 = vsel %vm2073, %v7064, %v7068
      %v7071 = vshrl.u32 %v6846, 16
      %v7073 = vrot.slane %v7071, 4
      %v7074 = vshll.u32 %v6846, 16
      %v7076 = vrot.slane %v7074, 5
      %v7077 = vor.u32 %v7073, %v7076
      %v7078 = vrot.slane %v7077, 4
      %v7080 = vshll.u32 %v6847, 16
      %v7082 = vrot.slane %v7080, 5
      %v7083 = vsel %vm2073, %v7078, %v7082
      %v7084 = vshrl.u32 %v6847, 16
      %v7086 = vrot.slane %v7084, 4
      %v7087 = vor.u32 %v7086, %v7082
      %v7088 = vrot.slane %v7087, 4
      %v7090 = vshll.u32 %v6870, 16
      %v7092 = vrot.slane %v7090, 5
      %v7093 = vsel %vm2073, %v7088, %v7092
      %v7095 = vshrl.u32 %v6848, 16
      %v7097 = vrot.slane %v7095, 4
      %v7098 = vshll.u32 %v6848, 16
      %v7100 = vrot.slane %v7098, 5
      %v7101 = vor.u32 %v7097, %v7100
      %v7102 = vrot.slane %v7101, 4
      %v7104 = vshll.u32 %v6849, 16
      %v7106 = vrot.slane %v7104, 5
      %v7107 = vsel %vm2073, %v7102, %v7106
      %v7108 = vshrl.u32 %v6849, 16
      %v7110 = vrot.slane %v7108, 4
      %v7111 = vor.u32 %v7110, %v7106
      %v7112 = vrot.slane %v7111, 4
      %v7114 = vshll.u32 %v6871, 16
      %v7116 = vrot.slane %v7114, 5
      %v7117 = vsel %vm2073, %v7112, %v7116
      %v7119 = vshrl.u32 %v6850, 16
      %v7121 = vrot.slane %v7119, 4
      %v7122 = vshll.u32 %v6850, 16
      %v7124 = vrot.slane %v7122, 5
      %v7125 = vor.u32 %v7121, %v7124
      %v7126 = vrot.slane %v7125, 4
      %v7128 = vshll.u32 %v6851, 16
      %v7130 = vrot.slane %v7128, 5
      %v7131 = vsel %vm2073, %v7126, %v7130
      %v7132 = vshrl.u32 %v6851, 16
      %v7134 = vrot.slane %v7132, 4
      %v7135 = vor.u32 %v7134, %v7130
      %v7136 = vrot.slane %v7135, 4
      %v7138 = vshll.u32 %v6872, 16
      %v7140 = vrot.slane %v7138, 5
      %v7141 = vsel %vm2073, %v7136, %v7140
      %v7143 = vshrl.u32 %v6852, 16
      %v7145 = vrot.slane %v7143, 4
      %v7146 = vshll.u32 %v6852, 16
      %v7148 = vrot.slane %v7146, 5
      %v7149 = vor.u32 %v7145, %v7148
      %v7150 = vrot.slane %v7149, 4
      %v7152 = vshll.u32 %v6853, 16
      %v7154 = vrot.slane %v7152, 5
      %v7155 = vsel %vm2073, %v7150, %v7154
      %v7156 = vshrl.u32 %v6853, 16
      %v7158 = vrot.slane %v7156, 4
      %v7159 = vor.u32 %v7158, %v7154
      %v7160 = vrot.slane %v7159, 4
      %v7162 = vshll.u32 %v6873, 16
      %v7164 = vrot.slane %v7162, 5
      %v7165 = vsel %vm2073, %v7160, %v7164
      %v7167 = vshrl.u32 %v6854, 16
      %v7169 = vrot.slane %v7167, 4
      %v7170 = vshll.u32 %v6854, 16
      %v7172 = vrot.slane %v7170, 5
      %v7173 = vor.u32 %v7169, %v7172
      %v7174 = vrot.slane %v7173, 4
      %v7176 = vshll.u32 %v6855, 16
      %v7178 = vrot.slane %v7176, 5
      %v7179 = vsel %vm2073, %v7174, %v7178
      %v7180 = vshrl.u32 %v6855, 16
      %v7182 = vrot.slane %v7180, 4
      %v7183 = vor.u32 %v7182, %v7178
      %v7184 = vrot.slane %v7183, 4
      %v7186 = vshll.u32 %v6874, 16
      %v7188 = vrot.slane %v7186, 5
      %v7189 = vsel %vm2073, %v7184, %v7188
      %v7191 = vshrl.u32 %v6856, 16
      %v7193 = vrot.slane %v7191, 4
      %v7194 = vshll.u32 %v6856, 16
      %v7196 = vrot.slane %v7194, 5
      %v7197 = vor.u32 %v7193, %v7196
      %v7198 = vrot.slane %v7197, 4
      %v7200 = vshll.u32 %v6857, 16
      %v7202 = vrot.slane %v7200, 5
      %v7203 = vsel %vm2073, %v7198, %v7202
      %v7204 = vshrl.u32 %v6857, 16
      %v7206 = vrot.slane %v7204, 4
      %v7207 = vor.u32 %v7206, %v7202
      %v7208 = vrot.slane %v7207, 4
      %v7210 = vshll.u32 %v6875, 16
      %v7212 = vrot.slane %v7210, 5
      %v7213 = vsel %vm2073, %v7208, %v7212
      %v7215 = vshrl.u32 %v6858, 16
      %v7217 = vrot.slane %v7215, 4
      %v7218 = vshll.u32 %v6858, 16
      %v7220 = vrot.slane %v7218, 5
      %v7221 = vor.u32 %v7217, %v7220
      %v7222 = vrot.slane %v7221, 4
      %v7224 = vshll.u32 %v6859, 16
      %v7226 = vrot.slane %v7224, 5
      %v7227 = vsel %vm2073, %v7222, %v7226
      %v7228 = vshrl.u32 %v6859, 16
      %v7230 = vrot.slane %v7228, 4
      %v7231 = vor.u32 %v7230, %v7226
      %v7232 = vrot.slane %v7231, 4
      %v7234 = vshll.u32 %v6876, 16
      %v7236 = vrot.slane %v7234, 5
      %v7237 = vsel %vm2073, %v7232, %v7236
      %v7239 = vshrl.u32 %v6860, 16
      %v7241 = vrot.slane %v7239, 4
      %v7242 = vshll.u32 %v6860, 16
      %v7244 = vrot.slane %v7242, 5
      %v7245 = vor.u32 %v7241, %v7244
      %v7246 = vrot.slane %v7245, 4
      %v7248 = vshll.u32 %v6861, 16
      %v7250 = vrot.slane %v7248, 5
      %v7251 = vsel %vm2073, %v7246, %v7250
      %v7252 = vshrl.u32 %v6861, 16
      %v7254 = vrot.slane %v7252, 4
      %v7255 = vor.u32 %v7254, %v7250
      %v7256 = vrot.slane %v7255, 4
      %v7258 = vshll.u32 %v6877, 16
      %v7260 = vrot.slane %v7258, 5
      %v7261 = vsel %vm2073, %v7256, %v7260
      %v7262 = vld [vmem:[%s6829] sm:$0xe]
      %v7263 = vld [vmem:[%s6829 + $0xc] sm:$0xe]
      %v7264 = vld [vmem:[%s6829 + $0x18] sm:$0xe]
      %v7265 = vld [vmem:[%s6829 + $0x24] sm:$0xe]
      %v7266 = vld [vmem:[%s6829 + $0x30] sm:$0xe]
      %v7267 = vld [vmem:[%s6829 + $0x3c] sm:$0xe]
      %v7268 = vld [vmem:[%s6829 + $0x48] sm:$0xe]
      %v7269 = vld [vmem:[%s6829 + $0x54] sm:$0xe]
      %v7270 = vld [vmem:[%s6829 + $0x60] sm:$0xe]
      %v7271 = vld [vmem:[%s6829 + $0x6c] sm:$0xe]
      %v7272 = vld [vmem:[%s6829 + $0x78] sm:$0xe]
      %v7273 = vld [vmem:[%s6829 + $0x84] sm:$0xe]
      %v7274 = vld [vmem:[%s6829 + $0x90] sm:$0xe]
      %v7275 = vld [vmem:[%s6829 + $0x9c] sm:$0xe]
      %v7276 = vld [vmem:[%s6829 + $0xa8] sm:$0xe]
      %v7277 = vld [vmem:[%s6829 + $0xb4] sm:$0xe]
      %v7326 = vrot.slane %v7262, 5
      %v7327 = vrot.slane %v7326, 4
      %v7328 = vrot.slane %v6831, 5
      %v7329 = vsel %vm2524, %v7327, %v7328
      %v7330 = vrot.slane %v7328, 4
      %v7331 = vrot.slane %v6862, 5
      %v7332 = vsel %vm2524, %v7330, %v7331
      %v7333 = vrot.slane %v7263, 5
      %v7334 = vrot.slane %v7333, 4
      %v7335 = vrot.slane %v6833, 5
      %v7336 = vsel %vm2524, %v7334, %v7335
      %v7337 = vrot.slane %v7335, 4
      %v7338 = vrot.slane %v6863, 5
      %v7339 = vsel %vm2524, %v7337, %v7338
      %v7340 = vrot.slane %v7264, 5
      %v7341 = vrot.slane %v7340, 4
      %v7342 = vrot.slane %v6835, 5
      %v7343 = vsel %vm2524, %v7341, %v7342
      %v7344 = vrot.slane %v7342, 4
      %v7345 = vrot.slane %v6864, 5
      %v7346 = vsel %vm2524, %v7344, %v7345
      %v7347 = vrot.slane %v7265, 5
      %v7348 = vrot.slane %v7347, 4
      %v7349 = vrot.slane %v6837, 5
      %v7350 = vsel %vm2524, %v7348, %v7349
      %v7351 = vrot.slane %v7349, 4
      %v7352 = vrot.slane %v6865, 5
      %v7353 = vsel %vm2524, %v7351, %v7352
      %v7354 = vrot.slane %v7266, 5
      %v7355 = vrot.slane %v7354, 4
      %v7356 = vrot.slane %v6839, 5
      %v7357 = vsel %vm2524, %v7355, %v7356
      %v7358 = vrot.slane %v7356, 4
      %v7359 = vrot.slane %v6866, 5
      %v7360 = vsel %vm2524, %v7358, %v7359
      %v7361 = vrot.slane %v7267, 5
      %v7362 = vrot.slane %v7361, 4
      %v7363 = vrot.slane %v6841, 5
      %v7364 = vsel %vm2524, %v7362, %v7363
      %v7365 = vrot.slane %v7363, 4
      %v7366 = vrot.slane %v6867, 5
      %v7367 = vsel %vm2524, %v7365, %v7366
      %v7368 = vrot.slane %v7268, 5
      %v7369 = vrot.slane %v7368, 4
      %v7370 = vrot.slane %v6843, 5
      %v7371 = vsel %vm2524, %v7369, %v7370
      %v7372 = vrot.slane %v7370, 4
      %v7373 = vrot.slane %v6868, 5
      %v7374 = vsel %vm2524, %v7372, %v7373
      %v7375 = vrot.slane %v7269, 5
      %v7376 = vrot.slane %v7375, 4
      %v7377 = vrot.slane %v6845, 5
      %v7378 = vsel %vm2524, %v7376, %v7377
      %v7379 = vrot.slane %v7377, 4
      %v7380 = vrot.slane %v6869, 5
      %v7381 = vsel %vm2524, %v7379, %v7380
      %v7382 = vrot.slane %v7270, 5
      %v7383 = vrot.slane %v7382, 4
      %v7384 = vrot.slane %v6847, 5
      %v7385 = vsel %vm2524, %v7383, %v7384
      %v7386 = vrot.slane %v7384, 4
      %v7387 = vrot.slane %v6870, 5
      %v7388 = vsel %vm2524, %v7386, %v7387
      %v7389 = vrot.slane %v7271, 5
      %v7390 = vrot.slane %v7389, 4
      %v7391 = vrot.slane %v6849, 5
      %v7392 = vsel %vm2524, %v7390, %v7391
      %v7393 = vrot.slane %v7391, 4
      %v7394 = vrot.slane %v6871, 5
      %v7395 = vsel %vm2524, %v7393, %v7394
      %v7396 = vrot.slane %v7272, 5
      %v7397 = vrot.slane %v7396, 4
      %v7398 = vrot.slane %v6851, 5
      %v7399 = vsel %vm2524, %v7397, %v7398
      %v7400 = vrot.slane %v7398, 4
      %v7401 = vrot.slane %v6872, 5
      %v7402 = vsel %vm2524, %v7400, %v7401
      %v7403 = vrot.slane %v7273, 5
      %v7404 = vrot.slane %v7403, 4
      %v7405 = vrot.slane %v6853, 5
      %v7406 = vsel %vm2524, %v7404, %v7405
      %v7407 = vrot.slane %v7405, 4
      %v7408 = vrot.slane %v6873, 5
      %v7409 = vsel %vm2524, %v7407, %v7408
      %v7410 = vrot.slane %v7274, 5
      %v7411 = vrot.slane %v7410, 4
      %v7412 = vrot.slane %v6855, 5
      %v7413 = vsel %vm2524, %v7411, %v7412
      %v7414 = vrot.slane %v7412, 4
      %v7415 = vrot.slane %v6874, 5
      %v7416 = vsel %vm2524, %v7414, %v7415
      %v7417 = vrot.slane %v7275, 5
      %v7418 = vrot.slane %v7417, 4
      %v7419 = vrot.slane %v6857, 5
      %v7420 = vsel %vm2524, %v7418, %v7419
      %v7421 = vrot.slane %v7419, 4
      %v7422 = vrot.slane %v6875, 5
      %v7423 = vsel %vm2524, %v7421, %v7422
      %v7424 = vrot.slane %v7276, 5
      %v7425 = vrot.slane %v7424, 4
      %v7426 = vrot.slane %v6859, 5
      %v7427 = vsel %vm2524, %v7425, %v7426
      %v7428 = vrot.slane %v7426, 4
      %v7429 = vrot.slane %v6876, 5
      %v7430 = vsel %vm2524, %v7428, %v7429
      %v7431 = vrot.slane %v7277, 5
      %v7432 = vrot.slane %v7431, 4
      %v7433 = vrot.slane %v6861, 5
      %v7434 = vsel %vm2524, %v7432, %v7433
      %v7435 = vrot.slane %v7433, 4
      %v7436 = vrot.slane %v6877, 5
      %v7437 = vsel %vm2524, %v7435, %v7436
      %v7454 = vunpack.c.l.b16 %v5613
      %v7455 = vunpack.c.l.b16 %v5614
      %v7456 = vunpack.c.l.b16 %v5615
      %v7457 = vunpack.c.l.b16 %v5616
      %v7458 = vunpack.c.l.b16 %v5617
      %v7459 = vunpack.c.l.b16 %v5618
      %v7460 = vunpack.c.l.b16 %v5619
      %v7461 = vunpack.c.l.b16 %v5620
      %v7462 = vunpack.c.l.b16 %v5621
      %v7463 = vunpack.c.l.b16 %v5622
      %v7464 = vunpack.c.l.b16 %v5623
      %v7465 = vunpack.c.l.b16 %v5624
      %v7466 = vunpack.c.l.b16 %v5625
      %v7467 = vunpack.c.l.b16 %v5626
      %v7468 = vunpack.c.l.b16 %v5627
      %v7469 = vunpack.c.l.b16 %v5628
      %v7470 = vunpack.c.l.b16 %v5629
      %v7471 = vunpack.c.l.b16 %v5630
      %v7472 = vunpack.c.l.b16 %v5631
      %v7473 = vunpack.c.l.b16 %v5632
      %v7474 = vunpack.c.l.b16 %v5633
      %v7475 = vunpack.c.l.b16 %v5634
      %v7476 = vunpack.c.l.b16 %v5635
      %v7477 = vunpack.c.l.b16 %v5636
      %v7478 = vunpack.c.l.b16 %v5637
      %v7479 = vunpack.c.l.b16 %v5638
      %v7480 = vunpack.c.l.b16 %v5639
      %v7481 = vunpack.c.l.b16 %v5640
      %v7482 = vunpack.c.l.b16 %v5641
      %v7483 = vunpack.c.l.b16 %v5642
      %v7484 = vunpack.c.l.b16 %v5643
      %v7485 = vunpack.c.l.b16 %v5644
      %v7486 = vpack.c.b16 %v7455, %v7454
      %v7487 = vpack.c.b16 %v7457, %v7456
      %v7488 = vpack.c.b16 %v7459, %v7458
      %v7489 = vpack.c.b16 %v7461, %v7460
      %v7490 = vpack.c.b16 %v7463, %v7462
      %v7491 = vpack.c.b16 %v7465, %v7464
      %v7492 = vpack.c.b16 %v7467, %v7466
      %v7493 = vpack.c.b16 %v7469, %v7468
      %v7494 = vpack.c.b16 %v7471, %v7470
      %v7495 = vpack.c.b16 %v7473, %v7472
      %v7496 = vpack.c.b16 %v7475, %v7474
      %v7497 = vpack.c.b16 %v7477, %v7476
      %v7498 = vpack.c.b16 %v7479, %v7478
      %v7499 = vpack.c.b16 %v7481, %v7480
      %v7500 = vpack.c.b16 %v7483, %v7482
      %v7501 = vpack.c.b16 %v7485, %v7484
      %v7502 = vunpack.c.l.b16 %v5674
      %v7503 = vunpack.c.l.b16 %v5684
      %v7504 = vunpack.c.l.b16 %v5698
      %v7505 = vunpack.c.l.b16 %v5708
      %v7506 = vunpack.c.l.b16 %v5722
      %v7507 = vunpack.c.l.b16 %v5732
      %v7508 = vunpack.c.l.b16 %v5746
      %v7509 = vunpack.c.l.b16 %v5756
      %v7510 = vunpack.c.l.b16 %v5770
      %v7511 = vunpack.c.l.b16 %v5780
      %v7512 = vunpack.c.l.b16 %v5794
      %v7513 = vunpack.c.l.b16 %v5804
      %v7514 = vunpack.c.l.b16 %v5818
      %v7515 = vunpack.c.l.b16 %v5828
      %v7516 = vunpack.c.l.b16 %v5842
      %v7517 = vunpack.c.l.b16 %v5852
      %v7518 = vunpack.c.l.b16 %v5866
      %v7519 = vunpack.c.l.b16 %v5876
      %v7520 = vunpack.c.l.b16 %v5890
      %v7521 = vunpack.c.l.b16 %v5900
      %v7522 = vunpack.c.l.b16 %v5914
      %v7523 = vunpack.c.l.b16 %v5924
      %v7524 = vunpack.c.l.b16 %v5938
      %v7525 = vunpack.c.l.b16 %v5948
      %v7526 = vunpack.c.l.b16 %v5962
      %v7527 = vunpack.c.l.b16 %v5972
      %v7528 = vunpack.c.l.b16 %v5986
      %v7529 = vunpack.c.l.b16 %v5996
      %v7530 = vunpack.c.l.b16 %v6010
      %v7531 = vunpack.c.l.b16 %v6020
      %v7532 = vunpack.c.l.b16 %v6034
      %v7533 = vunpack.c.l.b16 %v6044
      %v7534 = vpack.c.b16 %v7503, %v7502
      %v7535 = vpack.c.b16 %v7505, %v7504
      %v7536 = vpack.c.b16 %v7507, %v7506
      %v7537 = vpack.c.b16 %v7509, %v7508
      %v7538 = vpack.c.b16 %v7511, %v7510
      %v7539 = vpack.c.b16 %v7513, %v7512
      %v7540 = vpack.c.b16 %v7515, %v7514
      %v7541 = vpack.c.b16 %v7517, %v7516
      %v7542 = vpack.c.b16 %v7519, %v7518
      %v7543 = vpack.c.b16 %v7521, %v7520
      %v7544 = vpack.c.b16 %v7523, %v7522
      %v7545 = vpack.c.b16 %v7525, %v7524
      %v7546 = vpack.c.b16 %v7527, %v7526
      %v7547 = vpack.c.b16 %v7529, %v7528
      %v7548 = vpack.c.b16 %v7531, %v7530
      %v7549 = vpack.c.b16 %v7533, %v7532
      %7550 = vrot.lane.b32.xlu0 %v7534, 8
      %v7551 = vpop.permute.xlu0 %7550
      %7552 = vrot.lane.b32.xlu0 %v7535, 8
      %v7553 = vpop.permute.xlu0 %7552
      %7554 = vrot.lane.b32.xlu0 %v7536, 8
      %v7555 = vpop.permute.xlu0 %7554
      %7556 = vrot.lane.b32.xlu0 %v7537, 8
      %v7557 = vpop.permute.xlu0 %7556
      %7558 = vrot.lane.b32.xlu0 %v7538, 8
      %v7559 = vpop.permute.xlu0 %7558
      %7560 = vrot.lane.b32.xlu0 %v7539, 8
      %v7561 = vpop.permute.xlu0 %7560
      %7562 = vrot.lane.b32.xlu0 %v7540, 8
      %v7563 = vpop.permute.xlu0 %7562
      %7564 = vrot.lane.b32.xlu0 %v7541, 8
      %v7565 = vpop.permute.xlu0 %7564
      %7566 = vrot.lane.b32.xlu0 %v7542, 8
      %v7567 = vpop.permute.xlu0 %7566
      %7568 = vrot.lane.b32.xlu0 %v7543, 8
      %v7569 = vpop.permute.xlu0 %7568
      %7570 = vrot.lane.b32.xlu0 %v7544, 8
      %v7571 = vpop.permute.xlu0 %7570
      %7572 = vrot.lane.b32.xlu0 %v7545, 8
      %v7573 = vpop.permute.xlu0 %7572
      %7574 = vrot.lane.b32.xlu0 %v7546, 8
      %v7575 = vpop.permute.xlu0 %7574
      %7576 = vrot.lane.b32.xlu0 %v7547, 8
      %v7577 = vpop.permute.xlu0 %7576
      %7578 = vrot.lane.b32.xlu0 %v7548, 8
      %v7579 = vpop.permute.xlu0 %7578
      %7580 = vrot.lane.b32.xlu0 %v7549, 8
      %v7581 = vpop.permute.xlu0 %7580
      %v7582 = vunpack.c.l.b16 %v6112
      %v7583 = vunpack.c.l.b16 %v6115
      %v7584 = vunpack.c.l.b16 %v6119
      %v7585 = vunpack.c.l.b16 %v6122
      %v7586 = vunpack.c.l.b16 %v6126
      %v7587 = vunpack.c.l.b16 %v6129
      %v7588 = vunpack.c.l.b16 %v6133
      %v7589 = vunpack.c.l.b16 %v6136
      %v7590 = vunpack.c.l.b16 %v6140
      %v7591 = vunpack.c.l.b16 %v6143
      %v7592 = vunpack.c.l.b16 %v6147
      %v7593 = vunpack.c.l.b16 %v6150
      %v7594 = vunpack.c.l.b16 %v6154
      %v7595 = vunpack.c.l.b16 %v6157
      %v7596 = vunpack.c.l.b16 %v6161
      %v7597 = vunpack.c.l.b16 %v6164
      %v7598 = vunpack.c.l.b16 %v6168
      %v7599 = vunpack.c.l.b16 %v6171
      %v7600 = vunpack.c.l.b16 %v6175
      %v7601 = vunpack.c.l.b16 %v6178
      %v7602 = vunpack.c.l.b16 %v6182
      %v7603 = vunpack.c.l.b16 %v6185
      %v7604 = vunpack.c.l.b16 %v6189
      %v7605 = vunpack.c.l.b16 %v6192
      %v7606 = vunpack.c.l.b16 %v6196
      %v7607 = vunpack.c.l.b16 %v6199
      %v7608 = vunpack.c.l.b16 %v6203
      %v7609 = vunpack.c.l.b16 %v6206
      %v7610 = vunpack.c.l.b16 %v6210
      %v7611 = vunpack.c.l.b16 %v6213
      %v7612 = vunpack.c.l.b16 %v6217
      %v7613 = vunpack.c.l.b16 %v6220
      %v7614 = vpack.c.b16 %v7583, %v7582
      %v7615 = vpack.c.b16 %v7585, %v7584
      %v7616 = vpack.c.b16 %v7587, %v7586
      %v7617 = vpack.c.b16 %v7589, %v7588
      %v7618 = vpack.c.b16 %v7591, %v7590
      %v7619 = vpack.c.b16 %v7593, %v7592
      %v7620 = vpack.c.b16 %v7595, %v7594
      %v7621 = vpack.c.b16 %v7597, %v7596
      %v7622 = vpack.c.b16 %v7599, %v7598
      %v7623 = vpack.c.b16 %v7601, %v7600
      %v7624 = vpack.c.b16 %v7603, %v7602
      %v7625 = vpack.c.b16 %v7605, %v7604
      %v7626 = vpack.c.b16 %v7607, %v7606
      %v7627 = vpack.c.b16 %v7609, %v7608
      %v7628 = vpack.c.b16 %v7611, %v7610
      %v7629 = vpack.c.b16 %v7613, %v7612
      %7630 = vrot.lane.b32.xlu0 %v7614, 16
      %v7631 = vpop.permute.xlu0 %7630
      %7632 = vrot.lane.b32.xlu0 %v7615, 16
      %v7633 = vpop.permute.xlu0 %7632
      %7634 = vrot.lane.b32.xlu0 %v7616, 16
      %v7635 = vpop.permute.xlu0 %7634
      %7636 = vrot.lane.b32.xlu0 %v7617, 16
      %v7637 = vpop.permute.xlu0 %7636
      %7638 = vrot.lane.b32.xlu0 %v7618, 16
      %v7639 = vpop.permute.xlu0 %7638
      %7640 = vrot.lane.b32.xlu0 %v7619, 16
      %v7641 = vpop.permute.xlu0 %7640
      %7642 = vrot.lane.b32.xlu0 %v7620, 16
      %v7643 = vpop.permute.xlu0 %7642
      %7644 = vrot.lane.b32.xlu0 %v7621, 16
      %v7645 = vpop.permute.xlu0 %7644
      %7646 = vrot.lane.b32.xlu0 %v7622, 16
      %v7647 = vpop.permute.xlu0 %7646
      %7648 = vrot.lane.b32.xlu0 %v7623, 16
      %v7649 = vpop.permute.xlu0 %7648
      %7650 = vrot.lane.b32.xlu0 %v7624, 16
      %v7651 = vpop.permute.xlu0 %7650
      %7652 = vrot.lane.b32.xlu0 %v7625, 16
      %v7653 = vpop.permute.xlu0 %7652
      %7654 = vrot.lane.b32.xlu0 %v7626, 16
      %v7655 = vpop.permute.xlu0 %7654
      %7656 = vrot.lane.b32.xlu0 %v7627, 16
      %v7657 = vpop.permute.xlu0 %7656
      %7658 = vrot.lane.b32.xlu0 %v7628, 16
      %v7659 = vpop.permute.xlu0 %7658
      %7660 = vrot.lane.b32.xlu0 %v7629, 16
      %v7661 = vpop.permute.xlu0 %7660
      %v7678 = vunpack.c.l.b16 %v6221
      %v7679 = vunpack.c.l.b16 %v6222
      %v7680 = vunpack.c.l.b16 %v6223
      %v7681 = vunpack.c.l.b16 %v6224
      %v7682 = vunpack.c.l.b16 %v6225
      %v7683 = vunpack.c.l.b16 %v6226
      %v7684 = vunpack.c.l.b16 %v6227
      %v7685 = vunpack.c.l.b16 %v6228
      %v7686 = vunpack.c.l.b16 %v6229
      %v7687 = vunpack.c.l.b16 %v6230
      %v7688 = vunpack.c.l.b16 %v6231
      %v7689 = vunpack.c.l.b16 %v6232
      %v7690 = vunpack.c.l.b16 %v6233
      %v7691 = vunpack.c.l.b16 %v6234
      %v7692 = vunpack.c.l.b16 %v6235
      %v7693 = vunpack.c.l.b16 %v6236
      %v7694 = vunpack.c.l.b16 %v6237
      %v7695 = vunpack.c.l.b16 %v6238
      %v7696 = vunpack.c.l.b16 %v6239
      %v7697 = vunpack.c.l.b16 %v6240
      %v7698 = vunpack.c.l.b16 %v6241
      %v7699 = vunpack.c.l.b16 %v6242
      %v7700 = vunpack.c.l.b16 %v6243
      %v7701 = vunpack.c.l.b16 %v6244
      %v7702 = vunpack.c.l.b16 %v6245
      %v7703 = vunpack.c.l.b16 %v6246
      %v7704 = vunpack.c.l.b16 %v6247
      %v7705 = vunpack.c.l.b16 %v6248
      %v7706 = vunpack.c.l.b16 %v6249
      %v7707 = vunpack.c.l.b16 %v6250
      %v7708 = vunpack.c.l.b16 %v6251
      %v7709 = vunpack.c.l.b16 %v6252
      %v7710 = vpack.c.b16 %v7679, %v7678
      %v7711 = vpack.c.b16 %v7681, %v7680
      %v7712 = vpack.c.b16 %v7683, %v7682
      %v7713 = vpack.c.b16 %v7685, %v7684
      %v7714 = vpack.c.b16 %v7687, %v7686
      %v7715 = vpack.c.b16 %v7689, %v7688
      %v7716 = vpack.c.b16 %v7691, %v7690
      %v7717 = vpack.c.b16 %v7693, %v7692
      %v7718 = vpack.c.b16 %v7695, %v7694
      %v7719 = vpack.c.b16 %v7697, %v7696
      %v7720 = vpack.c.b16 %v7699, %v7698
      %v7721 = vpack.c.b16 %v7701, %v7700
      %v7722 = vpack.c.b16 %v7703, %v7702
      %v7723 = vpack.c.b16 %v7705, %v7704
      %v7724 = vpack.c.b16 %v7707, %v7706
      %v7725 = vpack.c.b16 %v7709, %v7708
      %7726 = vrot.lane.b32.xlu0 %v7710, 24
      %v7727 = vpop.permute.xlu0 %7726
      %7728 = vrot.lane.b32.xlu0 %v7711, 24
      %v7729 = vpop.permute.xlu0 %7728
      %7730 = vrot.lane.b32.xlu0 %v7712, 24
      %v7731 = vpop.permute.xlu0 %7730
      %7732 = vrot.lane.b32.xlu0 %v7713, 24
      %v7733 = vpop.permute.xlu0 %7732
      %7734 = vrot.lane.b32.xlu0 %v7714, 24
      %v7735 = vpop.permute.xlu0 %7734
      %7736 = vrot.lane.b32.xlu0 %v7715, 24
      %v7737 = vpop.permute.xlu0 %7736
      %7738 = vrot.lane.b32.xlu0 %v7716, 24
      %v7739 = vpop.permute.xlu0 %7738
      %7740 = vrot.lane.b32.xlu0 %v7717, 24
      %v7741 = vpop.permute.xlu0 %7740
      %7742 = vrot.lane.b32.xlu0 %v7718, 24
      %v7743 = vpop.permute.xlu0 %7742
      %7744 = vrot.lane.b32.xlu0 %v7719, 24
      %v7745 = vpop.permute.xlu0 %7744
      %7746 = vrot.lane.b32.xlu0 %v7720, 24
      %v7747 = vpop.permute.xlu0 %7746
      %7748 = vrot.lane.b32.xlu0 %v7721, 24
      %v7749 = vpop.permute.xlu0 %7748
      %7750 = vrot.lane.b32.xlu0 %v7722, 24
      %v7751 = vpop.permute.xlu0 %7750
      %7752 = vrot.lane.b32.xlu0 %v7723, 24
      %v7753 = vpop.permute.xlu0 %7752
      %7754 = vrot.lane.b32.xlu0 %v7724, 24
      %v7755 = vpop.permute.xlu0 %7754
      %7756 = vrot.lane.b32.xlu0 %v7725, 24
      %v7757 = vpop.permute.xlu0 %7756
      %v7758 = vunpack.c.l.b16 %v6282
      %v7759 = vunpack.c.l.b16 %v6292
      %v7760 = vunpack.c.l.b16 %v6306
      %v7761 = vunpack.c.l.b16 %v6316
      %v7762 = vunpack.c.l.b16 %v6330
      %v7763 = vunpack.c.l.b16 %v6340
      %v7764 = vunpack.c.l.b16 %v6354
      %v7765 = vunpack.c.l.b16 %v6364
      %v7766 = vunpack.c.l.b16 %v6378
      %v7767 = vunpack.c.l.b16 %v6388
      %v7768 = vunpack.c.l.b16 %v6402
      %v7769 = vunpack.c.l.b16 %v6412
      %v7770 = vunpack.c.l.b16 %v6426
      %v7771 = vunpack.c.l.b16 %v6436
      %v7772 = vunpack.c.l.b16 %v6450
      %v7773 = vunpack.c.l.b16 %v6460
      %v7774 = vunpack.c.l.b16 %v6474
      %v7775 = vunpack.c.l.b16 %v6484
      %v7776 = vunpack.c.l.b16 %v6498
      %v7777 = vunpack.c.l.b16 %v6508
      %v7778 = vunpack.c.l.b16 %v6522
      %v7779 = vunpack.c.l.b16 %v6532
      %v7780 = vunpack.c.l.b16 %v6546
      %v7781 = vunpack.c.l.b16 %v6556
      %v7782 = vunpack.c.l.b16 %v6570
      %v7783 = vunpack.c.l.b16 %v6580
      %v7784 = vunpack.c.l.b16 %v6594
      %v7785 = vunpack.c.l.b16 %v6604
      %v7786 = vunpack.c.l.b16 %v6618
      %v7787 = vunpack.c.l.b16 %v6628
      %v7788 = vunpack.c.l.b16 %v6642
      %v7789 = vunpack.c.l.b16 %v6652
      %v7790 = vpack.c.b16 %v7759, %v7758
      %v7791 = vpack.c.b16 %v7761, %v7760
      %v7792 = vpack.c.b16 %v7763, %v7762
      %v7793 = vpack.c.b16 %v7765, %v7764
      %v7794 = vpack.c.b16 %v7767, %v7766
      %v7795 = vpack.c.b16 %v7769, %v7768
      %v7796 = vpack.c.b16 %v7771, %v7770
      %v7797 = vpack.c.b16 %v7773, %v7772
      %v7798 = vpack.c.b16 %v7775, %v7774
      %v7799 = vpack.c.b16 %v7777, %v7776
      %v7800 = vpack.c.b16 %v7779, %v7778
      %v7801 = vpack.c.b16 %v7781, %v7780
      %v7802 = vpack.c.b16 %v7783, %v7782
      %v7803 = vpack.c.b16 %v7785, %v7784
      %v7804 = vpack.c.b16 %v7787, %v7786
      %v7805 = vpack.c.b16 %v7789, %v7788
      %7806 = vrot.lane.b32.xlu0 %v7790, 32
      %v7807 = vpop.permute.xlu0 %7806
      %7808 = vrot.lane.b32.xlu0 %v7791, 32
      %v7809 = vpop.permute.xlu0 %7808
      %7810 = vrot.lane.b32.xlu0 %v7792, 32
      %v7811 = vpop.permute.xlu0 %7810
      %7812 = vrot.lane.b32.xlu0 %v7793, 32
      %v7813 = vpop.permute.xlu0 %7812
      %7814 = vrot.lane.b32.xlu0 %v7794, 32
      %v7815 = vpop.permute.xlu0 %7814
      %7816 = vrot.lane.b32.xlu0 %v7795, 32
      %v7817 = vpop.permute.xlu0 %7816
      %7818 = vrot.lane.b32.xlu0 %v7796, 32
      %v7819 = vpop.permute.xlu0 %7818
      %7820 = vrot.lane.b32.xlu0 %v7797, 32
      %v7821 = vpop.permute.xlu0 %7820
      %7822 = vrot.lane.b32.xlu0 %v7798, 32
      %v7823 = vpop.permute.xlu0 %7822
      %7824 = vrot.lane.b32.xlu0 %v7799, 32
      %v7825 = vpop.permute.xlu0 %7824
      %7826 = vrot.lane.b32.xlu0 %v7800, 32
      %v7827 = vpop.permute.xlu0 %7826
      %7828 = vrot.lane.b32.xlu0 %v7801, 32
      %v7829 = vpop.permute.xlu0 %7828
      %7830 = vrot.lane.b32.xlu0 %v7802, 32
      %v7831 = vpop.permute.xlu0 %7830
      %7832 = vrot.lane.b32.xlu0 %v7803, 32
      %v7833 = vpop.permute.xlu0 %7832
      %7834 = vrot.lane.b32.xlu0 %v7804, 32
      %v7835 = vpop.permute.xlu0 %7834
      %7836 = vrot.lane.b32.xlu0 %v7805, 32
      %v7837 = vpop.permute.xlu0 %7836
      %v7838 = vunpack.c.l.b16 %v6720
      %v7839 = vunpack.c.l.b16 %v6723
      %v7840 = vunpack.c.l.b16 %v6727
      %v7841 = vunpack.c.l.b16 %v6730
      %v7842 = vunpack.c.l.b16 %v6734
      %v7843 = vunpack.c.l.b16 %v6737
      %v7844 = vunpack.c.l.b16 %v6741
      %v7845 = vunpack.c.l.b16 %v6744
      %v7846 = vunpack.c.l.b16 %v6748
      %v7847 = vunpack.c.l.b16 %v6751
      %v7848 = vunpack.c.l.b16 %v6755
      %v7849 = vunpack.c.l.b16 %v6758
      %v7850 = vunpack.c.l.b16 %v6762
      %v7851 = vunpack.c.l.b16 %v6765
      %v7852 = vunpack.c.l.b16 %v6769
      %v7853 = vunpack.c.l.b16 %v6772
      %v7854 = vunpack.c.l.b16 %v6776
      %v7855 = vunpack.c.l.b16 %v6779
      %v7856 = vunpack.c.l.b16 %v6783
      %v7857 = vunpack.c.l.b16 %v6786
      %v7858 = vunpack.c.l.b16 %v6790
      %v7859 = vunpack.c.l.b16 %v6793
      %v7860 = vunpack.c.l.b16 %v6797
      %v7861 = vunpack.c.l.b16 %v6800
      %v7862 = vunpack.c.l.b16 %v6804
      %v7863 = vunpack.c.l.b16 %v6807
      %v7864 = vunpack.c.l.b16 %v6811
      %v7865 = vunpack.c.l.b16 %v6814
      %v7866 = vunpack.c.l.b16 %v6818
      %v7867 = vunpack.c.l.b16 %v6821
      %v7868 = vunpack.c.l.b16 %v6825
      %v7869 = vunpack.c.l.b16 %v6828
      %v7870 = vpack.c.b16 %v7839, %v7838
      %v7871 = vpack.c.b16 %v7841, %v7840
      %v7872 = vpack.c.b16 %v7843, %v7842
      %v7873 = vpack.c.b16 %v7845, %v7844
      %v7874 = vpack.c.b16 %v7847, %v7846
      %v7875 = vpack.c.b16 %v7849, %v7848
      %v7876 = vpack.c.b16 %v7851, %v7850
      %v7877 = vpack.c.b16 %v7853, %v7852
      %v7878 = vpack.c.b16 %v7855, %v7854
      %v7879 = vpack.c.b16 %v7857, %v7856
      %v7880 = vpack.c.b16 %v7859, %v7858
      %v7881 = vpack.c.b16 %v7861, %v7860
      %v7882 = vpack.c.b16 %v7863, %v7862
      %v7883 = vpack.c.b16 %v7865, %v7864
      %v7884 = vpack.c.b16 %v7867, %v7866
      %v7885 = vpack.c.b16 %v7869, %v7868
      %7886 = vrot.lane.b32.xlu0 %v7870, 40
      %v7887 = vpop.permute.xlu0 %7886
      %7888 = vrot.lane.b32.xlu0 %v7871, 40
      %v7889 = vpop.permute.xlu0 %7888
      %7890 = vrot.lane.b32.xlu0 %v7872, 40
      %v7891 = vpop.permute.xlu0 %7890
      %7892 = vrot.lane.b32.xlu0 %v7873, 40
      %v7893 = vpop.permute.xlu0 %7892
      %7894 = vrot.lane.b32.xlu0 %v7874, 40
      %v7895 = vpop.permute.xlu0 %7894
      %7896 = vrot.lane.b32.xlu0 %v7875, 40
      %v7897 = vpop.permute.xlu0 %7896
      %7898 = vrot.lane.b32.xlu0 %v7876, 40
      %v7899 = vpop.permute.xlu0 %7898
      %7900 = vrot.lane.b32.xlu0 %v7877, 40
      %v7901 = vpop.permute.xlu0 %7900
      %7902 = vrot.lane.b32.xlu0 %v7878, 40
      %v7903 = vpop.permute.xlu0 %7902
      %7904 = vrot.lane.b32.xlu0 %v7879, 40
      %v7905 = vpop.permute.xlu0 %7904
      %7906 = vrot.lane.b32.xlu0 %v7880, 40
      %v7907 = vpop.permute.xlu0 %7906
      %7908 = vrot.lane.b32.xlu0 %v7881, 40
      %v7909 = vpop.permute.xlu0 %7908
      %7910 = vrot.lane.b32.xlu0 %v7882, 40
      %v7911 = vpop.permute.xlu0 %7910
      %7912 = vrot.lane.b32.xlu0 %v7883, 40
      %v7913 = vpop.permute.xlu0 %7912
      %7914 = vrot.lane.b32.xlu0 %v7884, 40
      %v7915 = vpop.permute.xlu0 %7914
      %7916 = vrot.lane.b32.xlu0 %v7885, 40
      %v7917 = vpop.permute.xlu0 %7916
      %v7934 = vunpack.c.l.b16 %v6830
      %v7935 = vunpack.c.l.b16 %v6831
      %v7936 = vunpack.c.l.b16 %v6832
      %v7937 = vunpack.c.l.b16 %v6833
      %v7938 = vunpack.c.l.b16 %v6834
      %v7939 = vunpack.c.l.b16 %v6835
      %v7940 = vunpack.c.l.b16 %v6836
      %v7941 = vunpack.c.l.b16 %v6837
      %v7942 = vunpack.c.l.b16 %v6838
      %v7943 = vunpack.c.l.b16 %v6839
      %v7944 = vunpack.c.l.b16 %v6840
      %v7945 = vunpack.c.l.b16 %v6841
      %v7946 = vunpack.c.l.b16 %v6842
      %v7947 = vunpack.c.l.b16 %v6843
      %v7948 = vunpack.c.l.b16 %v6844
      %v7949 = vunpack.c.l.b16 %v6845
      %v7950 = vunpack.c.l.b16 %v6846
      %v7951 = vunpack.c.l.b16 %v6847
      %v7952 = vunpack.c.l.b16 %v6848
      %v7953 = vunpack.c.l.b16 %v6849
      %v7954 = vunpack.c.l.b16 %v6850
      %v7955 = vunpack.c.l.b16 %v6851
      %v7956 = vunpack.c.l.b16 %v6852
      %v7957 = vunpack.c.l.b16 %v6853
      %v7958 = vunpack.c.l.b16 %v6854
      %v7959 = vunpack.c.l.b16 %v6855
      %v7960 = vunpack.c.l.b16 %v6856
      %v7961 = vunpack.c.l.b16 %v6857
      %v7962 = vunpack.c.l.b16 %v6858
      %v7963 = vunpack.c.l.b16 %v6859
      %v7964 = vunpack.c.l.b16 %v6860
      %v7965 = vunpack.c.l.b16 %v6861
      %v7966 = vpack.c.b16 %v7935, %v7934
      %v7967 = vpack.c.b16 %v7937, %v7936
      %v7968 = vpack.c.b16 %v7939, %v7938
      %v7969 = vpack.c.b16 %v7941, %v7940
      %v7970 = vpack.c.b16 %v7943, %v7942
      %v7971 = vpack.c.b16 %v7945, %v7944
      %v7972 = vpack.c.b16 %v7947, %v7946
      %v7973 = vpack.c.b16 %v7949, %v7948
      %v7974 = vpack.c.b16 %v7951, %v7950
      %v7975 = vpack.c.b16 %v7953, %v7952
      %v7976 = vpack.c.b16 %v7955, %v7954
      %v7977 = vpack.c.b16 %v7957, %v7956
      %v7978 = vpack.c.b16 %v7959, %v7958
      %v7979 = vpack.c.b16 %v7961, %v7960
      %v7980 = vpack.c.b16 %v7963, %v7962
      %v7981 = vpack.c.b16 %v7965, %v7964
      %7982 = vrot.lane.b32.xlu0 %v7966, 48
      %v7983 = vpop.permute.xlu0 %7982
      %7984 = vrot.lane.b32.xlu0 %v7967, 48
      %v7985 = vpop.permute.xlu0 %7984
      %7986 = vrot.lane.b32.xlu0 %v7968, 48
      %v7987 = vpop.permute.xlu0 %7986
      %7988 = vrot.lane.b32.xlu0 %v7969, 48
      %v7989 = vpop.permute.xlu0 %7988
      %7990 = vrot.lane.b32.xlu0 %v7970, 48
      %v7991 = vpop.permute.xlu0 %7990
      %7992 = vrot.lane.b32.xlu0 %v7971, 48
      %v7993 = vpop.permute.xlu0 %7992
      %7994 = vrot.lane.b32.xlu0 %v7972, 48
      %v7995 = vpop.permute.xlu0 %7994
      %7996 = vrot.lane.b32.xlu0 %v7973, 48
      %v7997 = vpop.permute.xlu0 %7996
      %7998 = vrot.lane.b32.xlu0 %v7974, 48
      %v7999 = vpop.permute.xlu0 %7998
      %8000 = vrot.lane.b32.xlu0 %v7975, 48
      %v8001 = vpop.permute.xlu0 %8000
      %8002 = vrot.lane.b32.xlu0 %v7976, 48
      %v8003 = vpop.permute.xlu0 %8002
      %8004 = vrot.lane.b32.xlu0 %v7977, 48
      %v8005 = vpop.permute.xlu0 %8004
      %8006 = vrot.lane.b32.xlu0 %v7978, 48
      %v8007 = vpop.permute.xlu0 %8006
      %8008 = vrot.lane.b32.xlu0 %v7979, 48
      %v8009 = vpop.permute.xlu0 %8008
      %8010 = vrot.lane.b32.xlu0 %v7980, 48
      %v8011 = vpop.permute.xlu0 %8010
      %8012 = vrot.lane.b32.xlu0 %v7981, 48
      %v8013 = vpop.permute.xlu0 %8012
      %v8014 = vunpack.c.l.b16 %v6891
      %v8015 = vunpack.c.l.b16 %v6901
      %v8016 = vunpack.c.l.b16 %v6915
      %v8017 = vunpack.c.l.b16 %v6925
      %v8018 = vunpack.c.l.b16 %v6939
      %v8019 = vunpack.c.l.b16 %v6949
      %v8020 = vunpack.c.l.b16 %v6963
      %v8021 = vunpack.c.l.b16 %v6973
      %v8022 = vunpack.c.l.b16 %v6987
      %v8023 = vunpack.c.l.b16 %v6997
      %v8024 = vunpack.c.l.b16 %v7011
      %v8025 = vunpack.c.l.b16 %v7021
      %v8026 = vunpack.c.l.b16 %v7035
      %v8027 = vunpack.c.l.b16 %v7045
      %v8028 = vunpack.c.l.b16 %v7059
      %v8029 = vunpack.c.l.b16 %v7069
      %v8030 = vunpack.c.l.b16 %v7083
      %v8031 = vunpack.c.l.b16 %v7093
      %v8032 = vunpack.c.l.b16 %v7107
      %v8033 = vunpack.c.l.b16 %v7117
      %v8034 = vunpack.c.l.b16 %v7131
      %v8035 = vunpack.c.l.b16 %v7141
      %v8036 = vunpack.c.l.b16 %v7155
      %v8037 = vunpack.c.l.b16 %v7165
      %v8038 = vunpack.c.l.b16 %v7179
      %v8039 = vunpack.c.l.b16 %v7189
      %v8040 = vunpack.c.l.b16 %v7203
      %v8041 = vunpack.c.l.b16 %v7213
      %v8042 = vunpack.c.l.b16 %v7227
      %v8043 = vunpack.c.l.b16 %v7237
      %v8044 = vunpack.c.l.b16 %v7251
      %v8045 = vunpack.c.l.b16 %v7261
      %v8046 = vpack.c.b16 %v8015, %v8014
      %v8047 = vpack.c.b16 %v8017, %v8016
      %v8048 = vpack.c.b16 %v8019, %v8018
      %v8049 = vpack.c.b16 %v8021, %v8020
      %v8050 = vpack.c.b16 %v8023, %v8022
      %v8051 = vpack.c.b16 %v8025, %v8024
      %v8052 = vpack.c.b16 %v8027, %v8026
      %v8053 = vpack.c.b16 %v8029, %v8028
      %v8054 = vpack.c.b16 %v8031, %v8030
      %v8055 = vpack.c.b16 %v8033, %v8032
      %v8056 = vpack.c.b16 %v8035, %v8034
      %v8057 = vpack.c.b16 %v8037, %v8036
      %v8058 = vpack.c.b16 %v8039, %v8038
      %v8059 = vpack.c.b16 %v8041, %v8040
      %v8060 = vpack.c.b16 %v8043, %v8042
      %v8061 = vpack.c.b16 %v8045, %v8044
      %8062 = vrot.lane.b32.xlu0 %v8046, 56
      %v8063 = vpop.permute.xlu0 %8062
      %8064 = vrot.lane.b32.xlu0 %v8047, 56
      %v8065 = vpop.permute.xlu0 %8064
      %8066 = vrot.lane.b32.xlu0 %v8048, 56
      %v8067 = vpop.permute.xlu0 %8066
      %8068 = vrot.lane.b32.xlu0 %v8049, 56
      %v8069 = vpop.permute.xlu0 %8068
      %8070 = vrot.lane.b32.xlu0 %v8050, 56
      %v8071 = vpop.permute.xlu0 %8070
      %8072 = vrot.lane.b32.xlu0 %v8051, 56
      %v8073 = vpop.permute.xlu0 %8072
      %8074 = vrot.lane.b32.xlu0 %v8052, 56
      %v8075 = vpop.permute.xlu0 %8074
      %8076 = vrot.lane.b32.xlu0 %v8053, 56
      %v8077 = vpop.permute.xlu0 %8076
      %8078 = vrot.lane.b32.xlu0 %v8054, 56
      %v8079 = vpop.permute.xlu0 %8078
      %8080 = vrot.lane.b32.xlu0 %v8055, 56
      %v8081 = vpop.permute.xlu0 %8080
      %8082 = vrot.lane.b32.xlu0 %v8056, 56
      %v8083 = vpop.permute.xlu0 %8082
      %8084 = vrot.lane.b32.xlu0 %v8057, 56
      %v8085 = vpop.permute.xlu0 %8084
      %8086 = vrot.lane.b32.xlu0 %v8058, 56
      %v8087 = vpop.permute.xlu0 %8086
      %8088 = vrot.lane.b32.xlu0 %v8059, 56
      %v8089 = vpop.permute.xlu0 %8088
      %8090 = vrot.lane.b32.xlu0 %v8060, 56
      %v8091 = vpop.permute.xlu0 %8090
      %8092 = vrot.lane.b32.xlu0 %v8061, 56
      %v8093 = vpop.permute.xlu0 %8092
      %v8094 = vunpack.c.l.b16 %v7329
      %v8095 = vunpack.c.l.b16 %v7332
      %v8096 = vunpack.c.l.b16 %v7336
      %v8097 = vunpack.c.l.b16 %v7339
      %v8098 = vunpack.c.l.b16 %v7343
      %v8099 = vunpack.c.l.b16 %v7346
      %v8100 = vunpack.c.l.b16 %v7350
      %v8101 = vunpack.c.l.b16 %v7353
      %v8102 = vunpack.c.l.b16 %v7357
      %v8103 = vunpack.c.l.b16 %v7360
      %v8104 = vunpack.c.l.b16 %v7364
      %v8105 = vunpack.c.l.b16 %v7367
      %v8106 = vunpack.c.l.b16 %v7371
      %v8107 = vunpack.c.l.b16 %v7374
      %v8108 = vunpack.c.l.b16 %v7378
      %v8109 = vunpack.c.l.b16 %v7381
      %v8110 = vunpack.c.l.b16 %v7385
      %v8111 = vunpack.c.l.b16 %v7388
      %v8112 = vunpack.c.l.b16 %v7392
      %v8113 = vunpack.c.l.b16 %v7395
      %v8114 = vunpack.c.l.b16 %v7399
      %v8115 = vunpack.c.l.b16 %v7402
      %v8116 = vunpack.c.l.b16 %v7406
      %v8117 = vunpack.c.l.b16 %v7409
      %v8118 = vunpack.c.l.b16 %v7413
      %v8119 = vunpack.c.l.b16 %v7416
      %v8120 = vunpack.c.l.b16 %v7420
      %v8121 = vunpack.c.l.b16 %v7423
      %v8122 = vunpack.c.l.b16 %v7427
      %v8123 = vunpack.c.l.b16 %v7430
      %v8124 = vunpack.c.l.b16 %v7434
      %v8125 = vunpack.c.l.b16 %v7437
      %v8126 = vpack.c.b16 %v8095, %v8094
      %v8127 = vpack.c.b16 %v8097, %v8096
      %v8128 = vpack.c.b16 %v8099, %v8098
      %v8129 = vpack.c.b16 %v8101, %v8100
      %v8130 = vpack.c.b16 %v8103, %v8102
      %v8131 = vpack.c.b16 %v8105, %v8104
      %v8132 = vpack.c.b16 %v8107, %v8106
      %v8133 = vpack.c.b16 %v8109, %v8108
      %v8134 = vpack.c.b16 %v8111, %v8110
      %v8135 = vpack.c.b16 %v8113, %v8112
      %v8136 = vpack.c.b16 %v8115, %v8114
      %v8137 = vpack.c.b16 %v8117, %v8116
      %v8138 = vpack.c.b16 %v8119, %v8118
      %v8139 = vpack.c.b16 %v8121, %v8120
      %v8140 = vpack.c.b16 %v8123, %v8122
      %v8141 = vpack.c.b16 %v8125, %v8124
      %8142 = vrot.lane.b32.xlu0 %v8126, 64
      %v8143 = vpop.permute.xlu0 %8142
      %8144 = vrot.lane.b32.xlu0 %v8127, 64
      %v8145 = vpop.permute.xlu0 %8144
      %8146 = vrot.lane.b32.xlu0 %v8128, 64
      %v8147 = vpop.permute.xlu0 %8146
      %8148 = vrot.lane.b32.xlu0 %v8129, 64
      %v8149 = vpop.permute.xlu0 %8148
      %8150 = vrot.lane.b32.xlu0 %v8130, 64
      %v8151 = vpop.permute.xlu0 %8150
      %8152 = vrot.lane.b32.xlu0 %v8131, 64
      %v8153 = vpop.permute.xlu0 %8152
      %8154 = vrot.lane.b32.xlu0 %v8132, 64
      %v8155 = vpop.permute.xlu0 %8154
      %8156 = vrot.lane.b32.xlu0 %v8133, 64
      %v8157 = vpop.permute.xlu0 %8156
      %8158 = vrot.lane.b32.xlu0 %v8134, 64
      %v8159 = vpop.permute.xlu0 %8158
      %8160 = vrot.lane.b32.xlu0 %v8135, 64
      %v8161 = vpop.permute.xlu0 %8160
      %8162 = vrot.lane.b32.xlu0 %v8136, 64
      %v8163 = vpop.permute.xlu0 %8162
      %8164 = vrot.lane.b32.xlu0 %v8137, 64
      %v8165 = vpop.permute.xlu0 %8164
      %8166 = vrot.lane.b32.xlu0 %v8138, 64
      %v8167 = vpop.permute.xlu0 %8166
      %8168 = vrot.lane.b32.xlu0 %v8139, 64
      %v8169 = vpop.permute.xlu0 %8168
      %8170 = vrot.lane.b32.xlu0 %v8140, 64
      %v8171 = vpop.permute.xlu0 %8170
      %8172 = vrot.lane.b32.xlu0 %v8141, 64
      %v8173 = vpop.permute.xlu0 %8172
      %v8176 = vsel %vm1454, %v7486, %v7551
      %v8179 = vsel %vm1454, %v7487, %v7553
      %v8182 = vsel %vm1454, %v7488, %v7555
      %v8185 = vsel %vm1454, %v7489, %v7557
      %v8188 = vsel %vm1454, %v7490, %v7559
      %v8191 = vsel %vm1454, %v7491, %v7561
      %v8194 = vsel %vm1454, %v7492, %v7563
      %v8197 = vsel %vm1454, %v7493, %v7565
      %v8200 = vsel %vm1454, %v7494, %v7567
      %v8203 = vsel %vm1454, %v7495, %v7569
      %v8206 = vsel %vm1454, %v7496, %v7571
      %v8209 = vsel %vm1454, %v7497, %v7573
      %v8212 = vsel %vm1454, %v7498, %v7575
      %v8215 = vsel %vm1454, %v7499, %v7577
      %v8218 = vsel %vm1454, %v7500, %v7579
      %v8221 = vsel %vm1454, %v7501, %v7581
      %v8223 = vsel %vm4558, %v8176, %v7631
      %v8225 = vsel %vm4558, %v8179, %v7633
      %v8227 = vsel %vm4558, %v8182, %v7635
      %v8229 = vsel %vm4558, %v8185, %v7637
      %v8231 = vsel %vm4558, %v8188, %v7639
      %v8233 = vsel %vm4558, %v8191, %v7641
      %v8235 = vsel %vm4558, %v8194, %v7643
      %v8237 = vsel %vm4558, %v8197, %v7645
      %v8239 = vsel %vm4558, %v8200, %v7647
      %v8241 = vsel %vm4558, %v8203, %v7649
      %v8243 = vsel %vm4558, %v8206, %v7651
      %v8245 = vsel %vm4558, %v8209, %v7653
      %v8247 = vsel %vm4558, %v8212, %v7655
      %v8249 = vsel %vm4558, %v8215, %v7657
      %v8251 = vsel %vm4558, %v8218, %v7659
      %v8253 = vsel %vm4558, %v8221, %v7661
      %vm8254 = vcmask 195584
      %v8256 = vsel %vm8254, %v8223, %v7727
      %v8258 = vsel %vm8254, %v8225, %v7729
      %v8260 = vsel %vm8254, %v8227, %v7731
      %v8262 = vsel %vm8254, %v8229, %v7733
      %v8264 = vsel %vm8254, %v8231, %v7735
      %v8266 = vsel %vm8254, %v8233, %v7737
      %v8268 = vsel %vm8254, %v8235, %v7739
      %v8270 = vsel %vm8254, %v8237, %v7741
      %v8272 = vsel %vm8254, %v8239, %v7743
      %v8274 = vsel %vm8254, %v8241, %v7745
      %v8276 = vsel %vm8254, %v8243, %v7747
      %v8278 = vsel %vm8254, %v8245, %v7749
      %v8280 = vsel %vm8254, %v8247, %v7751
      %v8282 = vsel %vm8254, %v8249, %v7753
      %v8284 = vsel %vm8254, %v8251, %v7755
      %v8286 = vsel %vm8254, %v8253, %v7757
      %v8288 = vsel %vm4607, %v8256, %v7807
      %v8290 = vsel %vm4607, %v8258, %v7809
      %v8292 = vsel %vm4607, %v8260, %v7811
      %v8294 = vsel %vm4607, %v8262, %v7813
      %v8296 = vsel %vm4607, %v8264, %v7815
      %v8298 = vsel %vm4607, %v8266, %v7817
      %v8300 = vsel %vm4607, %v8268, %v7819
      %v8302 = vsel %vm4607, %v8270, %v7821
      %v8304 = vsel %vm4607, %v8272, %v7823
      %v8306 = vsel %vm4607, %v8274, %v7825
      %v8308 = vsel %vm4607, %v8276, %v7827
      %v8310 = vsel %vm4607, %v8278, %v7829
      %v8312 = vsel %vm4607, %v8280, %v7831
      %v8314 = vsel %vm4607, %v8282, %v7833
      %v8316 = vsel %vm4607, %v8284, %v7835
      %v8318 = vsel %vm4607, %v8286, %v7837
      %vm8319 = vcmask 326656
      %v8321 = vsel %vm8319, %v8288, %v7887
      %v8323 = vsel %vm8319, %v8290, %v7889
      %v8325 = vsel %vm8319, %v8292, %v7891
      %v8327 = vsel %vm8319, %v8294, %v7893
      %v8329 = vsel %vm8319, %v8296, %v7895
      %v8331 = vsel %vm8319, %v8298, %v7897
      %v8333 = vsel %vm8319, %v8300, %v7899
      %v8335 = vsel %vm8319, %v8302, %v7901
      %v8337 = vsel %vm8319, %v8304, %v7903
      %v8339 = vsel %vm8319, %v8306, %v7905
      %v8341 = vsel %vm8319, %v8308, %v7907
      %v8343 = vsel %vm8319, %v8310, %v7909
      %v8345 = vsel %vm8319, %v8312, %v7911
      %v8347 = vsel %vm8319, %v8314, %v7913
      %v8349 = vsel %vm8319, %v8316, %v7915
      %v8351 = vsel %vm8319, %v8318, %v7917
      %v8353 = vsel %vm4640, %v8321, %v7983
      %v8355 = vsel %vm4640, %v8323, %v7985
      %v8357 = vsel %vm4640, %v8325, %v7987
      %v8359 = vsel %vm4640, %v8327, %v7989
      %v8361 = vsel %vm4640, %v8329, %v7991
      %v8363 = vsel %vm4640, %v8331, %v7993
      %v8365 = vsel %vm4640, %v8333, %v7995
      %v8367 = vsel %vm4640, %v8335, %v7997
      %v8369 = vsel %vm4640, %v8337, %v7999
      %v8371 = vsel %vm4640, %v8339, %v8001
      %v8373 = vsel %vm4640, %v8341, %v8003
      %v8375 = vsel %vm4640, %v8343, %v8005
      %v8377 = vsel %vm4640, %v8345, %v8007
      %v8379 = vsel %vm4640, %v8347, %v8009
      %v8381 = vsel %vm4640, %v8349, %v8011
      %v8383 = vsel %vm4640, %v8351, %v8013
      %vm8384 = vcmask 457728
      %v8386 = vsel %vm8384, %v8353, %v8063
      %v8388 = vsel %vm8384, %v8355, %v8065
      %v8390 = vsel %vm8384, %v8357, %v8067
      %v8392 = vsel %vm8384, %v8359, %v8069
      %v8394 = vsel %vm8384, %v8361, %v8071
      %v8396 = vsel %vm8384, %v8363, %v8073
      %v8398 = vsel %vm8384, %v8365, %v8075
      %v8400 = vsel %vm8384, %v8367, %v8077
      %v8402 = vsel %vm8384, %v8369, %v8079
      %v8404 = vsel %vm8384, %v8371, %v8081
      %v8406 = vsel %vm8384, %v8373, %v8083
      %v8408 = vsel %vm8384, %v8375, %v8085
      %v8410 = vsel %vm8384, %v8377, %v8087
      %v8412 = vsel %vm8384, %v8379, %v8089
      %v8414 = vsel %vm8384, %v8381, %v8091
      %v8416 = vsel %vm8384, %v8383, %v8093
      %v8418 = vsel %vm4673, %v8386, %v8143
      %v8420 = vsel %vm4673, %v8388, %v8145
      %v8422 = vsel %vm4673, %v8390, %v8147
      %v8424 = vsel %vm4673, %v8392, %v8149
      %v8426 = vsel %vm4673, %v8394, %v8151
      %v8428 = vsel %vm4673, %v8396, %v8153
      %v8430 = vsel %vm4673, %v8398, %v8155
      %v8432 = vsel %vm4673, %v8400, %v8157
      %v8434 = vsel %vm4673, %v8402, %v8159
      %v8436 = vsel %vm4673, %v8404, %v8161
      %v8438 = vsel %vm4673, %v8406, %v8163
      %v8440 = vsel %vm4673, %v8408, %v8165
      %v8442 = vsel %vm4673, %v8410, %v8167
      %v8444 = vsel %vm4673, %v8412, %v8169
      %v8446 = vsel %vm4673, %v8414, %v8171
      %v8448 = vsel %vm4673, %v8416, %v8173
      %v8450 = vperm.slane %v5612, 0
      %v8461 = vunpack.c.l.b16 %v5603
      %v8462 = vunpack.c.l.b16 %v5604
      %v8463 = vunpack.c.l.b16 %v5605
      %v8464 = vunpack.c.l.b16 %v5606
      %v8465 = vunpack.c.l.b16 %v5607
      %v8466 = vunpack.c.l.b16 %v5608
      %v8467 = vunpack.c.l.b16 %v5609
      %v8468 = vunpack.c.l.b16 %v5610
      %v8469 = vunpack.c.l.b16 %v5611
      %v8470 = vpack.c.b16 %v8462, %v8461
      %v8471 = vpack.c.b16 %v8464, %v8463
      %v8472 = vpack.c.b16 %v8466, %v8465
      %v8473 = vpack.c.b16 %v8468, %v8467
      %v8474 = vpack.c.b16 %v8469, %v8469
      %vm8479 = vcmask 588800
      %v8480 = vsel %vm8479, %v8418, 0
      %v8482 = vsel %vm8479, %v8420, 0
      %v8484 = vsel %vm8479, %v8422, 0
      %v8486 = vsel %vm8479, %v8424, 0
      %v8488 = vsel %vm8479, %v8426, 0
      %v8490 = vsel %vm8479, %v8428, 0
      %v8492 = vsel %vm8479, %v8430, 0
      %v8494 = vsel %vm8479, %v8432, 0
      %v8496 = vsel %vm8479, %v8434, 0
      %v8498 = vsel %vm8479, %v8436, 0
      %v8500 = vsel %vm8479, %v8438, 0
      %v8502 = vsel %vm8479, %v8440, 0
      %v8504 = vsel %vm8479, %v8442, 0
      %v8506 = vsel %vm8479, %v8444, 0
      %v8508 = vsel %vm8479, %v8446, 0
      %v8510 = vsel %vm8479, %v8448, 0
      %vm8512 = vcmask 1043456
      %v8514 = vsel %vm8512, %v8474, 0
      %8516 = vmatpush.bf16.msra.mxu0 0
      %8517 = vmatpush.bf16.msra.mxu0 0
      %8518 = vmatpush.bf16.msra.mxu0 0
      %8519 = vmatpush.bf16.msra.mxu0 %v8514
      %8520 = vmatpush.bf16.msra.mxu0 %v8473
      %8521 = vmatpush.bf16.msra.mxu0 %v8472
      %8522 = vmatpush.bf16.msra.mxu0 %v8471
      %8523 = vmatpush.bf16.msra.mxu0 %v8470
      %8524 = vmatmul.bf16.gmra.mxu0 %v8480
      %v8525 = vpop.f32.mrf.mxu0
      %v8526 = vadd.f32 %v8450, %v8525
      %v8527 = vpop.f32.mrf.mxu0
      %v8528 = vadd.f32 %v8450, %v8527
      %8529 = vmatmul.bf16.gmra.mxu0 %v8482
      %v8530 = vpop.f32.mrf.mxu0
      %v8531 = vadd.f32 %v8450, %v8530
      %v8532 = vpop.f32.mrf.mxu0
      %v8533 = vadd.f32 %v8450, %v8532
      %8534 = vmatmul.bf16.gmra.mxu0 %v8484
      %v8535 = vpop.f32.mrf.mxu0
      %v8536 = vadd.f32 %v8450, %v8535
      %v8537 = vpop.f32.mrf.mxu0
      %v8538 = vadd.f32 %v8450, %v8537
      %8539 = vmatmul.bf16.gmra.mxu0 %v8486
      %v8540 = vpop.f32.mrf.mxu0
      %v8541 = vadd.f32 %v8450, %v8540
      %v8542 = vpop.f32.mrf.mxu0
      %v8543 = vadd.f32 %v8450, %v8542
      %8544 = vmatmul.bf16.gmra.mxu0 %v8488
      %v8545 = vpop.f32.mrf.mxu0
      %v8546 = vadd.f32 %v8450, %v8545
      %v8547 = vpop.f32.mrf.mxu0
      %v8548 = vadd.f32 %v8450, %v8547
      %8549 = vmatmul.bf16.gmra.mxu0 %v8490
      %v8550 = vpop.f32.mrf.mxu0
      %v8551 = vadd.f32 %v8450, %v8550
      %v8552 = vpop.f32.mrf.mxu0
      %v8553 = vadd.f32 %v8450, %v8552
      %8554 = vmatmul.bf16.gmra.mxu0 %v8492
      %v8555 = vpop.f32.mrf.mxu0
      %v8556 = vadd.f32 %v8450, %v8555
      %v8557 = vpop.f32.mrf.mxu0
      %v8558 = vadd.f32 %v8450, %v8557
      %8559 = vmatmul.bf16.gmra.mxu0 %v8494
      %v8560 = vpop.f32.mrf.mxu0
      %v8561 = vadd.f32 %v8450, %v8560
      %v8562 = vpop.f32.mrf.mxu0
      %v8563 = vadd.f32 %v8450, %v8562
      %8564 = vmatmul.bf16.gmra.mxu0 %v8496
      %v8565 = vpop.f32.mrf.mxu0
      %v8566 = vadd.f32 %v8450, %v8565
      %v8567 = vpop.f32.mrf.mxu0
      %v8568 = vadd.f32 %v8450, %v8567
      %8569 = vmatmul.bf16.gmra.mxu0 %v8498
      %v8570 = vpop.f32.mrf.mxu0
      %v8571 = vadd.f32 %v8450, %v8570
      %v8572 = vpop.f32.mrf.mxu0
      %v8573 = vadd.f32 %v8450, %v8572
      %8574 = vmatmul.bf16.gmra.mxu0 %v8500
      %v8575 = vpop.f32.mrf.mxu0
      %v8576 = vadd.f32 %v8450, %v8575
      %v8577 = vpop.f32.mrf.mxu0
      %v8578 = vadd.f32 %v8450, %v8577
      %8579 = vmatmul.bf16.gmra.mxu0 %v8502
      %v8580 = vpop.f32.mrf.mxu0
      %v8581 = vadd.f32 %v8450, %v8580
      %v8582 = vpop.f32.mrf.mxu0
      %v8583 = vadd.f32 %v8450, %v8582
      %8584 = vmatmul.bf16.gmra.mxu0 %v8504
      %v8585 = vpop.f32.mrf.mxu0
      %v8586 = vadd.f32 %v8450, %v8585
      %v8587 = vpop.f32.mrf.mxu0
      %v8588 = vadd.f32 %v8450, %v8587
      %8589 = vmatmul.bf16.gmra.mxu0 %v8506
      %v8590 = vpop.f32.mrf.mxu0
      %v8591 = vadd.f32 %v8450, %v8590
      %v8592 = vpop.f32.mrf.mxu0
      %v8593 = vadd.f32 %v8450, %v8592
      %8594 = vmatmul.bf16.gmra.mxu0 %v8508
      %v8595 = vpop.f32.mrf.mxu0
      %v8596 = vadd.f32 %v8450, %v8595
      %v8597 = vpop.f32.mrf.mxu0
      %v8598 = vadd.f32 %v8450, %v8597
      %8599 = vmatmul.bf16.gmra.mxu0 %v8510
      %v8600 = vpop.f32.mrf.mxu0
      %v8601 = vadd.f32 %v8450, %v8600
      %v8602 = vpop.f32.mrf.mxu0
      %v8603 = vadd.f32 %v8450, %v8602
      %8604 = vdwg.mxu0
      %v8605 = vmax.f32 %v8526, 0.0
      %v8606 = vmax.f32 %v8528, 0.0
      %v8607 = vmax.f32 %v8531, 0.0
      %v8608 = vmax.f32 %v8533, 0.0
      %v8609 = vmax.f32 %v8536, 0.0
      %v8610 = vmax.f32 %v8538, 0.0
      %v8611 = vmax.f32 %v8541, 0.0
      %v8612 = vmax.f32 %v8543, 0.0
      %v8613 = vmax.f32 %v8546, 0.0
      %v8614 = vmax.f32 %v8548, 0.0
      %v8615 = vmax.f32 %v8551, 0.0
      %v8616 = vmax.f32 %v8553, 0.0
      %v8617 = vmax.f32 %v8556, 0.0
      %v8618 = vmax.f32 %v8558, 0.0
      %v8619 = vmax.f32 %v8561, 0.0
      %v8620 = vmax.f32 %v8563, 0.0
      %v8621 = vmax.f32 %v8566, 0.0
      %v8622 = vmax.f32 %v8568, 0.0
      %v8623 = vmax.f32 %v8571, 0.0
      %v8624 = vmax.f32 %v8573, 0.0
      %v8625 = vmax.f32 %v8576, 0.0
      %v8626 = vmax.f32 %v8578, 0.0
      %v8627 = vmax.f32 %v8581, 0.0
      %v8628 = vmax.f32 %v8583, 0.0
      %v8629 = vmax.f32 %v8586, 0.0
      %v8630 = vmax.f32 %v8588, 0.0
      %v8631 = vmax.f32 %v8591, 0.0
      %v8632 = vmax.f32 %v8593, 0.0
      %v8633 = vmax.f32 %v8596, 0.0
      %v8634 = vmax.f32 %v8598, 0.0
      %v8635 = vmax.f32 %v8601, 0.0
      %v8636 = vmax.f32 %v8603, 0.0
      %v8637 = vpack.c.bf16 %v8605, %v8605
      %v8638 = vpack.c.bf16 %v8606, %v8606
      %v8639 = vpack.c.bf16 %v8607, %v8607
      %v8640 = vpack.c.bf16 %v8608, %v8608
      %v8641 = vpack.c.bf16 %v8609, %v8609
      %v8642 = vpack.c.bf16 %v8610, %v8610
      %v8643 = vpack.c.bf16 %v8611, %v8611
      %v8644 = vpack.c.bf16 %v8612, %v8612
      %v8645 = vpack.c.bf16 %v8613, %v8613
      %v8646 = vpack.c.bf16 %v8614, %v8614
      %v8647 = vpack.c.bf16 %v8615, %v8615
      %v8648 = vpack.c.bf16 %v8616, %v8616
      %v8649 = vpack.c.bf16 %v8617, %v8617
      %v8650 = vpack.c.bf16 %v8618, %v8618
      %v8651 = vpack.c.bf16 %v8619, %v8619
      %v8652 = vpack.c.bf16 %v8620, %v8620
      %v8653 = vpack.c.bf16 %v8621, %v8621
      %v8654 = vpack.c.bf16 %v8622, %v8622
      %v8655 = vpack.c.bf16 %v8623, %v8623
      %v8656 = vpack.c.bf16 %v8624, %v8624
      %v8657 = vpack.c.bf16 %v8625, %v8625
      %v8658 = vpack.c.bf16 %v8626, %v8626
      %v8659 = vpack.c.bf16 %v8627, %v8627
      %v8660 = vpack.c.bf16 %v8628, %v8628
      %v8661 = vpack.c.bf16 %v8629, %v8629
      %v8662 = vpack.c.bf16 %v8630, %v8630
      %v8663 = vpack.c.bf16 %v8631, %v8631
      %v8664 = vpack.c.bf16 %v8632, %v8632
      %v8665 = vpack.c.bf16 %v8633, %v8633
      %v8666 = vpack.c.bf16 %v8634, %v8634
      %v8667 = vpack.c.bf16 %v8635, %v8635
      %v8668 = vpack.c.bf16 %v8636, %v8636
      %8669 = vst.msk [vmem:[%s271] sm:$0xf] %vm395, %v8637
      %8670 = vst.msk [vmem:[%s271 + $0x4] sm:$0xf] %vm395, %v8638
      %8671 = vst.msk [vmem:[%s271 + $0x8] sm:$0xf] %vm395, %v8639
      %8672 = vst.msk [vmem:[%s271 + $0xc] sm:$0xf] %vm395, %v8640
      %8673 = vst.msk [vmem:[%s271 + $0x10] sm:$0xf] %vm395, %v8641
      %8674 = vst.msk [vmem:[%s271 + $0x14] sm:$0xf] %vm395, %v8642
      %8675 = vst.msk [vmem:[%s271 + $0x18] sm:$0xf] %vm395, %v8643
      %8676 = vst.msk [vmem:[%s271 + $0x1c] sm:$0xf] %vm395, %v8644
      %8677 = vst.msk [vmem:[%s271 + $0x20] sm:$0xf] %vm395, %v8645
      %8678 = vst.msk [vmem:[%s271 + $0x24] sm:$0xf] %vm395, %v8646
      %8679 = vst.msk [vmem:[%s271 + $0x28] sm:$0xf] %vm395, %v8647
      %8680 = vst.msk [vmem:[%s271 + $0x2c] sm:$0xf] %vm395, %v8648
      %8681 = vst.msk [vmem:[%s271 + $0x30] sm:$0xf] %vm395, %v8649
      %8682 = vst.msk [vmem:[%s271 + $0x34] sm:$0xf] %vm395, %v8650
      %8683 = vst.msk [vmem:[%s271 + $0x38] sm:$0xf] %vm395, %v8651
      %8684 = vst.msk [vmem:[%s271 + $0x3c] sm:$0xf] %vm395, %v8652
      %8685 = vst.msk [vmem:[%s271 + $0x40] sm:$0xf] %vm395, %v8653
      %8686 = vst.msk [vmem:[%s271 + $0x44] sm:$0xf] %vm395, %v8654
      %8687 = vst.msk [vmem:[%s271 + $0x48] sm:$0xf] %vm395, %v8655
      %8688 = vst.msk [vmem:[%s271 + $0x4c] sm:$0xf] %vm395, %v8656
      %8689 = vst.msk [vmem:[%s271 + $0x50] sm:$0xf] %vm395, %v8657
      %8690 = vst.msk [vmem:[%s271 + $0x54] sm:$0xf] %vm395, %v8658
      %8691 = vst.msk [vmem:[%s271 + $0x58] sm:$0xf] %vm395, %v8659
      %8692 = vst.msk [vmem:[%s271 + $0x5c] sm:$0xf] %vm395, %v8660
      %8693 = vst.msk [vmem:[%s271 + $0x60] sm:$0xf] %vm395, %v8661
      %8694 = vst.msk [vmem:[%s271 + $0x64] sm:$0xf] %vm395, %v8662
      %8695 = vst.msk [vmem:[%s271 + $0x68] sm:$0xf] %vm395, %v8663
      %8696 = vst.msk [vmem:[%s271 + $0x6c] sm:$0xf] %vm395, %v8664
      %8697 = vst.msk [vmem:[%s271 + $0x70] sm:$0xf] %vm395, %v8665
      %8698 = vst.msk [vmem:[%s271 + $0x74] sm:$0xf] %vm395, %v8666
      %8699 = vst.msk [vmem:[%s271 + $0x78] sm:$0xf] %vm395, %v8667
      %8700 = vst.msk [vmem:[%s271 + $0x7c] sm:$0xf] %vm395, %v8668
      %p8701 = scmp.lt.s32.totalorder %s17, 1
      %s8702 = scalar_select %p8701, %s17, 1
      %s8703 = smul.addr %s8702, 32
      %s8704 = smul.addr %s8703, 4
      %s8705 = scalar_lea.vmem %s6, %s8704
      // Predicated region
      $region45: #{a_call__.1} parent=43 // pred_check
        %p8706 = pneg %p171
      $region46: #{a_call__.1} parent=43 // pred_check_branch
        %8708 = sbr.rel (%p8706) target = $region48
      $region47: #{a_call__.1} parent=43 // pred_region
        _
      $region48: #{a_call__.1} parent=43 // pred_fallthru
        _
    $region44: #{a_call__.1} parent=5 // pred_fallthru
      _
    %p8709 = scmp.le.s32.totalorder 2, %s12
    // Predicated region
    $region49: #{a_call__.1} parent=5 // pred_check
      %p8710 = pneg %p8709
    $region50: #{a_call__.1} parent=5 // pred_check_branch
      %8712 = sbr.rel (%p8710) target = $region52
    $region51: #{a_call__.1} parent=5 // pred_region
      %s8713 = ssub.s32 %s12, 2
      // Predicated region
      $region53: #{a_call__.1} parent=51 // pred_check
        %p8714 = pneg %p177
      $region54: #{a_call__.1} parent=51 // pred_check_branch
        %8716 = sbr.rel (%p8714) target = $region56
      $region55: #{a_call__.1} parent=51 // pred_region
        %p8717 = scmp.lt.s32.totalorder %s18, 1
        %s8718 = scalar_select %p8717, %s18, 1
        %s8719 = smul.addr %s8718, 32
        %s8720 = smul.addr %s8719, 4
        %s8721 = scalar_lea.vmem %s6, %s8720
      $region56: #{a_call__.1} parent=51 // pred_fallthru
        _
    $region52: #{a_call__.1} parent=5 // pred_fallthru
      _
  $region6: #{a_call__.1} parent=0 // loop_footer
    %s16 = sadd.s32 1, %s12
  $region7: #{a_call__.1} parent=0 // loop_footer_branch
    %11 = sbr.rel target = $region3
  $region8: #{a_call__.1} parent=0 // loop_exit
    _

</llo_original>
